<compile_context>
chip_gen: v7x
topology: tpu7x:2x2x1
jax: 0.10.0
libtpu: 0.0.40
codegen_flags: <defaults>
</compile_context>

<pallas_src>
import math

import jax
import jax.numpy as jnp
from jax.experimental import pallas as pl
from jax.experimental.pallas import tpu as pltpu


TILE_ROWS = 512  # packed rows per grid step (multiple of 8); 512*128*4B = 256 KiB/buffer


def _te_kernel_dot(t_ref, d_ref, ph_ref, o_ref):
    # t_ref: [TILE, k]   d_ref: [k, P] (block-diag, includes *200)
    # ph_ref: [1, P]     o_ref: [TILE, P]
    pos = jnp.dot(t_ref[...], d_ref[...], preferred_element_type=jnp.float32)
    o_ref[...] = jnp.sin(pos + ph_ref[...])


def _te_kernel_bcast(t_ref, d_ref, ph_ref, o_ref):
    # Fallback (no lane packing): t_ref: [TILE, 1], d_ref/ph_ref: [1, d_hid]
    pos = t_ref[...] * d_ref[...]          # outer-product broadcast on the VPU
    o_ref[...] = jnp.sin(pos + ph_ref[...])


def make_div_term(d_hid: int) -> jnp.ndarray:
    """Deterministic parameter, identical to the PyTorch __init__."""
    vals = [1.0 / math.pow(10000.0, 2 * (j // 2) / d_hid) for j in range(d_hid)]
    return jnp.asarray(vals, dtype=jnp.float32).reshape(1, d_hid)


def temporal_encoding(t: jnp.ndarray, div_term: jnp.ndarray) -> jnp.ndarray:
    """t: any shape with n elements (flattened to [n, 1]); returns [n, d_hid]."""
    t2 = t.reshape(-1, 1).astype(jnp.float32)       # t.view(-1, 1)
    n = t2.shape[0]
    d_hid = div_term.shape[1]

    # Constant preprocessing (tiny, compile-time foldable): fold *200 into
    # div_term; phase vector implements cos(x) = sin(x + pi/2) on odd columns.
    div_scaled = (div_term.astype(jnp.float32) * 200.0).reshape(1, d_hid)
    phase = jnp.where(jnp.arange(d_hid) % 2 == 0, 0.0, jnp.pi / 2.0)
    phase = phase.astype(jnp.float32)

    # Lane-dense packing factor: pack k rows into one 128-lane output row.
    if d_hid < 128 and 128 % d_hid == 0 and n % (128 // d_hid) == 0:
        k = 128 // d_hid
    else:
        k = 1
    pack = k * d_hid          # packed lane width (128 when packing is active)
    n_rows = n // k           # packed row count

    if k > 1:
        # Constant block-diagonal broadcast matrix:
        #   D[j, j*d_hid + c] = 200 * div_term[c], zero elsewhere.
        eye = jnp.eye(k, dtype=jnp.float32)
        dmat = (eye[:, :, None] * div_scaled[0][None, None, :]).reshape(k, pack)
        t_in = t2.reshape(n_rows, k)
        phase_in = jnp.tile(phase, k).reshape(1, pack)
        kernel = _te_kernel_dot
    else:
        dmat = div_scaled
        t_in = t2
        phase_in = phase.reshape(1, d_hid)
        kernel = _te_kernel_bcast

    tile = min(TILE_ROWS, n_rows)   # TILE_ROWS is a multiple of 8; else full extent
    grid = (pl.cdiv(n_rows, tile),)
    t_cols = t_in.shape[1]

    out_packed = pl.pallas_call(
        kernel,
        out_shape=jax.ShapeDtypeStruct((n_rows, pack), jnp.float32),
        grid=grid,
        in_specs=[
            pl.BlockSpec((tile, t_cols), lambda i: (i, 0)),
            pl.BlockSpec(dmat.shape, lambda i: (0, 0)),
            pl.BlockSpec((1, pack), lambda i: (0, 0)),
        ],
        out_specs=pl.BlockSpec((tile, pack), lambda i: (i, 0)),
        compiler_params=pltpu.CompilerParams(
            # Row tiles are independent -> megacore sharding on v7x.
            dimension_semantics=("parallel",),
            # Tiles are small (<=256 KiB/buffer), so the default scoped VMEM
            # limit is ample on v5e/v6e/v7x; no override needed.
        ),
    )(t_in, dmat, phase_in)

    # Free row-major view back to [n, d_hid].
    return out_packed.reshape(n, d_hid)


def temporal_encoding_ref(t: jnp.ndarray, div_term: jnp.ndarray) -> jnp.ndarray:
    """Pure-JAX reference mirroring the PyTorch forward."""
    t2 = t.reshape(-1, 1).astype(jnp.float32) * 200.0
    pos = t2 @ div_term
    col = jnp.arange(div_term.shape[1])
    return jnp.where((col % 2) == 0, jnp.sin(pos), jnp.cos(pos))


if __name__ == "__main__":
    key = jax.random.PRNGKey(0)
    n_edges, d_hid = 4096, 32    # edge_time rows, GTrans d_input

    t = jax.random.uniform(key, (n_edges, 1), dtype=jnp.float32)  # timestamps in [0,1)
    div_term = make_div_term(d_hid)

    out = temporal_encoding(t, div_term)
    out = jax.block_until_ready(out)

    ref = temporal_encoding_ref(t, div_term)
    assert out.shape == (n_edges, d_hid)
    # Tolerance covers the fp32 rounding of the cos(x)=sin(x+pi/2) phase trick
    # at arguments up to ~200.
    assert jnp.allclose(out, ref, atol=5e-4, rtol=1e-4), "mismatch vs reference"

    print("KERNEL_OK")
</pallas_src>

<mosaic_0001>
module attributes {stable_mosaic.version = 11 : i64} {
  func.func @_te_kernel_dot(%arg0: i32, %arg1: memref<512x4xf32, #tpu.memory_space<vmem>>, %arg2: memref<4x128xf32, #tpu.memory_space<vmem>>, %arg3: memref<1x128xf32, #tpu.memory_space<vmem>>, %arg4: memref<512x128xf32, #tpu.memory_space<vmem>>) attributes {dimension_semantics = [#tpu.dimension_semantics<parallel>], iteration_bounds = array<i64: 2>, scalar_prefetch = 0 : i64, scratch_operands = 0 : i64, tpu.core_type = #tpu.core_type<tc>, window_params = [{transform_indices = @transform_0, window_bounds = array<i64: 512, 4>}, {pipeline_mode = #tpu.pipeline_mode<synchronous>, transform_indices = @transform_1, window_bounds = array<i64: 4, 128>}, {pipeline_mode = #tpu.pipeline_mode<synchronous>, transform_indices = @transform_2, window_bounds = array<i64: 1, 128>}, {transform_indices = @transform_3, window_bounds = array<i64: 512, 128>}]} {
    %c0 = arith.constant 0 : index
    %c0_0 = arith.constant 0 : index
    %0 = vector.load %arg1[%c0, %c0_0] : memref<512x4xf32, #tpu.memory_space<vmem>>, vector<512x4xf32>
    %c0_1 = arith.constant 0 : index
    %c0_2 = arith.constant 0 : index
    %1 = vector.load %arg2[%c0_1, %c0_2] : memref<4x128xf32, #tpu.memory_space<vmem>>, vector<4x128xf32>
    %cst = arith.constant dense<0.000000e+00> : vector<512x128xf32>
    %2 = tpu.matmul %0, %1, %cst {dimension_numbers = #tpu.dot_dimension_numbers<[1], [0], [0], [1], [0, 0, 1, 1], [], []>} : vector<512x4xf32>, vector<4x128xf32>, vector<512x128xf32> -> vector<512x128xf32>
    %c0_3 = arith.constant 0 : index
    %c0_4 = arith.constant 0 : index
    %3 = vector.load %arg3[%c0_3, %c0_4] : memref<1x128xf32, #tpu.memory_space<vmem>>, vector<1x128xf32>
    %4 = vector.broadcast %3 : vector<1x128xf32> to vector<512x128xf32>
    %5 = arith.addf %2, %4 : vector<512x128xf32>
    %6 = math.sin %5 : vector<512x128xf32>
    %c0_5 = arith.constant 0 : index
    %c0_6 = arith.constant 0 : index
    %7 = vector.load %arg4[%c0_5, %c0_6] : memref<512x128xf32, #tpu.memory_space<vmem>>, vector<512x128xf32>
    tpu.vector_store %arg4[%c0_5, %c0_6], %6 {strides = array<i32>} : memref<512x128xf32, #tpu.memory_space<vmem>>, vector<512x128xf32>,
    return
  }
  func.func @transform_0(%arg0: i32) -> (i32, i32) {
    %c0_i32 = arith.constant 0 : i32
    %c0_i32_0 = arith.constant 0 : i32
    return %arg0, %c0_i32 : i32, i32
  }
  func.func @transform_1(%arg0: i32) -> (i32, i32) {
    %c0_i32 = arith.constant 0 : i32
    %c0_i32_0 = arith.constant 0 : i32
    %c0_i32_1 = arith.constant 0 : i32
    return %c0_i32, %c0_i32_0 : i32, i32
  }
  func.func @transform_2(%arg0: i32) -> (i32, i32) {
    %c0_i32 = arith.constant 0 : i32
    %c0_i32_0 = arith.constant 0 : i32
    %c0_i32_1 = arith.constant 0 : i32
    return %c0_i32, %c0_i32_0 : i32, i32
  }
  func.func @transform_3(%arg0: i32) -> (i32, i32) {
    %c0_i32 = arith.constant 0 : i32
    %c0_i32_0 = arith.constant 0 : i32
    return %arg0, %c0_i32 : i32, i32
  }
}

</mosaic_0001>

<llo_original>
// kernel: tpu_custom_call.1
$region0: #{tpu_custom_call.1}
  #allocation0 [shape = 'u32[]', space=smem, size = 0x4, offset = 0x4, fixed_abs, tag = 'smem constant byte address 0x4 - core index']
  #allocation1 [shape = 'u32[144,128]{1,0:T(1,128)}', space=vmem, size = 0x12000, scoped, tag = 'internal scratch']
  %s0 = inlined_call_operand.vmem [shape: f32[1024,4], index: 0, kind: input, shape index: {}]
  %s1 = inlined_call_operand.vmem [shape: f32[4,128], index: 1, kind: input, shape index: {}]
  %s2 = inlined_call_operand.vmem [shape: f32[1,128], index: 2, kind: input, shape index: {}]
  %s3 = inlined_call_operand.hbm [shape: f32[1024,128], index: 3, kind: output, shape index: {}]
  %s4 = sld [smem:[#allocation0]]
  $region45: #{tpu_custom_call.1} parent=0
    _
  %s6 = ssub.s32 1, %s4
  %s7 = scalar_select 0, %s6, %s4
  $region1: #{tpu_custom_call.1} parent=0
    #allocation2 [shape = 'u8[524288]{0}', space=vmem, size = 0x80000, scoped, tag = 'output window, operand 0']
    #allocation3 [shape = 's32[2]{0}', space=sflag, size = 0x8, scoped, tag = 'scoped memory for tpu_custom_call.1']
    %8 = vsyncpa [#allocation3], 0
    %s9 = scalar_lea.sflag [#allocation3], 1
    %10 = vsyncpa %s9, 0
    loop: start=0, step=1, limit=4
    $region2: #{tpu_custom_call.1} parent=1 // loop_pre_header
      _
    $region3: #{tpu_custom_call.1} parent=1 // loop_header
      %s12 = sphi 0, %s16
      %p13 = scmp.ge.s32.totalorder %s12, 4
      %s22 = sphi 0, %s24
      %s25 = sphi 0, %s22
      %s26 = sphi 0, %s25
      %s42 = sphi 0, %s26
      %s46 = sphi 0, %s46
      %s48 = sphi 0, %s46
      %s49 = sphi 0, %s48
      %s63 = sphi 0, %s49
      %s67 = sphi 0, %s67
      %s69 = sphi 0, %s67
      %s70 = sphi 0, %s69
      %s84 = sphi 0, %s70
      %s90 = sphi 0, %s92
      %s93 = sphi 0, %s90
      %s94 = sphi 0, %s93
      %s110 = sphi 0, %s94
    $region4: #{tpu_custom_call.1} parent=1 // loop_header_branch
      %15 = sbr.rel (%p13) target = $region8
    $region5: #{tpu_custom_call.1} parent=1 // loop_body
      %s17 = ssub.s32 %s12, 1
      %s18 = ssub.s32 %s12, 2
      %s19 = sadd.s32 %s12, 1
      %s20 = ssub.s32 %s12, %s19
      %p21 = scmp.eq.s32.totalorder %s20, 0
      %s23 = sadd.s32 %s22, 1
      %s24 = scalar_select %p21, %s22, %s23
      %p27 = pneg %p21
      %p28 = scmp.eq.s32.totalorder %s12, 1
      %p29 = por %p27, %p28
      %p30 = scmp.ne.s32.totalorder %s22, %s25
      %p31 = scmp.eq.s32.totalorder %s12, 0
      %p32 = por %p30, %p31
      %p33 = scmp.ne.s32.totalorder %s22, %s25
      %p34 = scmp.eq.s32.totalorder %s17, 1
      %p35 = por %p33, %p34
      %p36 = scmp.ne.s32.totalorder %s25, %s26
      %p37 = scmp.eq.s32.totalorder %s17, 0
      %p38 = por %p36, %p37
      %p39 = scmp.ne.s32.totalorder %s25, %s26
      %p40 = scmp.eq.s32.totalorder %s18, 1
      %p41 = por %p39, %p40
      %p43 = scmp.ne.s32.totalorder %s26, %s42
      %p44 = scmp.eq.s32.totalorder %s18, 0
      %p45 = por %p43, %p44
      %s47 = sadd.s32 %s46, 1
      %p50 = scmp.eq.s32.totalorder %s12, 1
      %p51 = scmp.ne.s32.totalorder %s46, %s48
      %p52 = scmp.eq.s32.totalorder %s12, 0
      %p53 = por %p51, %p52
      %p54 = scmp.ne.s32.totalorder %s46, %s48
      %p55 = scmp.eq.s32.totalorder %s17, 1
      %p56 = por %p54, %p55
      %p57 = scmp.ne.s32.totalorder %s48, %s49
      %p58 = scmp.eq.s32.totalorder %s17, 0
      %p59 = por %p57, %p58
      %p60 = scmp.ne.s32.totalorder %s48, %s49
      %p61 = scmp.eq.s32.totalorder %s18, 1
      %p62 = por %p60, %p61
      %p64 = scmp.ne.s32.totalorder %s49, %s63
      %p65 = scmp.eq.s32.totalorder %s18, 0
      %p66 = por %p64, %p65
      %s68 = sadd.s32 %s67, 1
      %p71 = scmp.eq.s32.totalorder %s12, 1
      %p72 = scmp.ne.s32.totalorder %s67, %s69
      %p73 = scmp.eq.s32.totalorder %s12, 0
      %p74 = por %p72, %p73
      %p75 = scmp.ne.s32.totalorder %s67, %s69
      %p76 = scmp.eq.s32.totalorder %s17, 1
      %p77 = por %p75, %p76
      %p78 = scmp.ne.s32.totalorder %s69, %s70
      %p79 = scmp.eq.s32.totalorder %s17, 0
      %p80 = por %p78, %p79
      %p81 = scmp.ne.s32.totalorder %s69, %s70
      %p82 = scmp.eq.s32.totalorder %s18, 1
      %p83 = por %p81, %p82
      %p85 = scmp.ne.s32.totalorder %s70, %s84
      %p86 = scmp.eq.s32.totalorder %s18, 0
      %p87 = por %p85, %p86
      %s88 = ssub.s32 %s12, %s19
      %p89 = scmp.eq.s32.totalorder %s88, 0
      %s91 = sadd.s32 %s90, 1
      %s92 = scalar_select %p89, %s90, %s91
      %p95 = pneg %p89
      %p96 = scmp.eq.s32.totalorder %s12, 1
      %p97 = por %p95, %p96
      %p98 = scmp.ne.s32.totalorder %s90, %s93
      %p99 = scmp.eq.s32.totalorder %s12, 0
      %p100 = por %p98, %p99
      %p101 = scmp.ne.s32.totalorder %s90, %s93
      %p102 = scmp.eq.s32.totalorder %s17, 1
      %p103 = por %p101, %p102
      %p104 = scmp.ne.s32.totalorder %s93, %s94
      %p105 = scmp.eq.s32.totalorder %s17, 0
      %p106 = por %p104, %p105
      %p107 = scmp.ne.s32.totalorder %s93, %s94
      %p108 = scmp.eq.s32.totalorder %s18, 1
      %p109 = por %p107, %p108
      %p111 = scmp.ne.s32.totalorder %s94, %s110
      %p112 = scmp.eq.s32.totalorder %s18, 0
      %p113 = por %p111, %p112
      %p114 = scmp.le.s32.totalorder 1, %s12
      %p115 = scmp.lt.s32.totalorder %s12, 3
      %p116 = pnand %p114, %p115
      %p117 = pneg %p116
      // Predicated region
      $region9: #{tpu_custom_call.1} parent=5 // pred_check
        _
      $region10: #{tpu_custom_call.1} parent=5 // pred_check_branch
        %119 = sbr.rel (%p116) target = $region12
      $region11: #{tpu_custom_call.1} parent=5 // pred_region
        %s120 = ssub.s32 %s12, 1
        // Predicated region
        $region13: #{tpu_custom_call.1} parent=11 // pred_check
          %p121 = pneg %p59
        $region14: #{tpu_custom_call.1} parent=11 // pred_check_branch
          %123 = sbr.rel (%p121) target = $region16
        $region15: #{tpu_custom_call.1} parent=11 // pred_region
          _
        $region16: #{tpu_custom_call.1} parent=11 // pred_fallthru
          _
        // Predicated region
        $region17: #{tpu_custom_call.1} parent=11 // pred_check
          %p124 = pneg %p80
        $region18: #{tpu_custom_call.1} parent=11 // pred_check_branch
          %126 = sbr.rel (%p124) target = $region20
        $region19: #{tpu_custom_call.1} parent=11 // pred_region
          _
        $region20: #{tpu_custom_call.1} parent=11 // pred_fallthru
          _
      $region12: #{tpu_custom_call.1} parent=5 // pred_fallthru
        _
      %p127 = scmp.lt.s32.totalorder %s12, 2
      // Predicated region
      $region21: #{tpu_custom_call.1} parent=5 // pred_check
        %p128 = pneg %p127
      $region22: #{tpu_custom_call.1} parent=5 // pred_check_branch
        %130 = sbr.rel (%p128) target = $region24
      $region23: #{tpu_custom_call.1} parent=5 // pred_region
        // Predicated region
        $region25: #{tpu_custom_call.1} parent=23 // pred_check
          %p131 = pneg %p32
        $region26: #{tpu_custom_call.1} parent=23 // pred_check_branch
          %133 = sbr.rel (%p131) target = $region28
        $region27: #{tpu_custom_call.1} parent=23 // pred_region
          %s134 = smul.u32 64, %s12
          %p135 = scmp.lt.s32.totalorder %s134, 127
          %s136 = scalar_select %p135, %s134, 127
          %s137 = smul.addr %s136, 8
          %s138 = scalar_lea.vmem %s0, %s137
          %s139 = smul.u32 64, %s12
        $region28: #{tpu_custom_call.1} parent=23 // pred_fallthru
          _
      $region24: #{tpu_custom_call.1} parent=5 // pred_fallthru
        _
      %p140 = scmp.le.s32.totalorder 1, %s12
      %p141 = scmp.lt.s32.totalorder %s12, 3
      %p142 = pnand %p140, %p141
      %p143 = pneg %p142
      // Predicated region
      $region29: #{tpu_custom_call.1} parent=5 // pred_check
        _
      $region30: #{tpu_custom_call.1} parent=5 // pred_check_branch
        %145 = sbr.rel (%p142) target = $region32
      $region31: #{tpu_custom_call.1} parent=5 // pred_region
        %s146 = ssub.s32 %s12, 1
        %s147 = smul.u32 64, %s17
        %p148 = scmp.lt.s32.totalorder %s147, 127
        %s149 = scalar_select %p148, %s147, 127
        %s150 = smul.addr %s149, 8
        %s151 = scalar_lea.vmem %s0, %s150
        %p152 = pneg %p38
        %p153 = pneg %p35
        %p154 = pneg %p59
        %p155 = pneg %p56
        %p156 = pneg %p80
        %p157 = pneg %p77
        %p158 = pneg %p106
        %p159 = pneg %p103
        %s160 = sand.u32 %s93, 1
        %s161 = scalar_lea.sflag [#allocation3], %s160
        %s162 = sand.u32 %s93, 1
        %s163 = smul.addr %s162, 512
        %s164 = scalar_lea.vmem [#allocation2], %s163
        %s165 = smul.u32 64, %s17
        %p166 = scmp.lt.s32.totalorder %s165, 127
        %s167 = scalar_select %p166, %s165, 127
        %s168 = smul.addr %s167, 8
        %s169 = scalar_lea.vmem %s0, %s168
        %s170 = smul.u32 64, %s17
        %s171 = smul.u32 64, %s17
        %v172 = vld [vmem:[%s169] sm:$0xff]
        %v173 = vld [vmem:[%s169 + $0x8] sm:$0xff]
        %v174 = vld [vmem:[%s169 + $0x10] sm:$0xff]
        %v175 = vld [vmem:[%s169 + $0x18] sm:$0xff]
        %v176 = vld [vmem:[%s169 + $0x20] sm:$0xff]
        %v177 = vld [vmem:[%s169 + $0x28] sm:$0xff]
        %v178 = vld [vmem:[%s169 + $0x30] sm:$0xff]
        %v179 = vld [vmem:[%s169 + $0x38] sm:$0xff]
        %v180 = vld [vmem:[%s169 + $0x40] sm:$0xff]
        %v181 = vld [vmem:[%s169 + $0x48] sm:$0xff]
        %v182 = vld [vmem:[%s169 + $0x50] sm:$0xff]
        %v183 = vld [vmem:[%s169 + $0x58] sm:$0xff]
        %v184 = vld [vmem:[%s169 + $0x60] sm:$0xff]
        %v185 = vld [vmem:[%s169 + $0x68] sm:$0xff]
        %v186 = vld [vmem:[%s169 + $0x70] sm:$0xff]
        %v187 = vld [vmem:[%s169 + $0x78] sm:$0xff]
        %v188 = vld [vmem:[%s169 + $0x80] sm:$0xff]
        %v189 = vld [vmem:[%s169 + $0x88] sm:$0xff]
        %v190 = vld [vmem:[%s169 + $0x90] sm:$0xff]
        %v191 = vld [vmem:[%s169 + $0x98] sm:$0xff]
        %v192 = vld [vmem:[%s169 + $0xa0] sm:$0xff]
        %v193 = vld [vmem:[%s169 + $0xa8] sm:$0xff]
        %v194 = vld [vmem:[%s169 + $0xb0] sm:$0xff]
        %v195 = vld [vmem:[%s169 + $0xb8] sm:$0xff]
        %v196 = vld [vmem:[%s169 + $0xc0] sm:$0xff]
        %v197 = vld [vmem:[%s169 + $0xc8] sm:$0xff]
        %v198 = vld [vmem:[%s169 + $0xd0] sm:$0xff]
        %v199 = vld [vmem:[%s169 + $0xd8] sm:$0xff]
        %v200 = vld [vmem:[%s169 + $0xe0] sm:$0xff]
        %v201 = vld [vmem:[%s169 + $0xe8] sm:$0xff]
        %v202 = vld [vmem:[%s169 + $0xf0] sm:$0xff]
        %v203 = vld [vmem:[%s169 + $0xf8] sm:$0xff]
        %v204 = vld [vmem:[%s169 + $0x100] sm:$0xff]
        %v205 = vld [vmem:[%s169 + $0x108] sm:$0xff]
        %v206 = vld [vmem:[%s169 + $0x110] sm:$0xff]
        %v207 = vld [vmem:[%s169 + $0x118] sm:$0xff]
        %v208 = vld [vmem:[%s169 + $0x120] sm:$0xff]
        %v209 = vld [vmem:[%s169 + $0x128] sm:$0xff]
        %v210 = vld [vmem:[%s169 + $0x130] sm:$0xff]
        %v211 = vld [vmem:[%s169 + $0x138] sm:$0xff]
        %v212 = vld [vmem:[%s169 + $0x140] sm:$0xff]
        %v213 = vld [vmem:[%s169 + $0x148] sm:$0xff]
        %v214 = vld [vmem:[%s169 + $0x150] sm:$0xff]
        %v215 = vld [vmem:[%s169 + $0x158] sm:$0xff]
        %v216 = vld [vmem:[%s169 + $0x160] sm:$0xff]
        %v217 = vld [vmem:[%s169 + $0x168] sm:$0xff]
        %v218 = vld [vmem:[%s169 + $0x170] sm:$0xff]
        %v219 = vld [vmem:[%s169 + $0x178] sm:$0xff]
        %v220 = vld [vmem:[%s169 + $0x180] sm:$0xff]
        %v221 = vld [vmem:[%s169 + $0x188] sm:$0xff]
        %v222 = vld [vmem:[%s169 + $0x190] sm:$0xff]
        %v223 = vld [vmem:[%s169 + $0x198] sm:$0xff]
        %v224 = vld [vmem:[%s169 + $0x1a0] sm:$0xff]
        %v225 = vld [vmem:[%s169 + $0x1a8] sm:$0xff]
        %v226 = vld [vmem:[%s169 + $0x1b0] sm:$0xff]
        %v227 = vld [vmem:[%s169 + $0x1b8] sm:$0xff]
        %v228 = vld [vmem:[%s169 + $0x1c0] sm:$0xff]
        %v229 = vld [vmem:[%s169 + $0x1c8] sm:$0xff]
        %v230 = vld [vmem:[%s169 + $0x1d0] sm:$0xff]
        %v231 = vld [vmem:[%s169 + $0x1d8] sm:$0xff]
        %v232 = vld [vmem:[%s169 + $0x1e0] sm:$0xff]
        %v233 = vld [vmem:[%s169 + $0x1e8] sm:$0xff]
        %v234 = vld [vmem:[%s169 + $0x1f0] sm:$0xff]
        %v235 = vld [vmem:[%s169 + $0x1f8] sm:$0xff]
        %v236 = vld [vmem:[%s1] sm:$0xf]
        %v237 = vld [vmem:[%s2] sm:$0x1]
        %v239 = vlaneseq
        %v240 = vshrl.u32 %v239, 7
        %v241 = vsub.s32 0, %v240
        %v242 = vrot.slane %v237, %v241
        %vm244 = vcmask 31744
        %v246 = vsel %vm244, %v172, 0
        %v249 = vsel %vm244, %v173, 0
        %v252 = vsel %vm244, %v174, 0
        %v255 = vsel %vm244, %v175, 0
        %v258 = vsel %vm244, %v176, 0
        %v261 = vsel %vm244, %v177, 0
        %v264 = vsel %vm244, %v178, 0
        %v267 = vsel %vm244, %v179, 0
        %v270 = vsel %vm244, %v180, 0
        %v273 = vsel %vm244, %v181, 0
        %v276 = vsel %vm244, %v182, 0
        %v279 = vsel %vm244, %v183, 0
        %v282 = vsel %vm244, %v184, 0
        %v285 = vsel %vm244, %v185, 0
        %v288 = vsel %vm244, %v186, 0
        %v291 = vsel %vm244, %v187, 0
        %v294 = vsel %vm244, %v188, 0
        %v297 = vsel %vm244, %v189, 0
        %v300 = vsel %vm244, %v190, 0
        %v303 = vsel %vm244, %v191, 0
        %v306 = vsel %vm244, %v192, 0
        %v309 = vsel %vm244, %v193, 0
        %v312 = vsel %vm244, %v194, 0
        %v315 = vsel %vm244, %v195, 0
        %v318 = vsel %vm244, %v196, 0
        %v321 = vsel %vm244, %v197, 0
        %v324 = vsel %vm244, %v198, 0
        %v327 = vsel %vm244, %v199, 0
        %v330 = vsel %vm244, %v200, 0
        %v333 = vsel %vm244, %v201, 0
        %v336 = vsel %vm244, %v202, 0
        %v339 = vsel %vm244, %v203, 0
        %v342 = vsel %vm244, %v204, 0
        %v345 = vsel %vm244, %v205, 0
        %v348 = vsel %vm244, %v206, 0
        %v351 = vsel %vm244, %v207, 0
        %v354 = vsel %vm244, %v208, 0
        %v357 = vsel %vm244, %v209, 0
        %v360 = vsel %vm244, %v210, 0
        %v363 = vsel %vm244, %v211, 0
        %v366 = vsel %vm244, %v212, 0
        %v369 = vsel %vm244, %v213, 0
        %v372 = vsel %vm244, %v214, 0
        %v375 = vsel %vm244, %v215, 0
        %v378 = vsel %vm244, %v216, 0
        %v381 = vsel %vm244, %v217, 0
        %v384 = vsel %vm244, %v218, 0
        %v387 = vsel %vm244, %v219, 0
        %v390 = vsel %vm244, %v220, 0
        %v393 = vsel %vm244, %v221, 0
        %v396 = vsel %vm244, %v222, 0
        %v399 = vsel %vm244, %v223, 0
        %v402 = vsel %vm244, %v224, 0
        %v405 = vsel %vm244, %v225, 0
        %v408 = vsel %vm244, %v226, 0
        %v411 = vsel %vm244, %v227, 0
        %v414 = vsel %vm244, %v228, 0
        %v417 = vsel %vm244, %v229, 0
        %v420 = vsel %vm244, %v230, 0
        %v423 = vsel %vm244, %v231, 0
        %v426 = vsel %vm244, %v232, 0
        %v429 = vsel %vm244, %v233, 0
        %v432 = vsel %vm244, %v234, 0
        %v435 = vsel %vm244, %v235, 0
        %vm437 = vcmask 1043456
        %v439 = vsel %vm437, %v236, 0
        %441 = vmatprep.subr.mxu0 0.0
        %442 = vmatpush1.msra.mxu0 %v439
        %443 = vmatprep.subr.mxu0 0.0
        %444 = vmatpush1.msra.mxu0 0.0
        %445 = vmatprep.subr.mxu0 0.0
        %446 = vmatpush1.msra.mxu0 0.0
        %447 = vmatprep.subr.mxu0 0.0
        %448 = vmatpush1.msra.mxu0 0.0
        %449 = vmatprep.subr.mxu0 0.0
        %450 = vmatpush1.msra.mxu0 0.0
        %451 = vmatprep.subr.mxu0 0.0
        %452 = vmatpush1.msra.mxu0 0.0
        %453 = vmatprep.subr.mxu0 0.0
        %454 = vmatpush1.msra.mxu0 0.0
        %455 = vmatprep.subr.mxu0 0.0
        %456 = vmatpush1.msra.mxu0 0.0
        %457 = vmatprep.subr.mxu0 0.0
        %458 = vmatpush1.msra.mxu0 0.0
        %459 = vmatprep.subr.mxu0 0.0
        %460 = vmatpush1.msra.mxu0 0.0
        %461 = vmatprep.subr.mxu0 0.0
        %462 = vmatpush1.msra.mxu0 0.0
        %463 = vmatprep.subr.mxu0 0.0
        %464 = vmatpush1.msra.mxu0 0.0
        %465 = vmatprep.subr.mxu0 0.0
        %466 = vmatpush1.msra.mxu0 0.0
        %467 = vmatprep.subr.mxu0 0.0
        %468 = vmatpush1.msra.mxu0 0.0
        %469 = vmatprep.subr.mxu0 0.0
        %470 = vmatpush1.msra.mxu0 0.0
        %471 = vmatprep.subr.mxu0 0.0
        %472 = vmatpush1.msra.mxu0 0.0
        %473 = vmatprep.subr.mxu0 0.0
        %474 = vmatpush1.msra.mxu0 0.0
        %475 = vmatprep.subr.mxu0 0.0
        %476 = vmatpush1.msra.mxu0 0.0
        %477 = vmatprep.subr.mxu0 0.0
        %478 = vmatpush1.msra.mxu0 0.0
        %479 = vmatprep.subr.mxu0 0.0
        %480 = vmatpush1.msra.mxu0 0.0
        %481 = vmatprep.subr.mxu0 0.0
        %482 = vmatpush1.msra.mxu0 0.0
        %483 = vmatprep.subr.mxu0 0.0
        %484 = vmatpush1.msra.mxu0 0.0
        %485 = vmatprep.subr.mxu0 0.0
        %486 = vmatpush1.msra.mxu0 0.0
        %487 = vmatprep.subr.mxu0 0.0
        %488 = vmatpush1.msra.mxu0 0.0
        %489 = vmatprep.subr.mxu0 0.0
        %490 = vmatpush1.msra.mxu0 0.0
        %491 = vmatprep.subr.mxu0 0.0
        %492 = vmatpush1.msra.mxu0 0.0
        %493 = vmatprep.subr.mxu0 0.0
        %494 = vmatpush1.msra.mxu0 0.0
        %495 = vmatprep.subr.mxu0 0.0
        %496 = vmatpush1.msra.mxu0 0.0
        %497 = vmatprep.subr.mxu0 0.0
        %498 = vmatpush1.msra.mxu0 0.0
        %499 = vmatprep.subr.mxu0 0.0
        %500 = vmatpush1.msra.mxu0 0.0
        %501 = vmatprep.subr.mxu0 0.0
        %502 = vmatpush1.msra.mxu0 0.0
        %503 = vmatprep.subr.mxu0 0.0
        %504 = vmatpush1.msra.mxu0 0.0
        %505 = vmatprep.mubr.f32.mxu0 0.0
        %506 = vmatmul.mubr.f32.gmra.mrb[0].mxu0 %v246
        %v507 = vpop.f32.mrb[0].mxu0
        %v508 = vadd.f32 %v242, %v507
        %v509 = vpop.f32.mrb[0].mxu0
        %510 = vmatprep.mubr.f32.mxu0 0.0
        %511 = vmatmul.mubr.f32.gmra.mrb[0].mxu0 %v249
        %v512 = vpop.f32.mrb[0].mxu0
        %v513 = vadd.f32 %v242, %v512
        %v514 = vpop.f32.mrb[0].mxu0
        %515 = vmatprep.mubr.f32.mxu0 0.0
        %516 = vmatmul.mubr.f32.gmra.mrb[0].mxu0 %v252
        %v517 = vpop.f32.mrb[0].mxu0
        %v518 = vadd.f32 %v242, %v517
        %v519 = vpop.f32.mrb[0].mxu0
        %520 = vmatprep.mubr.f32.mxu0 0.0
        %521 = vmatmul.mubr.f32.gmra.mrb[0].mxu0 %v255
        %v522 = vpop.f32.mrb[0].mxu0
        %v523 = vadd.f32 %v242, %v522
        %v524 = vpop.f32.mrb[0].mxu0
        %525 = vmatprep.mubr.f32.mxu0 0.0
        %526 = vmatmul.mubr.f32.gmra.mrb[0].mxu0 %v258
        %v527 = vpop.f32.mrb[0].mxu0
        %v528 = vadd.f32 %v242, %v527
        %v529 = vpop.f32.mrb[0].mxu0
        %530 = vmatprep.mubr.f32.mxu0 0.0
        %531 = vmatmul.mubr.f32.gmra.mrb[0].mxu0 %v261
        %v532 = vpop.f32.mrb[0].mxu0
        %v533 = vadd.f32 %v242, %v532
        %v534 = vpop.f32.mrb[0].mxu0
        %535 = vmatprep.mubr.f32.mxu0 0.0
        %536 = vmatmul.mubr.f32.gmra.mrb[0].mxu0 %v264
        %v537 = vpop.f32.mrb[0].mxu0
        %v538 = vadd.f32 %v242, %v537
        %v539 = vpop.f32.mrb[0].mxu0
        %540 = vmatprep.mubr.f32.mxu0 0.0
        %541 = vmatmul.mubr.f32.gmra.mrb[0].mxu0 %v267
        %v542 = vpop.f32.mrb[0].mxu0
        %v543 = vadd.f32 %v242, %v542
        %v544 = vpop.f32.mrb[0].mxu0
        %545 = vmatprep.mubr.f32.mxu0 0.0
        %546 = vmatmul.mubr.f32.gmra.mrb[0].mxu0 %v270
        %v547 = vpop.f32.mrb[0].mxu0
        %v548 = vadd.f32 %v242, %v547
        %v549 = vpop.f32.mrb[0].mxu0
        %550 = vmatprep.mubr.f32.mxu0 0.0
        %551 = vmatmul.mubr.f32.gmra.mrb[0].mxu0 %v273
        %v552 = vpop.f32.mrb[0].mxu0
        %v553 = vadd.f32 %v242, %v552
        %v554 = vpop.f32.mrb[0].mxu0
        %555 = vmatprep.mubr.f32.mxu0 0.0
        %556 = vmatmul.mubr.f32.gmra.mrb[0].mxu0 %v276
        %v557 = vpop.f32.mrb[0].mxu0
        %v558 = vadd.f32 %v242, %v557
        %v559 = vpop.f32.mrb[0].mxu0
        %560 = vmatprep.mubr.f32.mxu0 0.0
        %561 = vmatmul.mubr.f32.gmra.mrb[0].mxu0 %v279
        %v562 = vpop.f32.mrb[0].mxu0
        %v563 = vadd.f32 %v242, %v562
        %v564 = vpop.f32.mrb[0].mxu0
        %565 = vmatprep.mubr.f32.mxu0 0.0
        %566 = vmatmul.mubr.f32.gmra.mrb[0].mxu0 %v282
        %v567 = vpop.f32.mrb[0].mxu0
        %v568 = vadd.f32 %v242, %v567
        %v569 = vpop.f32.mrb[0].mxu0
        %570 = vmatprep.mubr.f32.mxu0 0.0
        %571 = vmatmul.mubr.f32.gmra.mrb[0].mxu0 %v285
        %v572 = vpop.f32.mrb[0].mxu0
        %v573 = vadd.f32 %v242, %v572
        %v574 = vpop.f32.mrb[0].mxu0
        %575 = vmatprep.mubr.f32.mxu0 0.0
        %576 = vmatmul.mubr.f32.gmra.mrb[0].mxu0 %v288
        %v577 = vpop.f32.mrb[0].mxu0
        %v578 = vadd.f32 %v242, %v577
        %v579 = vpop.f32.mrb[0].mxu0
        %580 = vmatprep.mubr.f32.mxu0 0.0
        %581 = vmatmul.mubr.f32.gmra.mrb[0].mxu0 %v291
        %v582 = vpop.f32.mrb[0].mxu0
        %v583 = vadd.f32 %v242, %v582
        %v584 = vpop.f32.mrb[0].mxu0
        %585 = vmatprep.mubr.f32.mxu0 0.0
        %586 = vmatmul.mubr.f32.gmra.mrb[0].mxu0 %v294
        %v587 = vpop.f32.mrb[0].mxu0
        %v588 = vadd.f32 %v242, %v587
        %v589 = vpop.f32.mrb[0].mxu0
        %590 = vmatprep.mubr.f32.mxu0 0.0
        %591 = vmatmul.mubr.f32.gmra.mrb[0].mxu0 %v297
        %v592 = vpop.f32.mrb[0].mxu0
        %v593 = vadd.f32 %v242, %v592
        %v594 = vpop.f32.mrb[0].mxu0
        %595 = vmatprep.mubr.f32.mxu0 0.0
        %596 = vmatmul.mubr.f32.gmra.mrb[0].mxu0 %v300
        %v597 = vpop.f32.mrb[0].mxu0
        %v598 = vadd.f32 %v242, %v597
        %v599 = vpop.f32.mrb[0].mxu0
        %600 = vmatprep.mubr.f32.mxu0 0.0
        %601 = vmatmul.mubr.f32.gmra.mrb[0].mxu0 %v303
        %v602 = vpop.f32.mrb[0].mxu0
        %v603 = vadd.f32 %v242, %v602
        %v604 = vpop.f32.mrb[0].mxu0
        %605 = vmatprep.mubr.f32.mxu0 0.0
        %606 = vmatmul.mubr.f32.gmra.mrb[0].mxu0 %v306
        %v607 = vpop.f32.mrb[0].mxu0
        %v608 = vadd.f32 %v242, %v607
        %v609 = vpop.f32.mrb[0].mxu0
        %610 = vmatprep.mubr.f32.mxu0 0.0
        %611 = vmatmul.mubr.f32.gmra.mrb[0].mxu0 %v309
        %v612 = vpop.f32.mrb[0].mxu0
        %v613 = vadd.f32 %v242, %v612
        %v614 = vpop.f32.mrb[0].mxu0
        %615 = vmatprep.mubr.f32.mxu0 0.0
        %616 = vmatmul.mubr.f32.gmra.mrb[0].mxu0 %v312
        %v617 = vpop.f32.mrb[0].mxu0
        %v618 = vadd.f32 %v242, %v617
        %v619 = vpop.f32.mrb[0].mxu0
        %620 = vmatprep.mubr.f32.mxu0 0.0
        %621 = vmatmul.mubr.f32.gmra.mrb[0].mxu0 %v315
        %v622 = vpop.f32.mrb[0].mxu0
        %v623 = vadd.f32 %v242, %v622
        %v624 = vpop.f32.mrb[0].mxu0
        %625 = vmatprep.mubr.f32.mxu0 0.0
        %626 = vmatmul.mubr.f32.gmra.mrb[0].mxu0 %v318
        %v627 = vpop.f32.mrb[0].mxu0
        %v628 = vadd.f32 %v242, %v627
        %v629 = vpop.f32.mrb[0].mxu0
        %630 = vmatprep.mubr.f32.mxu0 0.0
        %631 = vmatmul.mubr.f32.gmra.mrb[0].mxu0 %v321
        %v632 = vpop.f32.mrb[0].mxu0
        %v633 = vadd.f32 %v242, %v632
        %v634 = vpop.f32.mrb[0].mxu0
        %635 = vmatprep.mubr.f32.mxu0 0.0
        %636 = vmatmul.mubr.f32.gmra.mrb[0].mxu0 %v324
        %v637 = vpop.f32.mrb[0].mxu0
        %v638 = vadd.f32 %v242, %v637
        %v639 = vpop.f32.mrb[0].mxu0
        %640 = vmatprep.mubr.f32.mxu0 0.0
        %641 = vmatmul.mubr.f32.gmra.mrb[0].mxu0 %v327
        %v642 = vpop.f32.mrb[0].mxu0
        %v643 = vadd.f32 %v242, %v642
        %v644 = vpop.f32.mrb[0].mxu0
        %645 = vmatprep.mubr.f32.mxu0 0.0
        %646 = vmatmul.mubr.f32.gmra.mrb[0].mxu0 %v330
        %v647 = vpop.f32.mrb[0].mxu0
        %v648 = vadd.f32 %v242, %v647
        %v649 = vpop.f32.mrb[0].mxu0
        %650 = vmatprep.mubr.f32.mxu0 0.0
        %651 = vmatmul.mubr.f32.gmra.mrb[0].mxu0 %v333
        %v652 = vpop.f32.mrb[0].mxu0
        %v653 = vadd.f32 %v242, %v652
        %v654 = vpop.f32.mrb[0].mxu0
        %655 = vmatprep.mubr.f32.mxu0 0.0
        %656 = vmatmul.mubr.f32.gmra.mrb[0].mxu0 %v336
        %v657 = vpop.f32.mrb[0].mxu0
        %v658 = vadd.f32 %v242, %v657
        %v659 = vpop.f32.mrb[0].mxu0
        %660 = vmatprep.mubr.f32.mxu0 0.0
        %661 = vmatmul.mubr.f32.gmra.mrb[0].mxu0 %v339
        %v662 = vpop.f32.mrb[0].mxu0
        %v663 = vadd.f32 %v242, %v662
        %v664 = vpop.f32.mrb[0].mxu0
        %665 = vmatprep.mubr.f32.mxu0 0.0
        %666 = vmatmul.mubr.f32.gmra.mrb[0].mxu0 %v342
        %v667 = vpop.f32.mrb[0].mxu0
        %v668 = vadd.f32 %v242, %v667
        %v669 = vpop.f32.mrb[0].mxu0
        %670 = vmatprep.mubr.f32.mxu0 0.0
        %671 = vmatmul.mubr.f32.gmra.mrb[0].mxu0 %v345
        %v672 = vpop.f32.mrb[0].mxu0
        %v673 = vadd.f32 %v242, %v672
        %v674 = vpop.f32.mrb[0].mxu0
        %675 = vmatprep.mubr.f32.mxu0 0.0
        %676 = vmatmul.mubr.f32.gmra.mrb[0].mxu0 %v348
        %v677 = vpop.f32.mrb[0].mxu0
        %v678 = vadd.f32 %v242, %v677
        %v679 = vpop.f32.mrb[0].mxu0
        %680 = vmatprep.mubr.f32.mxu0 0.0
        %681 = vmatmul.mubr.f32.gmra.mrb[0].mxu0 %v351
        %v682 = vpop.f32.mrb[0].mxu0
        %v683 = vadd.f32 %v242, %v682
        %v684 = vpop.f32.mrb[0].mxu0
        %685 = vmatprep.mubr.f32.mxu0 0.0
        %686 = vmatmul.mubr.f32.gmra.mrb[0].mxu0 %v354
        %v687 = vpop.f32.mrb[0].mxu0
        %v688 = vadd.f32 %v242, %v687
        %v689 = vpop.f32.mrb[0].mxu0
        %690 = vmatprep.mubr.f32.mxu0 0.0
        %691 = vmatmul.mubr.f32.gmra.mrb[0].mxu0 %v357
        %v692 = vpop.f32.mrb[0].mxu0
        %v693 = vadd.f32 %v242, %v692
        %v694 = vpop.f32.mrb[0].mxu0
        %695 = vmatprep.mubr.f32.mxu0 0.0
        %696 = vmatmul.mubr.f32.gmra.mrb[0].mxu0 %v360
        %v697 = vpop.f32.mrb[0].mxu0
        %v698 = vadd.f32 %v242, %v697
        %v699 = vpop.f32.mrb[0].mxu0
        %700 = vmatprep.mubr.f32.mxu0 0.0
        %701 = vmatmul.mubr.f32.gmra.mrb[0].mxu0 %v363
        %v702 = vpop.f32.mrb[0].mxu0
        %v703 = vadd.f32 %v242, %v702
        %v704 = vpop.f32.mrb[0].mxu0
        %705 = vmatprep.mubr.f32.mxu0 0.0
        %706 = vmatmul.mubr.f32.gmra.mrb[0].mxu0 %v366
        %v707 = vpop.f32.mrb[0].mxu0
        %v708 = vadd.f32 %v242, %v707
        %v709 = vpop.f32.mrb[0].mxu0
        %710 = vmatprep.mubr.f32.mxu0 0.0
        %711 = vmatmul.mubr.f32.gmra.mrb[0].mxu0 %v369
        %v712 = vpop.f32.mrb[0].mxu0
        %v713 = vadd.f32 %v242, %v712
        %v714 = vpop.f32.mrb[0].mxu0
        %715 = vmatprep.mubr.f32.mxu0 0.0
        %716 = vmatmul.mubr.f32.gmra.mrb[0].mxu0 %v372
        %v717 = vpop.f32.mrb[0].mxu0
        %v718 = vadd.f32 %v242, %v717
        %v719 = vpop.f32.mrb[0].mxu0
        %720 = vmatprep.mubr.f32.mxu0 0.0
        %721 = vmatmul.mubr.f32.gmra.mrb[0].mxu0 %v375
        %v722 = vpop.f32.mrb[0].mxu0
        %v723 = vadd.f32 %v242, %v722
        %v724 = vpop.f32.mrb[0].mxu0
        %725 = vmatprep.mubr.f32.mxu0 0.0
        %726 = vmatmul.mubr.f32.gmra.mrb[0].mxu0 %v378
        %v727 = vpop.f32.mrb[0].mxu0
        %v728 = vadd.f32 %v242, %v727
        %v729 = vpop.f32.mrb[0].mxu0
        %730 = vmatprep.mubr.f32.mxu0 0.0
        %731 = vmatmul.mubr.f32.gmra.mrb[0].mxu0 %v381
        %v732 = vpop.f32.mrb[0].mxu0
        %v733 = vadd.f32 %v242, %v732
        %v734 = vpop.f32.mrb[0].mxu0
        %735 = vmatprep.mubr.f32.mxu0 0.0
        %736 = vmatmul.mubr.f32.gmra.mrb[0].mxu0 %v384
        %v737 = vpop.f32.mrb[0].mxu0
        %v738 = vadd.f32 %v242, %v737
        %v739 = vpop.f32.mrb[0].mxu0
        %740 = vmatprep.mubr.f32.mxu0 0.0
        %741 = vmatmul.mubr.f32.gmra.mrb[0].mxu0 %v387
        %v742 = vpop.f32.mrb[0].mxu0
        %v743 = vadd.f32 %v242, %v742
        %v744 = vpop.f32.mrb[0].mxu0
        %745 = vmatprep.mubr.f32.mxu0 0.0
        %746 = vmatmul.mubr.f32.gmra.mrb[0].mxu0 %v390
        %v747 = vpop.f32.mrb[0].mxu0
        %v748 = vadd.f32 %v242, %v747
        %v749 = vpop.f32.mrb[0].mxu0
        %750 = vmatprep.mubr.f32.mxu0 0.0
        %751 = vmatmul.mubr.f32.gmra.mrb[0].mxu0 %v393
        %v752 = vpop.f32.mrb[0].mxu0
        %v753 = vadd.f32 %v242, %v752
        %v754 = vpop.f32.mrb[0].mxu0
        %755 = vmatprep.mubr.f32.mxu0 0.0
        %756 = vmatmul.mubr.f32.gmra.mrb[0].mxu0 %v396
        %v757 = vpop.f32.mrb[0].mxu0
        %v758 = vadd.f32 %v242, %v757
        %v759 = vpop.f32.mrb[0].mxu0
        %760 = vmatprep.mubr.f32.mxu0 0.0
        %761 = vmatmul.mubr.f32.gmra.mrb[0].mxu0 %v399
        %v762 = vpop.f32.mrb[0].mxu0
        %v763 = vadd.f32 %v242, %v762
        %v764 = vpop.f32.mrb[0].mxu0
        %765 = vmatprep.mubr.f32.mxu0 0.0
        %766 = vmatmul.mubr.f32.gmra.mrb[0].mxu0 %v402
        %v767 = vpop.f32.mrb[0].mxu0
        %v768 = vadd.f32 %v242, %v767
        %v769 = vpop.f32.mrb[0].mxu0
        %770 = vmatprep.mubr.f32.mxu0 0.0
        %771 = vmatmul.mubr.f32.gmra.mrb[0].mxu0 %v405
        %v772 = vpop.f32.mrb[0].mxu0
        %v773 = vadd.f32 %v242, %v772
        %v774 = vpop.f32.mrb[0].mxu0
        %775 = vmatprep.mubr.f32.mxu0 0.0
        %776 = vmatmul.mubr.f32.gmra.mrb[0].mxu0 %v408
        %v777 = vpop.f32.mrb[0].mxu0
        %v778 = vadd.f32 %v242, %v777
        %v779 = vpop.f32.mrb[0].mxu0
        %780 = vmatprep.mubr.f32.mxu0 0.0
        %781 = vmatmul.mubr.f32.gmra.mrb[0].mxu0 %v411
        %v782 = vpop.f32.mrb[0].mxu0
        %v783 = vadd.f32 %v242, %v782
        %v784 = vpop.f32.mrb[0].mxu0
        %785 = vmatprep.mubr.f32.mxu0 0.0
        %786 = vmatmul.mubr.f32.gmra.mrb[0].mxu0 %v414
        %v787 = vpop.f32.mrb[0].mxu0
        %v788 = vadd.f32 %v242, %v787
        %v789 = vpop.f32.mrb[0].mxu0
        %790 = vmatprep.mubr.f32.mxu0 0.0
        %791 = vmatmul.mubr.f32.gmra.mrb[0].mxu0 %v417
        %v792 = vpop.f32.mrb[0].mxu0
        %v793 = vadd.f32 %v242, %v792
        %v794 = vpop.f32.mrb[0].mxu0
        %795 = vmatprep.mubr.f32.mxu0 0.0
        %796 = vmatmul.mubr.f32.gmra.mrb[0].mxu0 %v420
        %v797 = vpop.f32.mrb[0].mxu0
        %v798 = vadd.f32 %v242, %v797
        %v799 = vpop.f32.mrb[0].mxu0
        %800 = vmatprep.mubr.f32.mxu0 0.0
        %801 = vmatmul.mubr.f32.gmra.mrb[0].mxu0 %v423
        %v802 = vpop.f32.mrb[0].mxu0
        %v803 = vadd.f32 %v242, %v802
        %v804 = vpop.f32.mrb[0].mxu0
        %805 = vmatprep.mubr.f32.mxu0 0.0
        %806 = vmatmul.mubr.f32.gmra.mrb[0].mxu0 %v426
        %v807 = vpop.f32.mrb[0].mxu0
        %v808 = vadd.f32 %v242, %v807
        %v809 = vpop.f32.mrb[0].mxu0
        %810 = vmatprep.mubr.f32.mxu0 0.0
        %811 = vmatmul.mubr.f32.gmra.mrb[0].mxu0 %v429
        %v812 = vpop.f32.mrb[0].mxu0
        %v813 = vadd.f32 %v242, %v812
        %v814 = vpop.f32.mrb[0].mxu0
        %815 = vmatprep.mubr.f32.mxu0 0.0
        %816 = vmatmul.mubr.f32.gmra.mrb[0].mxu0 %v432
        %v817 = vpop.f32.mrb[0].mxu0
        %v818 = vadd.f32 %v242, %v817
        %v819 = vpop.f32.mrb[0].mxu0
        %820 = vmatprep.mubr.f32.mxu0 0.0
        %821 = vmatmul.mubr.f32.gmra.mrb[0].mxu0 %v435
        %v822 = vpop.f32.mrb[0].mxu0
        %v823 = vadd.f32 %v242, %v822
        %v824 = vpop.f32.mrb[0].mxu0
        %825 = vdwg.mxu0
        %v826 = vand.u32 2147483647, %v508
        %vm827 = vcmp.le.f32.partialorder %v826, 0.7853982
        %vm828 = vcmp.lt.s32.totalorder %v508, 0
        %v829 = vand.u32 %v508, 2139095040
        %v830 = vshrl.u32 %v829, 23
        %v831 = vsub.s32 %v830, 127
        %v832 = vand.u32 2147483647, %v508
        %v833 = vand.u32 %v832, 8388607
        %v834 = vor.u32 %v833, 8388608
        %v835 = vsub.s32 0, %v834
        %v836 = vadd.s32 %v831, 1
        %vm837 = vcmp.gt.s32.totalorder %v836, 0
        %v838 = vsel %vm837, %v836, 0
        %v839 = vshrl.u32 %v838, 5
        %v840 = vand.u32 %v838, 31
        %v841 = vsub.s32 32, %v840
        %v842 = vshrl.u32 683565275, %v841
        %v843 = vshll.u32 683565275, %v840
        %v844 = vshrl.u32 2475754826, %v841
        %v845 = vor.u32 %v843, %v844
        %v846 = vshll.u32 2475754826, %v840
        %v847 = vshrl.u32 2131351028, %v841
        %v848 = vor.u32 %v846, %v847
        %v849 = vshll.u32 2131351028, %v840
        %v850 = vshrl.u32 2102212464, %v841
        %v851 = vor.u32 %v849, %v850
        %v852 = vshll.u32 2102212464, %v840
        %v853 = vshrl.u32 920167782, %v841
        %v854 = vor.u32 %v852, %v853
        %v855 = vshll.u32 920167782, %v840
        %v856 = vshrl.u32 1326507024, %v841
        %v857 = vor.u32 %v855, %v856
        %vm858 = vcmp.lt.s32.totalorder %v839, 1
        %vm859 = vcmp.lt.s32.totalorder %v839, 2
        %vm860 = vcmp.lt.s32.totalorder %v839, 3
        %vm861 = vcmp.lt.s32.totalorder %v839, 4
        %v862 = vsel %vm858, %v842, %v845
        %v863 = vsel %vm861, %v851, 2102212464
        %v864 = vsel %vm860, %v848, %v863
        %v865 = vsel %vm859, %v862, %v864
        %v866 = vsel %vm858, %v845, %v848
        %v867 = vsel %vm861, %v854, 920167782
        %v868 = vsel %vm860, %v851, %v867
        %v869 = vsel %vm859, %v866, %v868
        %v870 = vsel %vm858, %v848, %v851
        %v871 = vsel %vm861, %v857, 1326507024
        %v872 = vsel %vm860, %v854, %v871
        %v873 = vsel %vm859, %v870, %v872
        %v874 = vshll.u32 %v834, 8
        %v875 = vmul.u32.u64.compose %v874, %v873
        %v876 = vextract.low.u32 %v875
        %v877 = vextract.high.u32 %v875
        %v878 = vmul.u32.u64.compose %v874, %v869
        %v879 = vextract.low.u32 %v878
        %v880 = vextract.high.u32 %v878
        %v881 = vmul.u32 %v874, %v865
        %v882 = vadd.s32 %v877, %v879
        %vm883 = vc.u32 %v877, %v879
        %v884 = vadd.s32 %v880, 1
        %v885 = vsel %vm883, %v884, %v880
        %v886 = vadd.s32 %v881, %v885
        %v887 = vadd.s32 %v886, 536870912
        %v888 = vshrl.u32 %v887, 30
        %v889 = vshll.u32 %v888, 30
        %v890 = vsub.s32 %v886, %v889
        %vm891 = vcmp.lt.s32.totalorder %v890, 0
        %v892 = vsub.s32 0, %v890
        %v893 = vsel %vm891, %v892, %v890
        %v894 = vclz %v893
        %v895 = vsub.s32 %v894, 2
        %vm896 = vcmp.gt.s32.totalorder 0, %v895
        %v897 = vsel %vm896, 0, %v895
        %v898 = vsub.s32 32, %v897
        %v899 = vshll.u32 %v890, %v897
        %v900 = vshrl.u32 %v882, %v898
        %v901 = vor.u32 %v899, %v900
        %v902 = vsub.s32 4294967266, %v897
        %v903 = vadd.s32 %v902, 127
        %v904 = vshll.u32 %v903, 23
        %v905 = vor.u32 4788187, %v904
        %v906 = vand.u32 2147483647, %v905
        %v908 = vcvt.s32.f32 %v901
        %v909 = vmul.f32 %v908, %v906
        %v910 = vxor.u32 %v909, 2147483648
        %v911 = vsel %vm828, %v910, %v909
        %v912 = vsub.s32 4, %v888
        %v913 = vsel %vm828, %v912, %v888
        %v914 = vsel %vm827, %v508, %v911
        %v915 = vsel %vm827, 0, %v913
        %v916 = vcosq.f32.pop %v914
        %v917 = vsinq.f32.pop %v914
        %vm918 = vweird.f32 %v508
        %v919 = vadd.s32 %v915, 3
        %v920 = vand.u32 %v919, 3
        %vm921 = vcmp.lt.s32.totalorder %v920, 2
        %vm922 = vcmp.eq.s32.totalorder %v920, 0
        %v923 = vxor.u32 %v917, 2147483648
        %v924 = vsel %vm922, %v916, %v923
        %vm925 = vcmp.eq.s32.totalorder %v920, 2
        %v926 = vxor.u32 %v916, 2147483648
        %v927 = vsel %vm925, %v926, %v917
        %v928 = vsel %vm921, %v924, %v927
        %v929 = vsel %vm918, nan, %v928
        %v930 = vand.u32 2147483647, %v513
        %vm931 = vcmp.le.f32.partialorder %v930, 0.7853982
        %vm932 = vcmp.lt.s32.totalorder %v513, 0
        %v933 = vand.u32 %v513, 2139095040
        %v934 = vshrl.u32 %v933, 23
        %v935 = vsub.s32 %v934, 127
        %v936 = vand.u32 2147483647, %v513
        %v937 = vand.u32 %v936, 8388607
        %v938 = vor.u32 %v937, 8388608
        %v939 = vsub.s32 0, %v938
        %v940 = vadd.s32 %v935, 1
        %vm941 = vcmp.gt.s32.totalorder %v940, 0
        %v942 = vsel %vm941, %v940, 0
        %v943 = vshrl.u32 %v942, 5
        %v944 = vand.u32 %v942, 31
        %v945 = vsub.s32 32, %v944
        %v946 = vshrl.u32 683565275, %v945
        %v947 = vshll.u32 683565275, %v944
        %v948 = vshrl.u32 2475754826, %v945
        %v949 = vor.u32 %v947, %v948
        %v950 = vshll.u32 2475754826, %v944
        %v951 = vshrl.u32 2131351028, %v945
        %v952 = vor.u32 %v950, %v951
        %v953 = vshll.u32 2131351028, %v944
        %v954 = vshrl.u32 2102212464, %v945
        %v955 = vor.u32 %v953, %v954
        %v956 = vshll.u32 2102212464, %v944
        %v957 = vshrl.u32 920167782, %v945
        %v958 = vor.u32 %v956, %v957
        %v959 = vshll.u32 920167782, %v944
        %v960 = vshrl.u32 1326507024, %v945
        %v961 = vor.u32 %v959, %v960
        %vm962 = vcmp.lt.s32.totalorder %v943, 1
        %vm963 = vcmp.lt.s32.totalorder %v943, 2
        %vm964 = vcmp.lt.s32.totalorder %v943, 3
        %vm965 = vcmp.lt.s32.totalorder %v943, 4
        %v966 = vsel %vm962, %v946, %v949
        %v967 = vsel %vm965, %v955, 2102212464
        %v968 = vsel %vm964, %v952, %v967
        %v969 = vsel %vm963, %v966, %v968
        %v970 = vsel %vm962, %v949, %v952
        %v971 = vsel %vm965, %v958, 920167782
        %v972 = vsel %vm964, %v955, %v971
        %v973 = vsel %vm963, %v970, %v972
        %v974 = vsel %vm962, %v952, %v955
        %v975 = vsel %vm965, %v961, 1326507024
        %v976 = vsel %vm964, %v958, %v975
        %v977 = vsel %vm963, %v974, %v976
        %v978 = vshll.u32 %v938, 8
        %v979 = vmul.u32.u64.compose %v978, %v977
        %v980 = vextract.low.u32 %v979
        %v981 = vextract.high.u32 %v979
        %v982 = vmul.u32.u64.compose %v978, %v973
        %v983 = vextract.low.u32 %v982
        %v984 = vextract.high.u32 %v982
        %v985 = vmul.u32 %v978, %v969
        %v986 = vadd.s32 %v981, %v983
        %vm987 = vc.u32 %v981, %v983
        %v988 = vadd.s32 %v984, 1
        %v989 = vsel %vm987, %v988, %v984
        %v990 = vadd.s32 %v985, %v989
        %v991 = vadd.s32 %v990, 536870912
        %v992 = vshrl.u32 %v991, 30
        %v993 = vshll.u32 %v992, 30
        %v994 = vsub.s32 %v990, %v993
        %vm995 = vcmp.lt.s32.totalorder %v994, 0
        %v996 = vsub.s32 0, %v994
        %v997 = vsel %vm995, %v996, %v994
        %v998 = vclz %v997
        %v999 = vsub.s32 %v998, 2
        %vm1000 = vcmp.gt.s32.totalorder 0, %v999
        %v1001 = vsel %vm1000, 0, %v999
        %v1002 = vsub.s32 32, %v1001
        %v1003 = vshll.u32 %v994, %v1001
        %v1004 = vshrl.u32 %v986, %v1002
        %v1005 = vor.u32 %v1003, %v1004
        %v1006 = vsub.s32 4294967266, %v1001
        %v1007 = vadd.s32 %v1006, 127
        %v1008 = vshll.u32 %v1007, 23
        %v1009 = vor.u32 4788187, %v1008
        %v1010 = vand.u32 2147483647, %v1009
        %v1012 = vcvt.s32.f32 %v1005
        %v1013 = vmul.f32 %v1012, %v1010
        %v1014 = vxor.u32 %v1013, 2147483648
        %v1015 = vsel %vm932, %v1014, %v1013
        %v1016 = vsub.s32 4, %v992
        %v1017 = vsel %vm932, %v1016, %v992
        %v1018 = vsel %vm931, %v513, %v1015
        %v1019 = vsel %vm931, 0, %v1017
        %v1020 = vcosq.f32.pop %v1018
        %v1021 = vsinq.f32.pop %v1018
        %vm1022 = vweird.f32 %v513
        %v1023 = vadd.s32 %v1019, 3
        %v1024 = vand.u32 %v1023, 3
        %vm1025 = vcmp.lt.s32.totalorder %v1024, 2
        %vm1026 = vcmp.eq.s32.totalorder %v1024, 0
        %v1027 = vxor.u32 %v1021, 2147483648
        %v1028 = vsel %vm1026, %v1020, %v1027
        %vm1029 = vcmp.eq.s32.totalorder %v1024, 2
        %v1030 = vxor.u32 %v1020, 2147483648
        %v1031 = vsel %vm1029, %v1030, %v1021
        %v1032 = vsel %vm1025, %v1028, %v1031
        %v1033 = vsel %vm1022, nan, %v1032
        %v1034 = vand.u32 2147483647, %v518
        %vm1035 = vcmp.le.f32.partialorder %v1034, 0.7853982
        %vm1036 = vcmp.lt.s32.totalorder %v518, 0
        %v1037 = vand.u32 %v518, 2139095040
        %v1038 = vshrl.u32 %v1037, 23
        %v1039 = vsub.s32 %v1038, 127
        %v1040 = vand.u32 2147483647, %v518
        %v1041 = vand.u32 %v1040, 8388607
        %v1042 = vor.u32 %v1041, 8388608
        %v1043 = vsub.s32 0, %v1042
        %v1044 = vadd.s32 %v1039, 1
        %vm1045 = vcmp.gt.s32.totalorder %v1044, 0
        %v1046 = vsel %vm1045, %v1044, 0
        %v1047 = vshrl.u32 %v1046, 5
        %v1048 = vand.u32 %v1046, 31
        %v1049 = vsub.s32 32, %v1048
        %v1050 = vshrl.u32 683565275, %v1049
        %v1051 = vshll.u32 683565275, %v1048
        %v1052 = vshrl.u32 2475754826, %v1049
        %v1053 = vor.u32 %v1051, %v1052
        %v1054 = vshll.u32 2475754826, %v1048
        %v1055 = vshrl.u32 2131351028, %v1049
        %v1056 = vor.u32 %v1054, %v1055
        %v1057 = vshll.u32 2131351028, %v1048
        %v1058 = vshrl.u32 2102212464, %v1049
        %v1059 = vor.u32 %v1057, %v1058
        %v1060 = vshll.u32 2102212464, %v1048
        %v1061 = vshrl.u32 920167782, %v1049
        %v1062 = vor.u32 %v1060, %v1061
        %v1063 = vshll.u32 920167782, %v1048
        %v1064 = vshrl.u32 1326507024, %v1049
        %v1065 = vor.u32 %v1063, %v1064
        %vm1066 = vcmp.lt.s32.totalorder %v1047, 1
        %vm1067 = vcmp.lt.s32.totalorder %v1047, 2
        %vm1068 = vcmp.lt.s32.totalorder %v1047, 3
        %vm1069 = vcmp.lt.s32.totalorder %v1047, 4
        %v1070 = vsel %vm1066, %v1050, %v1053
        %v1071 = vsel %vm1069, %v1059, 2102212464
        %v1072 = vsel %vm1068, %v1056, %v1071
        %v1073 = vsel %vm1067, %v1070, %v1072
        %v1074 = vsel %vm1066, %v1053, %v1056
        %v1075 = vsel %vm1069, %v1062, 920167782
        %v1076 = vsel %vm1068, %v1059, %v1075
        %v1077 = vsel %vm1067, %v1074, %v1076
        %v1078 = vsel %vm1066, %v1056, %v1059
        %v1079 = vsel %vm1069, %v1065, 1326507024
        %v1080 = vsel %vm1068, %v1062, %v1079
        %v1081 = vsel %vm1067, %v1078, %v1080
        %v1082 = vshll.u32 %v1042, 8
        %v1083 = vmul.u32.u64.compose %v1082, %v1081
        %v1084 = vextract.low.u32 %v1083
        %v1085 = vextract.high.u32 %v1083
        %v1086 = vmul.u32.u64.compose %v1082, %v1077
        %v1087 = vextract.low.u32 %v1086
        %v1088 = vextract.high.u32 %v1086
        %v1089 = vmul.u32 %v1082, %v1073
        %v1090 = vadd.s32 %v1085, %v1087
        %vm1091 = vc.u32 %v1085, %v1087
        %v1092 = vadd.s32 %v1088, 1
        %v1093 = vsel %vm1091, %v1092, %v1088
        %v1094 = vadd.s32 %v1089, %v1093
        %v1095 = vadd.s32 %v1094, 536870912
        %v1096 = vshrl.u32 %v1095, 30
        %v1097 = vshll.u32 %v1096, 30
        %v1098 = vsub.s32 %v1094, %v1097
        %vm1099 = vcmp.lt.s32.totalorder %v1098, 0
        %v1100 = vsub.s32 0, %v1098
        %v1101 = vsel %vm1099, %v1100, %v1098
        %v1102 = vclz %v1101
        %v1103 = vsub.s32 %v1102, 2
        %vm1104 = vcmp.gt.s32.totalorder 0, %v1103
        %v1105 = vsel %vm1104, 0, %v1103
        %v1106 = vsub.s32 32, %v1105
        %v1107 = vshll.u32 %v1098, %v1105
        %v1108 = vshrl.u32 %v1090, %v1106
        %v1109 = vor.u32 %v1107, %v1108
        %v1110 = vsub.s32 4294967266, %v1105
        %v1111 = vadd.s32 %v1110, 127
        %v1112 = vshll.u32 %v1111, 23
        %v1113 = vor.u32 4788187, %v1112
        %v1114 = vand.u32 2147483647, %v1113
        %v1116 = vcvt.s32.f32 %v1109
        %v1117 = vmul.f32 %v1116, %v1114
        %v1118 = vxor.u32 %v1117, 2147483648
        %v1119 = vsel %vm1036, %v1118, %v1117
        %v1120 = vsub.s32 4, %v1096
        %v1121 = vsel %vm1036, %v1120, %v1096
        %v1122 = vsel %vm1035, %v518, %v1119
        %v1123 = vsel %vm1035, 0, %v1121
        %v1124 = vcosq.f32.pop %v1122
        %v1125 = vsinq.f32.pop %v1122
        %vm1126 = vweird.f32 %v518
        %v1127 = vadd.s32 %v1123, 3
        %v1128 = vand.u32 %v1127, 3
        %vm1129 = vcmp.lt.s32.totalorder %v1128, 2
        %vm1130 = vcmp.eq.s32.totalorder %v1128, 0
        %v1131 = vxor.u32 %v1125, 2147483648
        %v1132 = vsel %vm1130, %v1124, %v1131
        %vm1133 = vcmp.eq.s32.totalorder %v1128, 2
        %v1134 = vxor.u32 %v1124, 2147483648
        %v1135 = vsel %vm1133, %v1134, %v1125
        %v1136 = vsel %vm1129, %v1132, %v1135
        %v1137 = vsel %vm1126, nan, %v1136
        %v1138 = vand.u32 2147483647, %v523
        %vm1139 = vcmp.le.f32.partialorder %v1138, 0.7853982
        %vm1140 = vcmp.lt.s32.totalorder %v523, 0
        %v1141 = vand.u32 %v523, 2139095040
        %v1142 = vshrl.u32 %v1141, 23
        %v1143 = vsub.s32 %v1142, 127
        %v1144 = vand.u32 2147483647, %v523
        %v1145 = vand.u32 %v1144, 8388607
        %v1146 = vor.u32 %v1145, 8388608
        %v1147 = vsub.s32 0, %v1146
        %v1148 = vadd.s32 %v1143, 1
        %vm1149 = vcmp.gt.s32.totalorder %v1148, 0
        %v1150 = vsel %vm1149, %v1148, 0
        %v1151 = vshrl.u32 %v1150, 5
        %v1152 = vand.u32 %v1150, 31
        %v1153 = vsub.s32 32, %v1152
        %v1154 = vshrl.u32 683565275, %v1153
        %v1155 = vshll.u32 683565275, %v1152
        %v1156 = vshrl.u32 2475754826, %v1153
        %v1157 = vor.u32 %v1155, %v1156
        %v1158 = vshll.u32 2475754826, %v1152
        %v1159 = vshrl.u32 2131351028, %v1153
        %v1160 = vor.u32 %v1158, %v1159
        %v1161 = vshll.u32 2131351028, %v1152
        %v1162 = vshrl.u32 2102212464, %v1153
        %v1163 = vor.u32 %v1161, %v1162
        %v1164 = vshll.u32 2102212464, %v1152
        %v1165 = vshrl.u32 920167782, %v1153
        %v1166 = vor.u32 %v1164, %v1165
        %v1167 = vshll.u32 920167782, %v1152
        %v1168 = vshrl.u32 1326507024, %v1153
        %v1169 = vor.u32 %v1167, %v1168
        %vm1170 = vcmp.lt.s32.totalorder %v1151, 1
        %vm1171 = vcmp.lt.s32.totalorder %v1151, 2
        %vm1172 = vcmp.lt.s32.totalorder %v1151, 3
        %vm1173 = vcmp.lt.s32.totalorder %v1151, 4
        %v1174 = vsel %vm1170, %v1154, %v1157
        %v1175 = vsel %vm1173, %v1163, 2102212464
        %v1176 = vsel %vm1172, %v1160, %v1175
        %v1177 = vsel %vm1171, %v1174, %v1176
        %v1178 = vsel %vm1170, %v1157, %v1160
        %v1179 = vsel %vm1173, %v1166, 920167782
        %v1180 = vsel %vm1172, %v1163, %v1179
        %v1181 = vsel %vm1171, %v1178, %v1180
        %v1182 = vsel %vm1170, %v1160, %v1163
        %v1183 = vsel %vm1173, %v1169, 1326507024
        %v1184 = vsel %vm1172, %v1166, %v1183
        %v1185 = vsel %vm1171, %v1182, %v1184
        %v1186 = vshll.u32 %v1146, 8
        %v1187 = vmul.u32.u64.compose %v1186, %v1185
        %v1188 = vextract.low.u32 %v1187
        %v1189 = vextract.high.u32 %v1187
        %v1190 = vmul.u32.u64.compose %v1186, %v1181
        %v1191 = vextract.low.u32 %v1190
        %v1192 = vextract.high.u32 %v1190
        %v1193 = vmul.u32 %v1186, %v1177
        %v1194 = vadd.s32 %v1189, %v1191
        %vm1195 = vc.u32 %v1189, %v1191
        %v1196 = vadd.s32 %v1192, 1
        %v1197 = vsel %vm1195, %v1196, %v1192
        %v1198 = vadd.s32 %v1193, %v1197
        %v1199 = vadd.s32 %v1198, 536870912
        %v1200 = vshrl.u32 %v1199, 30
        %v1201 = vshll.u32 %v1200, 30
        %v1202 = vsub.s32 %v1198, %v1201
        %vm1203 = vcmp.lt.s32.totalorder %v1202, 0
        %v1204 = vsub.s32 0, %v1202
        %v1205 = vsel %vm1203, %v1204, %v1202
        %v1206 = vclz %v1205
        %v1207 = vsub.s32 %v1206, 2
        %vm1208 = vcmp.gt.s32.totalorder 0, %v1207
        %v1209 = vsel %vm1208, 0, %v1207
        %v1210 = vsub.s32 32, %v1209
        %v1211 = vshll.u32 %v1202, %v1209
        %v1212 = vshrl.u32 %v1194, %v1210
        %v1213 = vor.u32 %v1211, %v1212
        %v1214 = vsub.s32 4294967266, %v1209
        %v1215 = vadd.s32 %v1214, 127
        %v1216 = vshll.u32 %v1215, 23
        %v1217 = vor.u32 4788187, %v1216
        %v1218 = vand.u32 2147483647, %v1217
        %v1220 = vcvt.s32.f32 %v1213
        %v1221 = vmul.f32 %v1220, %v1218
        %v1222 = vxor.u32 %v1221, 2147483648
        %v1223 = vsel %vm1140, %v1222, %v1221
        %v1224 = vsub.s32 4, %v1200
        %v1225 = vsel %vm1140, %v1224, %v1200
        %v1226 = vsel %vm1139, %v523, %v1223
        %v1227 = vsel %vm1139, 0, %v1225
        %v1228 = vcosq.f32.pop %v1226
        %v1229 = vsinq.f32.pop %v1226
        %vm1230 = vweird.f32 %v523
        %v1231 = vadd.s32 %v1227, 3
        %v1232 = vand.u32 %v1231, 3
        %vm1233 = vcmp.lt.s32.totalorder %v1232, 2
        %vm1234 = vcmp.eq.s32.totalorder %v1232, 0
        %v1235 = vxor.u32 %v1229, 2147483648
        %v1236 = vsel %vm1234, %v1228, %v1235
        %vm1237 = vcmp.eq.s32.totalorder %v1232, 2
        %v1238 = vxor.u32 %v1228, 2147483648
        %v1239 = vsel %vm1237, %v1238, %v1229
        %v1240 = vsel %vm1233, %v1236, %v1239
        %v1241 = vsel %vm1230, nan, %v1240
        %v1242 = vand.u32 2147483647, %v528
        %vm1243 = vcmp.le.f32.partialorder %v1242, 0.7853982
        %vm1244 = vcmp.lt.s32.totalorder %v528, 0
        %v1245 = vand.u32 %v528, 2139095040
        %v1246 = vshrl.u32 %v1245, 23
        %v1247 = vsub.s32 %v1246, 127
        %v1248 = vand.u32 2147483647, %v528
        %v1249 = vand.u32 %v1248, 8388607
        %v1250 = vor.u32 %v1249, 8388608
        %v1251 = vsub.s32 0, %v1250
        %v1252 = vadd.s32 %v1247, 1
        %vm1253 = vcmp.gt.s32.totalorder %v1252, 0
        %v1254 = vsel %vm1253, %v1252, 0
        %v1255 = vshrl.u32 %v1254, 5
        %v1256 = vand.u32 %v1254, 31
        %v1257 = vsub.s32 32, %v1256
        %v1258 = vshrl.u32 683565275, %v1257
        %v1259 = vshll.u32 683565275, %v1256
        %v1260 = vshrl.u32 2475754826, %v1257
        %v1261 = vor.u32 %v1259, %v1260
        %v1262 = vshll.u32 2475754826, %v1256
        %v1263 = vshrl.u32 2131351028, %v1257
        %v1264 = vor.u32 %v1262, %v1263
        %v1265 = vshll.u32 2131351028, %v1256
        %v1266 = vshrl.u32 2102212464, %v1257
        %v1267 = vor.u32 %v1265, %v1266
        %v1268 = vshll.u32 2102212464, %v1256
        %v1269 = vshrl.u32 920167782, %v1257
        %v1270 = vor.u32 %v1268, %v1269
        %v1271 = vshll.u32 920167782, %v1256
        %v1272 = vshrl.u32 1326507024, %v1257
        %v1273 = vor.u32 %v1271, %v1272
        %vm1274 = vcmp.lt.s32.totalorder %v1255, 1
        %vm1275 = vcmp.lt.s32.totalorder %v1255, 2
        %vm1276 = vcmp.lt.s32.totalorder %v1255, 3
        %vm1277 = vcmp.lt.s32.totalorder %v1255, 4
        %v1278 = vsel %vm1274, %v1258, %v1261
        %v1279 = vsel %vm1277, %v1267, 2102212464
        %v1280 = vsel %vm1276, %v1264, %v1279
        %v1281 = vsel %vm1275, %v1278, %v1280
        %v1282 = vsel %vm1274, %v1261, %v1264
        %v1283 = vsel %vm1277, %v1270, 920167782
        %v1284 = vsel %vm1276, %v1267, %v1283
        %v1285 = vsel %vm1275, %v1282, %v1284
        %v1286 = vsel %vm1274, %v1264, %v1267
        %v1287 = vsel %vm1277, %v1273, 1326507024
        %v1288 = vsel %vm1276, %v1270, %v1287
        %v1289 = vsel %vm1275, %v1286, %v1288
        %v1290 = vshll.u32 %v1250, 8
        %v1291 = vmul.u32.u64.compose %v1290, %v1289
        %v1292 = vextract.low.u32 %v1291
        %v1293 = vextract.high.u32 %v1291
        %v1294 = vmul.u32.u64.compose %v1290, %v1285
        %v1295 = vextract.low.u32 %v1294
        %v1296 = vextract.high.u32 %v1294
        %v1297 = vmul.u32 %v1290, %v1281
        %v1298 = vadd.s32 %v1293, %v1295
        %vm1299 = vc.u32 %v1293, %v1295
        %v1300 = vadd.s32 %v1296, 1
        %v1301 = vsel %vm1299, %v1300, %v1296
        %v1302 = vadd.s32 %v1297, %v1301
        %v1303 = vadd.s32 %v1302, 536870912
        %v1304 = vshrl.u32 %v1303, 30
        %v1305 = vshll.u32 %v1304, 30
        %v1306 = vsub.s32 %v1302, %v1305
        %vm1307 = vcmp.lt.s32.totalorder %v1306, 0
        %v1308 = vsub.s32 0, %v1306
        %v1309 = vsel %vm1307, %v1308, %v1306
        %v1310 = vclz %v1309
        %v1311 = vsub.s32 %v1310, 2
        %vm1312 = vcmp.gt.s32.totalorder 0, %v1311
        %v1313 = vsel %vm1312, 0, %v1311
        %v1314 = vsub.s32 32, %v1313
        %v1315 = vshll.u32 %v1306, %v1313
        %v1316 = vshrl.u32 %v1298, %v1314
        %v1317 = vor.u32 %v1315, %v1316
        %v1318 = vsub.s32 4294967266, %v1313
        %v1319 = vadd.s32 %v1318, 127
        %v1320 = vshll.u32 %v1319, 23
        %v1321 = vor.u32 4788187, %v1320
        %v1322 = vand.u32 2147483647, %v1321
        %v1324 = vcvt.s32.f32 %v1317
        %v1325 = vmul.f32 %v1324, %v1322
        %v1326 = vxor.u32 %v1325, 2147483648
        %v1327 = vsel %vm1244, %v1326, %v1325
        %v1328 = vsub.s32 4, %v1304
        %v1329 = vsel %vm1244, %v1328, %v1304
        %v1330 = vsel %vm1243, %v528, %v1327
        %v1331 = vsel %vm1243, 0, %v1329
        %v1332 = vcosq.f32.pop %v1330
        %v1333 = vsinq.f32.pop %v1330
        %vm1334 = vweird.f32 %v528
        %v1335 = vadd.s32 %v1331, 3
        %v1336 = vand.u32 %v1335, 3
        %vm1337 = vcmp.lt.s32.totalorder %v1336, 2
        %vm1338 = vcmp.eq.s32.totalorder %v1336, 0
        %v1339 = vxor.u32 %v1333, 2147483648
        %v1340 = vsel %vm1338, %v1332, %v1339
        %vm1341 = vcmp.eq.s32.totalorder %v1336, 2
        %v1342 = vxor.u32 %v1332, 2147483648
        %v1343 = vsel %vm1341, %v1342, %v1333
        %v1344 = vsel %vm1337, %v1340, %v1343
        %v1345 = vsel %vm1334, nan, %v1344
        %v1346 = vand.u32 2147483647, %v533
        %vm1347 = vcmp.le.f32.partialorder %v1346, 0.7853982
        %vm1348 = vcmp.lt.s32.totalorder %v533, 0
        %v1349 = vand.u32 %v533, 2139095040
        %v1350 = vshrl.u32 %v1349, 23
        %v1351 = vsub.s32 %v1350, 127
        %v1352 = vand.u32 2147483647, %v533
        %v1353 = vand.u32 %v1352, 8388607
        %v1354 = vor.u32 %v1353, 8388608
        %v1355 = vsub.s32 0, %v1354
        %v1356 = vadd.s32 %v1351, 1
        %vm1357 = vcmp.gt.s32.totalorder %v1356, 0
        %v1358 = vsel %vm1357, %v1356, 0
        %v1359 = vshrl.u32 %v1358, 5
        %v1360 = vand.u32 %v1358, 31
        %v1361 = vsub.s32 32, %v1360
        %v1362 = vshrl.u32 683565275, %v1361
        %v1363 = vshll.u32 683565275, %v1360
        %v1364 = vshrl.u32 2475754826, %v1361
        %v1365 = vor.u32 %v1363, %v1364
        %v1366 = vshll.u32 2475754826, %v1360
        %v1367 = vshrl.u32 2131351028, %v1361
        %v1368 = vor.u32 %v1366, %v1367
        %v1369 = vshll.u32 2131351028, %v1360
        %v1370 = vshrl.u32 2102212464, %v1361
        %v1371 = vor.u32 %v1369, %v1370
        %v1372 = vshll.u32 2102212464, %v1360
        %v1373 = vshrl.u32 920167782, %v1361
        %v1374 = vor.u32 %v1372, %v1373
        %v1375 = vshll.u32 920167782, %v1360
        %v1376 = vshrl.u32 1326507024, %v1361
        %v1377 = vor.u32 %v1375, %v1376
        %vm1378 = vcmp.lt.s32.totalorder %v1359, 1
        %vm1379 = vcmp.lt.s32.totalorder %v1359, 2
        %vm1380 = vcmp.lt.s32.totalorder %v1359, 3
        %vm1381 = vcmp.lt.s32.totalorder %v1359, 4
        %v1382 = vsel %vm1378, %v1362, %v1365
        %v1383 = vsel %vm1381, %v1371, 2102212464
        %v1384 = vsel %vm1380, %v1368, %v1383
        %v1385 = vsel %vm1379, %v1382, %v1384
        %v1386 = vsel %vm1378, %v1365, %v1368
        %v1387 = vsel %vm1381, %v1374, 920167782
        %v1388 = vsel %vm1380, %v1371, %v1387
        %v1389 = vsel %vm1379, %v1386, %v1388
        %v1390 = vsel %vm1378, %v1368, %v1371
        %v1391 = vsel %vm1381, %v1377, 1326507024
        %v1392 = vsel %vm1380, %v1374, %v1391
        %v1393 = vsel %vm1379, %v1390, %v1392
        %v1394 = vshll.u32 %v1354, 8
        %v1395 = vmul.u32.u64.compose %v1394, %v1393
        %v1396 = vextract.low.u32 %v1395
        %v1397 = vextract.high.u32 %v1395
        %v1398 = vmul.u32.u64.compose %v1394, %v1389
        %v1399 = vextract.low.u32 %v1398
        %v1400 = vextract.high.u32 %v1398
        %v1401 = vmul.u32 %v1394, %v1385
        %v1402 = vadd.s32 %v1397, %v1399
        %vm1403 = vc.u32 %v1397, %v1399
        %v1404 = vadd.s32 %v1400, 1
        %v1405 = vsel %vm1403, %v1404, %v1400
        %v1406 = vadd.s32 %v1401, %v1405
        %v1407 = vadd.s32 %v1406, 536870912
        %v1408 = vshrl.u32 %v1407, 30
        %v1409 = vshll.u32 %v1408, 30
        %v1410 = vsub.s32 %v1406, %v1409
        %vm1411 = vcmp.lt.s32.totalorder %v1410, 0
        %v1412 = vsub.s32 0, %v1410
        %v1413 = vsel %vm1411, %v1412, %v1410
        %v1414 = vclz %v1413
        %v1415 = vsub.s32 %v1414, 2
        %vm1416 = vcmp.gt.s32.totalorder 0, %v1415
        %v1417 = vsel %vm1416, 0, %v1415
        %v1418 = vsub.s32 32, %v1417
        %v1419 = vshll.u32 %v1410, %v1417
        %v1420 = vshrl.u32 %v1402, %v1418
        %v1421 = vor.u32 %v1419, %v1420
        %v1422 = vsub.s32 4294967266, %v1417
        %v1423 = vadd.s32 %v1422, 127
        %v1424 = vshll.u32 %v1423, 23
        %v1425 = vor.u32 4788187, %v1424
        %v1426 = vand.u32 2147483647, %v1425
        %v1428 = vcvt.s32.f32 %v1421
        %v1429 = vmul.f32 %v1428, %v1426
        %v1430 = vxor.u32 %v1429, 2147483648
        %v1431 = vsel %vm1348, %v1430, %v1429
        %v1432 = vsub.s32 4, %v1408
        %v1433 = vsel %vm1348, %v1432, %v1408
        %v1434 = vsel %vm1347, %v533, %v1431
        %v1435 = vsel %vm1347, 0, %v1433
        %v1436 = vcosq.f32.pop %v1434
        %v1437 = vsinq.f32.pop %v1434
        %vm1438 = vweird.f32 %v533
        %v1439 = vadd.s32 %v1435, 3
        %v1440 = vand.u32 %v1439, 3
        %vm1441 = vcmp.lt.s32.totalorder %v1440, 2
        %vm1442 = vcmp.eq.s32.totalorder %v1440, 0
        %v1443 = vxor.u32 %v1437, 2147483648
        %v1444 = vsel %vm1442, %v1436, %v1443
        %vm1445 = vcmp.eq.s32.totalorder %v1440, 2
        %v1446 = vxor.u32 %v1436, 2147483648
        %v1447 = vsel %vm1445, %v1446, %v1437
        %v1448 = vsel %vm1441, %v1444, %v1447
        %v1449 = vsel %vm1438, nan, %v1448
        %v1450 = vand.u32 2147483647, %v538
        %vm1451 = vcmp.le.f32.partialorder %v1450, 0.7853982
        %vm1452 = vcmp.lt.s32.totalorder %v538, 0
        %v1453 = vand.u32 %v538, 2139095040
        %v1454 = vshrl.u32 %v1453, 23
        %v1455 = vsub.s32 %v1454, 127
        %v1456 = vand.u32 2147483647, %v538
        %v1457 = vand.u32 %v1456, 8388607
        %v1458 = vor.u32 %v1457, 8388608
        %v1459 = vsub.s32 0, %v1458
        %v1460 = vadd.s32 %v1455, 1
        %vm1461 = vcmp.gt.s32.totalorder %v1460, 0
        %v1462 = vsel %vm1461, %v1460, 0
        %v1463 = vshrl.u32 %v1462, 5
        %v1464 = vand.u32 %v1462, 31
        %v1465 = vsub.s32 32, %v1464
        %v1466 = vshrl.u32 683565275, %v1465
        %v1467 = vshll.u32 683565275, %v1464
        %v1468 = vshrl.u32 2475754826, %v1465
        %v1469 = vor.u32 %v1467, %v1468
        %v1470 = vshll.u32 2475754826, %v1464
        %v1471 = vshrl.u32 2131351028, %v1465
        %v1472 = vor.u32 %v1470, %v1471
        %v1473 = vshll.u32 2131351028, %v1464
        %v1474 = vshrl.u32 2102212464, %v1465
        %v1475 = vor.u32 %v1473, %v1474
        %v1476 = vshll.u32 2102212464, %v1464
        %v1477 = vshrl.u32 920167782, %v1465
        %v1478 = vor.u32 %v1476, %v1477
        %v1479 = vshll.u32 920167782, %v1464
        %v1480 = vshrl.u32 1326507024, %v1465
        %v1481 = vor.u32 %v1479, %v1480
        %vm1482 = vcmp.lt.s32.totalorder %v1463, 1
        %vm1483 = vcmp.lt.s32.totalorder %v1463, 2
        %vm1484 = vcmp.lt.s32.totalorder %v1463, 3
        %vm1485 = vcmp.lt.s32.totalorder %v1463, 4
        %v1486 = vsel %vm1482, %v1466, %v1469
        %v1487 = vsel %vm1485, %v1475, 2102212464
        %v1488 = vsel %vm1484, %v1472, %v1487
        %v1489 = vsel %vm1483, %v1486, %v1488
        %v1490 = vsel %vm1482, %v1469, %v1472
        %v1491 = vsel %vm1485, %v1478, 920167782
        %v1492 = vsel %vm1484, %v1475, %v1491
        %v1493 = vsel %vm1483, %v1490, %v1492
        %v1494 = vsel %vm1482, %v1472, %v1475
        %v1495 = vsel %vm1485, %v1481, 1326507024
        %v1496 = vsel %vm1484, %v1478, %v1495
        %v1497 = vsel %vm1483, %v1494, %v1496
        %v1498 = vshll.u32 %v1458, 8
        %v1499 = vmul.u32.u64.compose %v1498, %v1497
        %v1500 = vextract.low.u32 %v1499
        %v1501 = vextract.high.u32 %v1499
        %v1502 = vmul.u32.u64.compose %v1498, %v1493
        %v1503 = vextract.low.u32 %v1502
        %v1504 = vextract.high.u32 %v1502
        %v1505 = vmul.u32 %v1498, %v1489
        %v1506 = vadd.s32 %v1501, %v1503
        %vm1507 = vc.u32 %v1501, %v1503
        %v1508 = vadd.s32 %v1504, 1
        %v1509 = vsel %vm1507, %v1508, %v1504
        %v1510 = vadd.s32 %v1505, %v1509
        %v1511 = vadd.s32 %v1510, 536870912
        %v1512 = vshrl.u32 %v1511, 30
        %v1513 = vshll.u32 %v1512, 30
        %v1514 = vsub.s32 %v1510, %v1513
        %vm1515 = vcmp.lt.s32.totalorder %v1514, 0
        %v1516 = vsub.s32 0, %v1514
        %v1517 = vsel %vm1515, %v1516, %v1514
        %v1518 = vclz %v1517
        %v1519 = vsub.s32 %v1518, 2
        %vm1520 = vcmp.gt.s32.totalorder 0, %v1519
        %v1521 = vsel %vm1520, 0, %v1519
        %v1522 = vsub.s32 32, %v1521
        %v1523 = vshll.u32 %v1514, %v1521
        %v1524 = vshrl.u32 %v1506, %v1522
        %v1525 = vor.u32 %v1523, %v1524
        %v1526 = vsub.s32 4294967266, %v1521
        %v1527 = vadd.s32 %v1526, 127
        %v1528 = vshll.u32 %v1527, 23
        %v1529 = vor.u32 4788187, %v1528
        %v1530 = vand.u32 2147483647, %v1529
        %v1532 = vcvt.s32.f32 %v1525
        %v1533 = vmul.f32 %v1532, %v1530
        %v1534 = vxor.u32 %v1533, 2147483648
        %v1535 = vsel %vm1452, %v1534, %v1533
        %v1536 = vsub.s32 4, %v1512
        %v1537 = vsel %vm1452, %v1536, %v1512
        %v1538 = vsel %vm1451, %v538, %v1535
        %v1539 = vsel %vm1451, 0, %v1537
        %v1540 = vcosq.f32.pop %v1538
        %v1541 = vsinq.f32.pop %v1538
        %vm1542 = vweird.f32 %v538
        %v1543 = vadd.s32 %v1539, 3
        %v1544 = vand.u32 %v1543, 3
        %vm1545 = vcmp.lt.s32.totalorder %v1544, 2
        %vm1546 = vcmp.eq.s32.totalorder %v1544, 0
        %v1547 = vxor.u32 %v1541, 2147483648
        %v1548 = vsel %vm1546, %v1540, %v1547
        %vm1549 = vcmp.eq.s32.totalorder %v1544, 2
        %v1550 = vxor.u32 %v1540, 2147483648
        %v1551 = vsel %vm1549, %v1550, %v1541
        %v1552 = vsel %vm1545, %v1548, %v1551
        %v1553 = vsel %vm1542, nan, %v1552
        %v1554 = vand.u32 2147483647, %v543
        %vm1555 = vcmp.le.f32.partialorder %v1554, 0.7853982
        %vm1556 = vcmp.lt.s32.totalorder %v543, 0
        %v1557 = vand.u32 %v543, 2139095040
        %v1558 = vshrl.u32 %v1557, 23
        %v1559 = vsub.s32 %v1558, 127
        %v1560 = vand.u32 2147483647, %v543
        %v1561 = vand.u32 %v1560, 8388607
        %v1562 = vor.u32 %v1561, 8388608
        %v1563 = vsub.s32 0, %v1562
        %v1564 = vadd.s32 %v1559, 1
        %vm1565 = vcmp.gt.s32.totalorder %v1564, 0
        %v1566 = vsel %vm1565, %v1564, 0
        %v1567 = vshrl.u32 %v1566, 5
        %v1568 = vand.u32 %v1566, 31
        %v1569 = vsub.s32 32, %v1568
        %v1570 = vshrl.u32 683565275, %v1569
        %v1571 = vshll.u32 683565275, %v1568
        %v1572 = vshrl.u32 2475754826, %v1569
        %v1573 = vor.u32 %v1571, %v1572
        %v1574 = vshll.u32 2475754826, %v1568
        %v1575 = vshrl.u32 2131351028, %v1569
        %v1576 = vor.u32 %v1574, %v1575
        %v1577 = vshll.u32 2131351028, %v1568
        %v1578 = vshrl.u32 2102212464, %v1569
        %v1579 = vor.u32 %v1577, %v1578
        %v1580 = vshll.u32 2102212464, %v1568
        %v1581 = vshrl.u32 920167782, %v1569
        %v1582 = vor.u32 %v1580, %v1581
        %v1583 = vshll.u32 920167782, %v1568
        %v1584 = vshrl.u32 1326507024, %v1569
        %v1585 = vor.u32 %v1583, %v1584
        %vm1586 = vcmp.lt.s32.totalorder %v1567, 1
        %vm1587 = vcmp.lt.s32.totalorder %v1567, 2
        %vm1588 = vcmp.lt.s32.totalorder %v1567, 3
        %vm1589 = vcmp.lt.s32.totalorder %v1567, 4
        %v1590 = vsel %vm1586, %v1570, %v1573
        %v1591 = vsel %vm1589, %v1579, 2102212464
        %v1592 = vsel %vm1588, %v1576, %v1591
        %v1593 = vsel %vm1587, %v1590, %v1592
        %v1594 = vsel %vm1586, %v1573, %v1576
        %v1595 = vsel %vm1589, %v1582, 920167782
        %v1596 = vsel %vm1588, %v1579, %v1595
        %v1597 = vsel %vm1587, %v1594, %v1596
        %v1598 = vsel %vm1586, %v1576, %v1579
        %v1599 = vsel %vm1589, %v1585, 1326507024
        %v1600 = vsel %vm1588, %v1582, %v1599
        %v1601 = vsel %vm1587, %v1598, %v1600
        %v1602 = vshll.u32 %v1562, 8
        %v1603 = vmul.u32.u64.compose %v1602, %v1601
        %v1604 = vextract.low.u32 %v1603
        %v1605 = vextract.high.u32 %v1603
        %v1606 = vmul.u32.u64.compose %v1602, %v1597
        %v1607 = vextract.low.u32 %v1606
        %v1608 = vextract.high.u32 %v1606
        %v1609 = vmul.u32 %v1602, %v1593
        %v1610 = vadd.s32 %v1605, %v1607
        %vm1611 = vc.u32 %v1605, %v1607
        %v1612 = vadd.s32 %v1608, 1
        %v1613 = vsel %vm1611, %v1612, %v1608
        %v1614 = vadd.s32 %v1609, %v1613
        %v1615 = vadd.s32 %v1614, 536870912
        %v1616 = vshrl.u32 %v1615, 30
        %v1617 = vshll.u32 %v1616, 30
        %v1618 = vsub.s32 %v1614, %v1617
        %vm1619 = vcmp.lt.s32.totalorder %v1618, 0
        %v1620 = vsub.s32 0, %v1618
        %v1621 = vsel %vm1619, %v1620, %v1618
        %v1622 = vclz %v1621
        %v1623 = vsub.s32 %v1622, 2
        %vm1624 = vcmp.gt.s32.totalorder 0, %v1623
        %v1625 = vsel %vm1624, 0, %v1623
        %v1626 = vsub.s32 32, %v1625
        %v1627 = vshll.u32 %v1618, %v1625
        %v1628 = vshrl.u32 %v1610, %v1626
        %v1629 = vor.u32 %v1627, %v1628
        %v1630 = vsub.s32 4294967266, %v1625
        %v1631 = vadd.s32 %v1630, 127
        %v1632 = vshll.u32 %v1631, 23
        %v1633 = vor.u32 4788187, %v1632
        %v1634 = vand.u32 2147483647, %v1633
        %v1636 = vcvt.s32.f32 %v1629
        %v1637 = vmul.f32 %v1636, %v1634
        %v1638 = vxor.u32 %v1637, 2147483648
        %v1639 = vsel %vm1556, %v1638, %v1637
        %v1640 = vsub.s32 4, %v1616
        %v1641 = vsel %vm1556, %v1640, %v1616
        %v1642 = vsel %vm1555, %v543, %v1639
        %v1643 = vsel %vm1555, 0, %v1641
        %v1644 = vcosq.f32.pop %v1642
        %v1645 = vsinq.f32.pop %v1642
        %vm1646 = vweird.f32 %v543
        %v1647 = vadd.s32 %v1643, 3
        %v1648 = vand.u32 %v1647, 3
        %vm1649 = vcmp.lt.s32.totalorder %v1648, 2
        %vm1650 = vcmp.eq.s32.totalorder %v1648, 0
        %v1651 = vxor.u32 %v1645, 2147483648
        %v1652 = vsel %vm1650, %v1644, %v1651
        %vm1653 = vcmp.eq.s32.totalorder %v1648, 2
        %v1654 = vxor.u32 %v1644, 2147483648
        %v1655 = vsel %vm1653, %v1654, %v1645
        %v1656 = vsel %vm1649, %v1652, %v1655
        %v1657 = vsel %vm1646, nan, %v1656
        %v1658 = vand.u32 2147483647, %v548
        %vm1659 = vcmp.le.f32.partialorder %v1658, 0.7853982
        %vm1660 = vcmp.lt.s32.totalorder %v548, 0
        %v1661 = vand.u32 %v548, 2139095040
        %v1662 = vshrl.u32 %v1661, 23
        %v1663 = vsub.s32 %v1662, 127
        %v1664 = vand.u32 2147483647, %v548
        %v1665 = vand.u32 %v1664, 8388607
        %v1666 = vor.u32 %v1665, 8388608
        %v1667 = vsub.s32 0, %v1666
        %v1668 = vadd.s32 %v1663, 1
        %vm1669 = vcmp.gt.s32.totalorder %v1668, 0
        %v1670 = vsel %vm1669, %v1668, 0
        %v1671 = vshrl.u32 %v1670, 5
        %v1672 = vand.u32 %v1670, 31
        %v1673 = vsub.s32 32, %v1672
        %v1674 = vshrl.u32 683565275, %v1673
        %v1675 = vshll.u32 683565275, %v1672
        %v1676 = vshrl.u32 2475754826, %v1673
        %v1677 = vor.u32 %v1675, %v1676
        %v1678 = vshll.u32 2475754826, %v1672
        %v1679 = vshrl.u32 2131351028, %v1673
        %v1680 = vor.u32 %v1678, %v1679
        %v1681 = vshll.u32 2131351028, %v1672
        %v1682 = vshrl.u32 2102212464, %v1673
        %v1683 = vor.u32 %v1681, %v1682
        %v1684 = vshll.u32 2102212464, %v1672
        %v1685 = vshrl.u32 920167782, %v1673
        %v1686 = vor.u32 %v1684, %v1685
        %v1687 = vshll.u32 920167782, %v1672
        %v1688 = vshrl.u32 1326507024, %v1673
        %v1689 = vor.u32 %v1687, %v1688
        %vm1690 = vcmp.lt.s32.totalorder %v1671, 1
        %vm1691 = vcmp.lt.s32.totalorder %v1671, 2
        %vm1692 = vcmp.lt.s32.totalorder %v1671, 3
        %vm1693 = vcmp.lt.s32.totalorder %v1671, 4
        %v1694 = vsel %vm1690, %v1674, %v1677
        %v1695 = vsel %vm1693, %v1683, 2102212464
        %v1696 = vsel %vm1692, %v1680, %v1695
        %v1697 = vsel %vm1691, %v1694, %v1696
        %v1698 = vsel %vm1690, %v1677, %v1680
        %v1699 = vsel %vm1693, %v1686, 920167782
        %v1700 = vsel %vm1692, %v1683, %v1699
        %v1701 = vsel %vm1691, %v1698, %v1700
        %v1702 = vsel %vm1690, %v1680, %v1683
        %v1703 = vsel %vm1693, %v1689, 1326507024
        %v1704 = vsel %vm1692, %v1686, %v1703
        %v1705 = vsel %vm1691, %v1702, %v1704
        %v1706 = vshll.u32 %v1666, 8
        %v1707 = vmul.u32.u64.compose %v1706, %v1705
        %v1708 = vextract.low.u32 %v1707
        %v1709 = vextract.high.u32 %v1707
        %v1710 = vmul.u32.u64.compose %v1706, %v1701
        %v1711 = vextract.low.u32 %v1710
        %v1712 = vextract.high.u32 %v1710
        %v1713 = vmul.u32 %v1706, %v1697
        %v1714 = vadd.s32 %v1709, %v1711
        %vm1715 = vc.u32 %v1709, %v1711
        %v1716 = vadd.s32 %v1712, 1
        %v1717 = vsel %vm1715, %v1716, %v1712
        %v1718 = vadd.s32 %v1713, %v1717
        %v1719 = vadd.s32 %v1718, 536870912
        %v1720 = vshrl.u32 %v1719, 30
        %v1721 = vshll.u32 %v1720, 30
        %v1722 = vsub.s32 %v1718, %v1721
        %vm1723 = vcmp.lt.s32.totalorder %v1722, 0
        %v1724 = vsub.s32 0, %v1722
        %v1725 = vsel %vm1723, %v1724, %v1722
        %v1726 = vclz %v1725
        %v1727 = vsub.s32 %v1726, 2
        %vm1728 = vcmp.gt.s32.totalorder 0, %v1727
        %v1729 = vsel %vm1728, 0, %v1727
        %v1730 = vsub.s32 32, %v1729
        %v1731 = vshll.u32 %v1722, %v1729
        %v1732 = vshrl.u32 %v1714, %v1730
        %v1733 = vor.u32 %v1731, %v1732
        %v1734 = vsub.s32 4294967266, %v1729
        %v1735 = vadd.s32 %v1734, 127
        %v1736 = vshll.u32 %v1735, 23
        %v1737 = vor.u32 4788187, %v1736
        %v1738 = vand.u32 2147483647, %v1737
        %v1740 = vcvt.s32.f32 %v1733
        %v1741 = vmul.f32 %v1740, %v1738
        %v1742 = vxor.u32 %v1741, 2147483648
        %v1743 = vsel %vm1660, %v1742, %v1741
        %v1744 = vsub.s32 4, %v1720
        %v1745 = vsel %vm1660, %v1744, %v1720
        %v1746 = vsel %vm1659, %v548, %v1743
        %v1747 = vsel %vm1659, 0, %v1745
        %v1748 = vcosq.f32.pop %v1746
        %v1749 = vsinq.f32.pop %v1746
        %vm1750 = vweird.f32 %v548
        %v1751 = vadd.s32 %v1747, 3
        %v1752 = vand.u32 %v1751, 3
        %vm1753 = vcmp.lt.s32.totalorder %v1752, 2
        %vm1754 = vcmp.eq.s32.totalorder %v1752, 0
        %v1755 = vxor.u32 %v1749, 2147483648
        %v1756 = vsel %vm1754, %v1748, %v1755
        %vm1757 = vcmp.eq.s32.totalorder %v1752, 2
        %v1758 = vxor.u32 %v1748, 2147483648
        %v1759 = vsel %vm1757, %v1758, %v1749
        %v1760 = vsel %vm1753, %v1756, %v1759
        %v1761 = vsel %vm1750, nan, %v1760
        %v1762 = vand.u32 2147483647, %v553
        %vm1763 = vcmp.le.f32.partialorder %v1762, 0.7853982
        %vm1764 = vcmp.lt.s32.totalorder %v553, 0
        %v1765 = vand.u32 %v553, 2139095040
        %v1766 = vshrl.u32 %v1765, 23
        %v1767 = vsub.s32 %v1766, 127
        %v1768 = vand.u32 2147483647, %v553
        %v1769 = vand.u32 %v1768, 8388607
        %v1770 = vor.u32 %v1769, 8388608
        %v1771 = vsub.s32 0, %v1770
        %v1772 = vadd.s32 %v1767, 1
        %vm1773 = vcmp.gt.s32.totalorder %v1772, 0
        %v1774 = vsel %vm1773, %v1772, 0
        %v1775 = vshrl.u32 %v1774, 5
        %v1776 = vand.u32 %v1774, 31
        %v1777 = vsub.s32 32, %v1776
        %v1778 = vshrl.u32 683565275, %v1777
        %v1779 = vshll.u32 683565275, %v1776
        %v1780 = vshrl.u32 2475754826, %v1777
        %v1781 = vor.u32 %v1779, %v1780
        %v1782 = vshll.u32 2475754826, %v1776
        %v1783 = vshrl.u32 2131351028, %v1777
        %v1784 = vor.u32 %v1782, %v1783
        %v1785 = vshll.u32 2131351028, %v1776
        %v1786 = vshrl.u32 2102212464, %v1777
        %v1787 = vor.u32 %v1785, %v1786
        %v1788 = vshll.u32 2102212464, %v1776
        %v1789 = vshrl.u32 920167782, %v1777
        %v1790 = vor.u32 %v1788, %v1789
        %v1791 = vshll.u32 920167782, %v1776
        %v1792 = vshrl.u32 1326507024, %v1777
        %v1793 = vor.u32 %v1791, %v1792
        %vm1794 = vcmp.lt.s32.totalorder %v1775, 1
        %vm1795 = vcmp.lt.s32.totalorder %v1775, 2
        %vm1796 = vcmp.lt.s32.totalorder %v1775, 3
        %vm1797 = vcmp.lt.s32.totalorder %v1775, 4
        %v1798 = vsel %vm1794, %v1778, %v1781
        %v1799 = vsel %vm1797, %v1787, 2102212464
        %v1800 = vsel %vm1796, %v1784, %v1799
        %v1801 = vsel %vm1795, %v1798, %v1800
        %v1802 = vsel %vm1794, %v1781, %v1784
        %v1803 = vsel %vm1797, %v1790, 920167782
        %v1804 = vsel %vm1796, %v1787, %v1803
        %v1805 = vsel %vm1795, %v1802, %v1804
        %v1806 = vsel %vm1794, %v1784, %v1787
        %v1807 = vsel %vm1797, %v1793, 1326507024
        %v1808 = vsel %vm1796, %v1790, %v1807
        %v1809 = vsel %vm1795, %v1806, %v1808
        %v1810 = vshll.u32 %v1770, 8
        %v1811 = vmul.u32.u64.compose %v1810, %v1809
        %v1812 = vextract.low.u32 %v1811
        %v1813 = vextract.high.u32 %v1811
        %v1814 = vmul.u32.u64.compose %v1810, %v1805
        %v1815 = vextract.low.u32 %v1814
        %v1816 = vextract.high.u32 %v1814
        %v1817 = vmul.u32 %v1810, %v1801
        %v1818 = vadd.s32 %v1813, %v1815
        %vm1819 = vc.u32 %v1813, %v1815
        %v1820 = vadd.s32 %v1816, 1
        %v1821 = vsel %vm1819, %v1820, %v1816
        %v1822 = vadd.s32 %v1817, %v1821
        %v1823 = vadd.s32 %v1822, 536870912
        %v1824 = vshrl.u32 %v1823, 30
        %v1825 = vshll.u32 %v1824, 30
        %v1826 = vsub.s32 %v1822, %v1825
        %vm1827 = vcmp.lt.s32.totalorder %v1826, 0
        %v1828 = vsub.s32 0, %v1826
        %v1829 = vsel %vm1827, %v1828, %v1826
        %v1830 = vclz %v1829
        %v1831 = vsub.s32 %v1830, 2
        %vm1832 = vcmp.gt.s32.totalorder 0, %v1831
        %v1833 = vsel %vm1832, 0, %v1831
        %v1834 = vsub.s32 32, %v1833
        %v1835 = vshll.u32 %v1826, %v1833
        %v1836 = vshrl.u32 %v1818, %v1834
        %v1837 = vor.u32 %v1835, %v1836
        %v1838 = vsub.s32 4294967266, %v1833
        %v1839 = vadd.s32 %v1838, 127
        %v1840 = vshll.u32 %v1839, 23
        %v1841 = vor.u32 4788187, %v1840
        %v1842 = vand.u32 2147483647, %v1841
        %v1844 = vcvt.s32.f32 %v1837
        %v1845 = vmul.f32 %v1844, %v1842
        %v1846 = vxor.u32 %v1845, 2147483648
        %v1847 = vsel %vm1764, %v1846, %v1845
        %v1848 = vsub.s32 4, %v1824
        %v1849 = vsel %vm1764, %v1848, %v1824
        %v1850 = vsel %vm1763, %v553, %v1847
        %v1851 = vsel %vm1763, 0, %v1849
        %v1852 = vcosq.f32.pop %v1850
        %v1853 = vsinq.f32.pop %v1850
        %vm1854 = vweird.f32 %v553
        %v1855 = vadd.s32 %v1851, 3
        %v1856 = vand.u32 %v1855, 3
        %vm1857 = vcmp.lt.s32.totalorder %v1856, 2
        %vm1858 = vcmp.eq.s32.totalorder %v1856, 0
        %v1859 = vxor.u32 %v1853, 2147483648
        %v1860 = vsel %vm1858, %v1852, %v1859
        %vm1861 = vcmp.eq.s32.totalorder %v1856, 2
        %v1862 = vxor.u32 %v1852, 2147483648
        %v1863 = vsel %vm1861, %v1862, %v1853
        %v1864 = vsel %vm1857, %v1860, %v1863
        %v1865 = vsel %vm1854, nan, %v1864
        %v1866 = vand.u32 2147483647, %v558
        %vm1867 = vcmp.le.f32.partialorder %v1866, 0.7853982
        %vm1868 = vcmp.lt.s32.totalorder %v558, 0
        %v1869 = vand.u32 %v558, 2139095040
        %v1870 = vshrl.u32 %v1869, 23
        %v1871 = vsub.s32 %v1870, 127
        %v1872 = vand.u32 2147483647, %v558
        %v1873 = vand.u32 %v1872, 8388607
        %v1874 = vor.u32 %v1873, 8388608
        %v1875 = vsub.s32 0, %v1874
        %v1876 = vadd.s32 %v1871, 1
        %vm1877 = vcmp.gt.s32.totalorder %v1876, 0
        %v1878 = vsel %vm1877, %v1876, 0
        %v1879 = vshrl.u32 %v1878, 5
        %v1880 = vand.u32 %v1878, 31
        %v1881 = vsub.s32 32, %v1880
        %v1882 = vshrl.u32 683565275, %v1881
        %v1883 = vshll.u32 683565275, %v1880
        %v1884 = vshrl.u32 2475754826, %v1881
        %v1885 = vor.u32 %v1883, %v1884
        %v1886 = vshll.u32 2475754826, %v1880
        %v1887 = vshrl.u32 2131351028, %v1881
        %v1888 = vor.u32 %v1886, %v1887
        %v1889 = vshll.u32 2131351028, %v1880
        %v1890 = vshrl.u32 2102212464, %v1881
        %v1891 = vor.u32 %v1889, %v1890
        %v1892 = vshll.u32 2102212464, %v1880
        %v1893 = vshrl.u32 920167782, %v1881
        %v1894 = vor.u32 %v1892, %v1893
        %v1895 = vshll.u32 920167782, %v1880
        %v1896 = vshrl.u32 1326507024, %v1881
        %v1897 = vor.u32 %v1895, %v1896
        %vm1898 = vcmp.lt.s32.totalorder %v1879, 1
        %vm1899 = vcmp.lt.s32.totalorder %v1879, 2
        %vm1900 = vcmp.lt.s32.totalorder %v1879, 3
        %vm1901 = vcmp.lt.s32.totalorder %v1879, 4
        %v1902 = vsel %vm1898, %v1882, %v1885
        %v1903 = vsel %vm1901, %v1891, 2102212464
        %v1904 = vsel %vm1900, %v1888, %v1903
        %v1905 = vsel %vm1899, %v1902, %v1904
        %v1906 = vsel %vm1898, %v1885, %v1888
        %v1907 = vsel %vm1901, %v1894, 920167782
        %v1908 = vsel %vm1900, %v1891, %v1907
        %v1909 = vsel %vm1899, %v1906, %v1908
        %v1910 = vsel %vm1898, %v1888, %v1891
        %v1911 = vsel %vm1901, %v1897, 1326507024
        %v1912 = vsel %vm1900, %v1894, %v1911
        %v1913 = vsel %vm1899, %v1910, %v1912
        %v1914 = vshll.u32 %v1874, 8
        %v1915 = vmul.u32.u64.compose %v1914, %v1913
        %v1916 = vextract.low.u32 %v1915
        %v1917 = vextract.high.u32 %v1915
        %v1918 = vmul.u32.u64.compose %v1914, %v1909
        %v1919 = vextract.low.u32 %v1918
        %v1920 = vextract.high.u32 %v1918
        %v1921 = vmul.u32 %v1914, %v1905
        %v1922 = vadd.s32 %v1917, %v1919
        %vm1923 = vc.u32 %v1917, %v1919
        %v1924 = vadd.s32 %v1920, 1
        %v1925 = vsel %vm1923, %v1924, %v1920
        %v1926 = vadd.s32 %v1921, %v1925
        %v1927 = vadd.s32 %v1926, 536870912
        %v1928 = vshrl.u32 %v1927, 30
        %v1929 = vshll.u32 %v1928, 30
        %v1930 = vsub.s32 %v1926, %v1929
        %vm1931 = vcmp.lt.s32.totalorder %v1930, 0
        %v1932 = vsub.s32 0, %v1930
        %v1933 = vsel %vm1931, %v1932, %v1930
        %v1934 = vclz %v1933
        %v1935 = vsub.s32 %v1934, 2
        %vm1936 = vcmp.gt.s32.totalorder 0, %v1935
        %v1937 = vsel %vm1936, 0, %v1935
        %v1938 = vsub.s32 32, %v1937
        %v1939 = vshll.u32 %v1930, %v1937
        %v1940 = vshrl.u32 %v1922, %v1938
        %v1941 = vor.u32 %v1939, %v1940
        %v1942 = vsub.s32 4294967266, %v1937
        %v1943 = vadd.s32 %v1942, 127
        %v1944 = vshll.u32 %v1943, 23
        %v1945 = vor.u32 4788187, %v1944
        %v1946 = vand.u32 2147483647, %v1945
        %v1948 = vcvt.s32.f32 %v1941
        %v1949 = vmul.f32 %v1948, %v1946
        %v1950 = vxor.u32 %v1949, 2147483648
        %v1951 = vsel %vm1868, %v1950, %v1949
        %v1952 = vsub.s32 4, %v1928
        %v1953 = vsel %vm1868, %v1952, %v1928
        %v1954 = vsel %vm1867, %v558, %v1951
        %v1955 = vsel %vm1867, 0, %v1953
        %v1956 = vcosq.f32.pop %v1954
        %v1957 = vsinq.f32.pop %v1954
        %vm1958 = vweird.f32 %v558
        %v1959 = vadd.s32 %v1955, 3
        %v1960 = vand.u32 %v1959, 3
        %vm1961 = vcmp.lt.s32.totalorder %v1960, 2
        %vm1962 = vcmp.eq.s32.totalorder %v1960, 0
        %v1963 = vxor.u32 %v1957, 2147483648
        %v1964 = vsel %vm1962, %v1956, %v1963
        %vm1965 = vcmp.eq.s32.totalorder %v1960, 2
        %v1966 = vxor.u32 %v1956, 2147483648
        %v1967 = vsel %vm1965, %v1966, %v1957
        %v1968 = vsel %vm1961, %v1964, %v1967
        %v1969 = vsel %vm1958, nan, %v1968
        %v1970 = vand.u32 2147483647, %v563
        %vm1971 = vcmp.le.f32.partialorder %v1970, 0.7853982
        %vm1972 = vcmp.lt.s32.totalorder %v563, 0
        %v1973 = vand.u32 %v563, 2139095040
        %v1974 = vshrl.u32 %v1973, 23
        %v1975 = vsub.s32 %v1974, 127
        %v1976 = vand.u32 2147483647, %v563
        %v1977 = vand.u32 %v1976, 8388607
        %v1978 = vor.u32 %v1977, 8388608
        %v1979 = vsub.s32 0, %v1978
        %v1980 = vadd.s32 %v1975, 1
        %vm1981 = vcmp.gt.s32.totalorder %v1980, 0
        %v1982 = vsel %vm1981, %v1980, 0
        %v1983 = vshrl.u32 %v1982, 5
        %v1984 = vand.u32 %v1982, 31
        %v1985 = vsub.s32 32, %v1984
        %v1986 = vshrl.u32 683565275, %v1985
        %v1987 = vshll.u32 683565275, %v1984
        %v1988 = vshrl.u32 2475754826, %v1985
        %v1989 = vor.u32 %v1987, %v1988
        %v1990 = vshll.u32 2475754826, %v1984
        %v1991 = vshrl.u32 2131351028, %v1985
        %v1992 = vor.u32 %v1990, %v1991
        %v1993 = vshll.u32 2131351028, %v1984
        %v1994 = vshrl.u32 2102212464, %v1985
        %v1995 = vor.u32 %v1993, %v1994
        %v1996 = vshll.u32 2102212464, %v1984
        %v1997 = vshrl.u32 920167782, %v1985
        %v1998 = vor.u32 %v1996, %v1997
        %v1999 = vshll.u32 920167782, %v1984
        %v2000 = vshrl.u32 1326507024, %v1985
        %v2001 = vor.u32 %v1999, %v2000
        %vm2002 = vcmp.lt.s32.totalorder %v1983, 1
        %vm2003 = vcmp.lt.s32.totalorder %v1983, 2
        %vm2004 = vcmp.lt.s32.totalorder %v1983, 3
        %vm2005 = vcmp.lt.s32.totalorder %v1983, 4
        %v2006 = vsel %vm2002, %v1986, %v1989
        %v2007 = vsel %vm2005, %v1995, 2102212464
        %v2008 = vsel %vm2004, %v1992, %v2007
        %v2009 = vsel %vm2003, %v2006, %v2008
        %v2010 = vsel %vm2002, %v1989, %v1992
        %v2011 = vsel %vm2005, %v1998, 920167782
        %v2012 = vsel %vm2004, %v1995, %v2011
        %v2013 = vsel %vm2003, %v2010, %v2012
        %v2014 = vsel %vm2002, %v1992, %v1995
        %v2015 = vsel %vm2005, %v2001, 1326507024
        %v2016 = vsel %vm2004, %v1998, %v2015
        %v2017 = vsel %vm2003, %v2014, %v2016
        %v2018 = vshll.u32 %v1978, 8
        %v2019 = vmul.u32.u64.compose %v2018, %v2017
        %v2020 = vextract.low.u32 %v2019
        %v2021 = vextract.high.u32 %v2019
        %v2022 = vmul.u32.u64.compose %v2018, %v2013
        %v2023 = vextract.low.u32 %v2022
        %v2024 = vextract.high.u32 %v2022
        %v2025 = vmul.u32 %v2018, %v2009
        %v2026 = vadd.s32 %v2021, %v2023
        %vm2027 = vc.u32 %v2021, %v2023
        %v2028 = vadd.s32 %v2024, 1
        %v2029 = vsel %vm2027, %v2028, %v2024
        %v2030 = vadd.s32 %v2025, %v2029
        %v2031 = vadd.s32 %v2030, 536870912
        %v2032 = vshrl.u32 %v2031, 30
        %v2033 = vshll.u32 %v2032, 30
        %v2034 = vsub.s32 %v2030, %v2033
        %vm2035 = vcmp.lt.s32.totalorder %v2034, 0
        %v2036 = vsub.s32 0, %v2034
        %v2037 = vsel %vm2035, %v2036, %v2034
        %v2038 = vclz %v2037
        %v2039 = vsub.s32 %v2038, 2
        %vm2040 = vcmp.gt.s32.totalorder 0, %v2039
        %v2041 = vsel %vm2040, 0, %v2039
        %v2042 = vsub.s32 32, %v2041
        %v2043 = vshll.u32 %v2034, %v2041
        %v2044 = vshrl.u32 %v2026, %v2042
        %v2045 = vor.u32 %v2043, %v2044
        %v2046 = vsub.s32 4294967266, %v2041
        %v2047 = vadd.s32 %v2046, 127
        %v2048 = vshll.u32 %v2047, 23
        %v2049 = vor.u32 4788187, %v2048
        %v2050 = vand.u32 2147483647, %v2049
        %v2052 = vcvt.s32.f32 %v2045
        %v2053 = vmul.f32 %v2052, %v2050
        %v2054 = vxor.u32 %v2053, 2147483648
        %v2055 = vsel %vm1972, %v2054, %v2053
        %v2056 = vsub.s32 4, %v2032
        %v2057 = vsel %vm1972, %v2056, %v2032
        %v2058 = vsel %vm1971, %v563, %v2055
        %v2059 = vsel %vm1971, 0, %v2057
        %v2060 = vcosq.f32.pop %v2058
        %v2061 = vsinq.f32.pop %v2058
        %vm2062 = vweird.f32 %v563
        %v2063 = vadd.s32 %v2059, 3
        %v2064 = vand.u32 %v2063, 3
        %vm2065 = vcmp.lt.s32.totalorder %v2064, 2
        %vm2066 = vcmp.eq.s32.totalorder %v2064, 0
        %v2067 = vxor.u32 %v2061, 2147483648
        %v2068 = vsel %vm2066, %v2060, %v2067
        %vm2069 = vcmp.eq.s32.totalorder %v2064, 2
        %v2070 = vxor.u32 %v2060, 2147483648
        %v2071 = vsel %vm2069, %v2070, %v2061
        %v2072 = vsel %vm2065, %v2068, %v2071
        %v2073 = vsel %vm2062, nan, %v2072
        %v2074 = vand.u32 2147483647, %v568
        %vm2075 = vcmp.le.f32.partialorder %v2074, 0.7853982
        %vm2076 = vcmp.lt.s32.totalorder %v568, 0
        %v2077 = vand.u32 %v568, 2139095040
        %v2078 = vshrl.u32 %v2077, 23
        %v2079 = vsub.s32 %v2078, 127
        %v2080 = vand.u32 2147483647, %v568
        %v2081 = vand.u32 %v2080, 8388607
        %v2082 = vor.u32 %v2081, 8388608
        %v2083 = vsub.s32 0, %v2082
        %v2084 = vadd.s32 %v2079, 1
        %vm2085 = vcmp.gt.s32.totalorder %v2084, 0
        %v2086 = vsel %vm2085, %v2084, 0
        %v2087 = vshrl.u32 %v2086, 5
        %v2088 = vand.u32 %v2086, 31
        %v2089 = vsub.s32 32, %v2088
        %v2090 = vshrl.u32 683565275, %v2089
        %v2091 = vshll.u32 683565275, %v2088
        %v2092 = vshrl.u32 2475754826, %v2089
        %v2093 = vor.u32 %v2091, %v2092
        %v2094 = vshll.u32 2475754826, %v2088
        %v2095 = vshrl.u32 2131351028, %v2089
        %v2096 = vor.u32 %v2094, %v2095
        %v2097 = vshll.u32 2131351028, %v2088
        %v2098 = vshrl.u32 2102212464, %v2089
        %v2099 = vor.u32 %v2097, %v2098
        %v2100 = vshll.u32 2102212464, %v2088
        %v2101 = vshrl.u32 920167782, %v2089
        %v2102 = vor.u32 %v2100, %v2101
        %v2103 = vshll.u32 920167782, %v2088
        %v2104 = vshrl.u32 1326507024, %v2089
        %v2105 = vor.u32 %v2103, %v2104
        %vm2106 = vcmp.lt.s32.totalorder %v2087, 1
        %vm2107 = vcmp.lt.s32.totalorder %v2087, 2
        %vm2108 = vcmp.lt.s32.totalorder %v2087, 3
        %vm2109 = vcmp.lt.s32.totalorder %v2087, 4
        %v2110 = vsel %vm2106, %v2090, %v2093
        %v2111 = vsel %vm2109, %v2099, 2102212464
        %v2112 = vsel %vm2108, %v2096, %v2111
        %v2113 = vsel %vm2107, %v2110, %v2112
        %v2114 = vsel %vm2106, %v2093, %v2096
        %v2115 = vsel %vm2109, %v2102, 920167782
        %v2116 = vsel %vm2108, %v2099, %v2115
        %v2117 = vsel %vm2107, %v2114, %v2116
        %v2118 = vsel %vm2106, %v2096, %v2099
        %v2119 = vsel %vm2109, %v2105, 1326507024
        %v2120 = vsel %vm2108, %v2102, %v2119
        %v2121 = vsel %vm2107, %v2118, %v2120
        %v2122 = vshll.u32 %v2082, 8
        %v2123 = vmul.u32.u64.compose %v2122, %v2121
        %v2124 = vextract.low.u32 %v2123
        %v2125 = vextract.high.u32 %v2123
        %v2126 = vmul.u32.u64.compose %v2122, %v2117
        %v2127 = vextract.low.u32 %v2126
        %v2128 = vextract.high.u32 %v2126
        %v2129 = vmul.u32 %v2122, %v2113
        %v2130 = vadd.s32 %v2125, %v2127
        %vm2131 = vc.u32 %v2125, %v2127
        %v2132 = vadd.s32 %v2128, 1
        %v2133 = vsel %vm2131, %v2132, %v2128
        %v2134 = vadd.s32 %v2129, %v2133
        %v2135 = vadd.s32 %v2134, 536870912
        %v2136 = vshrl.u32 %v2135, 30
        %v2137 = vshll.u32 %v2136, 30
        %v2138 = vsub.s32 %v2134, %v2137
        %vm2139 = vcmp.lt.s32.totalorder %v2138, 0
        %v2140 = vsub.s32 0, %v2138
        %v2141 = vsel %vm2139, %v2140, %v2138
        %v2142 = vclz %v2141
        %v2143 = vsub.s32 %v2142, 2
        %vm2144 = vcmp.gt.s32.totalorder 0, %v2143
        %v2145 = vsel %vm2144, 0, %v2143
        %v2146 = vsub.s32 32, %v2145
        %v2147 = vshll.u32 %v2138, %v2145
        %v2148 = vshrl.u32 %v2130, %v2146
        %v2149 = vor.u32 %v2147, %v2148
        %v2150 = vsub.s32 4294967266, %v2145
        %v2151 = vadd.s32 %v2150, 127
        %v2152 = vshll.u32 %v2151, 23
        %v2153 = vor.u32 4788187, %v2152
        %v2154 = vand.u32 2147483647, %v2153
        %v2156 = vcvt.s32.f32 %v2149
        %v2157 = vmul.f32 %v2156, %v2154
        %v2158 = vxor.u32 %v2157, 2147483648
        %v2159 = vsel %vm2076, %v2158, %v2157
        %v2160 = vsub.s32 4, %v2136
        %v2161 = vsel %vm2076, %v2160, %v2136
        %v2162 = vsel %vm2075, %v568, %v2159
        %v2163 = vsel %vm2075, 0, %v2161
        %v2164 = vcosq.f32.pop %v2162
        %v2165 = vsinq.f32.pop %v2162
        %vm2166 = vweird.f32 %v568
        %v2167 = vadd.s32 %v2163, 3
        %v2168 = vand.u32 %v2167, 3
        %vm2169 = vcmp.lt.s32.totalorder %v2168, 2
        %vm2170 = vcmp.eq.s32.totalorder %v2168, 0
        %v2171 = vxor.u32 %v2165, 2147483648
        %v2172 = vsel %vm2170, %v2164, %v2171
        %vm2173 = vcmp.eq.s32.totalorder %v2168, 2
        %v2174 = vxor.u32 %v2164, 2147483648
        %v2175 = vsel %vm2173, %v2174, %v2165
        %v2176 = vsel %vm2169, %v2172, %v2175
        %v2177 = vsel %vm2166, nan, %v2176
        %v2178 = vand.u32 2147483647, %v573
        %vm2179 = vcmp.le.f32.partialorder %v2178, 0.7853982
        %vm2180 = vcmp.lt.s32.totalorder %v573, 0
        %v2181 = vand.u32 %v573, 2139095040
        %v2182 = vshrl.u32 %v2181, 23
        %v2183 = vsub.s32 %v2182, 127
        %v2184 = vand.u32 2147483647, %v573
        %v2185 = vand.u32 %v2184, 8388607
        %v2186 = vor.u32 %v2185, 8388608
        %v2187 = vsub.s32 0, %v2186
        %v2188 = vadd.s32 %v2183, 1
        %vm2189 = vcmp.gt.s32.totalorder %v2188, 0
        %v2190 = vsel %vm2189, %v2188, 0
        %v2191 = vshrl.u32 %v2190, 5
        %v2192 = vand.u32 %v2190, 31
        %v2193 = vsub.s32 32, %v2192
        %v2194 = vshrl.u32 683565275, %v2193
        %v2195 = vshll.u32 683565275, %v2192
        %v2196 = vshrl.u32 2475754826, %v2193
        %v2197 = vor.u32 %v2195, %v2196
        %v2198 = vshll.u32 2475754826, %v2192
        %v2199 = vshrl.u32 2131351028, %v2193
        %v2200 = vor.u32 %v2198, %v2199
        %v2201 = vshll.u32 2131351028, %v2192
        %v2202 = vshrl.u32 2102212464, %v2193
        %v2203 = vor.u32 %v2201, %v2202
        %v2204 = vshll.u32 2102212464, %v2192
        %v2205 = vshrl.u32 920167782, %v2193
        %v2206 = vor.u32 %v2204, %v2205
        %v2207 = vshll.u32 920167782, %v2192
        %v2208 = vshrl.u32 1326507024, %v2193
        %v2209 = vor.u32 %v2207, %v2208
        %vm2210 = vcmp.lt.s32.totalorder %v2191, 1
        %vm2211 = vcmp.lt.s32.totalorder %v2191, 2
        %vm2212 = vcmp.lt.s32.totalorder %v2191, 3
        %vm2213 = vcmp.lt.s32.totalorder %v2191, 4
        %v2214 = vsel %vm2210, %v2194, %v2197
        %v2215 = vsel %vm2213, %v2203, 2102212464
        %v2216 = vsel %vm2212, %v2200, %v2215
        %v2217 = vsel %vm2211, %v2214, %v2216
        %v2218 = vsel %vm2210, %v2197, %v2200
        %v2219 = vsel %vm2213, %v2206, 920167782
        %v2220 = vsel %vm2212, %v2203, %v2219
        %v2221 = vsel %vm2211, %v2218, %v2220
        %v2222 = vsel %vm2210, %v2200, %v2203
        %v2223 = vsel %vm2213, %v2209, 1326507024
        %v2224 = vsel %vm2212, %v2206, %v2223
        %v2225 = vsel %vm2211, %v2222, %v2224
        %v2226 = vshll.u32 %v2186, 8
        %v2227 = vmul.u32.u64.compose %v2226, %v2225
        %v2228 = vextract.low.u32 %v2227
        %v2229 = vextract.high.u32 %v2227
        %v2230 = vmul.u32.u64.compose %v2226, %v2221
        %v2231 = vextract.low.u32 %v2230
        %v2232 = vextract.high.u32 %v2230
        %v2233 = vmul.u32 %v2226, %v2217
        %v2234 = vadd.s32 %v2229, %v2231
        %vm2235 = vc.u32 %v2229, %v2231
        %v2236 = vadd.s32 %v2232, 1
        %v2237 = vsel %vm2235, %v2236, %v2232
        %v2238 = vadd.s32 %v2233, %v2237
        %v2239 = vadd.s32 %v2238, 536870912
        %v2240 = vshrl.u32 %v2239, 30
        %v2241 = vshll.u32 %v2240, 30
        %v2242 = vsub.s32 %v2238, %v2241
        %vm2243 = vcmp.lt.s32.totalorder %v2242, 0
        %v2244 = vsub.s32 0, %v2242
        %v2245 = vsel %vm2243, %v2244, %v2242
        %v2246 = vclz %v2245
        %v2247 = vsub.s32 %v2246, 2
        %vm2248 = vcmp.gt.s32.totalorder 0, %v2247
        %v2249 = vsel %vm2248, 0, %v2247
        %v2250 = vsub.s32 32, %v2249
        %v2251 = vshll.u32 %v2242, %v2249
        %v2252 = vshrl.u32 %v2234, %v2250
        %v2253 = vor.u32 %v2251, %v2252
        %v2254 = vsub.s32 4294967266, %v2249
        %v2255 = vadd.s32 %v2254, 127
        %v2256 = vshll.u32 %v2255, 23
        %v2257 = vor.u32 4788187, %v2256
        %v2258 = vand.u32 2147483647, %v2257
        %v2260 = vcvt.s32.f32 %v2253
        %v2261 = vmul.f32 %v2260, %v2258
        %v2262 = vxor.u32 %v2261, 2147483648
        %v2263 = vsel %vm2180, %v2262, %v2261
        %v2264 = vsub.s32 4, %v2240
        %v2265 = vsel %vm2180, %v2264, %v2240
        %v2266 = vsel %vm2179, %v573, %v2263
        %v2267 = vsel %vm2179, 0, %v2265
        %v2268 = vcosq.f32.pop %v2266
        %v2269 = vsinq.f32.pop %v2266
        %vm2270 = vweird.f32 %v573
        %v2271 = vadd.s32 %v2267, 3
        %v2272 = vand.u32 %v2271, 3
        %vm2273 = vcmp.lt.s32.totalorder %v2272, 2
        %vm2274 = vcmp.eq.s32.totalorder %v2272, 0
        %v2275 = vxor.u32 %v2269, 2147483648
        %v2276 = vsel %vm2274, %v2268, %v2275
        %vm2277 = vcmp.eq.s32.totalorder %v2272, 2
        %v2278 = vxor.u32 %v2268, 2147483648
        %v2279 = vsel %vm2277, %v2278, %v2269
        %v2280 = vsel %vm2273, %v2276, %v2279
        %v2281 = vsel %vm2270, nan, %v2280
        %v2282 = vand.u32 2147483647, %v578
        %vm2283 = vcmp.le.f32.partialorder %v2282, 0.7853982
        %vm2284 = vcmp.lt.s32.totalorder %v578, 0
        %v2285 = vand.u32 %v578, 2139095040
        %v2286 = vshrl.u32 %v2285, 23
        %v2287 = vsub.s32 %v2286, 127
        %v2288 = vand.u32 2147483647, %v578
        %v2289 = vand.u32 %v2288, 8388607
        %v2290 = vor.u32 %v2289, 8388608
        %v2291 = vsub.s32 0, %v2290
        %v2292 = vadd.s32 %v2287, 1
        %vm2293 = vcmp.gt.s32.totalorder %v2292, 0
        %v2294 = vsel %vm2293, %v2292, 0
        %v2295 = vshrl.u32 %v2294, 5
        %v2296 = vand.u32 %v2294, 31
        %v2297 = vsub.s32 32, %v2296
        %v2298 = vshrl.u32 683565275, %v2297
        %v2299 = vshll.u32 683565275, %v2296
        %v2300 = vshrl.u32 2475754826, %v2297
        %v2301 = vor.u32 %v2299, %v2300
        %v2302 = vshll.u32 2475754826, %v2296
        %v2303 = vshrl.u32 2131351028, %v2297
        %v2304 = vor.u32 %v2302, %v2303
        %v2305 = vshll.u32 2131351028, %v2296
        %v2306 = vshrl.u32 2102212464, %v2297
        %v2307 = vor.u32 %v2305, %v2306
        %v2308 = vshll.u32 2102212464, %v2296
        %v2309 = vshrl.u32 920167782, %v2297
        %v2310 = vor.u32 %v2308, %v2309
        %v2311 = vshll.u32 920167782, %v2296
        %v2312 = vshrl.u32 1326507024, %v2297
        %v2313 = vor.u32 %v2311, %v2312
        %vm2314 = vcmp.lt.s32.totalorder %v2295, 1
        %vm2315 = vcmp.lt.s32.totalorder %v2295, 2
        %vm2316 = vcmp.lt.s32.totalorder %v2295, 3
        %vm2317 = vcmp.lt.s32.totalorder %v2295, 4
        %v2318 = vsel %vm2314, %v2298, %v2301
        %v2319 = vsel %vm2317, %v2307, 2102212464
        %v2320 = vsel %vm2316, %v2304, %v2319
        %v2321 = vsel %vm2315, %v2318, %v2320
        %v2322 = vsel %vm2314, %v2301, %v2304
        %v2323 = vsel %vm2317, %v2310, 920167782
        %v2324 = vsel %vm2316, %v2307, %v2323
        %v2325 = vsel %vm2315, %v2322, %v2324
        %v2326 = vsel %vm2314, %v2304, %v2307
        %v2327 = vsel %vm2317, %v2313, 1326507024
        %v2328 = vsel %vm2316, %v2310, %v2327
        %v2329 = vsel %vm2315, %v2326, %v2328
        %v2330 = vshll.u32 %v2290, 8
        %v2331 = vmul.u32.u64.compose %v2330, %v2329
        %v2332 = vextract.low.u32 %v2331
        %v2333 = vextract.high.u32 %v2331
        %v2334 = vmul.u32.u64.compose %v2330, %v2325
        %v2335 = vextract.low.u32 %v2334
        %v2336 = vextract.high.u32 %v2334
        %v2337 = vmul.u32 %v2330, %v2321
        %v2338 = vadd.s32 %v2333, %v2335
        %vm2339 = vc.u32 %v2333, %v2335
        %v2340 = vadd.s32 %v2336, 1
        %v2341 = vsel %vm2339, %v2340, %v2336
        %v2342 = vadd.s32 %v2337, %v2341
        %v2343 = vadd.s32 %v2342, 536870912
        %v2344 = vshrl.u32 %v2343, 30
        %v2345 = vshll.u32 %v2344, 30
        %v2346 = vsub.s32 %v2342, %v2345
        %vm2347 = vcmp.lt.s32.totalorder %v2346, 0
        %v2348 = vsub.s32 0, %v2346
        %v2349 = vsel %vm2347, %v2348, %v2346
        %v2350 = vclz %v2349
        %v2351 = vsub.s32 %v2350, 2
        %vm2352 = vcmp.gt.s32.totalorder 0, %v2351
        %v2353 = vsel %vm2352, 0, %v2351
        %v2354 = vsub.s32 32, %v2353
        %v2355 = vshll.u32 %v2346, %v2353
        %v2356 = vshrl.u32 %v2338, %v2354
        %v2357 = vor.u32 %v2355, %v2356
        %v2358 = vsub.s32 4294967266, %v2353
        %v2359 = vadd.s32 %v2358, 127
        %v2360 = vshll.u32 %v2359, 23
        %v2361 = vor.u32 4788187, %v2360
        %v2362 = vand.u32 2147483647, %v2361
        %v2364 = vcvt.s32.f32 %v2357
        %v2365 = vmul.f32 %v2364, %v2362
        %v2366 = vxor.u32 %v2365, 2147483648
        %v2367 = vsel %vm2284, %v2366, %v2365
        %v2368 = vsub.s32 4, %v2344
        %v2369 = vsel %vm2284, %v2368, %v2344
        %v2370 = vsel %vm2283, %v578, %v2367
        %v2371 = vsel %vm2283, 0, %v2369
        %v2372 = vcosq.f32.pop %v2370
        %v2373 = vsinq.f32.pop %v2370
        %vm2374 = vweird.f32 %v578
        %v2375 = vadd.s32 %v2371, 3
        %v2376 = vand.u32 %v2375, 3
        %vm2377 = vcmp.lt.s32.totalorder %v2376, 2
        %vm2378 = vcmp.eq.s32.totalorder %v2376, 0
        %v2379 = vxor.u32 %v2373, 2147483648
        %v2380 = vsel %vm2378, %v2372, %v2379
        %vm2381 = vcmp.eq.s32.totalorder %v2376, 2
        %v2382 = vxor.u32 %v2372, 2147483648
        %v2383 = vsel %vm2381, %v2382, %v2373
        %v2384 = vsel %vm2377, %v2380, %v2383
        %v2385 = vsel %vm2374, nan, %v2384
        %v2386 = vand.u32 2147483647, %v583
        %vm2387 = vcmp.le.f32.partialorder %v2386, 0.7853982
        %vm2388 = vcmp.lt.s32.totalorder %v583, 0
        %v2389 = vand.u32 %v583, 2139095040
        %v2390 = vshrl.u32 %v2389, 23
        %v2391 = vsub.s32 %v2390, 127
        %v2392 = vand.u32 2147483647, %v583
        %v2393 = vand.u32 %v2392, 8388607
        %v2394 = vor.u32 %v2393, 8388608
        %v2395 = vsub.s32 0, %v2394
        %v2396 = vadd.s32 %v2391, 1
        %vm2397 = vcmp.gt.s32.totalorder %v2396, 0
        %v2398 = vsel %vm2397, %v2396, 0
        %v2399 = vshrl.u32 %v2398, 5
        %v2400 = vand.u32 %v2398, 31
        %v2401 = vsub.s32 32, %v2400
        %v2402 = vshrl.u32 683565275, %v2401
        %v2403 = vshll.u32 683565275, %v2400
        %v2404 = vshrl.u32 2475754826, %v2401
        %v2405 = vor.u32 %v2403, %v2404
        %v2406 = vshll.u32 2475754826, %v2400
        %v2407 = vshrl.u32 2131351028, %v2401
        %v2408 = vor.u32 %v2406, %v2407
        %v2409 = vshll.u32 2131351028, %v2400
        %v2410 = vshrl.u32 2102212464, %v2401
        %v2411 = vor.u32 %v2409, %v2410
        %v2412 = vshll.u32 2102212464, %v2400
        %v2413 = vshrl.u32 920167782, %v2401
        %v2414 = vor.u32 %v2412, %v2413
        %v2415 = vshll.u32 920167782, %v2400
        %v2416 = vshrl.u32 1326507024, %v2401
        %v2417 = vor.u32 %v2415, %v2416
        %vm2418 = vcmp.lt.s32.totalorder %v2399, 1
        %vm2419 = vcmp.lt.s32.totalorder %v2399, 2
        %vm2420 = vcmp.lt.s32.totalorder %v2399, 3
        %vm2421 = vcmp.lt.s32.totalorder %v2399, 4
        %v2422 = vsel %vm2418, %v2402, %v2405
        %v2423 = vsel %vm2421, %v2411, 2102212464
        %v2424 = vsel %vm2420, %v2408, %v2423
        %v2425 = vsel %vm2419, %v2422, %v2424
        %v2426 = vsel %vm2418, %v2405, %v2408
        %v2427 = vsel %vm2421, %v2414, 920167782
        %v2428 = vsel %vm2420, %v2411, %v2427
        %v2429 = vsel %vm2419, %v2426, %v2428
        %v2430 = vsel %vm2418, %v2408, %v2411
        %v2431 = vsel %vm2421, %v2417, 1326507024
        %v2432 = vsel %vm2420, %v2414, %v2431
        %v2433 = vsel %vm2419, %v2430, %v2432
        %v2434 = vshll.u32 %v2394, 8
        %v2435 = vmul.u32.u64.compose %v2434, %v2433
        %v2436 = vextract.low.u32 %v2435
        %v2437 = vextract.high.u32 %v2435
        %v2438 = vmul.u32.u64.compose %v2434, %v2429
        %v2439 = vextract.low.u32 %v2438
        %v2440 = vextract.high.u32 %v2438
        %v2441 = vmul.u32 %v2434, %v2425
        %v2442 = vadd.s32 %v2437, %v2439
        %vm2443 = vc.u32 %v2437, %v2439
        %v2444 = vadd.s32 %v2440, 1
        %v2445 = vsel %vm2443, %v2444, %v2440
        %v2446 = vadd.s32 %v2441, %v2445
        %v2447 = vadd.s32 %v2446, 536870912
        %v2448 = vshrl.u32 %v2447, 30
        %v2449 = vshll.u32 %v2448, 30
        %v2450 = vsub.s32 %v2446, %v2449
        %vm2451 = vcmp.lt.s32.totalorder %v2450, 0
        %v2452 = vsub.s32 0, %v2450
        %v2453 = vsel %vm2451, %v2452, %v2450
        %v2454 = vclz %v2453
        %v2455 = vsub.s32 %v2454, 2
        %vm2456 = vcmp.gt.s32.totalorder 0, %v2455
        %v2457 = vsel %vm2456, 0, %v2455
        %v2458 = vsub.s32 32, %v2457
        %v2459 = vshll.u32 %v2450, %v2457
        %v2460 = vshrl.u32 %v2442, %v2458
        %v2461 = vor.u32 %v2459, %v2460
        %v2462 = vsub.s32 4294967266, %v2457
        %v2463 = vadd.s32 %v2462, 127
        %v2464 = vshll.u32 %v2463, 23
        %v2465 = vor.u32 4788187, %v2464
        %v2466 = vand.u32 2147483647, %v2465
        %v2468 = vcvt.s32.f32 %v2461
        %v2469 = vmul.f32 %v2468, %v2466
        %v2470 = vxor.u32 %v2469, 2147483648
        %v2471 = vsel %vm2388, %v2470, %v2469
        %v2472 = vsub.s32 4, %v2448
        %v2473 = vsel %vm2388, %v2472, %v2448
        %v2474 = vsel %vm2387, %v583, %v2471
        %v2475 = vsel %vm2387, 0, %v2473
        %v2476 = vcosq.f32.pop %v2474
        %v2477 = vsinq.f32.pop %v2474
        %vm2478 = vweird.f32 %v583
        %v2479 = vadd.s32 %v2475, 3
        %v2480 = vand.u32 %v2479, 3
        %vm2481 = vcmp.lt.s32.totalorder %v2480, 2
        %vm2482 = vcmp.eq.s32.totalorder %v2480, 0
        %v2483 = vxor.u32 %v2477, 2147483648
        %v2484 = vsel %vm2482, %v2476, %v2483
        %vm2485 = vcmp.eq.s32.totalorder %v2480, 2
        %v2486 = vxor.u32 %v2476, 2147483648
        %v2487 = vsel %vm2485, %v2486, %v2477
        %v2488 = vsel %vm2481, %v2484, %v2487
        %v2489 = vsel %vm2478, nan, %v2488
        %v2490 = vand.u32 2147483647, %v588
        %vm2491 = vcmp.le.f32.partialorder %v2490, 0.7853982
        %vm2492 = vcmp.lt.s32.totalorder %v588, 0
        %v2493 = vand.u32 %v588, 2139095040
        %v2494 = vshrl.u32 %v2493, 23
        %v2495 = vsub.s32 %v2494, 127
        %v2496 = vand.u32 2147483647, %v588
        %v2497 = vand.u32 %v2496, 8388607
        %v2498 = vor.u32 %v2497, 8388608
        %v2499 = vsub.s32 0, %v2498
        %v2500 = vadd.s32 %v2495, 1
        %vm2501 = vcmp.gt.s32.totalorder %v2500, 0
        %v2502 = vsel %vm2501, %v2500, 0
        %v2503 = vshrl.u32 %v2502, 5
        %v2504 = vand.u32 %v2502, 31
        %v2505 = vsub.s32 32, %v2504
        %v2506 = vshrl.u32 683565275, %v2505
        %v2507 = vshll.u32 683565275, %v2504
        %v2508 = vshrl.u32 2475754826, %v2505
        %v2509 = vor.u32 %v2507, %v2508
        %v2510 = vshll.u32 2475754826, %v2504
        %v2511 = vshrl.u32 2131351028, %v2505
        %v2512 = vor.u32 %v2510, %v2511
        %v2513 = vshll.u32 2131351028, %v2504
        %v2514 = vshrl.u32 2102212464, %v2505
        %v2515 = vor.u32 %v2513, %v2514
        %v2516 = vshll.u32 2102212464, %v2504
        %v2517 = vshrl.u32 920167782, %v2505
        %v2518 = vor.u32 %v2516, %v2517
        %v2519 = vshll.u32 920167782, %v2504
        %v2520 = vshrl.u32 1326507024, %v2505
        %v2521 = vor.u32 %v2519, %v2520
        %vm2522 = vcmp.lt.s32.totalorder %v2503, 1
        %vm2523 = vcmp.lt.s32.totalorder %v2503, 2
        %vm2524 = vcmp.lt.s32.totalorder %v2503, 3
        %vm2525 = vcmp.lt.s32.totalorder %v2503, 4
        %v2526 = vsel %vm2522, %v2506, %v2509
        %v2527 = vsel %vm2525, %v2515, 2102212464
        %v2528 = vsel %vm2524, %v2512, %v2527
        %v2529 = vsel %vm2523, %v2526, %v2528
        %v2530 = vsel %vm2522, %v2509, %v2512
        %v2531 = vsel %vm2525, %v2518, 920167782
        %v2532 = vsel %vm2524, %v2515, %v2531
        %v2533 = vsel %vm2523, %v2530, %v2532
        %v2534 = vsel %vm2522, %v2512, %v2515
        %v2535 = vsel %vm2525, %v2521, 1326507024
        %v2536 = vsel %vm2524, %v2518, %v2535
        %v2537 = vsel %vm2523, %v2534, %v2536
        %v2538 = vshll.u32 %v2498, 8
        %v2539 = vmul.u32.u64.compose %v2538, %v2537
        %v2540 = vextract.low.u32 %v2539
        %v2541 = vextract.high.u32 %v2539
        %v2542 = vmul.u32.u64.compose %v2538, %v2533
        %v2543 = vextract.low.u32 %v2542
        %v2544 = vextract.high.u32 %v2542
        %v2545 = vmul.u32 %v2538, %v2529
        %v2546 = vadd.s32 %v2541, %v2543
        %vm2547 = vc.u32 %v2541, %v2543
        %v2548 = vadd.s32 %v2544, 1
        %v2549 = vsel %vm2547, %v2548, %v2544
        %v2550 = vadd.s32 %v2545, %v2549
        %v2551 = vadd.s32 %v2550, 536870912
        %v2552 = vshrl.u32 %v2551, 30
        %v2553 = vshll.u32 %v2552, 30
        %v2554 = vsub.s32 %v2550, %v2553
        %vm2555 = vcmp.lt.s32.totalorder %v2554, 0
        %v2556 = vsub.s32 0, %v2554
        %v2557 = vsel %vm2555, %v2556, %v2554
        %v2558 = vclz %v2557
        %v2559 = vsub.s32 %v2558, 2
        %vm2560 = vcmp.gt.s32.totalorder 0, %v2559
        %v2561 = vsel %vm2560, 0, %v2559
        %v2562 = vsub.s32 32, %v2561
        %v2563 = vshll.u32 %v2554, %v2561
        %v2564 = vshrl.u32 %v2546, %v2562
        %v2565 = vor.u32 %v2563, %v2564
        %v2566 = vsub.s32 4294967266, %v2561
        %v2567 = vadd.s32 %v2566, 127
        %v2568 = vshll.u32 %v2567, 23
        %v2569 = vor.u32 4788187, %v2568
        %v2570 = vand.u32 2147483647, %v2569
        %v2572 = vcvt.s32.f32 %v2565
        %v2573 = vmul.f32 %v2572, %v2570
        %v2574 = vxor.u32 %v2573, 2147483648
        %v2575 = vsel %vm2492, %v2574, %v2573
        %v2576 = vsub.s32 4, %v2552
        %v2577 = vsel %vm2492, %v2576, %v2552
        %v2578 = vsel %vm2491, %v588, %v2575
        %v2579 = vsel %vm2491, 0, %v2577
        %v2580 = vcosq.f32.pop %v2578
        %v2581 = vsinq.f32.pop %v2578
        %vm2582 = vweird.f32 %v588
        %v2583 = vadd.s32 %v2579, 3
        %v2584 = vand.u32 %v2583, 3
        %vm2585 = vcmp.lt.s32.totalorder %v2584, 2
        %vm2586 = vcmp.eq.s32.totalorder %v2584, 0
        %v2587 = vxor.u32 %v2581, 2147483648
        %v2588 = vsel %vm2586, %v2580, %v2587
        %vm2589 = vcmp.eq.s32.totalorder %v2584, 2
        %v2590 = vxor.u32 %v2580, 2147483648
        %v2591 = vsel %vm2589, %v2590, %v2581
        %v2592 = vsel %vm2585, %v2588, %v2591
        %v2593 = vsel %vm2582, nan, %v2592
        %v2594 = vand.u32 2147483647, %v593
        %vm2595 = vcmp.le.f32.partialorder %v2594, 0.7853982
        %vm2596 = vcmp.lt.s32.totalorder %v593, 0
        %v2597 = vand.u32 %v593, 2139095040
        %v2598 = vshrl.u32 %v2597, 23
        %v2599 = vsub.s32 %v2598, 127
        %v2600 = vand.u32 2147483647, %v593
        %v2601 = vand.u32 %v2600, 8388607
        %v2602 = vor.u32 %v2601, 8388608
        %v2603 = vsub.s32 0, %v2602
        %v2604 = vadd.s32 %v2599, 1
        %vm2605 = vcmp.gt.s32.totalorder %v2604, 0
        %v2606 = vsel %vm2605, %v2604, 0
        %v2607 = vshrl.u32 %v2606, 5
        %v2608 = vand.u32 %v2606, 31
        %v2609 = vsub.s32 32, %v2608
        %v2610 = vshrl.u32 683565275, %v2609
        %v2611 = vshll.u32 683565275, %v2608
        %v2612 = vshrl.u32 2475754826, %v2609
        %v2613 = vor.u32 %v2611, %v2612
        %v2614 = vshll.u32 2475754826, %v2608
        %v2615 = vshrl.u32 2131351028, %v2609
        %v2616 = vor.u32 %v2614, %v2615
        %v2617 = vshll.u32 2131351028, %v2608
        %v2618 = vshrl.u32 2102212464, %v2609
        %v2619 = vor.u32 %v2617, %v2618
        %v2620 = vshll.u32 2102212464, %v2608
        %v2621 = vshrl.u32 920167782, %v2609
        %v2622 = vor.u32 %v2620, %v2621
        %v2623 = vshll.u32 920167782, %v2608
        %v2624 = vshrl.u32 1326507024, %v2609
        %v2625 = vor.u32 %v2623, %v2624
        %vm2626 = vcmp.lt.s32.totalorder %v2607, 1
        %vm2627 = vcmp.lt.s32.totalorder %v2607, 2
        %vm2628 = vcmp.lt.s32.totalorder %v2607, 3
        %vm2629 = vcmp.lt.s32.totalorder %v2607, 4
        %v2630 = vsel %vm2626, %v2610, %v2613
        %v2631 = vsel %vm2629, %v2619, 2102212464
        %v2632 = vsel %vm2628, %v2616, %v2631
        %v2633 = vsel %vm2627, %v2630, %v2632
        %v2634 = vsel %vm2626, %v2613, %v2616
        %v2635 = vsel %vm2629, %v2622, 920167782
        %v2636 = vsel %vm2628, %v2619, %v2635
        %v2637 = vsel %vm2627, %v2634, %v2636
        %v2638 = vsel %vm2626, %v2616, %v2619
        %v2639 = vsel %vm2629, %v2625, 1326507024
        %v2640 = vsel %vm2628, %v2622, %v2639
        %v2641 = vsel %vm2627, %v2638, %v2640
        %v2642 = vshll.u32 %v2602, 8
        %v2643 = vmul.u32.u64.compose %v2642, %v2641
        %v2644 = vextract.low.u32 %v2643
        %v2645 = vextract.high.u32 %v2643
        %v2646 = vmul.u32.u64.compose %v2642, %v2637
        %v2647 = vextract.low.u32 %v2646
        %v2648 = vextract.high.u32 %v2646
        %v2649 = vmul.u32 %v2642, %v2633
        %v2650 = vadd.s32 %v2645, %v2647
        %vm2651 = vc.u32 %v2645, %v2647
        %v2652 = vadd.s32 %v2648, 1
        %v2653 = vsel %vm2651, %v2652, %v2648
        %v2654 = vadd.s32 %v2649, %v2653
        %v2655 = vadd.s32 %v2654, 536870912
        %v2656 = vshrl.u32 %v2655, 30
        %v2657 = vshll.u32 %v2656, 30
        %v2658 = vsub.s32 %v2654, %v2657
        %vm2659 = vcmp.lt.s32.totalorder %v2658, 0
        %v2660 = vsub.s32 0, %v2658
        %v2661 = vsel %vm2659, %v2660, %v2658
        %v2662 = vclz %v2661
        %v2663 = vsub.s32 %v2662, 2
        %vm2664 = vcmp.gt.s32.totalorder 0, %v2663
        %v2665 = vsel %vm2664, 0, %v2663
        %v2666 = vsub.s32 32, %v2665
        %v2667 = vshll.u32 %v2658, %v2665
        %v2668 = vshrl.u32 %v2650, %v2666
        %v2669 = vor.u32 %v2667, %v2668
        %v2670 = vsub.s32 4294967266, %v2665
        %v2671 = vadd.s32 %v2670, 127
        %v2672 = vshll.u32 %v2671, 23
        %v2673 = vor.u32 4788187, %v2672
        %v2674 = vand.u32 2147483647, %v2673
        %v2676 = vcvt.s32.f32 %v2669
        %v2677 = vmul.f32 %v2676, %v2674
        %v2678 = vxor.u32 %v2677, 2147483648
        %v2679 = vsel %vm2596, %v2678, %v2677
        %v2680 = vsub.s32 4, %v2656
        %v2681 = vsel %vm2596, %v2680, %v2656
        %v2682 = vsel %vm2595, %v593, %v2679
        %v2683 = vsel %vm2595, 0, %v2681
        %v2684 = vcosq.f32.pop %v2682
        %v2685 = vsinq.f32.pop %v2682
        %vm2686 = vweird.f32 %v593
        %v2687 = vadd.s32 %v2683, 3
        %v2688 = vand.u32 %v2687, 3
        %vm2689 = vcmp.lt.s32.totalorder %v2688, 2
        %vm2690 = vcmp.eq.s32.totalorder %v2688, 0
        %v2691 = vxor.u32 %v2685, 2147483648
        %v2692 = vsel %vm2690, %v2684, %v2691
        %vm2693 = vcmp.eq.s32.totalorder %v2688, 2
        %v2694 = vxor.u32 %v2684, 2147483648
        %v2695 = vsel %vm2693, %v2694, %v2685
        %v2696 = vsel %vm2689, %v2692, %v2695
        %v2697 = vsel %vm2686, nan, %v2696
        %v2698 = vand.u32 2147483647, %v598
        %vm2699 = vcmp.le.f32.partialorder %v2698, 0.7853982
        %vm2700 = vcmp.lt.s32.totalorder %v598, 0
        %v2701 = vand.u32 %v598, 2139095040
        %v2702 = vshrl.u32 %v2701, 23
        %v2703 = vsub.s32 %v2702, 127
        %v2704 = vand.u32 2147483647, %v598
        %v2705 = vand.u32 %v2704, 8388607
        %v2706 = vor.u32 %v2705, 8388608
        %v2707 = vsub.s32 0, %v2706
        %v2708 = vadd.s32 %v2703, 1
        %vm2709 = vcmp.gt.s32.totalorder %v2708, 0
        %v2710 = vsel %vm2709, %v2708, 0
        %v2711 = vshrl.u32 %v2710, 5
        %v2712 = vand.u32 %v2710, 31
        %v2713 = vsub.s32 32, %v2712
        %v2714 = vshrl.u32 683565275, %v2713
        %v2715 = vshll.u32 683565275, %v2712
        %v2716 = vshrl.u32 2475754826, %v2713
        %v2717 = vor.u32 %v2715, %v2716
        %v2718 = vshll.u32 2475754826, %v2712
        %v2719 = vshrl.u32 2131351028, %v2713
        %v2720 = vor.u32 %v2718, %v2719
        %v2721 = vshll.u32 2131351028, %v2712
        %v2722 = vshrl.u32 2102212464, %v2713
        %v2723 = vor.u32 %v2721, %v2722
        %v2724 = vshll.u32 2102212464, %v2712
        %v2725 = vshrl.u32 920167782, %v2713
        %v2726 = vor.u32 %v2724, %v2725
        %v2727 = vshll.u32 920167782, %v2712
        %v2728 = vshrl.u32 1326507024, %v2713
        %v2729 = vor.u32 %v2727, %v2728
        %vm2730 = vcmp.lt.s32.totalorder %v2711, 1
        %vm2731 = vcmp.lt.s32.totalorder %v2711, 2
        %vm2732 = vcmp.lt.s32.totalorder %v2711, 3
        %vm2733 = vcmp.lt.s32.totalorder %v2711, 4
        %v2734 = vsel %vm2730, %v2714, %v2717
        %v2735 = vsel %vm2733, %v2723, 2102212464
        %v2736 = vsel %vm2732, %v2720, %v2735
        %v2737 = vsel %vm2731, %v2734, %v2736
        %v2738 = vsel %vm2730, %v2717, %v2720
        %v2739 = vsel %vm2733, %v2726, 920167782
        %v2740 = vsel %vm2732, %v2723, %v2739
        %v2741 = vsel %vm2731, %v2738, %v2740
        %v2742 = vsel %vm2730, %v2720, %v2723
        %v2743 = vsel %vm2733, %v2729, 1326507024
        %v2744 = vsel %vm2732, %v2726, %v2743
        %v2745 = vsel %vm2731, %v2742, %v2744
        %v2746 = vshll.u32 %v2706, 8
        %v2747 = vmul.u32.u64.compose %v2746, %v2745
        %v2748 = vextract.low.u32 %v2747
        %v2749 = vextract.high.u32 %v2747
        %v2750 = vmul.u32.u64.compose %v2746, %v2741
        %v2751 = vextract.low.u32 %v2750
        %v2752 = vextract.high.u32 %v2750
        %v2753 = vmul.u32 %v2746, %v2737
        %v2754 = vadd.s32 %v2749, %v2751
        %vm2755 = vc.u32 %v2749, %v2751
        %v2756 = vadd.s32 %v2752, 1
        %v2757 = vsel %vm2755, %v2756, %v2752
        %v2758 = vadd.s32 %v2753, %v2757
        %v2759 = vadd.s32 %v2758, 536870912
        %v2760 = vshrl.u32 %v2759, 30
        %v2761 = vshll.u32 %v2760, 30
        %v2762 = vsub.s32 %v2758, %v2761
        %vm2763 = vcmp.lt.s32.totalorder %v2762, 0
        %v2764 = vsub.s32 0, %v2762
        %v2765 = vsel %vm2763, %v2764, %v2762
        %v2766 = vclz %v2765
        %v2767 = vsub.s32 %v2766, 2
        %vm2768 = vcmp.gt.s32.totalorder 0, %v2767
        %v2769 = vsel %vm2768, 0, %v2767
        %v2770 = vsub.s32 32, %v2769
        %v2771 = vshll.u32 %v2762, %v2769
        %v2772 = vshrl.u32 %v2754, %v2770
        %v2773 = vor.u32 %v2771, %v2772
        %v2774 = vsub.s32 4294967266, %v2769
        %v2775 = vadd.s32 %v2774, 127
        %v2776 = vshll.u32 %v2775, 23
        %v2777 = vor.u32 4788187, %v2776
        %v2778 = vand.u32 2147483647, %v2777
        %v2780 = vcvt.s32.f32 %v2773
        %v2781 = vmul.f32 %v2780, %v2778
        %v2782 = vxor.u32 %v2781, 2147483648
        %v2783 = vsel %vm2700, %v2782, %v2781
        %v2784 = vsub.s32 4, %v2760
        %v2785 = vsel %vm2700, %v2784, %v2760
        %v2786 = vsel %vm2699, %v598, %v2783
        %v2787 = vsel %vm2699, 0, %v2785
        %v2788 = vcosq.f32.pop %v2786
        %v2789 = vsinq.f32.pop %v2786
        %vm2790 = vweird.f32 %v598
        %v2791 = vadd.s32 %v2787, 3
        %v2792 = vand.u32 %v2791, 3
        %vm2793 = vcmp.lt.s32.totalorder %v2792, 2
        %vm2794 = vcmp.eq.s32.totalorder %v2792, 0
        %v2795 = vxor.u32 %v2789, 2147483648
        %v2796 = vsel %vm2794, %v2788, %v2795
        %vm2797 = vcmp.eq.s32.totalorder %v2792, 2
        %v2798 = vxor.u32 %v2788, 2147483648
        %v2799 = vsel %vm2797, %v2798, %v2789
        %v2800 = vsel %vm2793, %v2796, %v2799
        %v2801 = vsel %vm2790, nan, %v2800
        %v2802 = vand.u32 2147483647, %v603
        %vm2803 = vcmp.le.f32.partialorder %v2802, 0.7853982
        %vm2804 = vcmp.lt.s32.totalorder %v603, 0
        %v2805 = vand.u32 %v603, 2139095040
        %v2806 = vshrl.u32 %v2805, 23
        %v2807 = vsub.s32 %v2806, 127
        %v2808 = vand.u32 2147483647, %v603
        %v2809 = vand.u32 %v2808, 8388607
        %v2810 = vor.u32 %v2809, 8388608
        %v2811 = vsub.s32 0, %v2810
        %v2812 = vadd.s32 %v2807, 1
        %vm2813 = vcmp.gt.s32.totalorder %v2812, 0
        %v2814 = vsel %vm2813, %v2812, 0
        %v2815 = vshrl.u32 %v2814, 5
        %v2816 = vand.u32 %v2814, 31
        %v2817 = vsub.s32 32, %v2816
        %v2818 = vshrl.u32 683565275, %v2817
        %v2819 = vshll.u32 683565275, %v2816
        %v2820 = vshrl.u32 2475754826, %v2817
        %v2821 = vor.u32 %v2819, %v2820
        %v2822 = vshll.u32 2475754826, %v2816
        %v2823 = vshrl.u32 2131351028, %v2817
        %v2824 = vor.u32 %v2822, %v2823
        %v2825 = vshll.u32 2131351028, %v2816
        %v2826 = vshrl.u32 2102212464, %v2817
        %v2827 = vor.u32 %v2825, %v2826
        %v2828 = vshll.u32 2102212464, %v2816
        %v2829 = vshrl.u32 920167782, %v2817
        %v2830 = vor.u32 %v2828, %v2829
        %v2831 = vshll.u32 920167782, %v2816
        %v2832 = vshrl.u32 1326507024, %v2817
        %v2833 = vor.u32 %v2831, %v2832
        %vm2834 = vcmp.lt.s32.totalorder %v2815, 1
        %vm2835 = vcmp.lt.s32.totalorder %v2815, 2
        %vm2836 = vcmp.lt.s32.totalorder %v2815, 3
        %vm2837 = vcmp.lt.s32.totalorder %v2815, 4
        %v2838 = vsel %vm2834, %v2818, %v2821
        %v2839 = vsel %vm2837, %v2827, 2102212464
        %v2840 = vsel %vm2836, %v2824, %v2839
        %v2841 = vsel %vm2835, %v2838, %v2840
        %v2842 = vsel %vm2834, %v2821, %v2824
        %v2843 = vsel %vm2837, %v2830, 920167782
        %v2844 = vsel %vm2836, %v2827, %v2843
        %v2845 = vsel %vm2835, %v2842, %v2844
        %v2846 = vsel %vm2834, %v2824, %v2827
        %v2847 = vsel %vm2837, %v2833, 1326507024
        %v2848 = vsel %vm2836, %v2830, %v2847
        %v2849 = vsel %vm2835, %v2846, %v2848
        %v2850 = vshll.u32 %v2810, 8
        %v2851 = vmul.u32.u64.compose %v2850, %v2849
        %v2852 = vextract.low.u32 %v2851
        %v2853 = vextract.high.u32 %v2851
        %v2854 = vmul.u32.u64.compose %v2850, %v2845
        %v2855 = vextract.low.u32 %v2854
        %v2856 = vextract.high.u32 %v2854
        %v2857 = vmul.u32 %v2850, %v2841
        %v2858 = vadd.s32 %v2853, %v2855
        %vm2859 = vc.u32 %v2853, %v2855
        %v2860 = vadd.s32 %v2856, 1
        %v2861 = vsel %vm2859, %v2860, %v2856
        %v2862 = vadd.s32 %v2857, %v2861
        %v2863 = vadd.s32 %v2862, 536870912
        %v2864 = vshrl.u32 %v2863, 30
        %v2865 = vshll.u32 %v2864, 30
        %v2866 = vsub.s32 %v2862, %v2865
        %vm2867 = vcmp.lt.s32.totalorder %v2866, 0
        %v2868 = vsub.s32 0, %v2866
        %v2869 = vsel %vm2867, %v2868, %v2866
        %v2870 = vclz %v2869
        %v2871 = vsub.s32 %v2870, 2
        %vm2872 = vcmp.gt.s32.totalorder 0, %v2871
        %v2873 = vsel %vm2872, 0, %v2871
        %v2874 = vsub.s32 32, %v2873
        %v2875 = vshll.u32 %v2866, %v2873
        %v2876 = vshrl.u32 %v2858, %v2874
        %v2877 = vor.u32 %v2875, %v2876
        %v2878 = vsub.s32 4294967266, %v2873
        %v2879 = vadd.s32 %v2878, 127
        %v2880 = vshll.u32 %v2879, 23
        %v2881 = vor.u32 4788187, %v2880
        %v2882 = vand.u32 2147483647, %v2881
        %v2884 = vcvt.s32.f32 %v2877
        %v2885 = vmul.f32 %v2884, %v2882
        %v2886 = vxor.u32 %v2885, 2147483648
        %v2887 = vsel %vm2804, %v2886, %v2885
        %v2888 = vsub.s32 4, %v2864
        %v2889 = vsel %vm2804, %v2888, %v2864
        %v2890 = vsel %vm2803, %v603, %v2887
        %v2891 = vsel %vm2803, 0, %v2889
        %v2892 = vcosq.f32.pop %v2890
        %v2893 = vsinq.f32.pop %v2890
        %vm2894 = vweird.f32 %v603
        %v2895 = vadd.s32 %v2891, 3
        %v2896 = vand.u32 %v2895, 3
        %vm2897 = vcmp.lt.s32.totalorder %v2896, 2
        %vm2898 = vcmp.eq.s32.totalorder %v2896, 0
        %v2899 = vxor.u32 %v2893, 2147483648
        %v2900 = vsel %vm2898, %v2892, %v2899
        %vm2901 = vcmp.eq.s32.totalorder %v2896, 2
        %v2902 = vxor.u32 %v2892, 2147483648
        %v2903 = vsel %vm2901, %v2902, %v2893
        %v2904 = vsel %vm2897, %v2900, %v2903
        %v2905 = vsel %vm2894, nan, %v2904
        %v2906 = vand.u32 2147483647, %v608
        %vm2907 = vcmp.le.f32.partialorder %v2906, 0.7853982
        %vm2908 = vcmp.lt.s32.totalorder %v608, 0
        %v2909 = vand.u32 %v608, 2139095040
        %v2910 = vshrl.u32 %v2909, 23
        %v2911 = vsub.s32 %v2910, 127
        %v2912 = vand.u32 2147483647, %v608
        %v2913 = vand.u32 %v2912, 8388607
        %v2914 = vor.u32 %v2913, 8388608
        %v2915 = vsub.s32 0, %v2914
        %v2916 = vadd.s32 %v2911, 1
        %vm2917 = vcmp.gt.s32.totalorder %v2916, 0
        %v2918 = vsel %vm2917, %v2916, 0
        %v2919 = vshrl.u32 %v2918, 5
        %v2920 = vand.u32 %v2918, 31
        %v2921 = vsub.s32 32, %v2920
        %v2922 = vshrl.u32 683565275, %v2921
        %v2923 = vshll.u32 683565275, %v2920
        %v2924 = vshrl.u32 2475754826, %v2921
        %v2925 = vor.u32 %v2923, %v2924
        %v2926 = vshll.u32 2475754826, %v2920
        %v2927 = vshrl.u32 2131351028, %v2921
        %v2928 = vor.u32 %v2926, %v2927
        %v2929 = vshll.u32 2131351028, %v2920
        %v2930 = vshrl.u32 2102212464, %v2921
        %v2931 = vor.u32 %v2929, %v2930
        %v2932 = vshll.u32 2102212464, %v2920
        %v2933 = vshrl.u32 920167782, %v2921
        %v2934 = vor.u32 %v2932, %v2933
        %v2935 = vshll.u32 920167782, %v2920
        %v2936 = vshrl.u32 1326507024, %v2921
        %v2937 = vor.u32 %v2935, %v2936
        %vm2938 = vcmp.lt.s32.totalorder %v2919, 1
        %vm2939 = vcmp.lt.s32.totalorder %v2919, 2
        %vm2940 = vcmp.lt.s32.totalorder %v2919, 3
        %vm2941 = vcmp.lt.s32.totalorder %v2919, 4
        %v2942 = vsel %vm2938, %v2922, %v2925
        %v2943 = vsel %vm2941, %v2931, 2102212464
        %v2944 = vsel %vm2940, %v2928, %v2943
        %v2945 = vsel %vm2939, %v2942, %v2944
        %v2946 = vsel %vm2938, %v2925, %v2928
        %v2947 = vsel %vm2941, %v2934, 920167782
        %v2948 = vsel %vm2940, %v2931, %v2947
        %v2949 = vsel %vm2939, %v2946, %v2948
        %v2950 = vsel %vm2938, %v2928, %v2931
        %v2951 = vsel %vm2941, %v2937, 1326507024
        %v2952 = vsel %vm2940, %v2934, %v2951
        %v2953 = vsel %vm2939, %v2950, %v2952
        %v2954 = vshll.u32 %v2914, 8
        %v2955 = vmul.u32.u64.compose %v2954, %v2953
        %v2956 = vextract.low.u32 %v2955
        %v2957 = vextract.high.u32 %v2955
        %v2958 = vmul.u32.u64.compose %v2954, %v2949
        %v2959 = vextract.low.u32 %v2958
        %v2960 = vextract.high.u32 %v2958
        %v2961 = vmul.u32 %v2954, %v2945
        %v2962 = vadd.s32 %v2957, %v2959
        %vm2963 = vc.u32 %v2957, %v2959
        %v2964 = vadd.s32 %v2960, 1
        %v2965 = vsel %vm2963, %v2964, %v2960
        %v2966 = vadd.s32 %v2961, %v2965
        %v2967 = vadd.s32 %v2966, 536870912
        %v2968 = vshrl.u32 %v2967, 30
        %v2969 = vshll.u32 %v2968, 30
        %v2970 = vsub.s32 %v2966, %v2969
        %vm2971 = vcmp.lt.s32.totalorder %v2970, 0
        %v2972 = vsub.s32 0, %v2970
        %v2973 = vsel %vm2971, %v2972, %v2970
        %v2974 = vclz %v2973
        %v2975 = vsub.s32 %v2974, 2
        %vm2976 = vcmp.gt.s32.totalorder 0, %v2975
        %v2977 = vsel %vm2976, 0, %v2975
        %v2978 = vsub.s32 32, %v2977
        %v2979 = vshll.u32 %v2970, %v2977
        %v2980 = vshrl.u32 %v2962, %v2978
        %v2981 = vor.u32 %v2979, %v2980
        %v2982 = vsub.s32 4294967266, %v2977
        %v2983 = vadd.s32 %v2982, 127
        %v2984 = vshll.u32 %v2983, 23
        %v2985 = vor.u32 4788187, %v2984
        %v2986 = vand.u32 2147483647, %v2985
        %v2988 = vcvt.s32.f32 %v2981
        %v2989 = vmul.f32 %v2988, %v2986
        %v2990 = vxor.u32 %v2989, 2147483648
        %v2991 = vsel %vm2908, %v2990, %v2989
        %v2992 = vsub.s32 4, %v2968
        %v2993 = vsel %vm2908, %v2992, %v2968
        %v2994 = vsel %vm2907, %v608, %v2991
        %v2995 = vsel %vm2907, 0, %v2993
        %v2996 = vcosq.f32.pop %v2994
        %v2997 = vsinq.f32.pop %v2994
        %vm2998 = vweird.f32 %v608
        %v2999 = vadd.s32 %v2995, 3
        %v3000 = vand.u32 %v2999, 3
        %vm3001 = vcmp.lt.s32.totalorder %v3000, 2
        %vm3002 = vcmp.eq.s32.totalorder %v3000, 0
        %v3003 = vxor.u32 %v2997, 2147483648
        %v3004 = vsel %vm3002, %v2996, %v3003
        %vm3005 = vcmp.eq.s32.totalorder %v3000, 2
        %v3006 = vxor.u32 %v2996, 2147483648
        %v3007 = vsel %vm3005, %v3006, %v2997
        %v3008 = vsel %vm3001, %v3004, %v3007
        %v3009 = vsel %vm2998, nan, %v3008
        %v3010 = vand.u32 2147483647, %v613
        %vm3011 = vcmp.le.f32.partialorder %v3010, 0.7853982
        %vm3012 = vcmp.lt.s32.totalorder %v613, 0
        %v3013 = vand.u32 %v613, 2139095040
        %v3014 = vshrl.u32 %v3013, 23
        %v3015 = vsub.s32 %v3014, 127
        %v3016 = vand.u32 2147483647, %v613
        %v3017 = vand.u32 %v3016, 8388607
        %v3018 = vor.u32 %v3017, 8388608
        %v3019 = vsub.s32 0, %v3018
        %v3020 = vadd.s32 %v3015, 1
        %vm3021 = vcmp.gt.s32.totalorder %v3020, 0
        %v3022 = vsel %vm3021, %v3020, 0
        %v3023 = vshrl.u32 %v3022, 5
        %v3024 = vand.u32 %v3022, 31
        %v3025 = vsub.s32 32, %v3024
        %v3026 = vshrl.u32 683565275, %v3025
        %v3027 = vshll.u32 683565275, %v3024
        %v3028 = vshrl.u32 2475754826, %v3025
        %v3029 = vor.u32 %v3027, %v3028
        %v3030 = vshll.u32 2475754826, %v3024
        %v3031 = vshrl.u32 2131351028, %v3025
        %v3032 = vor.u32 %v3030, %v3031
        %v3033 = vshll.u32 2131351028, %v3024
        %v3034 = vshrl.u32 2102212464, %v3025
        %v3035 = vor.u32 %v3033, %v3034
        %v3036 = vshll.u32 2102212464, %v3024
        %v3037 = vshrl.u32 920167782, %v3025
        %v3038 = vor.u32 %v3036, %v3037
        %v3039 = vshll.u32 920167782, %v3024
        %v3040 = vshrl.u32 1326507024, %v3025
        %v3041 = vor.u32 %v3039, %v3040
        %vm3042 = vcmp.lt.s32.totalorder %v3023, 1
        %vm3043 = vcmp.lt.s32.totalorder %v3023, 2
        %vm3044 = vcmp.lt.s32.totalorder %v3023, 3
        %vm3045 = vcmp.lt.s32.totalorder %v3023, 4
        %v3046 = vsel %vm3042, %v3026, %v3029
        %v3047 = vsel %vm3045, %v3035, 2102212464
        %v3048 = vsel %vm3044, %v3032, %v3047
        %v3049 = vsel %vm3043, %v3046, %v3048
        %v3050 = vsel %vm3042, %v3029, %v3032
        %v3051 = vsel %vm3045, %v3038, 920167782
        %v3052 = vsel %vm3044, %v3035, %v3051
        %v3053 = vsel %vm3043, %v3050, %v3052
        %v3054 = vsel %vm3042, %v3032, %v3035
        %v3055 = vsel %vm3045, %v3041, 1326507024
        %v3056 = vsel %vm3044, %v3038, %v3055
        %v3057 = vsel %vm3043, %v3054, %v3056
        %v3058 = vshll.u32 %v3018, 8
        %v3059 = vmul.u32.u64.compose %v3058, %v3057
        %v3060 = vextract.low.u32 %v3059
        %v3061 = vextract.high.u32 %v3059
        %v3062 = vmul.u32.u64.compose %v3058, %v3053
        %v3063 = vextract.low.u32 %v3062
        %v3064 = vextract.high.u32 %v3062
        %v3065 = vmul.u32 %v3058, %v3049
        %v3066 = vadd.s32 %v3061, %v3063
        %vm3067 = vc.u32 %v3061, %v3063
        %v3068 = vadd.s32 %v3064, 1
        %v3069 = vsel %vm3067, %v3068, %v3064
        %v3070 = vadd.s32 %v3065, %v3069
        %v3071 = vadd.s32 %v3070, 536870912
        %v3072 = vshrl.u32 %v3071, 30
        %v3073 = vshll.u32 %v3072, 30
        %v3074 = vsub.s32 %v3070, %v3073
        %vm3075 = vcmp.lt.s32.totalorder %v3074, 0
        %v3076 = vsub.s32 0, %v3074
        %v3077 = vsel %vm3075, %v3076, %v3074
        %v3078 = vclz %v3077
        %v3079 = vsub.s32 %v3078, 2
        %vm3080 = vcmp.gt.s32.totalorder 0, %v3079
        %v3081 = vsel %vm3080, 0, %v3079
        %v3082 = vsub.s32 32, %v3081
        %v3083 = vshll.u32 %v3074, %v3081
        %v3084 = vshrl.u32 %v3066, %v3082
        %v3085 = vor.u32 %v3083, %v3084
        %v3086 = vsub.s32 4294967266, %v3081
        %v3087 = vadd.s32 %v3086, 127
        %v3088 = vshll.u32 %v3087, 23
        %v3089 = vor.u32 4788187, %v3088
        %v3090 = vand.u32 2147483647, %v3089
        %v3092 = vcvt.s32.f32 %v3085
        %v3093 = vmul.f32 %v3092, %v3090
        %v3094 = vxor.u32 %v3093, 2147483648
        %v3095 = vsel %vm3012, %v3094, %v3093
        %v3096 = vsub.s32 4, %v3072
        %v3097 = vsel %vm3012, %v3096, %v3072
        %v3098 = vsel %vm3011, %v613, %v3095
        %v3099 = vsel %vm3011, 0, %v3097
        %v3100 = vcosq.f32.pop %v3098
        %v3101 = vsinq.f32.pop %v3098
        %vm3102 = vweird.f32 %v613
        %v3103 = vadd.s32 %v3099, 3
        %v3104 = vand.u32 %v3103, 3
        %vm3105 = vcmp.lt.s32.totalorder %v3104, 2
        %vm3106 = vcmp.eq.s32.totalorder %v3104, 0
        %v3107 = vxor.u32 %v3101, 2147483648
        %v3108 = vsel %vm3106, %v3100, %v3107
        %vm3109 = vcmp.eq.s32.totalorder %v3104, 2
        %v3110 = vxor.u32 %v3100, 2147483648
        %v3111 = vsel %vm3109, %v3110, %v3101
        %v3112 = vsel %vm3105, %v3108, %v3111
        %v3113 = vsel %vm3102, nan, %v3112
        %v3114 = vand.u32 2147483647, %v618
        %vm3115 = vcmp.le.f32.partialorder %v3114, 0.7853982
        %vm3116 = vcmp.lt.s32.totalorder %v618, 0
        %v3117 = vand.u32 %v618, 2139095040
        %v3118 = vshrl.u32 %v3117, 23
        %v3119 = vsub.s32 %v3118, 127
        %v3120 = vand.u32 2147483647, %v618
        %v3121 = vand.u32 %v3120, 8388607
        %v3122 = vor.u32 %v3121, 8388608
        %v3123 = vsub.s32 0, %v3122
        %v3124 = vadd.s32 %v3119, 1
        %vm3125 = vcmp.gt.s32.totalorder %v3124, 0
        %v3126 = vsel %vm3125, %v3124, 0
        %v3127 = vshrl.u32 %v3126, 5
        %v3128 = vand.u32 %v3126, 31
        %v3129 = vsub.s32 32, %v3128
        %v3130 = vshrl.u32 683565275, %v3129
        %v3131 = vshll.u32 683565275, %v3128
        %v3132 = vshrl.u32 2475754826, %v3129
        %v3133 = vor.u32 %v3131, %v3132
        %v3134 = vshll.u32 2475754826, %v3128
        %v3135 = vshrl.u32 2131351028, %v3129
        %v3136 = vor.u32 %v3134, %v3135
        %v3137 = vshll.u32 2131351028, %v3128
        %v3138 = vshrl.u32 2102212464, %v3129
        %v3139 = vor.u32 %v3137, %v3138
        %v3140 = vshll.u32 2102212464, %v3128
        %v3141 = vshrl.u32 920167782, %v3129
        %v3142 = vor.u32 %v3140, %v3141
        %v3143 = vshll.u32 920167782, %v3128
        %v3144 = vshrl.u32 1326507024, %v3129
        %v3145 = vor.u32 %v3143, %v3144
        %vm3146 = vcmp.lt.s32.totalorder %v3127, 1
        %vm3147 = vcmp.lt.s32.totalorder %v3127, 2
        %vm3148 = vcmp.lt.s32.totalorder %v3127, 3
        %vm3149 = vcmp.lt.s32.totalorder %v3127, 4
        %v3150 = vsel %vm3146, %v3130, %v3133
        %v3151 = vsel %vm3149, %v3139, 2102212464
        %v3152 = vsel %vm3148, %v3136, %v3151
        %v3153 = vsel %vm3147, %v3150, %v3152
        %v3154 = vsel %vm3146, %v3133, %v3136
        %v3155 = vsel %vm3149, %v3142, 920167782
        %v3156 = vsel %vm3148, %v3139, %v3155
        %v3157 = vsel %vm3147, %v3154, %v3156
        %v3158 = vsel %vm3146, %v3136, %v3139
        %v3159 = vsel %vm3149, %v3145, 1326507024
        %v3160 = vsel %vm3148, %v3142, %v3159
        %v3161 = vsel %vm3147, %v3158, %v3160
        %v3162 = vshll.u32 %v3122, 8
        %v3163 = vmul.u32.u64.compose %v3162, %v3161
        %v3164 = vextract.low.u32 %v3163
        %v3165 = vextract.high.u32 %v3163
        %v3166 = vmul.u32.u64.compose %v3162, %v3157
        %v3167 = vextract.low.u32 %v3166
        %v3168 = vextract.high.u32 %v3166
        %v3169 = vmul.u32 %v3162, %v3153
        %v3170 = vadd.s32 %v3165, %v3167
        %vm3171 = vc.u32 %v3165, %v3167
        %v3172 = vadd.s32 %v3168, 1
        %v3173 = vsel %vm3171, %v3172, %v3168
        %v3174 = vadd.s32 %v3169, %v3173
        %v3175 = vadd.s32 %v3174, 536870912
        %v3176 = vshrl.u32 %v3175, 30
        %v3177 = vshll.u32 %v3176, 30
        %v3178 = vsub.s32 %v3174, %v3177
        %vm3179 = vcmp.lt.s32.totalorder %v3178, 0
        %v3180 = vsub.s32 0, %v3178
        %v3181 = vsel %vm3179, %v3180, %v3178
        %v3182 = vclz %v3181
        %v3183 = vsub.s32 %v3182, 2
        %vm3184 = vcmp.gt.s32.totalorder 0, %v3183
        %v3185 = vsel %vm3184, 0, %v3183
        %v3186 = vsub.s32 32, %v3185
        %v3187 = vshll.u32 %v3178, %v3185
        %v3188 = vshrl.u32 %v3170, %v3186
        %v3189 = vor.u32 %v3187, %v3188
        %v3190 = vsub.s32 4294967266, %v3185
        %v3191 = vadd.s32 %v3190, 127
        %v3192 = vshll.u32 %v3191, 23
        %v3193 = vor.u32 4788187, %v3192
        %v3194 = vand.u32 2147483647, %v3193
        %v3196 = vcvt.s32.f32 %v3189
        %v3197 = vmul.f32 %v3196, %v3194
        %v3198 = vxor.u32 %v3197, 2147483648
        %v3199 = vsel %vm3116, %v3198, %v3197
        %v3200 = vsub.s32 4, %v3176
        %v3201 = vsel %vm3116, %v3200, %v3176
        %v3202 = vsel %vm3115, %v618, %v3199
        %v3203 = vsel %vm3115, 0, %v3201
        %v3204 = vcosq.f32.pop %v3202
        %v3205 = vsinq.f32.pop %v3202
        %vm3206 = vweird.f32 %v618
        %v3207 = vadd.s32 %v3203, 3
        %v3208 = vand.u32 %v3207, 3
        %vm3209 = vcmp.lt.s32.totalorder %v3208, 2
        %vm3210 = vcmp.eq.s32.totalorder %v3208, 0
        %v3211 = vxor.u32 %v3205, 2147483648
        %v3212 = vsel %vm3210, %v3204, %v3211
        %vm3213 = vcmp.eq.s32.totalorder %v3208, 2
        %v3214 = vxor.u32 %v3204, 2147483648
        %v3215 = vsel %vm3213, %v3214, %v3205
        %v3216 = vsel %vm3209, %v3212, %v3215
        %v3217 = vsel %vm3206, nan, %v3216
        %v3218 = vand.u32 2147483647, %v623
        %vm3219 = vcmp.le.f32.partialorder %v3218, 0.7853982
        %vm3220 = vcmp.lt.s32.totalorder %v623, 0
        %v3221 = vand.u32 %v623, 2139095040
        %v3222 = vshrl.u32 %v3221, 23
        %v3223 = vsub.s32 %v3222, 127
        %v3224 = vand.u32 2147483647, %v623
        %v3225 = vand.u32 %v3224, 8388607
        %v3226 = vor.u32 %v3225, 8388608
        %v3227 = vsub.s32 0, %v3226
        %v3228 = vadd.s32 %v3223, 1
        %vm3229 = vcmp.gt.s32.totalorder %v3228, 0
        %v3230 = vsel %vm3229, %v3228, 0
        %v3231 = vshrl.u32 %v3230, 5
        %v3232 = vand.u32 %v3230, 31
        %v3233 = vsub.s32 32, %v3232
        %v3234 = vshrl.u32 683565275, %v3233
        %v3235 = vshll.u32 683565275, %v3232
        %v3236 = vshrl.u32 2475754826, %v3233
        %v3237 = vor.u32 %v3235, %v3236
        %v3238 = vshll.u32 2475754826, %v3232
        %v3239 = vshrl.u32 2131351028, %v3233
        %v3240 = vor.u32 %v3238, %v3239
        %v3241 = vshll.u32 2131351028, %v3232
        %v3242 = vshrl.u32 2102212464, %v3233
        %v3243 = vor.u32 %v3241, %v3242
        %v3244 = vshll.u32 2102212464, %v3232
        %v3245 = vshrl.u32 920167782, %v3233
        %v3246 = vor.u32 %v3244, %v3245
        %v3247 = vshll.u32 920167782, %v3232
        %v3248 = vshrl.u32 1326507024, %v3233
        %v3249 = vor.u32 %v3247, %v3248
        %vm3250 = vcmp.lt.s32.totalorder %v3231, 1
        %vm3251 = vcmp.lt.s32.totalorder %v3231, 2
        %vm3252 = vcmp.lt.s32.totalorder %v3231, 3
        %vm3253 = vcmp.lt.s32.totalorder %v3231, 4
        %v3254 = vsel %vm3250, %v3234, %v3237
        %v3255 = vsel %vm3253, %v3243, 2102212464
        %v3256 = vsel %vm3252, %v3240, %v3255
        %v3257 = vsel %vm3251, %v3254, %v3256
        %v3258 = vsel %vm3250, %v3237, %v3240
        %v3259 = vsel %vm3253, %v3246, 920167782
        %v3260 = vsel %vm3252, %v3243, %v3259
        %v3261 = vsel %vm3251, %v3258, %v3260
        %v3262 = vsel %vm3250, %v3240, %v3243
        %v3263 = vsel %vm3253, %v3249, 1326507024
        %v3264 = vsel %vm3252, %v3246, %v3263
        %v3265 = vsel %vm3251, %v3262, %v3264
        %v3266 = vshll.u32 %v3226, 8
        %v3267 = vmul.u32.u64.compose %v3266, %v3265
        %v3268 = vextract.low.u32 %v3267
        %v3269 = vextract.high.u32 %v3267
        %v3270 = vmul.u32.u64.compose %v3266, %v3261
        %v3271 = vextract.low.u32 %v3270
        %v3272 = vextract.high.u32 %v3270
        %v3273 = vmul.u32 %v3266, %v3257
        %v3274 = vadd.s32 %v3269, %v3271
        %vm3275 = vc.u32 %v3269, %v3271
        %v3276 = vadd.s32 %v3272, 1
        %v3277 = vsel %vm3275, %v3276, %v3272
        %v3278 = vadd.s32 %v3273, %v3277
        %v3279 = vadd.s32 %v3278, 536870912
        %v3280 = vshrl.u32 %v3279, 30
        %v3281 = vshll.u32 %v3280, 30
        %v3282 = vsub.s32 %v3278, %v3281
        %vm3283 = vcmp.lt.s32.totalorder %v3282, 0
        %v3284 = vsub.s32 0, %v3282
        %v3285 = vsel %vm3283, %v3284, %v3282
        %v3286 = vclz %v3285
        %v3287 = vsub.s32 %v3286, 2
        %vm3288 = vcmp.gt.s32.totalorder 0, %v3287
        %v3289 = vsel %vm3288, 0, %v3287
        %v3290 = vsub.s32 32, %v3289
        %v3291 = vshll.u32 %v3282, %v3289
        %v3292 = vshrl.u32 %v3274, %v3290
        %v3293 = vor.u32 %v3291, %v3292
        %v3294 = vsub.s32 4294967266, %v3289
        %v3295 = vadd.s32 %v3294, 127
        %v3296 = vshll.u32 %v3295, 23
        %v3297 = vor.u32 4788187, %v3296
        %v3298 = vand.u32 2147483647, %v3297
        %v3300 = vcvt.s32.f32 %v3293
        %v3301 = vmul.f32 %v3300, %v3298
        %v3302 = vxor.u32 %v3301, 2147483648
        %v3303 = vsel %vm3220, %v3302, %v3301
        %v3304 = vsub.s32 4, %v3280
        %v3305 = vsel %vm3220, %v3304, %v3280
        %v3306 = vsel %vm3219, %v623, %v3303
        %v3307 = vsel %vm3219, 0, %v3305
        %v3308 = vcosq.f32.pop %v3306
        %v3309 = vsinq.f32.pop %v3306
        %vm3310 = vweird.f32 %v623
        %v3311 = vadd.s32 %v3307, 3
        %v3312 = vand.u32 %v3311, 3
        %vm3313 = vcmp.lt.s32.totalorder %v3312, 2
        %vm3314 = vcmp.eq.s32.totalorder %v3312, 0
        %v3315 = vxor.u32 %v3309, 2147483648
        %v3316 = vsel %vm3314, %v3308, %v3315
        %vm3317 = vcmp.eq.s32.totalorder %v3312, 2
        %v3318 = vxor.u32 %v3308, 2147483648
        %v3319 = vsel %vm3317, %v3318, %v3309
        %v3320 = vsel %vm3313, %v3316, %v3319
        %v3321 = vsel %vm3310, nan, %v3320
        %v3322 = vand.u32 2147483647, %v628
        %vm3323 = vcmp.le.f32.partialorder %v3322, 0.7853982
        %vm3324 = vcmp.lt.s32.totalorder %v628, 0
        %v3325 = vand.u32 %v628, 2139095040
        %v3326 = vshrl.u32 %v3325, 23
        %v3327 = vsub.s32 %v3326, 127
        %v3328 = vand.u32 2147483647, %v628
        %v3329 = vand.u32 %v3328, 8388607
        %v3330 = vor.u32 %v3329, 8388608
        %v3331 = vsub.s32 0, %v3330
        %v3332 = vadd.s32 %v3327, 1
        %vm3333 = vcmp.gt.s32.totalorder %v3332, 0
        %v3334 = vsel %vm3333, %v3332, 0
        %v3335 = vshrl.u32 %v3334, 5
        %v3336 = vand.u32 %v3334, 31
        %v3337 = vsub.s32 32, %v3336
        %v3338 = vshrl.u32 683565275, %v3337
        %v3339 = vshll.u32 683565275, %v3336
        %v3340 = vshrl.u32 2475754826, %v3337
        %v3341 = vor.u32 %v3339, %v3340
        %v3342 = vshll.u32 2475754826, %v3336
        %v3343 = vshrl.u32 2131351028, %v3337
        %v3344 = vor.u32 %v3342, %v3343
        %v3345 = vshll.u32 2131351028, %v3336
        %v3346 = vshrl.u32 2102212464, %v3337
        %v3347 = vor.u32 %v3345, %v3346
        %v3348 = vshll.u32 2102212464, %v3336
        %v3349 = vshrl.u32 920167782, %v3337
        %v3350 = vor.u32 %v3348, %v3349
        %v3351 = vshll.u32 920167782, %v3336
        %v3352 = vshrl.u32 1326507024, %v3337
        %v3353 = vor.u32 %v3351, %v3352
        %vm3354 = vcmp.lt.s32.totalorder %v3335, 1
        %vm3355 = vcmp.lt.s32.totalorder %v3335, 2
        %vm3356 = vcmp.lt.s32.totalorder %v3335, 3
        %vm3357 = vcmp.lt.s32.totalorder %v3335, 4
        %v3358 = vsel %vm3354, %v3338, %v3341
        %v3359 = vsel %vm3357, %v3347, 2102212464
        %v3360 = vsel %vm3356, %v3344, %v3359
        %v3361 = vsel %vm3355, %v3358, %v3360
        %v3362 = vsel %vm3354, %v3341, %v3344
        %v3363 = vsel %vm3357, %v3350, 920167782
        %v3364 = vsel %vm3356, %v3347, %v3363
        %v3365 = vsel %vm3355, %v3362, %v3364
        %v3366 = vsel %vm3354, %v3344, %v3347
        %v3367 = vsel %vm3357, %v3353, 1326507024
        %v3368 = vsel %vm3356, %v3350, %v3367
        %v3369 = vsel %vm3355, %v3366, %v3368
        %v3370 = vshll.u32 %v3330, 8
        %v3371 = vmul.u32.u64.compose %v3370, %v3369
        %v3372 = vextract.low.u32 %v3371
        %v3373 = vextract.high.u32 %v3371
        %v3374 = vmul.u32.u64.compose %v3370, %v3365
        %v3375 = vextract.low.u32 %v3374
        %v3376 = vextract.high.u32 %v3374
        %v3377 = vmul.u32 %v3370, %v3361
        %v3378 = vadd.s32 %v3373, %v3375
        %vm3379 = vc.u32 %v3373, %v3375
        %v3380 = vadd.s32 %v3376, 1
        %v3381 = vsel %vm3379, %v3380, %v3376
        %v3382 = vadd.s32 %v3377, %v3381
        %v3383 = vadd.s32 %v3382, 536870912
        %v3384 = vshrl.u32 %v3383, 30
        %v3385 = vshll.u32 %v3384, 30
        %v3386 = vsub.s32 %v3382, %v3385
        %vm3387 = vcmp.lt.s32.totalorder %v3386, 0
        %v3388 = vsub.s32 0, %v3386
        %v3389 = vsel %vm3387, %v3388, %v3386
        %v3390 = vclz %v3389
        %v3391 = vsub.s32 %v3390, 2
        %vm3392 = vcmp.gt.s32.totalorder 0, %v3391
        %v3393 = vsel %vm3392, 0, %v3391
        %v3394 = vsub.s32 32, %v3393
        %v3395 = vshll.u32 %v3386, %v3393
        %v3396 = vshrl.u32 %v3378, %v3394
        %v3397 = vor.u32 %v3395, %v3396
        %v3398 = vsub.s32 4294967266, %v3393
        %v3399 = vadd.s32 %v3398, 127
        %v3400 = vshll.u32 %v3399, 23
        %v3401 = vor.u32 4788187, %v3400
        %v3402 = vand.u32 2147483647, %v3401
        %v3404 = vcvt.s32.f32 %v3397
        %v3405 = vmul.f32 %v3404, %v3402
        %v3406 = vxor.u32 %v3405, 2147483648
        %v3407 = vsel %vm3324, %v3406, %v3405
        %v3408 = vsub.s32 4, %v3384
        %v3409 = vsel %vm3324, %v3408, %v3384
        %v3410 = vsel %vm3323, %v628, %v3407
        %v3411 = vsel %vm3323, 0, %v3409
        %v3412 = vcosq.f32.pop %v3410
        %v3413 = vsinq.f32.pop %v3410
        %vm3414 = vweird.f32 %v628
        %v3415 = vadd.s32 %v3411, 3
        %v3416 = vand.u32 %v3415, 3
        %vm3417 = vcmp.lt.s32.totalorder %v3416, 2
        %vm3418 = vcmp.eq.s32.totalorder %v3416, 0
        %v3419 = vxor.u32 %v3413, 2147483648
        %v3420 = vsel %vm3418, %v3412, %v3419
        %vm3421 = vcmp.eq.s32.totalorder %v3416, 2
        %v3422 = vxor.u32 %v3412, 2147483648
        %v3423 = vsel %vm3421, %v3422, %v3413
        %v3424 = vsel %vm3417, %v3420, %v3423
        %v3425 = vsel %vm3414, nan, %v3424
        %v3426 = vand.u32 2147483647, %v633
        %vm3427 = vcmp.le.f32.partialorder %v3426, 0.7853982
        %vm3428 = vcmp.lt.s32.totalorder %v633, 0
        %v3429 = vand.u32 %v633, 2139095040
        %v3430 = vshrl.u32 %v3429, 23
        %v3431 = vsub.s32 %v3430, 127
        %v3432 = vand.u32 2147483647, %v633
        %v3433 = vand.u32 %v3432, 8388607
        %v3434 = vor.u32 %v3433, 8388608
        %v3435 = vsub.s32 0, %v3434
        %v3436 = vadd.s32 %v3431, 1
        %vm3437 = vcmp.gt.s32.totalorder %v3436, 0
        %v3438 = vsel %vm3437, %v3436, 0
        %v3439 = vshrl.u32 %v3438, 5
        %v3440 = vand.u32 %v3438, 31
        %v3441 = vsub.s32 32, %v3440
        %v3442 = vshrl.u32 683565275, %v3441
        %v3443 = vshll.u32 683565275, %v3440
        %v3444 = vshrl.u32 2475754826, %v3441
        %v3445 = vor.u32 %v3443, %v3444
        %v3446 = vshll.u32 2475754826, %v3440
        %v3447 = vshrl.u32 2131351028, %v3441
        %v3448 = vor.u32 %v3446, %v3447
        %v3449 = vshll.u32 2131351028, %v3440
        %v3450 = vshrl.u32 2102212464, %v3441
        %v3451 = vor.u32 %v3449, %v3450
        %v3452 = vshll.u32 2102212464, %v3440
        %v3453 = vshrl.u32 920167782, %v3441
        %v3454 = vor.u32 %v3452, %v3453
        %v3455 = vshll.u32 920167782, %v3440
        %v3456 = vshrl.u32 1326507024, %v3441
        %v3457 = vor.u32 %v3455, %v3456
        %vm3458 = vcmp.lt.s32.totalorder %v3439, 1
        %vm3459 = vcmp.lt.s32.totalorder %v3439, 2
        %vm3460 = vcmp.lt.s32.totalorder %v3439, 3
        %vm3461 = vcmp.lt.s32.totalorder %v3439, 4
        %v3462 = vsel %vm3458, %v3442, %v3445
        %v3463 = vsel %vm3461, %v3451, 2102212464
        %v3464 = vsel %vm3460, %v3448, %v3463
        %v3465 = vsel %vm3459, %v3462, %v3464
        %v3466 = vsel %vm3458, %v3445, %v3448
        %v3467 = vsel %vm3461, %v3454, 920167782
        %v3468 = vsel %vm3460, %v3451, %v3467
        %v3469 = vsel %vm3459, %v3466, %v3468
        %v3470 = vsel %vm3458, %v3448, %v3451
        %v3471 = vsel %vm3461, %v3457, 1326507024
        %v3472 = vsel %vm3460, %v3454, %v3471
        %v3473 = vsel %vm3459, %v3470, %v3472
        %v3474 = vshll.u32 %v3434, 8
        %v3475 = vmul.u32.u64.compose %v3474, %v3473
        %v3476 = vextract.low.u32 %v3475
        %v3477 = vextract.high.u32 %v3475
        %v3478 = vmul.u32.u64.compose %v3474, %v3469
        %v3479 = vextract.low.u32 %v3478
        %v3480 = vextract.high.u32 %v3478
        %v3481 = vmul.u32 %v3474, %v3465
        %v3482 = vadd.s32 %v3477, %v3479
        %vm3483 = vc.u32 %v3477, %v3479
        %v3484 = vadd.s32 %v3480, 1
        %v3485 = vsel %vm3483, %v3484, %v3480
        %v3486 = vadd.s32 %v3481, %v3485
        %v3487 = vadd.s32 %v3486, 536870912
        %v3488 = vshrl.u32 %v3487, 30
        %v3489 = vshll.u32 %v3488, 30
        %v3490 = vsub.s32 %v3486, %v3489
        %vm3491 = vcmp.lt.s32.totalorder %v3490, 0
        %v3492 = vsub.s32 0, %v3490
        %v3493 = vsel %vm3491, %v3492, %v3490
        %v3494 = vclz %v3493
        %v3495 = vsub.s32 %v3494, 2
        %vm3496 = vcmp.gt.s32.totalorder 0, %v3495
        %v3497 = vsel %vm3496, 0, %v3495
        %v3498 = vsub.s32 32, %v3497
        %v3499 = vshll.u32 %v3490, %v3497
        %v3500 = vshrl.u32 %v3482, %v3498
        %v3501 = vor.u32 %v3499, %v3500
        %v3502 = vsub.s32 4294967266, %v3497
        %v3503 = vadd.s32 %v3502, 127
        %v3504 = vshll.u32 %v3503, 23
        %v3505 = vor.u32 4788187, %v3504
        %v3506 = vand.u32 2147483647, %v3505
        %v3508 = vcvt.s32.f32 %v3501
        %v3509 = vmul.f32 %v3508, %v3506
        %v3510 = vxor.u32 %v3509, 2147483648
        %v3511 = vsel %vm3428, %v3510, %v3509
        %v3512 = vsub.s32 4, %v3488
        %v3513 = vsel %vm3428, %v3512, %v3488
        %v3514 = vsel %vm3427, %v633, %v3511
        %v3515 = vsel %vm3427, 0, %v3513
        %v3516 = vcosq.f32.pop %v3514
        %v3517 = vsinq.f32.pop %v3514
        %vm3518 = vweird.f32 %v633
        %v3519 = vadd.s32 %v3515, 3
        %v3520 = vand.u32 %v3519, 3
        %vm3521 = vcmp.lt.s32.totalorder %v3520, 2
        %vm3522 = vcmp.eq.s32.totalorder %v3520, 0
        %v3523 = vxor.u32 %v3517, 2147483648
        %v3524 = vsel %vm3522, %v3516, %v3523
        %vm3525 = vcmp.eq.s32.totalorder %v3520, 2
        %v3526 = vxor.u32 %v3516, 2147483648
        %v3527 = vsel %vm3525, %v3526, %v3517
        %v3528 = vsel %vm3521, %v3524, %v3527
        %v3529 = vsel %vm3518, nan, %v3528
        %v3530 = vand.u32 2147483647, %v638
        %vm3531 = vcmp.le.f32.partialorder %v3530, 0.7853982
        %vm3532 = vcmp.lt.s32.totalorder %v638, 0
        %v3533 = vand.u32 %v638, 2139095040
        %v3534 = vshrl.u32 %v3533, 23
        %v3535 = vsub.s32 %v3534, 127
        %v3536 = vand.u32 2147483647, %v638
        %v3537 = vand.u32 %v3536, 8388607
        %v3538 = vor.u32 %v3537, 8388608
        %v3539 = vsub.s32 0, %v3538
        %v3540 = vadd.s32 %v3535, 1
        %vm3541 = vcmp.gt.s32.totalorder %v3540, 0
        %v3542 = vsel %vm3541, %v3540, 0
        %v3543 = vshrl.u32 %v3542, 5
        %v3544 = vand.u32 %v3542, 31
        %v3545 = vsub.s32 32, %v3544
        %v3546 = vshrl.u32 683565275, %v3545
        %v3547 = vshll.u32 683565275, %v3544
        %v3548 = vshrl.u32 2475754826, %v3545
        %v3549 = vor.u32 %v3547, %v3548
        %v3550 = vshll.u32 2475754826, %v3544
        %v3551 = vshrl.u32 2131351028, %v3545
        %v3552 = vor.u32 %v3550, %v3551
        %v3553 = vshll.u32 2131351028, %v3544
        %v3554 = vshrl.u32 2102212464, %v3545
        %v3555 = vor.u32 %v3553, %v3554
        %v3556 = vshll.u32 2102212464, %v3544
        %v3557 = vshrl.u32 920167782, %v3545
        %v3558 = vor.u32 %v3556, %v3557
        %v3559 = vshll.u32 920167782, %v3544
        %v3560 = vshrl.u32 1326507024, %v3545
        %v3561 = vor.u32 %v3559, %v3560
        %vm3562 = vcmp.lt.s32.totalorder %v3543, 1
        %vm3563 = vcmp.lt.s32.totalorder %v3543, 2
        %vm3564 = vcmp.lt.s32.totalorder %v3543, 3
        %vm3565 = vcmp.lt.s32.totalorder %v3543, 4
        %v3566 = vsel %vm3562, %v3546, %v3549
        %v3567 = vsel %vm3565, %v3555, 2102212464
        %v3568 = vsel %vm3564, %v3552, %v3567
        %v3569 = vsel %vm3563, %v3566, %v3568
        %v3570 = vsel %vm3562, %v3549, %v3552
        %v3571 = vsel %vm3565, %v3558, 920167782
        %v3572 = vsel %vm3564, %v3555, %v3571
        %v3573 = vsel %vm3563, %v3570, %v3572
        %v3574 = vsel %vm3562, %v3552, %v3555
        %v3575 = vsel %vm3565, %v3561, 1326507024
        %v3576 = vsel %vm3564, %v3558, %v3575
        %v3577 = vsel %vm3563, %v3574, %v3576
        %v3578 = vshll.u32 %v3538, 8
        %v3579 = vmul.u32.u64.compose %v3578, %v3577
        %v3580 = vextract.low.u32 %v3579
        %v3581 = vextract.high.u32 %v3579
        %v3582 = vmul.u32.u64.compose %v3578, %v3573
        %v3583 = vextract.low.u32 %v3582
        %v3584 = vextract.high.u32 %v3582
        %v3585 = vmul.u32 %v3578, %v3569
        %v3586 = vadd.s32 %v3581, %v3583
        %vm3587 = vc.u32 %v3581, %v3583
        %v3588 = vadd.s32 %v3584, 1
        %v3589 = vsel %vm3587, %v3588, %v3584
        %v3590 = vadd.s32 %v3585, %v3589
        %v3591 = vadd.s32 %v3590, 536870912
        %v3592 = vshrl.u32 %v3591, 30
        %v3593 = vshll.u32 %v3592, 30
        %v3594 = vsub.s32 %v3590, %v3593
        %vm3595 = vcmp.lt.s32.totalorder %v3594, 0
        %v3596 = vsub.s32 0, %v3594
        %v3597 = vsel %vm3595, %v3596, %v3594
        %v3598 = vclz %v3597
        %v3599 = vsub.s32 %v3598, 2
        %vm3600 = vcmp.gt.s32.totalorder 0, %v3599
        %v3601 = vsel %vm3600, 0, %v3599
        %v3602 = vsub.s32 32, %v3601
        %v3603 = vshll.u32 %v3594, %v3601
        %v3604 = vshrl.u32 %v3586, %v3602
        %v3605 = vor.u32 %v3603, %v3604
        %v3606 = vsub.s32 4294967266, %v3601
        %v3607 = vadd.s32 %v3606, 127
        %v3608 = vshll.u32 %v3607, 23
        %v3609 = vor.u32 4788187, %v3608
        %v3610 = vand.u32 2147483647, %v3609
        %v3612 = vcvt.s32.f32 %v3605
        %v3613 = vmul.f32 %v3612, %v3610
        %v3614 = vxor.u32 %v3613, 2147483648
        %v3615 = vsel %vm3532, %v3614, %v3613
        %v3616 = vsub.s32 4, %v3592
        %v3617 = vsel %vm3532, %v3616, %v3592
        %v3618 = vsel %vm3531, %v638, %v3615
        %v3619 = vsel %vm3531, 0, %v3617
        %v3620 = vcosq.f32.pop %v3618
        %v3621 = vsinq.f32.pop %v3618
        %vm3622 = vweird.f32 %v638
        %v3623 = vadd.s32 %v3619, 3
        %v3624 = vand.u32 %v3623, 3
        %vm3625 = vcmp.lt.s32.totalorder %v3624, 2
        %vm3626 = vcmp.eq.s32.totalorder %v3624, 0
        %v3627 = vxor.u32 %v3621, 2147483648
        %v3628 = vsel %vm3626, %v3620, %v3627
        %vm3629 = vcmp.eq.s32.totalorder %v3624, 2
        %v3630 = vxor.u32 %v3620, 2147483648
        %v3631 = vsel %vm3629, %v3630, %v3621
        %v3632 = vsel %vm3625, %v3628, %v3631
        %v3633 = vsel %vm3622, nan, %v3632
        %v3634 = vand.u32 2147483647, %v643
        %vm3635 = vcmp.le.f32.partialorder %v3634, 0.7853982
        %vm3636 = vcmp.lt.s32.totalorder %v643, 0
        %v3637 = vand.u32 %v643, 2139095040
        %v3638 = vshrl.u32 %v3637, 23
        %v3639 = vsub.s32 %v3638, 127
        %v3640 = vand.u32 2147483647, %v643
        %v3641 = vand.u32 %v3640, 8388607
        %v3642 = vor.u32 %v3641, 8388608
        %v3643 = vsub.s32 0, %v3642
        %v3644 = vadd.s32 %v3639, 1
        %vm3645 = vcmp.gt.s32.totalorder %v3644, 0
        %v3646 = vsel %vm3645, %v3644, 0
        %v3647 = vshrl.u32 %v3646, 5
        %v3648 = vand.u32 %v3646, 31
        %v3649 = vsub.s32 32, %v3648
        %v3650 = vshrl.u32 683565275, %v3649
        %v3651 = vshll.u32 683565275, %v3648
        %v3652 = vshrl.u32 2475754826, %v3649
        %v3653 = vor.u32 %v3651, %v3652
        %v3654 = vshll.u32 2475754826, %v3648
        %v3655 = vshrl.u32 2131351028, %v3649
        %v3656 = vor.u32 %v3654, %v3655
        %v3657 = vshll.u32 2131351028, %v3648
        %v3658 = vshrl.u32 2102212464, %v3649
        %v3659 = vor.u32 %v3657, %v3658
        %v3660 = vshll.u32 2102212464, %v3648
        %v3661 = vshrl.u32 920167782, %v3649
        %v3662 = vor.u32 %v3660, %v3661
        %v3663 = vshll.u32 920167782, %v3648
        %v3664 = vshrl.u32 1326507024, %v3649
        %v3665 = vor.u32 %v3663, %v3664
        %vm3666 = vcmp.lt.s32.totalorder %v3647, 1
        %vm3667 = vcmp.lt.s32.totalorder %v3647, 2
        %vm3668 = vcmp.lt.s32.totalorder %v3647, 3
        %vm3669 = vcmp.lt.s32.totalorder %v3647, 4
        %v3670 = vsel %vm3666, %v3650, %v3653
        %v3671 = vsel %vm3669, %v3659, 2102212464
        %v3672 = vsel %vm3668, %v3656, %v3671
        %v3673 = vsel %vm3667, %v3670, %v3672
        %v3674 = vsel %vm3666, %v3653, %v3656
        %v3675 = vsel %vm3669, %v3662, 920167782
        %v3676 = vsel %vm3668, %v3659, %v3675
        %v3677 = vsel %vm3667, %v3674, %v3676
        %v3678 = vsel %vm3666, %v3656, %v3659
        %v3679 = vsel %vm3669, %v3665, 1326507024
        %v3680 = vsel %vm3668, %v3662, %v3679
        %v3681 = vsel %vm3667, %v3678, %v3680
        %v3682 = vshll.u32 %v3642, 8
        %v3683 = vmul.u32.u64.compose %v3682, %v3681
        %v3684 = vextract.low.u32 %v3683
        %v3685 = vextract.high.u32 %v3683
        %v3686 = vmul.u32.u64.compose %v3682, %v3677
        %v3687 = vextract.low.u32 %v3686
        %v3688 = vextract.high.u32 %v3686
        %v3689 = vmul.u32 %v3682, %v3673
        %v3690 = vadd.s32 %v3685, %v3687
        %vm3691 = vc.u32 %v3685, %v3687
        %v3692 = vadd.s32 %v3688, 1
        %v3693 = vsel %vm3691, %v3692, %v3688
        %v3694 = vadd.s32 %v3689, %v3693
        %v3695 = vadd.s32 %v3694, 536870912
        %v3696 = vshrl.u32 %v3695, 30
        %v3697 = vshll.u32 %v3696, 30
        %v3698 = vsub.s32 %v3694, %v3697
        %vm3699 = vcmp.lt.s32.totalorder %v3698, 0
        %v3700 = vsub.s32 0, %v3698
        %v3701 = vsel %vm3699, %v3700, %v3698
        %v3702 = vclz %v3701
        %v3703 = vsub.s32 %v3702, 2
        %vm3704 = vcmp.gt.s32.totalorder 0, %v3703
        %v3705 = vsel %vm3704, 0, %v3703
        %v3706 = vsub.s32 32, %v3705
        %v3707 = vshll.u32 %v3698, %v3705
        %v3708 = vshrl.u32 %v3690, %v3706
        %v3709 = vor.u32 %v3707, %v3708
        %v3710 = vsub.s32 4294967266, %v3705
        %v3711 = vadd.s32 %v3710, 127
        %v3712 = vshll.u32 %v3711, 23
        %v3713 = vor.u32 4788187, %v3712
        %v3714 = vand.u32 2147483647, %v3713
        %v3716 = vcvt.s32.f32 %v3709
        %v3717 = vmul.f32 %v3716, %v3714
        %v3718 = vxor.u32 %v3717, 2147483648
        %v3719 = vsel %vm3636, %v3718, %v3717
        %v3720 = vsub.s32 4, %v3696
        %v3721 = vsel %vm3636, %v3720, %v3696
        %v3722 = vsel %vm3635, %v643, %v3719
        %v3723 = vsel %vm3635, 0, %v3721
        %v3724 = vcosq.f32.pop %v3722
        %v3725 = vsinq.f32.pop %v3722
        %vm3726 = vweird.f32 %v643
        %v3727 = vadd.s32 %v3723, 3
        %v3728 = vand.u32 %v3727, 3
        %vm3729 = vcmp.lt.s32.totalorder %v3728, 2
        %vm3730 = vcmp.eq.s32.totalorder %v3728, 0
        %v3731 = vxor.u32 %v3725, 2147483648
        %v3732 = vsel %vm3730, %v3724, %v3731
        %vm3733 = vcmp.eq.s32.totalorder %v3728, 2
        %v3734 = vxor.u32 %v3724, 2147483648
        %v3735 = vsel %vm3733, %v3734, %v3725
        %v3736 = vsel %vm3729, %v3732, %v3735
        %v3737 = vsel %vm3726, nan, %v3736
        %v3738 = vand.u32 2147483647, %v648
        %vm3739 = vcmp.le.f32.partialorder %v3738, 0.7853982
        %vm3740 = vcmp.lt.s32.totalorder %v648, 0
        %v3741 = vand.u32 %v648, 2139095040
        %v3742 = vshrl.u32 %v3741, 23
        %v3743 = vsub.s32 %v3742, 127
        %v3744 = vand.u32 2147483647, %v648
        %v3745 = vand.u32 %v3744, 8388607
        %v3746 = vor.u32 %v3745, 8388608
        %v3747 = vsub.s32 0, %v3746
        %v3748 = vadd.s32 %v3743, 1
        %vm3749 = vcmp.gt.s32.totalorder %v3748, 0
        %v3750 = vsel %vm3749, %v3748, 0
        %v3751 = vshrl.u32 %v3750, 5
        %v3752 = vand.u32 %v3750, 31
        %v3753 = vsub.s32 32, %v3752
        %v3754 = vshrl.u32 683565275, %v3753
        %v3755 = vshll.u32 683565275, %v3752
        %v3756 = vshrl.u32 2475754826, %v3753
        %v3757 = vor.u32 %v3755, %v3756
        %v3758 = vshll.u32 2475754826, %v3752
        %v3759 = vshrl.u32 2131351028, %v3753
        %v3760 = vor.u32 %v3758, %v3759
        %v3761 = vshll.u32 2131351028, %v3752
        %v3762 = vshrl.u32 2102212464, %v3753
        %v3763 = vor.u32 %v3761, %v3762
        %v3764 = vshll.u32 2102212464, %v3752
        %v3765 = vshrl.u32 920167782, %v3753
        %v3766 = vor.u32 %v3764, %v3765
        %v3767 = vshll.u32 920167782, %v3752
        %v3768 = vshrl.u32 1326507024, %v3753
        %v3769 = vor.u32 %v3767, %v3768
        %vm3770 = vcmp.lt.s32.totalorder %v3751, 1
        %vm3771 = vcmp.lt.s32.totalorder %v3751, 2
        %vm3772 = vcmp.lt.s32.totalorder %v3751, 3
        %vm3773 = vcmp.lt.s32.totalorder %v3751, 4
        %v3774 = vsel %vm3770, %v3754, %v3757
        %v3775 = vsel %vm3773, %v3763, 2102212464
        %v3776 = vsel %vm3772, %v3760, %v3775
        %v3777 = vsel %vm3771, %v3774, %v3776
        %v3778 = vsel %vm3770, %v3757, %v3760
        %v3779 = vsel %vm3773, %v3766, 920167782
        %v3780 = vsel %vm3772, %v3763, %v3779
        %v3781 = vsel %vm3771, %v3778, %v3780
        %v3782 = vsel %vm3770, %v3760, %v3763
        %v3783 = vsel %vm3773, %v3769, 1326507024
        %v3784 = vsel %vm3772, %v3766, %v3783
        %v3785 = vsel %vm3771, %v3782, %v3784
        %v3786 = vshll.u32 %v3746, 8
        %v3787 = vmul.u32.u64.compose %v3786, %v3785
        %v3788 = vextract.low.u32 %v3787
        %v3789 = vextract.high.u32 %v3787
        %v3790 = vmul.u32.u64.compose %v3786, %v3781
        %v3791 = vextract.low.u32 %v3790
        %v3792 = vextract.high.u32 %v3790
        %v3793 = vmul.u32 %v3786, %v3777
        %v3794 = vadd.s32 %v3789, %v3791
        %vm3795 = vc.u32 %v3789, %v3791
        %v3796 = vadd.s32 %v3792, 1
        %v3797 = vsel %vm3795, %v3796, %v3792
        %v3798 = vadd.s32 %v3793, %v3797
        %v3799 = vadd.s32 %v3798, 536870912
        %v3800 = vshrl.u32 %v3799, 30
        %v3801 = vshll.u32 %v3800, 30
        %v3802 = vsub.s32 %v3798, %v3801
        %vm3803 = vcmp.lt.s32.totalorder %v3802, 0
        %v3804 = vsub.s32 0, %v3802
        %v3805 = vsel %vm3803, %v3804, %v3802
        %v3806 = vclz %v3805
        %v3807 = vsub.s32 %v3806, 2
        %vm3808 = vcmp.gt.s32.totalorder 0, %v3807
        %v3809 = vsel %vm3808, 0, %v3807
        %v3810 = vsub.s32 32, %v3809
        %v3811 = vshll.u32 %v3802, %v3809
        %v3812 = vshrl.u32 %v3794, %v3810
        %v3813 = vor.u32 %v3811, %v3812
        %v3814 = vsub.s32 4294967266, %v3809
        %v3815 = vadd.s32 %v3814, 127
        %v3816 = vshll.u32 %v3815, 23
        %v3817 = vor.u32 4788187, %v3816
        %v3818 = vand.u32 2147483647, %v3817
        %v3820 = vcvt.s32.f32 %v3813
        %v3821 = vmul.f32 %v3820, %v3818
        %v3822 = vxor.u32 %v3821, 2147483648
        %v3823 = vsel %vm3740, %v3822, %v3821
        %v3824 = vsub.s32 4, %v3800
        %v3825 = vsel %vm3740, %v3824, %v3800
        %v3826 = vsel %vm3739, %v648, %v3823
        %v3827 = vsel %vm3739, 0, %v3825
        %v3828 = vcosq.f32.pop %v3826
        %v3829 = vsinq.f32.pop %v3826
        %vm3830 = vweird.f32 %v648
        %v3831 = vadd.s32 %v3827, 3
        %v3832 = vand.u32 %v3831, 3
        %vm3833 = vcmp.lt.s32.totalorder %v3832, 2
        %vm3834 = vcmp.eq.s32.totalorder %v3832, 0
        %v3835 = vxor.u32 %v3829, 2147483648
        %v3836 = vsel %vm3834, %v3828, %v3835
        %vm3837 = vcmp.eq.s32.totalorder %v3832, 2
        %v3838 = vxor.u32 %v3828, 2147483648
        %v3839 = vsel %vm3837, %v3838, %v3829
        %v3840 = vsel %vm3833, %v3836, %v3839
        %v3841 = vsel %vm3830, nan, %v3840
        %v3842 = vand.u32 2147483647, %v653
        %vm3843 = vcmp.le.f32.partialorder %v3842, 0.7853982
        %vm3844 = vcmp.lt.s32.totalorder %v653, 0
        %v3845 = vand.u32 %v653, 2139095040
        %v3846 = vshrl.u32 %v3845, 23
        %v3847 = vsub.s32 %v3846, 127
        %v3848 = vand.u32 2147483647, %v653
        %v3849 = vand.u32 %v3848, 8388607
        %v3850 = vor.u32 %v3849, 8388608
        %v3851 = vsub.s32 0, %v3850
        %v3852 = vadd.s32 %v3847, 1
        %vm3853 = vcmp.gt.s32.totalorder %v3852, 0
        %v3854 = vsel %vm3853, %v3852, 0
        %v3855 = vshrl.u32 %v3854, 5
        %v3856 = vand.u32 %v3854, 31
        %v3857 = vsub.s32 32, %v3856
        %v3858 = vshrl.u32 683565275, %v3857
        %v3859 = vshll.u32 683565275, %v3856
        %v3860 = vshrl.u32 2475754826, %v3857
        %v3861 = vor.u32 %v3859, %v3860
        %v3862 = vshll.u32 2475754826, %v3856
        %v3863 = vshrl.u32 2131351028, %v3857
        %v3864 = vor.u32 %v3862, %v3863
        %v3865 = vshll.u32 2131351028, %v3856
        %v3866 = vshrl.u32 2102212464, %v3857
        %v3867 = vor.u32 %v3865, %v3866
        %v3868 = vshll.u32 2102212464, %v3856
        %v3869 = vshrl.u32 920167782, %v3857
        %v3870 = vor.u32 %v3868, %v3869
        %v3871 = vshll.u32 920167782, %v3856
        %v3872 = vshrl.u32 1326507024, %v3857
        %v3873 = vor.u32 %v3871, %v3872
        %vm3874 = vcmp.lt.s32.totalorder %v3855, 1
        %vm3875 = vcmp.lt.s32.totalorder %v3855, 2
        %vm3876 = vcmp.lt.s32.totalorder %v3855, 3
        %vm3877 = vcmp.lt.s32.totalorder %v3855, 4
        %v3878 = vsel %vm3874, %v3858, %v3861
        %v3879 = vsel %vm3877, %v3867, 2102212464
        %v3880 = vsel %vm3876, %v3864, %v3879
        %v3881 = vsel %vm3875, %v3878, %v3880
        %v3882 = vsel %vm3874, %v3861, %v3864
        %v3883 = vsel %vm3877, %v3870, 920167782
        %v3884 = vsel %vm3876, %v3867, %v3883
        %v3885 = vsel %vm3875, %v3882, %v3884
        %v3886 = vsel %vm3874, %v3864, %v3867
        %v3887 = vsel %vm3877, %v3873, 1326507024
        %v3888 = vsel %vm3876, %v3870, %v3887
        %v3889 = vsel %vm3875, %v3886, %v3888
        %v3890 = vshll.u32 %v3850, 8
        %v3891 = vmul.u32.u64.compose %v3890, %v3889
        %v3892 = vextract.low.u32 %v3891
        %v3893 = vextract.high.u32 %v3891
        %v3894 = vmul.u32.u64.compose %v3890, %v3885
        %v3895 = vextract.low.u32 %v3894
        %v3896 = vextract.high.u32 %v3894
        %v3897 = vmul.u32 %v3890, %v3881
        %v3898 = vadd.s32 %v3893, %v3895
        %vm3899 = vc.u32 %v3893, %v3895
        %v3900 = vadd.s32 %v3896, 1
        %v3901 = vsel %vm3899, %v3900, %v3896
        %v3902 = vadd.s32 %v3897, %v3901
        %v3903 = vadd.s32 %v3902, 536870912
        %v3904 = vshrl.u32 %v3903, 30
        %v3905 = vshll.u32 %v3904, 30
        %v3906 = vsub.s32 %v3902, %v3905
        %vm3907 = vcmp.lt.s32.totalorder %v3906, 0
        %v3908 = vsub.s32 0, %v3906
        %v3909 = vsel %vm3907, %v3908, %v3906
        %v3910 = vclz %v3909
        %v3911 = vsub.s32 %v3910, 2
        %vm3912 = vcmp.gt.s32.totalorder 0, %v3911
        %v3913 = vsel %vm3912, 0, %v3911
        %v3914 = vsub.s32 32, %v3913
        %v3915 = vshll.u32 %v3906, %v3913
        %v3916 = vshrl.u32 %v3898, %v3914
        %v3917 = vor.u32 %v3915, %v3916
        %v3918 = vsub.s32 4294967266, %v3913
        %v3919 = vadd.s32 %v3918, 127
        %v3920 = vshll.u32 %v3919, 23
        %v3921 = vor.u32 4788187, %v3920
        %v3922 = vand.u32 2147483647, %v3921
        %v3924 = vcvt.s32.f32 %v3917
        %v3925 = vmul.f32 %v3924, %v3922
        %v3926 = vxor.u32 %v3925, 2147483648
        %v3927 = vsel %vm3844, %v3926, %v3925
        %v3928 = vsub.s32 4, %v3904
        %v3929 = vsel %vm3844, %v3928, %v3904
        %v3930 = vsel %vm3843, %v653, %v3927
        %v3931 = vsel %vm3843, 0, %v3929
        %v3932 = vcosq.f32.pop %v3930
        %v3933 = vsinq.f32.pop %v3930
        %vm3934 = vweird.f32 %v653
        %v3935 = vadd.s32 %v3931, 3
        %v3936 = vand.u32 %v3935, 3
        %vm3937 = vcmp.lt.s32.totalorder %v3936, 2
        %vm3938 = vcmp.eq.s32.totalorder %v3936, 0
        %v3939 = vxor.u32 %v3933, 2147483648
        %v3940 = vsel %vm3938, %v3932, %v3939
        %vm3941 = vcmp.eq.s32.totalorder %v3936, 2
        %v3942 = vxor.u32 %v3932, 2147483648
        %v3943 = vsel %vm3941, %v3942, %v3933
        %v3944 = vsel %vm3937, %v3940, %v3943
        %v3945 = vsel %vm3934, nan, %v3944
        %v3946 = vand.u32 2147483647, %v658
        %vm3947 = vcmp.le.f32.partialorder %v3946, 0.7853982
        %vm3948 = vcmp.lt.s32.totalorder %v658, 0
        %v3949 = vand.u32 %v658, 2139095040
        %v3950 = vshrl.u32 %v3949, 23
        %v3951 = vsub.s32 %v3950, 127
        %v3952 = vand.u32 2147483647, %v658
        %v3953 = vand.u32 %v3952, 8388607
        %v3954 = vor.u32 %v3953, 8388608
        %v3955 = vsub.s32 0, %v3954
        %v3956 = vadd.s32 %v3951, 1
        %vm3957 = vcmp.gt.s32.totalorder %v3956, 0
        %v3958 = vsel %vm3957, %v3956, 0
        %v3959 = vshrl.u32 %v3958, 5
        %v3960 = vand.u32 %v3958, 31
        %v3961 = vsub.s32 32, %v3960
        %v3962 = vshrl.u32 683565275, %v3961
        %v3963 = vshll.u32 683565275, %v3960
        %v3964 = vshrl.u32 2475754826, %v3961
        %v3965 = vor.u32 %v3963, %v3964
        %v3966 = vshll.u32 2475754826, %v3960
        %v3967 = vshrl.u32 2131351028, %v3961
        %v3968 = vor.u32 %v3966, %v3967
        %v3969 = vshll.u32 2131351028, %v3960
        %v3970 = vshrl.u32 2102212464, %v3961
        %v3971 = vor.u32 %v3969, %v3970
        %v3972 = vshll.u32 2102212464, %v3960
        %v3973 = vshrl.u32 920167782, %v3961
        %v3974 = vor.u32 %v3972, %v3973
        %v3975 = vshll.u32 920167782, %v3960
        %v3976 = vshrl.u32 1326507024, %v3961
        %v3977 = vor.u32 %v3975, %v3976
        %vm3978 = vcmp.lt.s32.totalorder %v3959, 1
        %vm3979 = vcmp.lt.s32.totalorder %v3959, 2
        %vm3980 = vcmp.lt.s32.totalorder %v3959, 3
        %vm3981 = vcmp.lt.s32.totalorder %v3959, 4
        %v3982 = vsel %vm3978, %v3962, %v3965
        %v3983 = vsel %vm3981, %v3971, 2102212464
        %v3984 = vsel %vm3980, %v3968, %v3983
        %v3985 = vsel %vm3979, %v3982, %v3984
        %v3986 = vsel %vm3978, %v3965, %v3968
        %v3987 = vsel %vm3981, %v3974, 920167782
        %v3988 = vsel %vm3980, %v3971, %v3987
        %v3989 = vsel %vm3979, %v3986, %v3988
        %v3990 = vsel %vm3978, %v3968, %v3971
        %v3991 = vsel %vm3981, %v3977, 1326507024
        %v3992 = vsel %vm3980, %v3974, %v3991
        %v3993 = vsel %vm3979, %v3990, %v3992
        %v3994 = vshll.u32 %v3954, 8
        %v3995 = vmul.u32.u64.compose %v3994, %v3993
        %v3996 = vextract.low.u32 %v3995
        %v3997 = vextract.high.u32 %v3995
        %v3998 = vmul.u32.u64.compose %v3994, %v3989
        %v3999 = vextract.low.u32 %v3998
        %v4000 = vextract.high.u32 %v3998
        %v4001 = vmul.u32 %v3994, %v3985
        %v4002 = vadd.s32 %v3997, %v3999
        %vm4003 = vc.u32 %v3997, %v3999
        %v4004 = vadd.s32 %v4000, 1
        %v4005 = vsel %vm4003, %v4004, %v4000
        %v4006 = vadd.s32 %v4001, %v4005
        %v4007 = vadd.s32 %v4006, 536870912
        %v4008 = vshrl.u32 %v4007, 30
        %v4009 = vshll.u32 %v4008, 30
        %v4010 = vsub.s32 %v4006, %v4009
        %vm4011 = vcmp.lt.s32.totalorder %v4010, 0
        %v4012 = vsub.s32 0, %v4010
        %v4013 = vsel %vm4011, %v4012, %v4010
        %v4014 = vclz %v4013
        %v4015 = vsub.s32 %v4014, 2
        %vm4016 = vcmp.gt.s32.totalorder 0, %v4015
        %v4017 = vsel %vm4016, 0, %v4015
        %v4018 = vsub.s32 32, %v4017
        %v4019 = vshll.u32 %v4010, %v4017
        %v4020 = vshrl.u32 %v4002, %v4018
        %v4021 = vor.u32 %v4019, %v4020
        %v4022 = vsub.s32 4294967266, %v4017
        %v4023 = vadd.s32 %v4022, 127
        %v4024 = vshll.u32 %v4023, 23
        %v4025 = vor.u32 4788187, %v4024
        %v4026 = vand.u32 2147483647, %v4025
        %v4028 = vcvt.s32.f32 %v4021
        %v4029 = vmul.f32 %v4028, %v4026
        %v4030 = vxor.u32 %v4029, 2147483648
        %v4031 = vsel %vm3948, %v4030, %v4029
        %v4032 = vsub.s32 4, %v4008
        %v4033 = vsel %vm3948, %v4032, %v4008
        %v4034 = vsel %vm3947, %v658, %v4031
        %v4035 = vsel %vm3947, 0, %v4033
        %v4036 = vcosq.f32.pop %v4034
        %v4037 = vsinq.f32.pop %v4034
        %vm4038 = vweird.f32 %v658
        %v4039 = vadd.s32 %v4035, 3
        %v4040 = vand.u32 %v4039, 3
        %vm4041 = vcmp.lt.s32.totalorder %v4040, 2
        %vm4042 = vcmp.eq.s32.totalorder %v4040, 0
        %v4043 = vxor.u32 %v4037, 2147483648
        %v4044 = vsel %vm4042, %v4036, %v4043
        %vm4045 = vcmp.eq.s32.totalorder %v4040, 2
        %v4046 = vxor.u32 %v4036, 2147483648
        %v4047 = vsel %vm4045, %v4046, %v4037
        %v4048 = vsel %vm4041, %v4044, %v4047
        %v4049 = vsel %vm4038, nan, %v4048
        %v4050 = vand.u32 2147483647, %v663
        %vm4051 = vcmp.le.f32.partialorder %v4050, 0.7853982
        %vm4052 = vcmp.lt.s32.totalorder %v663, 0
        %v4053 = vand.u32 %v663, 2139095040
        %v4054 = vshrl.u32 %v4053, 23
        %v4055 = vsub.s32 %v4054, 127
        %v4056 = vand.u32 2147483647, %v663
        %v4057 = vand.u32 %v4056, 8388607
        %v4058 = vor.u32 %v4057, 8388608
        %v4059 = vsub.s32 0, %v4058
        %v4060 = vadd.s32 %v4055, 1
        %vm4061 = vcmp.gt.s32.totalorder %v4060, 0
        %v4062 = vsel %vm4061, %v4060, 0
        %v4063 = vshrl.u32 %v4062, 5
        %v4064 = vand.u32 %v4062, 31
        %v4065 = vsub.s32 32, %v4064
        %v4066 = vshrl.u32 683565275, %v4065
        %v4067 = vshll.u32 683565275, %v4064
        %v4068 = vshrl.u32 2475754826, %v4065
        %v4069 = vor.u32 %v4067, %v4068
        %v4070 = vshll.u32 2475754826, %v4064
        %v4071 = vshrl.u32 2131351028, %v4065
        %v4072 = vor.u32 %v4070, %v4071
        %v4073 = vshll.u32 2131351028, %v4064
        %v4074 = vshrl.u32 2102212464, %v4065
        %v4075 = vor.u32 %v4073, %v4074
        %v4076 = vshll.u32 2102212464, %v4064
        %v4077 = vshrl.u32 920167782, %v4065
        %v4078 = vor.u32 %v4076, %v4077
        %v4079 = vshll.u32 920167782, %v4064
        %v4080 = vshrl.u32 1326507024, %v4065
        %v4081 = vor.u32 %v4079, %v4080
        %vm4082 = vcmp.lt.s32.totalorder %v4063, 1
        %vm4083 = vcmp.lt.s32.totalorder %v4063, 2
        %vm4084 = vcmp.lt.s32.totalorder %v4063, 3
        %vm4085 = vcmp.lt.s32.totalorder %v4063, 4
        %v4086 = vsel %vm4082, %v4066, %v4069
        %v4087 = vsel %vm4085, %v4075, 2102212464
        %v4088 = vsel %vm4084, %v4072, %v4087
        %v4089 = vsel %vm4083, %v4086, %v4088
        %v4090 = vsel %vm4082, %v4069, %v4072
        %v4091 = vsel %vm4085, %v4078, 920167782
        %v4092 = vsel %vm4084, %v4075, %v4091
        %v4093 = vsel %vm4083, %v4090, %v4092
        %v4094 = vsel %vm4082, %v4072, %v4075
        %v4095 = vsel %vm4085, %v4081, 1326507024
        %v4096 = vsel %vm4084, %v4078, %v4095
        %v4097 = vsel %vm4083, %v4094, %v4096
        %v4098 = vshll.u32 %v4058, 8
        %v4099 = vmul.u32.u64.compose %v4098, %v4097
        %v4100 = vextract.low.u32 %v4099
        %v4101 = vextract.high.u32 %v4099
        %v4102 = vmul.u32.u64.compose %v4098, %v4093
        %v4103 = vextract.low.u32 %v4102
        %v4104 = vextract.high.u32 %v4102
        %v4105 = vmul.u32 %v4098, %v4089
        %v4106 = vadd.s32 %v4101, %v4103
        %vm4107 = vc.u32 %v4101, %v4103
        %v4108 = vadd.s32 %v4104, 1
        %v4109 = vsel %vm4107, %v4108, %v4104
        %v4110 = vadd.s32 %v4105, %v4109
        %v4111 = vadd.s32 %v4110, 536870912
        %v4112 = vshrl.u32 %v4111, 30
        %v4113 = vshll.u32 %v4112, 30
        %v4114 = vsub.s32 %v4110, %v4113
        %vm4115 = vcmp.lt.s32.totalorder %v4114, 0
        %v4116 = vsub.s32 0, %v4114
        %v4117 = vsel %vm4115, %v4116, %v4114
        %v4118 = vclz %v4117
        %v4119 = vsub.s32 %v4118, 2
        %vm4120 = vcmp.gt.s32.totalorder 0, %v4119
        %v4121 = vsel %vm4120, 0, %v4119
        %v4122 = vsub.s32 32, %v4121
        %v4123 = vshll.u32 %v4114, %v4121
        %v4124 = vshrl.u32 %v4106, %v4122
        %v4125 = vor.u32 %v4123, %v4124
        %v4126 = vsub.s32 4294967266, %v4121
        %v4127 = vadd.s32 %v4126, 127
        %v4128 = vshll.u32 %v4127, 23
        %v4129 = vor.u32 4788187, %v4128
        %v4130 = vand.u32 2147483647, %v4129
        %v4132 = vcvt.s32.f32 %v4125
        %v4133 = vmul.f32 %v4132, %v4130
        %v4134 = vxor.u32 %v4133, 2147483648
        %v4135 = vsel %vm4052, %v4134, %v4133
        %v4136 = vsub.s32 4, %v4112
        %v4137 = vsel %vm4052, %v4136, %v4112
        %v4138 = vsel %vm4051, %v663, %v4135
        %v4139 = vsel %vm4051, 0, %v4137
        %v4140 = vcosq.f32.pop %v4138
        %v4141 = vsinq.f32.pop %v4138
        %vm4142 = vweird.f32 %v663
        %v4143 = vadd.s32 %v4139, 3
        %v4144 = vand.u32 %v4143, 3
        %vm4145 = vcmp.lt.s32.totalorder %v4144, 2
        %vm4146 = vcmp.eq.s32.totalorder %v4144, 0
        %v4147 = vxor.u32 %v4141, 2147483648
        %v4148 = vsel %vm4146, %v4140, %v4147
        %vm4149 = vcmp.eq.s32.totalorder %v4144, 2
        %v4150 = vxor.u32 %v4140, 2147483648
        %v4151 = vsel %vm4149, %v4150, %v4141
        %v4152 = vsel %vm4145, %v4148, %v4151
        %v4153 = vsel %vm4142, nan, %v4152
        %v4154 = vand.u32 2147483647, %v668
        %vm4155 = vcmp.le.f32.partialorder %v4154, 0.7853982
        %vm4156 = vcmp.lt.s32.totalorder %v668, 0
        %v4157 = vand.u32 %v668, 2139095040
        %v4158 = vshrl.u32 %v4157, 23
        %v4159 = vsub.s32 %v4158, 127
        %v4160 = vand.u32 2147483647, %v668
        %v4161 = vand.u32 %v4160, 8388607
        %v4162 = vor.u32 %v4161, 8388608
        %v4163 = vsub.s32 0, %v4162
        %v4164 = vadd.s32 %v4159, 1
        %vm4165 = vcmp.gt.s32.totalorder %v4164, 0
        %v4166 = vsel %vm4165, %v4164, 0
        %v4167 = vshrl.u32 %v4166, 5
        %v4168 = vand.u32 %v4166, 31
        %v4169 = vsub.s32 32, %v4168
        %v4170 = vshrl.u32 683565275, %v4169
        %v4171 = vshll.u32 683565275, %v4168
        %v4172 = vshrl.u32 2475754826, %v4169
        %v4173 = vor.u32 %v4171, %v4172
        %v4174 = vshll.u32 2475754826, %v4168
        %v4175 = vshrl.u32 2131351028, %v4169
        %v4176 = vor.u32 %v4174, %v4175
        %v4177 = vshll.u32 2131351028, %v4168
        %v4178 = vshrl.u32 2102212464, %v4169
        %v4179 = vor.u32 %v4177, %v4178
        %v4180 = vshll.u32 2102212464, %v4168
        %v4181 = vshrl.u32 920167782, %v4169
        %v4182 = vor.u32 %v4180, %v4181
        %v4183 = vshll.u32 920167782, %v4168
        %v4184 = vshrl.u32 1326507024, %v4169
        %v4185 = vor.u32 %v4183, %v4184
        %vm4186 = vcmp.lt.s32.totalorder %v4167, 1
        %vm4187 = vcmp.lt.s32.totalorder %v4167, 2
        %vm4188 = vcmp.lt.s32.totalorder %v4167, 3
        %vm4189 = vcmp.lt.s32.totalorder %v4167, 4
        %v4190 = vsel %vm4186, %v4170, %v4173
        %v4191 = vsel %vm4189, %v4179, 2102212464
        %v4192 = vsel %vm4188, %v4176, %v4191
        %v4193 = vsel %vm4187, %v4190, %v4192
        %v4194 = vsel %vm4186, %v4173, %v4176
        %v4195 = vsel %vm4189, %v4182, 920167782
        %v4196 = vsel %vm4188, %v4179, %v4195
        %v4197 = vsel %vm4187, %v4194, %v4196
        %v4198 = vsel %vm4186, %v4176, %v4179
        %v4199 = vsel %vm4189, %v4185, 1326507024
        %v4200 = vsel %vm4188, %v4182, %v4199
        %v4201 = vsel %vm4187, %v4198, %v4200
        %v4202 = vshll.u32 %v4162, 8
        %v4203 = vmul.u32.u64.compose %v4202, %v4201
        %v4204 = vextract.low.u32 %v4203
        %v4205 = vextract.high.u32 %v4203
        %v4206 = vmul.u32.u64.compose %v4202, %v4197
        %v4207 = vextract.low.u32 %v4206
        %v4208 = vextract.high.u32 %v4206
        %v4209 = vmul.u32 %v4202, %v4193
        %v4210 = vadd.s32 %v4205, %v4207
        %vm4211 = vc.u32 %v4205, %v4207
        %v4212 = vadd.s32 %v4208, 1
        %v4213 = vsel %vm4211, %v4212, %v4208
        %v4214 = vadd.s32 %v4209, %v4213
        %v4215 = vadd.s32 %v4214, 536870912
        %v4216 = vshrl.u32 %v4215, 30
        %v4217 = vshll.u32 %v4216, 30
        %v4218 = vsub.s32 %v4214, %v4217
        %vm4219 = vcmp.lt.s32.totalorder %v4218, 0
        %v4220 = vsub.s32 0, %v4218
        %v4221 = vsel %vm4219, %v4220, %v4218
        %v4222 = vclz %v4221
        %v4223 = vsub.s32 %v4222, 2
        %vm4224 = vcmp.gt.s32.totalorder 0, %v4223
        %v4225 = vsel %vm4224, 0, %v4223
        %v4226 = vsub.s32 32, %v4225
        %v4227 = vshll.u32 %v4218, %v4225
        %v4228 = vshrl.u32 %v4210, %v4226
        %v4229 = vor.u32 %v4227, %v4228
        %v4230 = vsub.s32 4294967266, %v4225
        %v4231 = vadd.s32 %v4230, 127
        %v4232 = vshll.u32 %v4231, 23
        %v4233 = vor.u32 4788187, %v4232
        %v4234 = vand.u32 2147483647, %v4233
        %v4236 = vcvt.s32.f32 %v4229
        %v4237 = vmul.f32 %v4236, %v4234
        %v4238 = vxor.u32 %v4237, 2147483648
        %v4239 = vsel %vm4156, %v4238, %v4237
        %v4240 = vsub.s32 4, %v4216
        %v4241 = vsel %vm4156, %v4240, %v4216
        %v4242 = vsel %vm4155, %v668, %v4239
        %v4243 = vsel %vm4155, 0, %v4241
        %v4244 = vcosq.f32.pop %v4242
        %v4245 = vsinq.f32.pop %v4242
        %vm4246 = vweird.f32 %v668
        %v4247 = vadd.s32 %v4243, 3
        %v4248 = vand.u32 %v4247, 3
        %vm4249 = vcmp.lt.s32.totalorder %v4248, 2
        %vm4250 = vcmp.eq.s32.totalorder %v4248, 0
        %v4251 = vxor.u32 %v4245, 2147483648
        %v4252 = vsel %vm4250, %v4244, %v4251
        %vm4253 = vcmp.eq.s32.totalorder %v4248, 2
        %v4254 = vxor.u32 %v4244, 2147483648
        %v4255 = vsel %vm4253, %v4254, %v4245
        %v4256 = vsel %vm4249, %v4252, %v4255
        %v4257 = vsel %vm4246, nan, %v4256
        %v4258 = vand.u32 2147483647, %v673
        %vm4259 = vcmp.le.f32.partialorder %v4258, 0.7853982
        %vm4260 = vcmp.lt.s32.totalorder %v673, 0
        %v4261 = vand.u32 %v673, 2139095040
        %v4262 = vshrl.u32 %v4261, 23
        %v4263 = vsub.s32 %v4262, 127
        %v4264 = vand.u32 2147483647, %v673
        %v4265 = vand.u32 %v4264, 8388607
        %v4266 = vor.u32 %v4265, 8388608
        %v4267 = vsub.s32 0, %v4266
        %v4268 = vadd.s32 %v4263, 1
        %vm4269 = vcmp.gt.s32.totalorder %v4268, 0
        %v4270 = vsel %vm4269, %v4268, 0
        %v4271 = vshrl.u32 %v4270, 5
        %v4272 = vand.u32 %v4270, 31
        %v4273 = vsub.s32 32, %v4272
        %v4274 = vshrl.u32 683565275, %v4273
        %v4275 = vshll.u32 683565275, %v4272
        %v4276 = vshrl.u32 2475754826, %v4273
        %v4277 = vor.u32 %v4275, %v4276
        %v4278 = vshll.u32 2475754826, %v4272
        %v4279 = vshrl.u32 2131351028, %v4273
        %v4280 = vor.u32 %v4278, %v4279
        %v4281 = vshll.u32 2131351028, %v4272
        %v4282 = vshrl.u32 2102212464, %v4273
        %v4283 = vor.u32 %v4281, %v4282
        %v4284 = vshll.u32 2102212464, %v4272
        %v4285 = vshrl.u32 920167782, %v4273
        %v4286 = vor.u32 %v4284, %v4285
        %v4287 = vshll.u32 920167782, %v4272
        %v4288 = vshrl.u32 1326507024, %v4273
        %v4289 = vor.u32 %v4287, %v4288
        %vm4290 = vcmp.lt.s32.totalorder %v4271, 1
        %vm4291 = vcmp.lt.s32.totalorder %v4271, 2
        %vm4292 = vcmp.lt.s32.totalorder %v4271, 3
        %vm4293 = vcmp.lt.s32.totalorder %v4271, 4
        %v4294 = vsel %vm4290, %v4274, %v4277
        %v4295 = vsel %vm4293, %v4283, 2102212464
        %v4296 = vsel %vm4292, %v4280, %v4295
        %v4297 = vsel %vm4291, %v4294, %v4296
        %v4298 = vsel %vm4290, %v4277, %v4280
        %v4299 = vsel %vm4293, %v4286, 920167782
        %v4300 = vsel %vm4292, %v4283, %v4299
        %v4301 = vsel %vm4291, %v4298, %v4300
        %v4302 = vsel %vm4290, %v4280, %v4283
        %v4303 = vsel %vm4293, %v4289, 1326507024
        %v4304 = vsel %vm4292, %v4286, %v4303
        %v4305 = vsel %vm4291, %v4302, %v4304
        %v4306 = vshll.u32 %v4266, 8
        %v4307 = vmul.u32.u64.compose %v4306, %v4305
        %v4308 = vextract.low.u32 %v4307
        %v4309 = vextract.high.u32 %v4307
        %v4310 = vmul.u32.u64.compose %v4306, %v4301
        %v4311 = vextract.low.u32 %v4310
        %v4312 = vextract.high.u32 %v4310
        %v4313 = vmul.u32 %v4306, %v4297
        %v4314 = vadd.s32 %v4309, %v4311
        %vm4315 = vc.u32 %v4309, %v4311
        %v4316 = vadd.s32 %v4312, 1
        %v4317 = vsel %vm4315, %v4316, %v4312
        %v4318 = vadd.s32 %v4313, %v4317
        %v4319 = vadd.s32 %v4318, 536870912
        %v4320 = vshrl.u32 %v4319, 30
        %v4321 = vshll.u32 %v4320, 30
        %v4322 = vsub.s32 %v4318, %v4321
        %vm4323 = vcmp.lt.s32.totalorder %v4322, 0
        %v4324 = vsub.s32 0, %v4322
        %v4325 = vsel %vm4323, %v4324, %v4322
        %v4326 = vclz %v4325
        %v4327 = vsub.s32 %v4326, 2
        %vm4328 = vcmp.gt.s32.totalorder 0, %v4327
        %v4329 = vsel %vm4328, 0, %v4327
        %v4330 = vsub.s32 32, %v4329
        %v4331 = vshll.u32 %v4322, %v4329
        %v4332 = vshrl.u32 %v4314, %v4330
        %v4333 = vor.u32 %v4331, %v4332
        %v4334 = vsub.s32 4294967266, %v4329
        %v4335 = vadd.s32 %v4334, 127
        %v4336 = vshll.u32 %v4335, 23
        %v4337 = vor.u32 4788187, %v4336
        %v4338 = vand.u32 2147483647, %v4337
        %v4340 = vcvt.s32.f32 %v4333
        %v4341 = vmul.f32 %v4340, %v4338
        %v4342 = vxor.u32 %v4341, 2147483648
        %v4343 = vsel %vm4260, %v4342, %v4341
        %v4344 = vsub.s32 4, %v4320
        %v4345 = vsel %vm4260, %v4344, %v4320
        %v4346 = vsel %vm4259, %v673, %v4343
        %v4347 = vsel %vm4259, 0, %v4345
        %v4348 = vcosq.f32.pop %v4346
        %v4349 = vsinq.f32.pop %v4346
        %vm4350 = vweird.f32 %v673
        %v4351 = vadd.s32 %v4347, 3
        %v4352 = vand.u32 %v4351, 3
        %vm4353 = vcmp.lt.s32.totalorder %v4352, 2
        %vm4354 = vcmp.eq.s32.totalorder %v4352, 0
        %v4355 = vxor.u32 %v4349, 2147483648
        %v4356 = vsel %vm4354, %v4348, %v4355
        %vm4357 = vcmp.eq.s32.totalorder %v4352, 2
        %v4358 = vxor.u32 %v4348, 2147483648
        %v4359 = vsel %vm4357, %v4358, %v4349
        %v4360 = vsel %vm4353, %v4356, %v4359
        %v4361 = vsel %vm4350, nan, %v4360
        %v4362 = vand.u32 2147483647, %v678
        %vm4363 = vcmp.le.f32.partialorder %v4362, 0.7853982
        %vm4364 = vcmp.lt.s32.totalorder %v678, 0
        %v4365 = vand.u32 %v678, 2139095040
        %v4366 = vshrl.u32 %v4365, 23
        %v4367 = vsub.s32 %v4366, 127
        %v4368 = vand.u32 2147483647, %v678
        %v4369 = vand.u32 %v4368, 8388607
        %v4370 = vor.u32 %v4369, 8388608
        %v4371 = vsub.s32 0, %v4370
        %v4372 = vadd.s32 %v4367, 1
        %vm4373 = vcmp.gt.s32.totalorder %v4372, 0
        %v4374 = vsel %vm4373, %v4372, 0
        %v4375 = vshrl.u32 %v4374, 5
        %v4376 = vand.u32 %v4374, 31
        %v4377 = vsub.s32 32, %v4376
        %v4378 = vshrl.u32 683565275, %v4377
        %v4379 = vshll.u32 683565275, %v4376
        %v4380 = vshrl.u32 2475754826, %v4377
        %v4381 = vor.u32 %v4379, %v4380
        %v4382 = vshll.u32 2475754826, %v4376
        %v4383 = vshrl.u32 2131351028, %v4377
        %v4384 = vor.u32 %v4382, %v4383
        %v4385 = vshll.u32 2131351028, %v4376
        %v4386 = vshrl.u32 2102212464, %v4377
        %v4387 = vor.u32 %v4385, %v4386
        %v4388 = vshll.u32 2102212464, %v4376
        %v4389 = vshrl.u32 920167782, %v4377
        %v4390 = vor.u32 %v4388, %v4389
        %v4391 = vshll.u32 920167782, %v4376
        %v4392 = vshrl.u32 1326507024, %v4377
        %v4393 = vor.u32 %v4391, %v4392
        %vm4394 = vcmp.lt.s32.totalorder %v4375, 1
        %vm4395 = vcmp.lt.s32.totalorder %v4375, 2
        %vm4396 = vcmp.lt.s32.totalorder %v4375, 3
        %vm4397 = vcmp.lt.s32.totalorder %v4375, 4
        %v4398 = vsel %vm4394, %v4378, %v4381
        %v4399 = vsel %vm4397, %v4387, 2102212464
        %v4400 = vsel %vm4396, %v4384, %v4399
        %v4401 = vsel %vm4395, %v4398, %v4400
        %v4402 = vsel %vm4394, %v4381, %v4384
        %v4403 = vsel %vm4397, %v4390, 920167782
        %v4404 = vsel %vm4396, %v4387, %v4403
        %v4405 = vsel %vm4395, %v4402, %v4404
        %v4406 = vsel %vm4394, %v4384, %v4387
        %v4407 = vsel %vm4397, %v4393, 1326507024
        %v4408 = vsel %vm4396, %v4390, %v4407
        %v4409 = vsel %vm4395, %v4406, %v4408
        %v4410 = vshll.u32 %v4370, 8
        %v4411 = vmul.u32.u64.compose %v4410, %v4409
        %v4412 = vextract.low.u32 %v4411
        %v4413 = vextract.high.u32 %v4411
        %v4414 = vmul.u32.u64.compose %v4410, %v4405
        %v4415 = vextract.low.u32 %v4414
        %v4416 = vextract.high.u32 %v4414
        %v4417 = vmul.u32 %v4410, %v4401
        %v4418 = vadd.s32 %v4413, %v4415
        %vm4419 = vc.u32 %v4413, %v4415
        %v4420 = vadd.s32 %v4416, 1
        %v4421 = vsel %vm4419, %v4420, %v4416
        %v4422 = vadd.s32 %v4417, %v4421
        %v4423 = vadd.s32 %v4422, 536870912
        %v4424 = vshrl.u32 %v4423, 30
        %v4425 = vshll.u32 %v4424, 30
        %v4426 = vsub.s32 %v4422, %v4425
        %vm4427 = vcmp.lt.s32.totalorder %v4426, 0
        %v4428 = vsub.s32 0, %v4426
        %v4429 = vsel %vm4427, %v4428, %v4426
        %v4430 = vclz %v4429
        %v4431 = vsub.s32 %v4430, 2
        %vm4432 = vcmp.gt.s32.totalorder 0, %v4431
        %v4433 = vsel %vm4432, 0, %v4431
        %v4434 = vsub.s32 32, %v4433
        %v4435 = vshll.u32 %v4426, %v4433
        %v4436 = vshrl.u32 %v4418, %v4434
        %v4437 = vor.u32 %v4435, %v4436
        %v4438 = vsub.s32 4294967266, %v4433
        %v4439 = vadd.s32 %v4438, 127
        %v4440 = vshll.u32 %v4439, 23
        %v4441 = vor.u32 4788187, %v4440
        %v4442 = vand.u32 2147483647, %v4441
        %v4444 = vcvt.s32.f32 %v4437
        %v4445 = vmul.f32 %v4444, %v4442
        %v4446 = vxor.u32 %v4445, 2147483648
        %v4447 = vsel %vm4364, %v4446, %v4445
        %v4448 = vsub.s32 4, %v4424
        %v4449 = vsel %vm4364, %v4448, %v4424
        %v4450 = vsel %vm4363, %v678, %v4447
        %v4451 = vsel %vm4363, 0, %v4449
        %v4452 = vcosq.f32.pop %v4450
        %v4453 = vsinq.f32.pop %v4450
        %vm4454 = vweird.f32 %v678
        %v4455 = vadd.s32 %v4451, 3
        %v4456 = vand.u32 %v4455, 3
        %vm4457 = vcmp.lt.s32.totalorder %v4456, 2
        %vm4458 = vcmp.eq.s32.totalorder %v4456, 0
        %v4459 = vxor.u32 %v4453, 2147483648
        %v4460 = vsel %vm4458, %v4452, %v4459
        %vm4461 = vcmp.eq.s32.totalorder %v4456, 2
        %v4462 = vxor.u32 %v4452, 2147483648
        %v4463 = vsel %vm4461, %v4462, %v4453
        %v4464 = vsel %vm4457, %v4460, %v4463
        %v4465 = vsel %vm4454, nan, %v4464
        %v4466 = vand.u32 2147483647, %v683
        %vm4467 = vcmp.le.f32.partialorder %v4466, 0.7853982
        %vm4468 = vcmp.lt.s32.totalorder %v683, 0
        %v4469 = vand.u32 %v683, 2139095040
        %v4470 = vshrl.u32 %v4469, 23
        %v4471 = vsub.s32 %v4470, 127
        %v4472 = vand.u32 2147483647, %v683
        %v4473 = vand.u32 %v4472, 8388607
        %v4474 = vor.u32 %v4473, 8388608
        %v4475 = vsub.s32 0, %v4474
        %v4476 = vadd.s32 %v4471, 1
        %vm4477 = vcmp.gt.s32.totalorder %v4476, 0
        %v4478 = vsel %vm4477, %v4476, 0
        %v4479 = vshrl.u32 %v4478, 5
        %v4480 = vand.u32 %v4478, 31
        %v4481 = vsub.s32 32, %v4480
        %v4482 = vshrl.u32 683565275, %v4481
        %v4483 = vshll.u32 683565275, %v4480
        %v4484 = vshrl.u32 2475754826, %v4481
        %v4485 = vor.u32 %v4483, %v4484
        %v4486 = vshll.u32 2475754826, %v4480
        %v4487 = vshrl.u32 2131351028, %v4481
        %v4488 = vor.u32 %v4486, %v4487
        %v4489 = vshll.u32 2131351028, %v4480
        %v4490 = vshrl.u32 2102212464, %v4481
        %v4491 = vor.u32 %v4489, %v4490
        %v4492 = vshll.u32 2102212464, %v4480
        %v4493 = vshrl.u32 920167782, %v4481
        %v4494 = vor.u32 %v4492, %v4493
        %v4495 = vshll.u32 920167782, %v4480
        %v4496 = vshrl.u32 1326507024, %v4481
        %v4497 = vor.u32 %v4495, %v4496
        %vm4498 = vcmp.lt.s32.totalorder %v4479, 1
        %vm4499 = vcmp.lt.s32.totalorder %v4479, 2
        %vm4500 = vcmp.lt.s32.totalorder %v4479, 3
        %vm4501 = vcmp.lt.s32.totalorder %v4479, 4
        %v4502 = vsel %vm4498, %v4482, %v4485
        %v4503 = vsel %vm4501, %v4491, 2102212464
        %v4504 = vsel %vm4500, %v4488, %v4503
        %v4505 = vsel %vm4499, %v4502, %v4504
        %v4506 = vsel %vm4498, %v4485, %v4488
        %v4507 = vsel %vm4501, %v4494, 920167782
        %v4508 = vsel %vm4500, %v4491, %v4507
        %v4509 = vsel %vm4499, %v4506, %v4508
        %v4510 = vsel %vm4498, %v4488, %v4491
        %v4511 = vsel %vm4501, %v4497, 1326507024
        %v4512 = vsel %vm4500, %v4494, %v4511
        %v4513 = vsel %vm4499, %v4510, %v4512
        %v4514 = vshll.u32 %v4474, 8
        %v4515 = vmul.u32.u64.compose %v4514, %v4513
        %v4516 = vextract.low.u32 %v4515
        %v4517 = vextract.high.u32 %v4515
        %v4518 = vmul.u32.u64.compose %v4514, %v4509
        %v4519 = vextract.low.u32 %v4518
        %v4520 = vextract.high.u32 %v4518
        %v4521 = vmul.u32 %v4514, %v4505
        %v4522 = vadd.s32 %v4517, %v4519
        %vm4523 = vc.u32 %v4517, %v4519
        %v4524 = vadd.s32 %v4520, 1
        %v4525 = vsel %vm4523, %v4524, %v4520
        %v4526 = vadd.s32 %v4521, %v4525
        %v4527 = vadd.s32 %v4526, 536870912
        %v4528 = vshrl.u32 %v4527, 30
        %v4529 = vshll.u32 %v4528, 30
        %v4530 = vsub.s32 %v4526, %v4529
        %vm4531 = vcmp.lt.s32.totalorder %v4530, 0
        %v4532 = vsub.s32 0, %v4530
        %v4533 = vsel %vm4531, %v4532, %v4530
        %v4534 = vclz %v4533
        %v4535 = vsub.s32 %v4534, 2
        %vm4536 = vcmp.gt.s32.totalorder 0, %v4535
        %v4537 = vsel %vm4536, 0, %v4535
        %v4538 = vsub.s32 32, %v4537
        %v4539 = vshll.u32 %v4530, %v4537
        %v4540 = vshrl.u32 %v4522, %v4538
        %v4541 = vor.u32 %v4539, %v4540
        %v4542 = vsub.s32 4294967266, %v4537
        %v4543 = vadd.s32 %v4542, 127
        %v4544 = vshll.u32 %v4543, 23
        %v4545 = vor.u32 4788187, %v4544
        %v4546 = vand.u32 2147483647, %v4545
        %v4548 = vcvt.s32.f32 %v4541
        %v4549 = vmul.f32 %v4548, %v4546
        %v4550 = vxor.u32 %v4549, 2147483648
        %v4551 = vsel %vm4468, %v4550, %v4549
        %v4552 = vsub.s32 4, %v4528
        %v4553 = vsel %vm4468, %v4552, %v4528
        %v4554 = vsel %vm4467, %v683, %v4551
        %v4555 = vsel %vm4467, 0, %v4553
        %v4556 = vcosq.f32.pop %v4554
        %v4557 = vsinq.f32.pop %v4554
        %vm4558 = vweird.f32 %v683
        %v4559 = vadd.s32 %v4555, 3
        %v4560 = vand.u32 %v4559, 3
        %vm4561 = vcmp.lt.s32.totalorder %v4560, 2
        %vm4562 = vcmp.eq.s32.totalorder %v4560, 0
        %v4563 = vxor.u32 %v4557, 2147483648
        %v4564 = vsel %vm4562, %v4556, %v4563
        %vm4565 = vcmp.eq.s32.totalorder %v4560, 2
        %v4566 = vxor.u32 %v4556, 2147483648
        %v4567 = vsel %vm4565, %v4566, %v4557
        %v4568 = vsel %vm4561, %v4564, %v4567
        %v4569 = vsel %vm4558, nan, %v4568
        %v4570 = vand.u32 2147483647, %v688
        %vm4571 = vcmp.le.f32.partialorder %v4570, 0.7853982
        %vm4572 = vcmp.lt.s32.totalorder %v688, 0
        %v4573 = vand.u32 %v688, 2139095040
        %v4574 = vshrl.u32 %v4573, 23
        %v4575 = vsub.s32 %v4574, 127
        %v4576 = vand.u32 2147483647, %v688
        %v4577 = vand.u32 %v4576, 8388607
        %v4578 = vor.u32 %v4577, 8388608
        %v4579 = vsub.s32 0, %v4578
        %v4580 = vadd.s32 %v4575, 1
        %vm4581 = vcmp.gt.s32.totalorder %v4580, 0
        %v4582 = vsel %vm4581, %v4580, 0
        %v4583 = vshrl.u32 %v4582, 5
        %v4584 = vand.u32 %v4582, 31
        %v4585 = vsub.s32 32, %v4584
        %v4586 = vshrl.u32 683565275, %v4585
        %v4587 = vshll.u32 683565275, %v4584
        %v4588 = vshrl.u32 2475754826, %v4585
        %v4589 = vor.u32 %v4587, %v4588
        %v4590 = vshll.u32 2475754826, %v4584
        %v4591 = vshrl.u32 2131351028, %v4585
        %v4592 = vor.u32 %v4590, %v4591
        %v4593 = vshll.u32 2131351028, %v4584
        %v4594 = vshrl.u32 2102212464, %v4585
        %v4595 = vor.u32 %v4593, %v4594
        %v4596 = vshll.u32 2102212464, %v4584
        %v4597 = vshrl.u32 920167782, %v4585
        %v4598 = vor.u32 %v4596, %v4597
        %v4599 = vshll.u32 920167782, %v4584
        %v4600 = vshrl.u32 1326507024, %v4585
        %v4601 = vor.u32 %v4599, %v4600
        %vm4602 = vcmp.lt.s32.totalorder %v4583, 1
        %vm4603 = vcmp.lt.s32.totalorder %v4583, 2
        %vm4604 = vcmp.lt.s32.totalorder %v4583, 3
        %vm4605 = vcmp.lt.s32.totalorder %v4583, 4
        %v4606 = vsel %vm4602, %v4586, %v4589
        %v4607 = vsel %vm4605, %v4595, 2102212464
        %v4608 = vsel %vm4604, %v4592, %v4607
        %v4609 = vsel %vm4603, %v4606, %v4608
        %v4610 = vsel %vm4602, %v4589, %v4592
        %v4611 = vsel %vm4605, %v4598, 920167782
        %v4612 = vsel %vm4604, %v4595, %v4611
        %v4613 = vsel %vm4603, %v4610, %v4612
        %v4614 = vsel %vm4602, %v4592, %v4595
        %v4615 = vsel %vm4605, %v4601, 1326507024
        %v4616 = vsel %vm4604, %v4598, %v4615
        %v4617 = vsel %vm4603, %v4614, %v4616
        %v4618 = vshll.u32 %v4578, 8
        %v4619 = vmul.u32.u64.compose %v4618, %v4617
        %v4620 = vextract.low.u32 %v4619
        %v4621 = vextract.high.u32 %v4619
        %v4622 = vmul.u32.u64.compose %v4618, %v4613
        %v4623 = vextract.low.u32 %v4622
        %v4624 = vextract.high.u32 %v4622
        %v4625 = vmul.u32 %v4618, %v4609
        %v4626 = vadd.s32 %v4621, %v4623
        %vm4627 = vc.u32 %v4621, %v4623
        %v4628 = vadd.s32 %v4624, 1
        %v4629 = vsel %vm4627, %v4628, %v4624
        %v4630 = vadd.s32 %v4625, %v4629
        %v4631 = vadd.s32 %v4630, 536870912
        %v4632 = vshrl.u32 %v4631, 30
        %v4633 = vshll.u32 %v4632, 30
        %v4634 = vsub.s32 %v4630, %v4633
        %vm4635 = vcmp.lt.s32.totalorder %v4634, 0
        %v4636 = vsub.s32 0, %v4634
        %v4637 = vsel %vm4635, %v4636, %v4634
        %v4638 = vclz %v4637
        %v4639 = vsub.s32 %v4638, 2
        %vm4640 = vcmp.gt.s32.totalorder 0, %v4639
        %v4641 = vsel %vm4640, 0, %v4639
        %v4642 = vsub.s32 32, %v4641
        %v4643 = vshll.u32 %v4634, %v4641
        %v4644 = vshrl.u32 %v4626, %v4642
        %v4645 = vor.u32 %v4643, %v4644
        %v4646 = vsub.s32 4294967266, %v4641
        %v4647 = vadd.s32 %v4646, 127
        %v4648 = vshll.u32 %v4647, 23
        %v4649 = vor.u32 4788187, %v4648
        %v4650 = vand.u32 2147483647, %v4649
        %v4652 = vcvt.s32.f32 %v4645
        %v4653 = vmul.f32 %v4652, %v4650
        %v4654 = vxor.u32 %v4653, 2147483648
        %v4655 = vsel %vm4572, %v4654, %v4653
        %v4656 = vsub.s32 4, %v4632
        %v4657 = vsel %vm4572, %v4656, %v4632
        %v4658 = vsel %vm4571, %v688, %v4655
        %v4659 = vsel %vm4571, 0, %v4657
        %v4660 = vcosq.f32.pop %v4658
        %v4661 = vsinq.f32.pop %v4658
        %vm4662 = vweird.f32 %v688
        %v4663 = vadd.s32 %v4659, 3
        %v4664 = vand.u32 %v4663, 3
        %vm4665 = vcmp.lt.s32.totalorder %v4664, 2
        %vm4666 = vcmp.eq.s32.totalorder %v4664, 0
        %v4667 = vxor.u32 %v4661, 2147483648
        %v4668 = vsel %vm4666, %v4660, %v4667
        %vm4669 = vcmp.eq.s32.totalorder %v4664, 2
        %v4670 = vxor.u32 %v4660, 2147483648
        %v4671 = vsel %vm4669, %v4670, %v4661
        %v4672 = vsel %vm4665, %v4668, %v4671
        %v4673 = vsel %vm4662, nan, %v4672
        %v4674 = vand.u32 2147483647, %v693
        %vm4675 = vcmp.le.f32.partialorder %v4674, 0.7853982
        %vm4676 = vcmp.lt.s32.totalorder %v693, 0
        %v4677 = vand.u32 %v693, 2139095040
        %v4678 = vshrl.u32 %v4677, 23
        %v4679 = vsub.s32 %v4678, 127
        %v4680 = vand.u32 2147483647, %v693
        %v4681 = vand.u32 %v4680, 8388607
        %v4682 = vor.u32 %v4681, 8388608
        %v4683 = vsub.s32 0, %v4682
        %v4684 = vadd.s32 %v4679, 1
        %vm4685 = vcmp.gt.s32.totalorder %v4684, 0
        %v4686 = vsel %vm4685, %v4684, 0
        %v4687 = vshrl.u32 %v4686, 5
        %v4688 = vand.u32 %v4686, 31
        %v4689 = vsub.s32 32, %v4688
        %v4690 = vshrl.u32 683565275, %v4689
        %v4691 = vshll.u32 683565275, %v4688
        %v4692 = vshrl.u32 2475754826, %v4689
        %v4693 = vor.u32 %v4691, %v4692
        %v4694 = vshll.u32 2475754826, %v4688
        %v4695 = vshrl.u32 2131351028, %v4689
        %v4696 = vor.u32 %v4694, %v4695
        %v4697 = vshll.u32 2131351028, %v4688
        %v4698 = vshrl.u32 2102212464, %v4689
        %v4699 = vor.u32 %v4697, %v4698
        %v4700 = vshll.u32 2102212464, %v4688
        %v4701 = vshrl.u32 920167782, %v4689
        %v4702 = vor.u32 %v4700, %v4701
        %v4703 = vshll.u32 920167782, %v4688
        %v4704 = vshrl.u32 1326507024, %v4689
        %v4705 = vor.u32 %v4703, %v4704
        %vm4706 = vcmp.lt.s32.totalorder %v4687, 1
        %vm4707 = vcmp.lt.s32.totalorder %v4687, 2
        %vm4708 = vcmp.lt.s32.totalorder %v4687, 3
        %vm4709 = vcmp.lt.s32.totalorder %v4687, 4
        %v4710 = vsel %vm4706, %v4690, %v4693
        %v4711 = vsel %vm4709, %v4699, 2102212464
        %v4712 = vsel %vm4708, %v4696, %v4711
        %v4713 = vsel %vm4707, %v4710, %v4712
        %v4714 = vsel %vm4706, %v4693, %v4696
        %v4715 = vsel %vm4709, %v4702, 920167782
        %v4716 = vsel %vm4708, %v4699, %v4715
        %v4717 = vsel %vm4707, %v4714, %v4716
        %v4718 = vsel %vm4706, %v4696, %v4699
        %v4719 = vsel %vm4709, %v4705, 1326507024
        %v4720 = vsel %vm4708, %v4702, %v4719
        %v4721 = vsel %vm4707, %v4718, %v4720
        %v4722 = vshll.u32 %v4682, 8
        %v4723 = vmul.u32.u64.compose %v4722, %v4721
        %v4724 = vextract.low.u32 %v4723
        %v4725 = vextract.high.u32 %v4723
        %v4726 = vmul.u32.u64.compose %v4722, %v4717
        %v4727 = vextract.low.u32 %v4726
        %v4728 = vextract.high.u32 %v4726
        %v4729 = vmul.u32 %v4722, %v4713
        %v4730 = vadd.s32 %v4725, %v4727
        %vm4731 = vc.u32 %v4725, %v4727
        %v4732 = vadd.s32 %v4728, 1
        %v4733 = vsel %vm4731, %v4732, %v4728
        %v4734 = vadd.s32 %v4729, %v4733
        %v4735 = vadd.s32 %v4734, 536870912
        %v4736 = vshrl.u32 %v4735, 30
        %v4737 = vshll.u32 %v4736, 30
        %v4738 = vsub.s32 %v4734, %v4737
        %vm4739 = vcmp.lt.s32.totalorder %v4738, 0
        %v4740 = vsub.s32 0, %v4738
        %v4741 = vsel %vm4739, %v4740, %v4738
        %v4742 = vclz %v4741
        %v4743 = vsub.s32 %v4742, 2
        %vm4744 = vcmp.gt.s32.totalorder 0, %v4743
        %v4745 = vsel %vm4744, 0, %v4743
        %v4746 = vsub.s32 32, %v4745
        %v4747 = vshll.u32 %v4738, %v4745
        %v4748 = vshrl.u32 %v4730, %v4746
        %v4749 = vor.u32 %v4747, %v4748
        %v4750 = vsub.s32 4294967266, %v4745
        %v4751 = vadd.s32 %v4750, 127
        %v4752 = vshll.u32 %v4751, 23
        %v4753 = vor.u32 4788187, %v4752
        %v4754 = vand.u32 2147483647, %v4753
        %v4756 = vcvt.s32.f32 %v4749
        %v4757 = vmul.f32 %v4756, %v4754
        %v4758 = vxor.u32 %v4757, 2147483648
        %v4759 = vsel %vm4676, %v4758, %v4757
        %v4760 = vsub.s32 4, %v4736
        %v4761 = vsel %vm4676, %v4760, %v4736
        %v4762 = vsel %vm4675, %v693, %v4759
        %v4763 = vsel %vm4675, 0, %v4761
        %v4764 = vcosq.f32.pop %v4762
        %v4765 = vsinq.f32.pop %v4762
        %vm4766 = vweird.f32 %v693
        %v4767 = vadd.s32 %v4763, 3
        %v4768 = vand.u32 %v4767, 3
        %vm4769 = vcmp.lt.s32.totalorder %v4768, 2
        %vm4770 = vcmp.eq.s32.totalorder %v4768, 0
        %v4771 = vxor.u32 %v4765, 2147483648
        %v4772 = vsel %vm4770, %v4764, %v4771
        %vm4773 = vcmp.eq.s32.totalorder %v4768, 2
        %v4774 = vxor.u32 %v4764, 2147483648
        %v4775 = vsel %vm4773, %v4774, %v4765
        %v4776 = vsel %vm4769, %v4772, %v4775
        %v4777 = vsel %vm4766, nan, %v4776
        %v4778 = vand.u32 2147483647, %v698
        %vm4779 = vcmp.le.f32.partialorder %v4778, 0.7853982
        %vm4780 = vcmp.lt.s32.totalorder %v698, 0
        %v4781 = vand.u32 %v698, 2139095040
        %v4782 = vshrl.u32 %v4781, 23
        %v4783 = vsub.s32 %v4782, 127
        %v4784 = vand.u32 2147483647, %v698
        %v4785 = vand.u32 %v4784, 8388607
        %v4786 = vor.u32 %v4785, 8388608
        %v4787 = vsub.s32 0, %v4786
        %v4788 = vadd.s32 %v4783, 1
        %vm4789 = vcmp.gt.s32.totalorder %v4788, 0
        %v4790 = vsel %vm4789, %v4788, 0
        %v4791 = vshrl.u32 %v4790, 5
        %v4792 = vand.u32 %v4790, 31
        %v4793 = vsub.s32 32, %v4792
        %v4794 = vshrl.u32 683565275, %v4793
        %v4795 = vshll.u32 683565275, %v4792
        %v4796 = vshrl.u32 2475754826, %v4793
        %v4797 = vor.u32 %v4795, %v4796
        %v4798 = vshll.u32 2475754826, %v4792
        %v4799 = vshrl.u32 2131351028, %v4793
        %v4800 = vor.u32 %v4798, %v4799
        %v4801 = vshll.u32 2131351028, %v4792
        %v4802 = vshrl.u32 2102212464, %v4793
        %v4803 = vor.u32 %v4801, %v4802
        %v4804 = vshll.u32 2102212464, %v4792
        %v4805 = vshrl.u32 920167782, %v4793
        %v4806 = vor.u32 %v4804, %v4805
        %v4807 = vshll.u32 920167782, %v4792
        %v4808 = vshrl.u32 1326507024, %v4793
        %v4809 = vor.u32 %v4807, %v4808
        %vm4810 = vcmp.lt.s32.totalorder %v4791, 1
        %vm4811 = vcmp.lt.s32.totalorder %v4791, 2
        %vm4812 = vcmp.lt.s32.totalorder %v4791, 3
        %vm4813 = vcmp.lt.s32.totalorder %v4791, 4
        %v4814 = vsel %vm4810, %v4794, %v4797
        %v4815 = vsel %vm4813, %v4803, 2102212464
        %v4816 = vsel %vm4812, %v4800, %v4815
        %v4817 = vsel %vm4811, %v4814, %v4816
        %v4818 = vsel %vm4810, %v4797, %v4800
        %v4819 = vsel %vm4813, %v4806, 920167782
        %v4820 = vsel %vm4812, %v4803, %v4819
        %v4821 = vsel %vm4811, %v4818, %v4820
        %v4822 = vsel %vm4810, %v4800, %v4803
        %v4823 = vsel %vm4813, %v4809, 1326507024
        %v4824 = vsel %vm4812, %v4806, %v4823
        %v4825 = vsel %vm4811, %v4822, %v4824
        %v4826 = vshll.u32 %v4786, 8
        %v4827 = vmul.u32.u64.compose %v4826, %v4825
        %v4828 = vextract.low.u32 %v4827
        %v4829 = vextract.high.u32 %v4827
        %v4830 = vmul.u32.u64.compose %v4826, %v4821
        %v4831 = vextract.low.u32 %v4830
        %v4832 = vextract.high.u32 %v4830
        %v4833 = vmul.u32 %v4826, %v4817
        %v4834 = vadd.s32 %v4829, %v4831
        %vm4835 = vc.u32 %v4829, %v4831
        %v4836 = vadd.s32 %v4832, 1
        %v4837 = vsel %vm4835, %v4836, %v4832
        %v4838 = vadd.s32 %v4833, %v4837
        %v4839 = vadd.s32 %v4838, 536870912
        %v4840 = vshrl.u32 %v4839, 30
        %v4841 = vshll.u32 %v4840, 30
        %v4842 = vsub.s32 %v4838, %v4841
        %vm4843 = vcmp.lt.s32.totalorder %v4842, 0
        %v4844 = vsub.s32 0, %v4842
        %v4845 = vsel %vm4843, %v4844, %v4842
        %v4846 = vclz %v4845
        %v4847 = vsub.s32 %v4846, 2
        %vm4848 = vcmp.gt.s32.totalorder 0, %v4847
        %v4849 = vsel %vm4848, 0, %v4847
        %v4850 = vsub.s32 32, %v4849
        %v4851 = vshll.u32 %v4842, %v4849
        %v4852 = vshrl.u32 %v4834, %v4850
        %v4853 = vor.u32 %v4851, %v4852
        %v4854 = vsub.s32 4294967266, %v4849
        %v4855 = vadd.s32 %v4854, 127
        %v4856 = vshll.u32 %v4855, 23
        %v4857 = vor.u32 4788187, %v4856
        %v4858 = vand.u32 2147483647, %v4857
        %v4860 = vcvt.s32.f32 %v4853
        %v4861 = vmul.f32 %v4860, %v4858
        %v4862 = vxor.u32 %v4861, 2147483648
        %v4863 = vsel %vm4780, %v4862, %v4861
        %v4864 = vsub.s32 4, %v4840
        %v4865 = vsel %vm4780, %v4864, %v4840
        %v4866 = vsel %vm4779, %v698, %v4863
        %v4867 = vsel %vm4779, 0, %v4865
        %v4868 = vcosq.f32.pop %v4866
        %v4869 = vsinq.f32.pop %v4866
        %vm4870 = vweird.f32 %v698
        %v4871 = vadd.s32 %v4867, 3
        %v4872 = vand.u32 %v4871, 3
        %vm4873 = vcmp.lt.s32.totalorder %v4872, 2
        %vm4874 = vcmp.eq.s32.totalorder %v4872, 0
        %v4875 = vxor.u32 %v4869, 2147483648
        %v4876 = vsel %vm4874, %v4868, %v4875
        %vm4877 = vcmp.eq.s32.totalorder %v4872, 2
        %v4878 = vxor.u32 %v4868, 2147483648
        %v4879 = vsel %vm4877, %v4878, %v4869
        %v4880 = vsel %vm4873, %v4876, %v4879
        %v4881 = vsel %vm4870, nan, %v4880
        %v4882 = vand.u32 2147483647, %v703
        %vm4883 = vcmp.le.f32.partialorder %v4882, 0.7853982
        %vm4884 = vcmp.lt.s32.totalorder %v703, 0
        %v4885 = vand.u32 %v703, 2139095040
        %v4886 = vshrl.u32 %v4885, 23
        %v4887 = vsub.s32 %v4886, 127
        %v4888 = vand.u32 2147483647, %v703
        %v4889 = vand.u32 %v4888, 8388607
        %v4890 = vor.u32 %v4889, 8388608
        %v4891 = vsub.s32 0, %v4890
        %v4892 = vadd.s32 %v4887, 1
        %vm4893 = vcmp.gt.s32.totalorder %v4892, 0
        %v4894 = vsel %vm4893, %v4892, 0
        %v4895 = vshrl.u32 %v4894, 5
        %v4896 = vand.u32 %v4894, 31
        %v4897 = vsub.s32 32, %v4896
        %v4898 = vshrl.u32 683565275, %v4897
        %v4899 = vshll.u32 683565275, %v4896
        %v4900 = vshrl.u32 2475754826, %v4897
        %v4901 = vor.u32 %v4899, %v4900
        %v4902 = vshll.u32 2475754826, %v4896
        %v4903 = vshrl.u32 2131351028, %v4897
        %v4904 = vor.u32 %v4902, %v4903
        %v4905 = vshll.u32 2131351028, %v4896
        %v4906 = vshrl.u32 2102212464, %v4897
        %v4907 = vor.u32 %v4905, %v4906
        %v4908 = vshll.u32 2102212464, %v4896
        %v4909 = vshrl.u32 920167782, %v4897
        %v4910 = vor.u32 %v4908, %v4909
        %v4911 = vshll.u32 920167782, %v4896
        %v4912 = vshrl.u32 1326507024, %v4897
        %v4913 = vor.u32 %v4911, %v4912
        %vm4914 = vcmp.lt.s32.totalorder %v4895, 1
        %vm4915 = vcmp.lt.s32.totalorder %v4895, 2
        %vm4916 = vcmp.lt.s32.totalorder %v4895, 3
        %vm4917 = vcmp.lt.s32.totalorder %v4895, 4
        %v4918 = vsel %vm4914, %v4898, %v4901
        %v4919 = vsel %vm4917, %v4907, 2102212464
        %v4920 = vsel %vm4916, %v4904, %v4919
        %v4921 = vsel %vm4915, %v4918, %v4920
        %v4922 = vsel %vm4914, %v4901, %v4904
        %v4923 = vsel %vm4917, %v4910, 920167782
        %v4924 = vsel %vm4916, %v4907, %v4923
        %v4925 = vsel %vm4915, %v4922, %v4924
        %v4926 = vsel %vm4914, %v4904, %v4907
        %v4927 = vsel %vm4917, %v4913, 1326507024
        %v4928 = vsel %vm4916, %v4910, %v4927
        %v4929 = vsel %vm4915, %v4926, %v4928
        %v4930 = vshll.u32 %v4890, 8
        %v4931 = vmul.u32.u64.compose %v4930, %v4929
        %v4932 = vextract.low.u32 %v4931
        %v4933 = vextract.high.u32 %v4931
        %v4934 = vmul.u32.u64.compose %v4930, %v4925
        %v4935 = vextract.low.u32 %v4934
        %v4936 = vextract.high.u32 %v4934
        %v4937 = vmul.u32 %v4930, %v4921
        %v4938 = vadd.s32 %v4933, %v4935
        %vm4939 = vc.u32 %v4933, %v4935
        %v4940 = vadd.s32 %v4936, 1
        %v4941 = vsel %vm4939, %v4940, %v4936
        %v4942 = vadd.s32 %v4937, %v4941
        %v4943 = vadd.s32 %v4942, 536870912
        %v4944 = vshrl.u32 %v4943, 30
        %v4945 = vshll.u32 %v4944, 30
        %v4946 = vsub.s32 %v4942, %v4945
        %vm4947 = vcmp.lt.s32.totalorder %v4946, 0
        %v4948 = vsub.s32 0, %v4946
        %v4949 = vsel %vm4947, %v4948, %v4946
        %v4950 = vclz %v4949
        %v4951 = vsub.s32 %v4950, 2
        %vm4952 = vcmp.gt.s32.totalorder 0, %v4951
        %v4953 = vsel %vm4952, 0, %v4951
        %v4954 = vsub.s32 32, %v4953
        %v4955 = vshll.u32 %v4946, %v4953
        %v4956 = vshrl.u32 %v4938, %v4954
        %v4957 = vor.u32 %v4955, %v4956
        %v4958 = vsub.s32 4294967266, %v4953
        %v4959 = vadd.s32 %v4958, 127
        %v4960 = vshll.u32 %v4959, 23
        %v4961 = vor.u32 4788187, %v4960
        %v4962 = vand.u32 2147483647, %v4961
        %v4964 = vcvt.s32.f32 %v4957
        %v4965 = vmul.f32 %v4964, %v4962
        %v4966 = vxor.u32 %v4965, 2147483648
        %v4967 = vsel %vm4884, %v4966, %v4965
        %v4968 = vsub.s32 4, %v4944
        %v4969 = vsel %vm4884, %v4968, %v4944
        %v4970 = vsel %vm4883, %v703, %v4967
        %v4971 = vsel %vm4883, 0, %v4969
        %v4972 = vcosq.f32.pop %v4970
        %v4973 = vsinq.f32.pop %v4970
        %vm4974 = vweird.f32 %v703
        %v4975 = vadd.s32 %v4971, 3
        %v4976 = vand.u32 %v4975, 3
        %vm4977 = vcmp.lt.s32.totalorder %v4976, 2
        %vm4978 = vcmp.eq.s32.totalorder %v4976, 0
        %v4979 = vxor.u32 %v4973, 2147483648
        %v4980 = vsel %vm4978, %v4972, %v4979
        %vm4981 = vcmp.eq.s32.totalorder %v4976, 2
        %v4982 = vxor.u32 %v4972, 2147483648
        %v4983 = vsel %vm4981, %v4982, %v4973
        %v4984 = vsel %vm4977, %v4980, %v4983
        %v4985 = vsel %vm4974, nan, %v4984
        %v4986 = vand.u32 2147483647, %v708
        %vm4987 = vcmp.le.f32.partialorder %v4986, 0.7853982
        %vm4988 = vcmp.lt.s32.totalorder %v708, 0
        %v4989 = vand.u32 %v708, 2139095040
        %v4990 = vshrl.u32 %v4989, 23
        %v4991 = vsub.s32 %v4990, 127
        %v4992 = vand.u32 2147483647, %v708
        %v4993 = vand.u32 %v4992, 8388607
        %v4994 = vor.u32 %v4993, 8388608
        %v4995 = vsub.s32 0, %v4994
        %v4996 = vadd.s32 %v4991, 1
        %vm4997 = vcmp.gt.s32.totalorder %v4996, 0
        %v4998 = vsel %vm4997, %v4996, 0
        %v4999 = vshrl.u32 %v4998, 5
        %v5000 = vand.u32 %v4998, 31
        %v5001 = vsub.s32 32, %v5000
        %v5002 = vshrl.u32 683565275, %v5001
        %v5003 = vshll.u32 683565275, %v5000
        %v5004 = vshrl.u32 2475754826, %v5001
        %v5005 = vor.u32 %v5003, %v5004
        %v5006 = vshll.u32 2475754826, %v5000
        %v5007 = vshrl.u32 2131351028, %v5001
        %v5008 = vor.u32 %v5006, %v5007
        %v5009 = vshll.u32 2131351028, %v5000
        %v5010 = vshrl.u32 2102212464, %v5001
        %v5011 = vor.u32 %v5009, %v5010
        %v5012 = vshll.u32 2102212464, %v5000
        %v5013 = vshrl.u32 920167782, %v5001
        %v5014 = vor.u32 %v5012, %v5013
        %v5015 = vshll.u32 920167782, %v5000
        %v5016 = vshrl.u32 1326507024, %v5001
        %v5017 = vor.u32 %v5015, %v5016
        %vm5018 = vcmp.lt.s32.totalorder %v4999, 1
        %vm5019 = vcmp.lt.s32.totalorder %v4999, 2
        %vm5020 = vcmp.lt.s32.totalorder %v4999, 3
        %vm5021 = vcmp.lt.s32.totalorder %v4999, 4
        %v5022 = vsel %vm5018, %v5002, %v5005
        %v5023 = vsel %vm5021, %v5011, 2102212464
        %v5024 = vsel %vm5020, %v5008, %v5023
        %v5025 = vsel %vm5019, %v5022, %v5024
        %v5026 = vsel %vm5018, %v5005, %v5008
        %v5027 = vsel %vm5021, %v5014, 920167782
        %v5028 = vsel %vm5020, %v5011, %v5027
        %v5029 = vsel %vm5019, %v5026, %v5028
        %v5030 = vsel %vm5018, %v5008, %v5011
        %v5031 = vsel %vm5021, %v5017, 1326507024
        %v5032 = vsel %vm5020, %v5014, %v5031
        %v5033 = vsel %vm5019, %v5030, %v5032
        %v5034 = vshll.u32 %v4994, 8
        %v5035 = vmul.u32.u64.compose %v5034, %v5033
        %v5036 = vextract.low.u32 %v5035
        %v5037 = vextract.high.u32 %v5035
        %v5038 = vmul.u32.u64.compose %v5034, %v5029
        %v5039 = vextract.low.u32 %v5038
        %v5040 = vextract.high.u32 %v5038
        %v5041 = vmul.u32 %v5034, %v5025
        %v5042 = vadd.s32 %v5037, %v5039
        %vm5043 = vc.u32 %v5037, %v5039
        %v5044 = vadd.s32 %v5040, 1
        %v5045 = vsel %vm5043, %v5044, %v5040
        %v5046 = vadd.s32 %v5041, %v5045
        %v5047 = vadd.s32 %v5046, 536870912
        %v5048 = vshrl.u32 %v5047, 30
        %v5049 = vshll.u32 %v5048, 30
        %v5050 = vsub.s32 %v5046, %v5049
        %vm5051 = vcmp.lt.s32.totalorder %v5050, 0
        %v5052 = vsub.s32 0, %v5050
        %v5053 = vsel %vm5051, %v5052, %v5050
        %v5054 = vclz %v5053
        %v5055 = vsub.s32 %v5054, 2
        %vm5056 = vcmp.gt.s32.totalorder 0, %v5055
        %v5057 = vsel %vm5056, 0, %v5055
        %v5058 = vsub.s32 32, %v5057
        %v5059 = vshll.u32 %v5050, %v5057
        %v5060 = vshrl.u32 %v5042, %v5058
        %v5061 = vor.u32 %v5059, %v5060
        %v5062 = vsub.s32 4294967266, %v5057
        %v5063 = vadd.s32 %v5062, 127
        %v5064 = vshll.u32 %v5063, 23
        %v5065 = vor.u32 4788187, %v5064
        %v5066 = vand.u32 2147483647, %v5065
        %v5068 = vcvt.s32.f32 %v5061
        %v5069 = vmul.f32 %v5068, %v5066
        %v5070 = vxor.u32 %v5069, 2147483648
        %v5071 = vsel %vm4988, %v5070, %v5069
        %v5072 = vsub.s32 4, %v5048
        %v5073 = vsel %vm4988, %v5072, %v5048
        %v5074 = vsel %vm4987, %v708, %v5071
        %v5075 = vsel %vm4987, 0, %v5073
        %v5076 = vcosq.f32.pop %v5074
        %v5077 = vsinq.f32.pop %v5074
        %vm5078 = vweird.f32 %v708
        %v5079 = vadd.s32 %v5075, 3
        %v5080 = vand.u32 %v5079, 3
        %vm5081 = vcmp.lt.s32.totalorder %v5080, 2
        %vm5082 = vcmp.eq.s32.totalorder %v5080, 0
        %v5083 = vxor.u32 %v5077, 2147483648
        %v5084 = vsel %vm5082, %v5076, %v5083
        %vm5085 = vcmp.eq.s32.totalorder %v5080, 2
        %v5086 = vxor.u32 %v5076, 2147483648
        %v5087 = vsel %vm5085, %v5086, %v5077
        %v5088 = vsel %vm5081, %v5084, %v5087
        %v5089 = vsel %vm5078, nan, %v5088
        %v5090 = vand.u32 2147483647, %v713
        %vm5091 = vcmp.le.f32.partialorder %v5090, 0.7853982
        %vm5092 = vcmp.lt.s32.totalorder %v713, 0
        %v5093 = vand.u32 %v713, 2139095040
        %v5094 = vshrl.u32 %v5093, 23
        %v5095 = vsub.s32 %v5094, 127
        %v5096 = vand.u32 2147483647, %v713
        %v5097 = vand.u32 %v5096, 8388607
        %v5098 = vor.u32 %v5097, 8388608
        %v5099 = vsub.s32 0, %v5098
        %v5100 = vadd.s32 %v5095, 1
        %vm5101 = vcmp.gt.s32.totalorder %v5100, 0
        %v5102 = vsel %vm5101, %v5100, 0
        %v5103 = vshrl.u32 %v5102, 5
        %v5104 = vand.u32 %v5102, 31
        %v5105 = vsub.s32 32, %v5104
        %v5106 = vshrl.u32 683565275, %v5105
        %v5107 = vshll.u32 683565275, %v5104
        %v5108 = vshrl.u32 2475754826, %v5105
        %v5109 = vor.u32 %v5107, %v5108
        %v5110 = vshll.u32 2475754826, %v5104
        %v5111 = vshrl.u32 2131351028, %v5105
        %v5112 = vor.u32 %v5110, %v5111
        %v5113 = vshll.u32 2131351028, %v5104
        %v5114 = vshrl.u32 2102212464, %v5105
        %v5115 = vor.u32 %v5113, %v5114
        %v5116 = vshll.u32 2102212464, %v5104
        %v5117 = vshrl.u32 920167782, %v5105
        %v5118 = vor.u32 %v5116, %v5117
        %v5119 = vshll.u32 920167782, %v5104
        %v5120 = vshrl.u32 1326507024, %v5105
        %v5121 = vor.u32 %v5119, %v5120
        %vm5122 = vcmp.lt.s32.totalorder %v5103, 1
        %vm5123 = vcmp.lt.s32.totalorder %v5103, 2
        %vm5124 = vcmp.lt.s32.totalorder %v5103, 3
        %vm5125 = vcmp.lt.s32.totalorder %v5103, 4
        %v5126 = vsel %vm5122, %v5106, %v5109
        %v5127 = vsel %vm5125, %v5115, 2102212464
        %v5128 = vsel %vm5124, %v5112, %v5127
        %v5129 = vsel %vm5123, %v5126, %v5128
        %v5130 = vsel %vm5122, %v5109, %v5112
        %v5131 = vsel %vm5125, %v5118, 920167782
        %v5132 = vsel %vm5124, %v5115, %v5131
        %v5133 = vsel %vm5123, %v5130, %v5132
        %v5134 = vsel %vm5122, %v5112, %v5115
        %v5135 = vsel %vm5125, %v5121, 1326507024
        %v5136 = vsel %vm5124, %v5118, %v5135
        %v5137 = vsel %vm5123, %v5134, %v5136
        %v5138 = vshll.u32 %v5098, 8
        %v5139 = vmul.u32.u64.compose %v5138, %v5137
        %v5140 = vextract.low.u32 %v5139
        %v5141 = vextract.high.u32 %v5139
        %v5142 = vmul.u32.u64.compose %v5138, %v5133
        %v5143 = vextract.low.u32 %v5142
        %v5144 = vextract.high.u32 %v5142
        %v5145 = vmul.u32 %v5138, %v5129
        %v5146 = vadd.s32 %v5141, %v5143
        %vm5147 = vc.u32 %v5141, %v5143
        %v5148 = vadd.s32 %v5144, 1
        %v5149 = vsel %vm5147, %v5148, %v5144
        %v5150 = vadd.s32 %v5145, %v5149
        %v5151 = vadd.s32 %v5150, 536870912
        %v5152 = vshrl.u32 %v5151, 30
        %v5153 = vshll.u32 %v5152, 30
        %v5154 = vsub.s32 %v5150, %v5153
        %vm5155 = vcmp.lt.s32.totalorder %v5154, 0
        %v5156 = vsub.s32 0, %v5154
        %v5157 = vsel %vm5155, %v5156, %v5154
        %v5158 = vclz %v5157
        %v5159 = vsub.s32 %v5158, 2
        %vm5160 = vcmp.gt.s32.totalorder 0, %v5159
        %v5161 = vsel %vm5160, 0, %v5159
        %v5162 = vsub.s32 32, %v5161
        %v5163 = vshll.u32 %v5154, %v5161
        %v5164 = vshrl.u32 %v5146, %v5162
        %v5165 = vor.u32 %v5163, %v5164
        %v5166 = vsub.s32 4294967266, %v5161
        %v5167 = vadd.s32 %v5166, 127
        %v5168 = vshll.u32 %v5167, 23
        %v5169 = vor.u32 4788187, %v5168
        %v5170 = vand.u32 2147483647, %v5169
        %v5172 = vcvt.s32.f32 %v5165
        %v5173 = vmul.f32 %v5172, %v5170
        %v5174 = vxor.u32 %v5173, 2147483648
        %v5175 = vsel %vm5092, %v5174, %v5173
        %v5176 = vsub.s32 4, %v5152
        %v5177 = vsel %vm5092, %v5176, %v5152
        %v5178 = vsel %vm5091, %v713, %v5175
        %v5179 = vsel %vm5091, 0, %v5177
        %v5180 = vcosq.f32.pop %v5178
        %v5181 = vsinq.f32.pop %v5178
        %vm5182 = vweird.f32 %v713
        %v5183 = vadd.s32 %v5179, 3
        %v5184 = vand.u32 %v5183, 3
        %vm5185 = vcmp.lt.s32.totalorder %v5184, 2
        %vm5186 = vcmp.eq.s32.totalorder %v5184, 0
        %v5187 = vxor.u32 %v5181, 2147483648
        %v5188 = vsel %vm5186, %v5180, %v5187
        %vm5189 = vcmp.eq.s32.totalorder %v5184, 2
        %v5190 = vxor.u32 %v5180, 2147483648
        %v5191 = vsel %vm5189, %v5190, %v5181
        %v5192 = vsel %vm5185, %v5188, %v5191
        %v5193 = vsel %vm5182, nan, %v5192
        %v5194 = vand.u32 2147483647, %v718
        %vm5195 = vcmp.le.f32.partialorder %v5194, 0.7853982
        %vm5196 = vcmp.lt.s32.totalorder %v718, 0
        %v5197 = vand.u32 %v718, 2139095040
        %v5198 = vshrl.u32 %v5197, 23
        %v5199 = vsub.s32 %v5198, 127
        %v5200 = vand.u32 2147483647, %v718
        %v5201 = vand.u32 %v5200, 8388607
        %v5202 = vor.u32 %v5201, 8388608
        %v5203 = vsub.s32 0, %v5202
        %v5204 = vadd.s32 %v5199, 1
        %vm5205 = vcmp.gt.s32.totalorder %v5204, 0
        %v5206 = vsel %vm5205, %v5204, 0
        %v5207 = vshrl.u32 %v5206, 5
        %v5208 = vand.u32 %v5206, 31
        %v5209 = vsub.s32 32, %v5208
        %v5210 = vshrl.u32 683565275, %v5209
        %v5211 = vshll.u32 683565275, %v5208
        %v5212 = vshrl.u32 2475754826, %v5209
        %v5213 = vor.u32 %v5211, %v5212
        %v5214 = vshll.u32 2475754826, %v5208
        %v5215 = vshrl.u32 2131351028, %v5209
        %v5216 = vor.u32 %v5214, %v5215
        %v5217 = vshll.u32 2131351028, %v5208
        %v5218 = vshrl.u32 2102212464, %v5209
        %v5219 = vor.u32 %v5217, %v5218
        %v5220 = vshll.u32 2102212464, %v5208
        %v5221 = vshrl.u32 920167782, %v5209
        %v5222 = vor.u32 %v5220, %v5221
        %v5223 = vshll.u32 920167782, %v5208
        %v5224 = vshrl.u32 1326507024, %v5209
        %v5225 = vor.u32 %v5223, %v5224
        %vm5226 = vcmp.lt.s32.totalorder %v5207, 1
        %vm5227 = vcmp.lt.s32.totalorder %v5207, 2
        %vm5228 = vcmp.lt.s32.totalorder %v5207, 3
        %vm5229 = vcmp.lt.s32.totalorder %v5207, 4
        %v5230 = vsel %vm5226, %v5210, %v5213
        %v5231 = vsel %vm5229, %v5219, 2102212464
        %v5232 = vsel %vm5228, %v5216, %v5231
        %v5233 = vsel %vm5227, %v5230, %v5232
        %v5234 = vsel %vm5226, %v5213, %v5216
        %v5235 = vsel %vm5229, %v5222, 920167782
        %v5236 = vsel %vm5228, %v5219, %v5235
        %v5237 = vsel %vm5227, %v5234, %v5236
        %v5238 = vsel %vm5226, %v5216, %v5219
        %v5239 = vsel %vm5229, %v5225, 1326507024
        %v5240 = vsel %vm5228, %v5222, %v5239
        %v5241 = vsel %vm5227, %v5238, %v5240
        %v5242 = vshll.u32 %v5202, 8
        %v5243 = vmul.u32.u64.compose %v5242, %v5241
        %v5244 = vextract.low.u32 %v5243
        %v5245 = vextract.high.u32 %v5243
        %v5246 = vmul.u32.u64.compose %v5242, %v5237
        %v5247 = vextract.low.u32 %v5246
        %v5248 = vextract.high.u32 %v5246
        %v5249 = vmul.u32 %v5242, %v5233
        %v5250 = vadd.s32 %v5245, %v5247
        %vm5251 = vc.u32 %v5245, %v5247
        %v5252 = vadd.s32 %v5248, 1
        %v5253 = vsel %vm5251, %v5252, %v5248
        %v5254 = vadd.s32 %v5249, %v5253
        %v5255 = vadd.s32 %v5254, 536870912
        %v5256 = vshrl.u32 %v5255, 30
        %v5257 = vshll.u32 %v5256, 30
        %v5258 = vsub.s32 %v5254, %v5257
        %vm5259 = vcmp.lt.s32.totalorder %v5258, 0
        %v5260 = vsub.s32 0, %v5258
        %v5261 = vsel %vm5259, %v5260, %v5258
        %v5262 = vclz %v5261
        %v5263 = vsub.s32 %v5262, 2
        %vm5264 = vcmp.gt.s32.totalorder 0, %v5263
        %v5265 = vsel %vm5264, 0, %v5263
        %v5266 = vsub.s32 32, %v5265
        %v5267 = vshll.u32 %v5258, %v5265
        %v5268 = vshrl.u32 %v5250, %v5266
        %v5269 = vor.u32 %v5267, %v5268
        %v5270 = vsub.s32 4294967266, %v5265
        %v5271 = vadd.s32 %v5270, 127
        %v5272 = vshll.u32 %v5271, 23
        %v5273 = vor.u32 4788187, %v5272
        %v5274 = vand.u32 2147483647, %v5273
        %v5276 = vcvt.s32.f32 %v5269
        %v5277 = vmul.f32 %v5276, %v5274
        %v5278 = vxor.u32 %v5277, 2147483648
        %v5279 = vsel %vm5196, %v5278, %v5277
        %v5280 = vsub.s32 4, %v5256
        %v5281 = vsel %vm5196, %v5280, %v5256
        %v5282 = vsel %vm5195, %v718, %v5279
        %v5283 = vsel %vm5195, 0, %v5281
        %v5284 = vcosq.f32.pop %v5282
        %v5285 = vsinq.f32.pop %v5282
        %vm5286 = vweird.f32 %v718
        %v5287 = vadd.s32 %v5283, 3
        %v5288 = vand.u32 %v5287, 3
        %vm5289 = vcmp.lt.s32.totalorder %v5288, 2
        %vm5290 = vcmp.eq.s32.totalorder %v5288, 0
        %v5291 = vxor.u32 %v5285, 2147483648
        %v5292 = vsel %vm5290, %v5284, %v5291
        %vm5293 = vcmp.eq.s32.totalorder %v5288, 2
        %v5294 = vxor.u32 %v5284, 2147483648
        %v5295 = vsel %vm5293, %v5294, %v5285
        %v5296 = vsel %vm5289, %v5292, %v5295
        %v5297 = vsel %vm5286, nan, %v5296
        %v5298 = vand.u32 2147483647, %v723
        %vm5299 = vcmp.le.f32.partialorder %v5298, 0.7853982
        %vm5300 = vcmp.lt.s32.totalorder %v723, 0
        %v5301 = vand.u32 %v723, 2139095040
        %v5302 = vshrl.u32 %v5301, 23
        %v5303 = vsub.s32 %v5302, 127
        %v5304 = vand.u32 2147483647, %v723
        %v5305 = vand.u32 %v5304, 8388607
        %v5306 = vor.u32 %v5305, 8388608
        %v5307 = vsub.s32 0, %v5306
        %v5308 = vadd.s32 %v5303, 1
        %vm5309 = vcmp.gt.s32.totalorder %v5308, 0
        %v5310 = vsel %vm5309, %v5308, 0
        %v5311 = vshrl.u32 %v5310, 5
        %v5312 = vand.u32 %v5310, 31
        %v5313 = vsub.s32 32, %v5312
        %v5314 = vshrl.u32 683565275, %v5313
        %v5315 = vshll.u32 683565275, %v5312
        %v5316 = vshrl.u32 2475754826, %v5313
        %v5317 = vor.u32 %v5315, %v5316
        %v5318 = vshll.u32 2475754826, %v5312
        %v5319 = vshrl.u32 2131351028, %v5313
        %v5320 = vor.u32 %v5318, %v5319
        %v5321 = vshll.u32 2131351028, %v5312
        %v5322 = vshrl.u32 2102212464, %v5313
        %v5323 = vor.u32 %v5321, %v5322
        %v5324 = vshll.u32 2102212464, %v5312
        %v5325 = vshrl.u32 920167782, %v5313
        %v5326 = vor.u32 %v5324, %v5325
        %v5327 = vshll.u32 920167782, %v5312
        %v5328 = vshrl.u32 1326507024, %v5313
        %v5329 = vor.u32 %v5327, %v5328
        %vm5330 = vcmp.lt.s32.totalorder %v5311, 1
        %vm5331 = vcmp.lt.s32.totalorder %v5311, 2
        %vm5332 = vcmp.lt.s32.totalorder %v5311, 3
        %vm5333 = vcmp.lt.s32.totalorder %v5311, 4
        %v5334 = vsel %vm5330, %v5314, %v5317
        %v5335 = vsel %vm5333, %v5323, 2102212464
        %v5336 = vsel %vm5332, %v5320, %v5335
        %v5337 = vsel %vm5331, %v5334, %v5336
        %v5338 = vsel %vm5330, %v5317, %v5320
        %v5339 = vsel %vm5333, %v5326, 920167782
        %v5340 = vsel %vm5332, %v5323, %v5339
        %v5341 = vsel %vm5331, %v5338, %v5340
        %v5342 = vsel %vm5330, %v5320, %v5323
        %v5343 = vsel %vm5333, %v5329, 1326507024
        %v5344 = vsel %vm5332, %v5326, %v5343
        %v5345 = vsel %vm5331, %v5342, %v5344
        %v5346 = vshll.u32 %v5306, 8
        %v5347 = vmul.u32.u64.compose %v5346, %v5345
        %v5348 = vextract.low.u32 %v5347
        %v5349 = vextract.high.u32 %v5347
        %v5350 = vmul.u32.u64.compose %v5346, %v5341
        %v5351 = vextract.low.u32 %v5350
        %v5352 = vextract.high.u32 %v5350
        %v5353 = vmul.u32 %v5346, %v5337
        %v5354 = vadd.s32 %v5349, %v5351
        %vm5355 = vc.u32 %v5349, %v5351
        %v5356 = vadd.s32 %v5352, 1
        %v5357 = vsel %vm5355, %v5356, %v5352
        %v5358 = vadd.s32 %v5353, %v5357
        %v5359 = vadd.s32 %v5358, 536870912
        %v5360 = vshrl.u32 %v5359, 30
        %v5361 = vshll.u32 %v5360, 30
        %v5362 = vsub.s32 %v5358, %v5361
        %vm5363 = vcmp.lt.s32.totalorder %v5362, 0
        %v5364 = vsub.s32 0, %v5362
        %v5365 = vsel %vm5363, %v5364, %v5362
        %v5366 = vclz %v5365
        %v5367 = vsub.s32 %v5366, 2
        %vm5368 = vcmp.gt.s32.totalorder 0, %v5367
        %v5369 = vsel %vm5368, 0, %v5367
        %v5370 = vsub.s32 32, %v5369
        %v5371 = vshll.u32 %v5362, %v5369
        %v5372 = vshrl.u32 %v5354, %v5370
        %v5373 = vor.u32 %v5371, %v5372
        %v5374 = vsub.s32 4294967266, %v5369
        %v5375 = vadd.s32 %v5374, 127
        %v5376 = vshll.u32 %v5375, 23
        %v5377 = vor.u32 4788187, %v5376
        %v5378 = vand.u32 2147483647, %v5377
        %v5380 = vcvt.s32.f32 %v5373
        %v5381 = vmul.f32 %v5380, %v5378
        %v5382 = vxor.u32 %v5381, 2147483648
        %v5383 = vsel %vm5300, %v5382, %v5381
        %v5384 = vsub.s32 4, %v5360
        %v5385 = vsel %vm5300, %v5384, %v5360
        %v5386 = vsel %vm5299, %v723, %v5383
        %v5387 = vsel %vm5299, 0, %v5385
        %v5388 = vcosq.f32.pop %v5386
        %v5389 = vsinq.f32.pop %v5386
        %vm5390 = vweird.f32 %v723
        %v5391 = vadd.s32 %v5387, 3
        %v5392 = vand.u32 %v5391, 3
        %vm5393 = vcmp.lt.s32.totalorder %v5392, 2
        %vm5394 = vcmp.eq.s32.totalorder %v5392, 0
        %v5395 = vxor.u32 %v5389, 2147483648
        %v5396 = vsel %vm5394, %v5388, %v5395
        %vm5397 = vcmp.eq.s32.totalorder %v5392, 2
        %v5398 = vxor.u32 %v5388, 2147483648
        %v5399 = vsel %vm5397, %v5398, %v5389
        %v5400 = vsel %vm5393, %v5396, %v5399
        %v5401 = vsel %vm5390, nan, %v5400
        %v5402 = vand.u32 2147483647, %v728
        %vm5403 = vcmp.le.f32.partialorder %v5402, 0.7853982
        %vm5404 = vcmp.lt.s32.totalorder %v728, 0
        %v5405 = vand.u32 %v728, 2139095040
        %v5406 = vshrl.u32 %v5405, 23
        %v5407 = vsub.s32 %v5406, 127
        %v5408 = vand.u32 2147483647, %v728
        %v5409 = vand.u32 %v5408, 8388607
        %v5410 = vor.u32 %v5409, 8388608
        %v5411 = vsub.s32 0, %v5410
        %v5412 = vadd.s32 %v5407, 1
        %vm5413 = vcmp.gt.s32.totalorder %v5412, 0
        %v5414 = vsel %vm5413, %v5412, 0
        %v5415 = vshrl.u32 %v5414, 5
        %v5416 = vand.u32 %v5414, 31
        %v5417 = vsub.s32 32, %v5416
        %v5418 = vshrl.u32 683565275, %v5417
        %v5419 = vshll.u32 683565275, %v5416
        %v5420 = vshrl.u32 2475754826, %v5417
        %v5421 = vor.u32 %v5419, %v5420
        %v5422 = vshll.u32 2475754826, %v5416
        %v5423 = vshrl.u32 2131351028, %v5417
        %v5424 = vor.u32 %v5422, %v5423
        %v5425 = vshll.u32 2131351028, %v5416
        %v5426 = vshrl.u32 2102212464, %v5417
        %v5427 = vor.u32 %v5425, %v5426
        %v5428 = vshll.u32 2102212464, %v5416
        %v5429 = vshrl.u32 920167782, %v5417
        %v5430 = vor.u32 %v5428, %v5429
        %v5431 = vshll.u32 920167782, %v5416
        %v5432 = vshrl.u32 1326507024, %v5417
        %v5433 = vor.u32 %v5431, %v5432
        %vm5434 = vcmp.lt.s32.totalorder %v5415, 1
        %vm5435 = vcmp.lt.s32.totalorder %v5415, 2
        %vm5436 = vcmp.lt.s32.totalorder %v5415, 3
        %vm5437 = vcmp.lt.s32.totalorder %v5415, 4
        %v5438 = vsel %vm5434, %v5418, %v5421
        %v5439 = vsel %vm5437, %v5427, 2102212464
        %v5440 = vsel %vm5436, %v5424, %v5439
        %v5441 = vsel %vm5435, %v5438, %v5440
        %v5442 = vsel %vm5434, %v5421, %v5424
        %v5443 = vsel %vm5437, %v5430, 920167782
        %v5444 = vsel %vm5436, %v5427, %v5443
        %v5445 = vsel %vm5435, %v5442, %v5444
        %v5446 = vsel %vm5434, %v5424, %v5427
        %v5447 = vsel %vm5437, %v5433, 1326507024
        %v5448 = vsel %vm5436, %v5430, %v5447
        %v5449 = vsel %vm5435, %v5446, %v5448
        %v5450 = vshll.u32 %v5410, 8
        %v5451 = vmul.u32.u64.compose %v5450, %v5449
        %v5452 = vextract.low.u32 %v5451
        %v5453 = vextract.high.u32 %v5451
        %v5454 = vmul.u32.u64.compose %v5450, %v5445
        %v5455 = vextract.low.u32 %v5454
        %v5456 = vextract.high.u32 %v5454
        %v5457 = vmul.u32 %v5450, %v5441
        %v5458 = vadd.s32 %v5453, %v5455
        %vm5459 = vc.u32 %v5453, %v5455
        %v5460 = vadd.s32 %v5456, 1
        %v5461 = vsel %vm5459, %v5460, %v5456
        %v5462 = vadd.s32 %v5457, %v5461
        %v5463 = vadd.s32 %v5462, 536870912
        %v5464 = vshrl.u32 %v5463, 30
        %v5465 = vshll.u32 %v5464, 30
        %v5466 = vsub.s32 %v5462, %v5465
        %vm5467 = vcmp.lt.s32.totalorder %v5466, 0
        %v5468 = vsub.s32 0, %v5466
        %v5469 = vsel %vm5467, %v5468, %v5466
        %v5470 = vclz %v5469
        %v5471 = vsub.s32 %v5470, 2
        %vm5472 = vcmp.gt.s32.totalorder 0, %v5471
        %v5473 = vsel %vm5472, 0, %v5471
        %v5474 = vsub.s32 32, %v5473
        %v5475 = vshll.u32 %v5466, %v5473
        %v5476 = vshrl.u32 %v5458, %v5474
        %v5477 = vor.u32 %v5475, %v5476
        %v5478 = vsub.s32 4294967266, %v5473
        %v5479 = vadd.s32 %v5478, 127
        %v5480 = vshll.u32 %v5479, 23
        %v5481 = vor.u32 4788187, %v5480
        %v5482 = vand.u32 2147483647, %v5481
        %v5484 = vcvt.s32.f32 %v5477
        %v5485 = vmul.f32 %v5484, %v5482
        %v5486 = vxor.u32 %v5485, 2147483648
        %v5487 = vsel %vm5404, %v5486, %v5485
        %v5488 = vsub.s32 4, %v5464
        %v5489 = vsel %vm5404, %v5488, %v5464
        %v5490 = vsel %vm5403, %v728, %v5487
        %v5491 = vsel %vm5403, 0, %v5489
        %v5492 = vcosq.f32.pop %v5490
        %v5493 = vsinq.f32.pop %v5490
        %vm5494 = vweird.f32 %v728
        %v5495 = vadd.s32 %v5491, 3
        %v5496 = vand.u32 %v5495, 3
        %vm5497 = vcmp.lt.s32.totalorder %v5496, 2
        %vm5498 = vcmp.eq.s32.totalorder %v5496, 0
        %v5499 = vxor.u32 %v5493, 2147483648
        %v5500 = vsel %vm5498, %v5492, %v5499
        %vm5501 = vcmp.eq.s32.totalorder %v5496, 2
        %v5502 = vxor.u32 %v5492, 2147483648
        %v5503 = vsel %vm5501, %v5502, %v5493
        %v5504 = vsel %vm5497, %v5500, %v5503
        %v5505 = vsel %vm5494, nan, %v5504
        %v5506 = vand.u32 2147483647, %v733
        %vm5507 = vcmp.le.f32.partialorder %v5506, 0.7853982
        %vm5508 = vcmp.lt.s32.totalorder %v733, 0
        %v5509 = vand.u32 %v733, 2139095040
        %v5510 = vshrl.u32 %v5509, 23
        %v5511 = vsub.s32 %v5510, 127
        %v5512 = vand.u32 2147483647, %v733
        %v5513 = vand.u32 %v5512, 8388607
        %v5514 = vor.u32 %v5513, 8388608
        %v5515 = vsub.s32 0, %v5514
        %v5516 = vadd.s32 %v5511, 1
        %vm5517 = vcmp.gt.s32.totalorder %v5516, 0
        %v5518 = vsel %vm5517, %v5516, 0
        %v5519 = vshrl.u32 %v5518, 5
        %v5520 = vand.u32 %v5518, 31
        %v5521 = vsub.s32 32, %v5520
        %v5522 = vshrl.u32 683565275, %v5521
        %v5523 = vshll.u32 683565275, %v5520
        %v5524 = vshrl.u32 2475754826, %v5521
        %v5525 = vor.u32 %v5523, %v5524
        %v5526 = vshll.u32 2475754826, %v5520
        %v5527 = vshrl.u32 2131351028, %v5521
        %v5528 = vor.u32 %v5526, %v5527
        %v5529 = vshll.u32 2131351028, %v5520
        %v5530 = vshrl.u32 2102212464, %v5521
        %v5531 = vor.u32 %v5529, %v5530
        %v5532 = vshll.u32 2102212464, %v5520
        %v5533 = vshrl.u32 920167782, %v5521
        %v5534 = vor.u32 %v5532, %v5533
        %v5535 = vshll.u32 920167782, %v5520
        %v5536 = vshrl.u32 1326507024, %v5521
        %v5537 = vor.u32 %v5535, %v5536
        %vm5538 = vcmp.lt.s32.totalorder %v5519, 1
        %vm5539 = vcmp.lt.s32.totalorder %v5519, 2
        %vm5540 = vcmp.lt.s32.totalorder %v5519, 3
        %vm5541 = vcmp.lt.s32.totalorder %v5519, 4
        %v5542 = vsel %vm5538, %v5522, %v5525
        %v5543 = vsel %vm5541, %v5531, 2102212464
        %v5544 = vsel %vm5540, %v5528, %v5543
        %v5545 = vsel %vm5539, %v5542, %v5544
        %v5546 = vsel %vm5538, %v5525, %v5528
        %v5547 = vsel %vm5541, %v5534, 920167782
        %v5548 = vsel %vm5540, %v5531, %v5547
        %v5549 = vsel %vm5539, %v5546, %v5548
        %v5550 = vsel %vm5538, %v5528, %v5531
        %v5551 = vsel %vm5541, %v5537, 1326507024
        %v5552 = vsel %vm5540, %v5534, %v5551
        %v5553 = vsel %vm5539, %v5550, %v5552
        %v5554 = vshll.u32 %v5514, 8
        %v5555 = vmul.u32.u64.compose %v5554, %v5553
        %v5556 = vextract.low.u32 %v5555
        %v5557 = vextract.high.u32 %v5555
        %v5558 = vmul.u32.u64.compose %v5554, %v5549
        %v5559 = vextract.low.u32 %v5558
        %v5560 = vextract.high.u32 %v5558
        %v5561 = vmul.u32 %v5554, %v5545
        %v5562 = vadd.s32 %v5557, %v5559
        %vm5563 = vc.u32 %v5557, %v5559
        %v5564 = vadd.s32 %v5560, 1
        %v5565 = vsel %vm5563, %v5564, %v5560
        %v5566 = vadd.s32 %v5561, %v5565
        %v5567 = vadd.s32 %v5566, 536870912
        %v5568 = vshrl.u32 %v5567, 30
        %v5569 = vshll.u32 %v5568, 30
        %v5570 = vsub.s32 %v5566, %v5569
        %vm5571 = vcmp.lt.s32.totalorder %v5570, 0
        %v5572 = vsub.s32 0, %v5570
        %v5573 = vsel %vm5571, %v5572, %v5570
        %v5574 = vclz %v5573
        %v5575 = vsub.s32 %v5574, 2
        %vm5576 = vcmp.gt.s32.totalorder 0, %v5575
        %v5577 = vsel %vm5576, 0, %v5575
        %v5578 = vsub.s32 32, %v5577
        %v5579 = vshll.u32 %v5570, %v5577
        %v5580 = vshrl.u32 %v5562, %v5578
        %v5581 = vor.u32 %v5579, %v5580
        %v5582 = vsub.s32 4294967266, %v5577
        %v5583 = vadd.s32 %v5582, 127
        %v5584 = vshll.u32 %v5583, 23
        %v5585 = vor.u32 4788187, %v5584
        %v5586 = vand.u32 2147483647, %v5585
        %v5588 = vcvt.s32.f32 %v5581
        %v5589 = vmul.f32 %v5588, %v5586
        %v5590 = vxor.u32 %v5589, 2147483648
        %v5591 = vsel %vm5508, %v5590, %v5589
        %v5592 = vsub.s32 4, %v5568
        %v5593 = vsel %vm5508, %v5592, %v5568
        %v5594 = vsel %vm5507, %v733, %v5591
        %v5595 = vsel %vm5507, 0, %v5593
        %v5596 = vcosq.f32.pop %v5594
        %v5597 = vsinq.f32.pop %v5594
        %vm5598 = vweird.f32 %v733
        %v5599 = vadd.s32 %v5595, 3
        %v5600 = vand.u32 %v5599, 3
        %vm5601 = vcmp.lt.s32.totalorder %v5600, 2
        %vm5602 = vcmp.eq.s32.totalorder %v5600, 0
        %v5603 = vxor.u32 %v5597, 2147483648
        %v5604 = vsel %vm5602, %v5596, %v5603
        %vm5605 = vcmp.eq.s32.totalorder %v5600, 2
        %v5606 = vxor.u32 %v5596, 2147483648
        %v5607 = vsel %vm5605, %v5606, %v5597
        %v5608 = vsel %vm5601, %v5604, %v5607
        %v5609 = vsel %vm5598, nan, %v5608
        %v5610 = vand.u32 2147483647, %v738
        %vm5611 = vcmp.le.f32.partialorder %v5610, 0.7853982
        %vm5612 = vcmp.lt.s32.totalorder %v738, 0
        %v5613 = vand.u32 %v738, 2139095040
        %v5614 = vshrl.u32 %v5613, 23
        %v5615 = vsub.s32 %v5614, 127
        %v5616 = vand.u32 2147483647, %v738
        %v5617 = vand.u32 %v5616, 8388607
        %v5618 = vor.u32 %v5617, 8388608
        %v5619 = vsub.s32 0, %v5618
        %v5620 = vadd.s32 %v5615, 1
        %vm5621 = vcmp.gt.s32.totalorder %v5620, 0
        %v5622 = vsel %vm5621, %v5620, 0
        %v5623 = vshrl.u32 %v5622, 5
        %v5624 = vand.u32 %v5622, 31
        %v5625 = vsub.s32 32, %v5624
        %v5626 = vshrl.u32 683565275, %v5625
        %v5627 = vshll.u32 683565275, %v5624
        %v5628 = vshrl.u32 2475754826, %v5625
        %v5629 = vor.u32 %v5627, %v5628
        %v5630 = vshll.u32 2475754826, %v5624
        %v5631 = vshrl.u32 2131351028, %v5625
        %v5632 = vor.u32 %v5630, %v5631
        %v5633 = vshll.u32 2131351028, %v5624
        %v5634 = vshrl.u32 2102212464, %v5625
        %v5635 = vor.u32 %v5633, %v5634
        %v5636 = vshll.u32 2102212464, %v5624
        %v5637 = vshrl.u32 920167782, %v5625
        %v5638 = vor.u32 %v5636, %v5637
        %v5639 = vshll.u32 920167782, %v5624
        %v5640 = vshrl.u32 1326507024, %v5625
        %v5641 = vor.u32 %v5639, %v5640
        %vm5642 = vcmp.lt.s32.totalorder %v5623, 1
        %vm5643 = vcmp.lt.s32.totalorder %v5623, 2
        %vm5644 = vcmp.lt.s32.totalorder %v5623, 3
        %vm5645 = vcmp.lt.s32.totalorder %v5623, 4
        %v5646 = vsel %vm5642, %v5626, %v5629
        %v5647 = vsel %vm5645, %v5635, 2102212464
        %v5648 = vsel %vm5644, %v5632, %v5647
        %v5649 = vsel %vm5643, %v5646, %v5648
        %v5650 = vsel %vm5642, %v5629, %v5632
        %v5651 = vsel %vm5645, %v5638, 920167782
        %v5652 = vsel %vm5644, %v5635, %v5651
        %v5653 = vsel %vm5643, %v5650, %v5652
        %v5654 = vsel %vm5642, %v5632, %v5635
        %v5655 = vsel %vm5645, %v5641, 1326507024
        %v5656 = vsel %vm5644, %v5638, %v5655
        %v5657 = vsel %vm5643, %v5654, %v5656
        %v5658 = vshll.u32 %v5618, 8
        %v5659 = vmul.u32.u64.compose %v5658, %v5657
        %v5660 = vextract.low.u32 %v5659
        %v5661 = vextract.high.u32 %v5659
        %v5662 = vmul.u32.u64.compose %v5658, %v5653
        %v5663 = vextract.low.u32 %v5662
        %v5664 = vextract.high.u32 %v5662
        %v5665 = vmul.u32 %v5658, %v5649
        %v5666 = vadd.s32 %v5661, %v5663
        %vm5667 = vc.u32 %v5661, %v5663
        %v5668 = vadd.s32 %v5664, 1
        %v5669 = vsel %vm5667, %v5668, %v5664
        %v5670 = vadd.s32 %v5665, %v5669
        %v5671 = vadd.s32 %v5670, 536870912
        %v5672 = vshrl.u32 %v5671, 30
        %v5673 = vshll.u32 %v5672, 30
        %v5674 = vsub.s32 %v5670, %v5673
        %vm5675 = vcmp.lt.s32.totalorder %v5674, 0
        %v5676 = vsub.s32 0, %v5674
        %v5677 = vsel %vm5675, %v5676, %v5674
        %v5678 = vclz %v5677
        %v5679 = vsub.s32 %v5678, 2
        %vm5680 = vcmp.gt.s32.totalorder 0, %v5679
        %v5681 = vsel %vm5680, 0, %v5679
        %v5682 = vsub.s32 32, %v5681
        %v5683 = vshll.u32 %v5674, %v5681
        %v5684 = vshrl.u32 %v5666, %v5682
        %v5685 = vor.u32 %v5683, %v5684
        %v5686 = vsub.s32 4294967266, %v5681
        %v5687 = vadd.s32 %v5686, 127
        %v5688 = vshll.u32 %v5687, 23
        %v5689 = vor.u32 4788187, %v5688
        %v5690 = vand.u32 2147483647, %v5689
        %v5692 = vcvt.s32.f32 %v5685
        %v5693 = vmul.f32 %v5692, %v5690
        %v5694 = vxor.u32 %v5693, 2147483648
        %v5695 = vsel %vm5612, %v5694, %v5693
        %v5696 = vsub.s32 4, %v5672
        %v5697 = vsel %vm5612, %v5696, %v5672
        %v5698 = vsel %vm5611, %v738, %v5695
        %v5699 = vsel %vm5611, 0, %v5697
        %v5700 = vcosq.f32.pop %v5698
        %v5701 = vsinq.f32.pop %v5698
        %vm5702 = vweird.f32 %v738
        %v5703 = vadd.s32 %v5699, 3
        %v5704 = vand.u32 %v5703, 3
        %vm5705 = vcmp.lt.s32.totalorder %v5704, 2
        %vm5706 = vcmp.eq.s32.totalorder %v5704, 0
        %v5707 = vxor.u32 %v5701, 2147483648
        %v5708 = vsel %vm5706, %v5700, %v5707
        %vm5709 = vcmp.eq.s32.totalorder %v5704, 2
        %v5710 = vxor.u32 %v5700, 2147483648
        %v5711 = vsel %vm5709, %v5710, %v5701
        %v5712 = vsel %vm5705, %v5708, %v5711
        %v5713 = vsel %vm5702, nan, %v5712
        %v5714 = vand.u32 2147483647, %v743
        %vm5715 = vcmp.le.f32.partialorder %v5714, 0.7853982
        %vm5716 = vcmp.lt.s32.totalorder %v743, 0
        %v5717 = vand.u32 %v743, 2139095040
        %v5718 = vshrl.u32 %v5717, 23
        %v5719 = vsub.s32 %v5718, 127
        %v5720 = vand.u32 2147483647, %v743
        %v5721 = vand.u32 %v5720, 8388607
        %v5722 = vor.u32 %v5721, 8388608
        %v5723 = vsub.s32 0, %v5722
        %v5724 = vadd.s32 %v5719, 1
        %vm5725 = vcmp.gt.s32.totalorder %v5724, 0
        %v5726 = vsel %vm5725, %v5724, 0
        %v5727 = vshrl.u32 %v5726, 5
        %v5728 = vand.u32 %v5726, 31
        %v5729 = vsub.s32 32, %v5728
        %v5730 = vshrl.u32 683565275, %v5729
        %v5731 = vshll.u32 683565275, %v5728
        %v5732 = vshrl.u32 2475754826, %v5729
        %v5733 = vor.u32 %v5731, %v5732
        %v5734 = vshll.u32 2475754826, %v5728
        %v5735 = vshrl.u32 2131351028, %v5729
        %v5736 = vor.u32 %v5734, %v5735
        %v5737 = vshll.u32 2131351028, %v5728
        %v5738 = vshrl.u32 2102212464, %v5729
        %v5739 = vor.u32 %v5737, %v5738
        %v5740 = vshll.u32 2102212464, %v5728
        %v5741 = vshrl.u32 920167782, %v5729
        %v5742 = vor.u32 %v5740, %v5741
        %v5743 = vshll.u32 920167782, %v5728
        %v5744 = vshrl.u32 1326507024, %v5729
        %v5745 = vor.u32 %v5743, %v5744
        %vm5746 = vcmp.lt.s32.totalorder %v5727, 1
        %vm5747 = vcmp.lt.s32.totalorder %v5727, 2
        %vm5748 = vcmp.lt.s32.totalorder %v5727, 3
        %vm5749 = vcmp.lt.s32.totalorder %v5727, 4
        %v5750 = vsel %vm5746, %v5730, %v5733
        %v5751 = vsel %vm5749, %v5739, 2102212464
        %v5752 = vsel %vm5748, %v5736, %v5751
        %v5753 = vsel %vm5747, %v5750, %v5752
        %v5754 = vsel %vm5746, %v5733, %v5736
        %v5755 = vsel %vm5749, %v5742, 920167782
        %v5756 = vsel %vm5748, %v5739, %v5755
        %v5757 = vsel %vm5747, %v5754, %v5756
        %v5758 = vsel %vm5746, %v5736, %v5739
        %v5759 = vsel %vm5749, %v5745, 1326507024
        %v5760 = vsel %vm5748, %v5742, %v5759
        %v5761 = vsel %vm5747, %v5758, %v5760
        %v5762 = vshll.u32 %v5722, 8
        %v5763 = vmul.u32.u64.compose %v5762, %v5761
        %v5764 = vextract.low.u32 %v5763
        %v5765 = vextract.high.u32 %v5763
        %v5766 = vmul.u32.u64.compose %v5762, %v5757
        %v5767 = vextract.low.u32 %v5766
        %v5768 = vextract.high.u32 %v5766
        %v5769 = vmul.u32 %v5762, %v5753
        %v5770 = vadd.s32 %v5765, %v5767
        %vm5771 = vc.u32 %v5765, %v5767
        %v5772 = vadd.s32 %v5768, 1
        %v5773 = vsel %vm5771, %v5772, %v5768
        %v5774 = vadd.s32 %v5769, %v5773
        %v5775 = vadd.s32 %v5774, 536870912
        %v5776 = vshrl.u32 %v5775, 30
        %v5777 = vshll.u32 %v5776, 30
        %v5778 = vsub.s32 %v5774, %v5777
        %vm5779 = vcmp.lt.s32.totalorder %v5778, 0
        %v5780 = vsub.s32 0, %v5778
        %v5781 = vsel %vm5779, %v5780, %v5778
        %v5782 = vclz %v5781
        %v5783 = vsub.s32 %v5782, 2
        %vm5784 = vcmp.gt.s32.totalorder 0, %v5783
        %v5785 = vsel %vm5784, 0, %v5783
        %v5786 = vsub.s32 32, %v5785
        %v5787 = vshll.u32 %v5778, %v5785
        %v5788 = vshrl.u32 %v5770, %v5786
        %v5789 = vor.u32 %v5787, %v5788
        %v5790 = vsub.s32 4294967266, %v5785
        %v5791 = vadd.s32 %v5790, 127
        %v5792 = vshll.u32 %v5791, 23
        %v5793 = vor.u32 4788187, %v5792
        %v5794 = vand.u32 2147483647, %v5793
        %v5796 = vcvt.s32.f32 %v5789
        %v5797 = vmul.f32 %v5796, %v5794
        %v5798 = vxor.u32 %v5797, 2147483648
        %v5799 = vsel %vm5716, %v5798, %v5797
        %v5800 = vsub.s32 4, %v5776
        %v5801 = vsel %vm5716, %v5800, %v5776
        %v5802 = vsel %vm5715, %v743, %v5799
        %v5803 = vsel %vm5715, 0, %v5801
        %v5804 = vcosq.f32.pop %v5802
        %v5805 = vsinq.f32.pop %v5802
        %vm5806 = vweird.f32 %v743
        %v5807 = vadd.s32 %v5803, 3
        %v5808 = vand.u32 %v5807, 3
        %vm5809 = vcmp.lt.s32.totalorder %v5808, 2
        %vm5810 = vcmp.eq.s32.totalorder %v5808, 0
        %v5811 = vxor.u32 %v5805, 2147483648
        %v5812 = vsel %vm5810, %v5804, %v5811
        %vm5813 = vcmp.eq.s32.totalorder %v5808, 2
        %v5814 = vxor.u32 %v5804, 2147483648
        %v5815 = vsel %vm5813, %v5814, %v5805
        %v5816 = vsel %vm5809, %v5812, %v5815
        %v5817 = vsel %vm5806, nan, %v5816
        %v5818 = vand.u32 2147483647, %v748
        %vm5819 = vcmp.le.f32.partialorder %v5818, 0.7853982
        %vm5820 = vcmp.lt.s32.totalorder %v748, 0
        %v5821 = vand.u32 %v748, 2139095040
        %v5822 = vshrl.u32 %v5821, 23
        %v5823 = vsub.s32 %v5822, 127
        %v5824 = vand.u32 2147483647, %v748
        %v5825 = vand.u32 %v5824, 8388607
        %v5826 = vor.u32 %v5825, 8388608
        %v5827 = vsub.s32 0, %v5826
        %v5828 = vadd.s32 %v5823, 1
        %vm5829 = vcmp.gt.s32.totalorder %v5828, 0
        %v5830 = vsel %vm5829, %v5828, 0
        %v5831 = vshrl.u32 %v5830, 5
        %v5832 = vand.u32 %v5830, 31
        %v5833 = vsub.s32 32, %v5832
        %v5834 = vshrl.u32 683565275, %v5833
        %v5835 = vshll.u32 683565275, %v5832
        %v5836 = vshrl.u32 2475754826, %v5833
        %v5837 = vor.u32 %v5835, %v5836
        %v5838 = vshll.u32 2475754826, %v5832
        %v5839 = vshrl.u32 2131351028, %v5833
        %v5840 = vor.u32 %v5838, %v5839
        %v5841 = vshll.u32 2131351028, %v5832
        %v5842 = vshrl.u32 2102212464, %v5833
        %v5843 = vor.u32 %v5841, %v5842
        %v5844 = vshll.u32 2102212464, %v5832
        %v5845 = vshrl.u32 920167782, %v5833
        %v5846 = vor.u32 %v5844, %v5845
        %v5847 = vshll.u32 920167782, %v5832
        %v5848 = vshrl.u32 1326507024, %v5833
        %v5849 = vor.u32 %v5847, %v5848
        %vm5850 = vcmp.lt.s32.totalorder %v5831, 1
        %vm5851 = vcmp.lt.s32.totalorder %v5831, 2
        %vm5852 = vcmp.lt.s32.totalorder %v5831, 3
        %vm5853 = vcmp.lt.s32.totalorder %v5831, 4
        %v5854 = vsel %vm5850, %v5834, %v5837
        %v5855 = vsel %vm5853, %v5843, 2102212464
        %v5856 = vsel %vm5852, %v5840, %v5855
        %v5857 = vsel %vm5851, %v5854, %v5856
        %v5858 = vsel %vm5850, %v5837, %v5840
        %v5859 = vsel %vm5853, %v5846, 920167782
        %v5860 = vsel %vm5852, %v5843, %v5859
        %v5861 = vsel %vm5851, %v5858, %v5860
        %v5862 = vsel %vm5850, %v5840, %v5843
        %v5863 = vsel %vm5853, %v5849, 1326507024
        %v5864 = vsel %vm5852, %v5846, %v5863
        %v5865 = vsel %vm5851, %v5862, %v5864
        %v5866 = vshll.u32 %v5826, 8
        %v5867 = vmul.u32.u64.compose %v5866, %v5865
        %v5868 = vextract.low.u32 %v5867
        %v5869 = vextract.high.u32 %v5867
        %v5870 = vmul.u32.u64.compose %v5866, %v5861
        %v5871 = vextract.low.u32 %v5870
        %v5872 = vextract.high.u32 %v5870
        %v5873 = vmul.u32 %v5866, %v5857
        %v5874 = vadd.s32 %v5869, %v5871
        %vm5875 = vc.u32 %v5869, %v5871
        %v5876 = vadd.s32 %v5872, 1
        %v5877 = vsel %vm5875, %v5876, %v5872
        %v5878 = vadd.s32 %v5873, %v5877
        %v5879 = vadd.s32 %v5878, 536870912
        %v5880 = vshrl.u32 %v5879, 30
        %v5881 = vshll.u32 %v5880, 30
        %v5882 = vsub.s32 %v5878, %v5881
        %vm5883 = vcmp.lt.s32.totalorder %v5882, 0
        %v5884 = vsub.s32 0, %v5882
        %v5885 = vsel %vm5883, %v5884, %v5882
        %v5886 = vclz %v5885
        %v5887 = vsub.s32 %v5886, 2
        %vm5888 = vcmp.gt.s32.totalorder 0, %v5887
        %v5889 = vsel %vm5888, 0, %v5887
        %v5890 = vsub.s32 32, %v5889
        %v5891 = vshll.u32 %v5882, %v5889
        %v5892 = vshrl.u32 %v5874, %v5890
        %v5893 = vor.u32 %v5891, %v5892
        %v5894 = vsub.s32 4294967266, %v5889
        %v5895 = vadd.s32 %v5894, 127
        %v5896 = vshll.u32 %v5895, 23
        %v5897 = vor.u32 4788187, %v5896
        %v5898 = vand.u32 2147483647, %v5897
        %v5900 = vcvt.s32.f32 %v5893
        %v5901 = vmul.f32 %v5900, %v5898
        %v5902 = vxor.u32 %v5901, 2147483648
        %v5903 = vsel %vm5820, %v5902, %v5901
        %v5904 = vsub.s32 4, %v5880
        %v5905 = vsel %vm5820, %v5904, %v5880
        %v5906 = vsel %vm5819, %v748, %v5903
        %v5907 = vsel %vm5819, 0, %v5905
        %v5908 = vcosq.f32.pop %v5906
        %v5909 = vsinq.f32.pop %v5906
        %vm5910 = vweird.f32 %v748
        %v5911 = vadd.s32 %v5907, 3
        %v5912 = vand.u32 %v5911, 3
        %vm5913 = vcmp.lt.s32.totalorder %v5912, 2
        %vm5914 = vcmp.eq.s32.totalorder %v5912, 0
        %v5915 = vxor.u32 %v5909, 2147483648
        %v5916 = vsel %vm5914, %v5908, %v5915
        %vm5917 = vcmp.eq.s32.totalorder %v5912, 2
        %v5918 = vxor.u32 %v5908, 2147483648
        %v5919 = vsel %vm5917, %v5918, %v5909
        %v5920 = vsel %vm5913, %v5916, %v5919
        %v5921 = vsel %vm5910, nan, %v5920
        %v5922 = vand.u32 2147483647, %v753
        %vm5923 = vcmp.le.f32.partialorder %v5922, 0.7853982
        %vm5924 = vcmp.lt.s32.totalorder %v753, 0
        %v5925 = vand.u32 %v753, 2139095040
        %v5926 = vshrl.u32 %v5925, 23
        %v5927 = vsub.s32 %v5926, 127
        %v5928 = vand.u32 2147483647, %v753
        %v5929 = vand.u32 %v5928, 8388607
        %v5930 = vor.u32 %v5929, 8388608
        %v5931 = vsub.s32 0, %v5930
        %v5932 = vadd.s32 %v5927, 1
        %vm5933 = vcmp.gt.s32.totalorder %v5932, 0
        %v5934 = vsel %vm5933, %v5932, 0
        %v5935 = vshrl.u32 %v5934, 5
        %v5936 = vand.u32 %v5934, 31
        %v5937 = vsub.s32 32, %v5936
        %v5938 = vshrl.u32 683565275, %v5937
        %v5939 = vshll.u32 683565275, %v5936
        %v5940 = vshrl.u32 2475754826, %v5937
        %v5941 = vor.u32 %v5939, %v5940
        %v5942 = vshll.u32 2475754826, %v5936
        %v5943 = vshrl.u32 2131351028, %v5937
        %v5944 = vor.u32 %v5942, %v5943
        %v5945 = vshll.u32 2131351028, %v5936
        %v5946 = vshrl.u32 2102212464, %v5937
        %v5947 = vor.u32 %v5945, %v5946
        %v5948 = vshll.u32 2102212464, %v5936
        %v5949 = vshrl.u32 920167782, %v5937
        %v5950 = vor.u32 %v5948, %v5949
        %v5951 = vshll.u32 920167782, %v5936
        %v5952 = vshrl.u32 1326507024, %v5937
        %v5953 = vor.u32 %v5951, %v5952
        %vm5954 = vcmp.lt.s32.totalorder %v5935, 1
        %vm5955 = vcmp.lt.s32.totalorder %v5935, 2
        %vm5956 = vcmp.lt.s32.totalorder %v5935, 3
        %vm5957 = vcmp.lt.s32.totalorder %v5935, 4
        %v5958 = vsel %vm5954, %v5938, %v5941
        %v5959 = vsel %vm5957, %v5947, 2102212464
        %v5960 = vsel %vm5956, %v5944, %v5959
        %v5961 = vsel %vm5955, %v5958, %v5960
        %v5962 = vsel %vm5954, %v5941, %v5944
        %v5963 = vsel %vm5957, %v5950, 920167782
        %v5964 = vsel %vm5956, %v5947, %v5963
        %v5965 = vsel %vm5955, %v5962, %v5964
        %v5966 = vsel %vm5954, %v5944, %v5947
        %v5967 = vsel %vm5957, %v5953, 1326507024
        %v5968 = vsel %vm5956, %v5950, %v5967
        %v5969 = vsel %vm5955, %v5966, %v5968
        %v5970 = vshll.u32 %v5930, 8
        %v5971 = vmul.u32.u64.compose %v5970, %v5969
        %v5972 = vextract.low.u32 %v5971
        %v5973 = vextract.high.u32 %v5971
        %v5974 = vmul.u32.u64.compose %v5970, %v5965
        %v5975 = vextract.low.u32 %v5974
        %v5976 = vextract.high.u32 %v5974
        %v5977 = vmul.u32 %v5970, %v5961
        %v5978 = vadd.s32 %v5973, %v5975
        %vm5979 = vc.u32 %v5973, %v5975
        %v5980 = vadd.s32 %v5976, 1
        %v5981 = vsel %vm5979, %v5980, %v5976
        %v5982 = vadd.s32 %v5977, %v5981
        %v5983 = vadd.s32 %v5982, 536870912
        %v5984 = vshrl.u32 %v5983, 30
        %v5985 = vshll.u32 %v5984, 30
        %v5986 = vsub.s32 %v5982, %v5985
        %vm5987 = vcmp.lt.s32.totalorder %v5986, 0
        %v5988 = vsub.s32 0, %v5986
        %v5989 = vsel %vm5987, %v5988, %v5986
        %v5990 = vclz %v5989
        %v5991 = vsub.s32 %v5990, 2
        %vm5992 = vcmp.gt.s32.totalorder 0, %v5991
        %v5993 = vsel %vm5992, 0, %v5991
        %v5994 = vsub.s32 32, %v5993
        %v5995 = vshll.u32 %v5986, %v5993
        %v5996 = vshrl.u32 %v5978, %v5994
        %v5997 = vor.u32 %v5995, %v5996
        %v5998 = vsub.s32 4294967266, %v5993
        %v5999 = vadd.s32 %v5998, 127
        %v6000 = vshll.u32 %v5999, 23
        %v6001 = vor.u32 4788187, %v6000
        %v6002 = vand.u32 2147483647, %v6001
        %v6004 = vcvt.s32.f32 %v5997
        %v6005 = vmul.f32 %v6004, %v6002
        %v6006 = vxor.u32 %v6005, 2147483648
        %v6007 = vsel %vm5924, %v6006, %v6005
        %v6008 = vsub.s32 4, %v5984
        %v6009 = vsel %vm5924, %v6008, %v5984
        %v6010 = vsel %vm5923, %v753, %v6007
        %v6011 = vsel %vm5923, 0, %v6009
        %v6012 = vcosq.f32.pop %v6010
        %v6013 = vsinq.f32.pop %v6010
        %vm6014 = vweird.f32 %v753
        %v6015 = vadd.s32 %v6011, 3
        %v6016 = vand.u32 %v6015, 3
        %vm6017 = vcmp.lt.s32.totalorder %v6016, 2
        %vm6018 = vcmp.eq.s32.totalorder %v6016, 0
        %v6019 = vxor.u32 %v6013, 2147483648
        %v6020 = vsel %vm6018, %v6012, %v6019
        %vm6021 = vcmp.eq.s32.totalorder %v6016, 2
        %v6022 = vxor.u32 %v6012, 2147483648
        %v6023 = vsel %vm6021, %v6022, %v6013
        %v6024 = vsel %vm6017, %v6020, %v6023
        %v6025 = vsel %vm6014, nan, %v6024
        %v6026 = vand.u32 2147483647, %v758
        %vm6027 = vcmp.le.f32.partialorder %v6026, 0.7853982
        %vm6028 = vcmp.lt.s32.totalorder %v758, 0
        %v6029 = vand.u32 %v758, 2139095040
        %v6030 = vshrl.u32 %v6029, 23
        %v6031 = vsub.s32 %v6030, 127
        %v6032 = vand.u32 2147483647, %v758
        %v6033 = vand.u32 %v6032, 8388607
        %v6034 = vor.u32 %v6033, 8388608
        %v6035 = vsub.s32 0, %v6034
        %v6036 = vadd.s32 %v6031, 1
        %vm6037 = vcmp.gt.s32.totalorder %v6036, 0
        %v6038 = vsel %vm6037, %v6036, 0
        %v6039 = vshrl.u32 %v6038, 5
        %v6040 = vand.u32 %v6038, 31
        %v6041 = vsub.s32 32, %v6040
        %v6042 = vshrl.u32 683565275, %v6041
        %v6043 = vshll.u32 683565275, %v6040
        %v6044 = vshrl.u32 2475754826, %v6041
        %v6045 = vor.u32 %v6043, %v6044
        %v6046 = vshll.u32 2475754826, %v6040
        %v6047 = vshrl.u32 2131351028, %v6041
        %v6048 = vor.u32 %v6046, %v6047
        %v6049 = vshll.u32 2131351028, %v6040
        %v6050 = vshrl.u32 2102212464, %v6041
        %v6051 = vor.u32 %v6049, %v6050
        %v6052 = vshll.u32 2102212464, %v6040
        %v6053 = vshrl.u32 920167782, %v6041
        %v6054 = vor.u32 %v6052, %v6053
        %v6055 = vshll.u32 920167782, %v6040
        %v6056 = vshrl.u32 1326507024, %v6041
        %v6057 = vor.u32 %v6055, %v6056
        %vm6058 = vcmp.lt.s32.totalorder %v6039, 1
        %vm6059 = vcmp.lt.s32.totalorder %v6039, 2
        %vm6060 = vcmp.lt.s32.totalorder %v6039, 3
        %vm6061 = vcmp.lt.s32.totalorder %v6039, 4
        %v6062 = vsel %vm6058, %v6042, %v6045
        %v6063 = vsel %vm6061, %v6051, 2102212464
        %v6064 = vsel %vm6060, %v6048, %v6063
        %v6065 = vsel %vm6059, %v6062, %v6064
        %v6066 = vsel %vm6058, %v6045, %v6048
        %v6067 = vsel %vm6061, %v6054, 920167782
        %v6068 = vsel %vm6060, %v6051, %v6067
        %v6069 = vsel %vm6059, %v6066, %v6068
        %v6070 = vsel %vm6058, %v6048, %v6051
        %v6071 = vsel %vm6061, %v6057, 1326507024
        %v6072 = vsel %vm6060, %v6054, %v6071
        %v6073 = vsel %vm6059, %v6070, %v6072
        %v6074 = vshll.u32 %v6034, 8
        %v6075 = vmul.u32.u64.compose %v6074, %v6073
        %v6076 = vextract.low.u32 %v6075
        %v6077 = vextract.high.u32 %v6075
        %v6078 = vmul.u32.u64.compose %v6074, %v6069
        %v6079 = vextract.low.u32 %v6078
        %v6080 = vextract.high.u32 %v6078
        %v6081 = vmul.u32 %v6074, %v6065
        %v6082 = vadd.s32 %v6077, %v6079
        %vm6083 = vc.u32 %v6077, %v6079
        %v6084 = vadd.s32 %v6080, 1
        %v6085 = vsel %vm6083, %v6084, %v6080
        %v6086 = vadd.s32 %v6081, %v6085
        %v6087 = vadd.s32 %v6086, 536870912
        %v6088 = vshrl.u32 %v6087, 30
        %v6089 = vshll.u32 %v6088, 30
        %v6090 = vsub.s32 %v6086, %v6089
        %vm6091 = vcmp.lt.s32.totalorder %v6090, 0
        %v6092 = vsub.s32 0, %v6090
        %v6093 = vsel %vm6091, %v6092, %v6090
        %v6094 = vclz %v6093
        %v6095 = vsub.s32 %v6094, 2
        %vm6096 = vcmp.gt.s32.totalorder 0, %v6095
        %v6097 = vsel %vm6096, 0, %v6095
        %v6098 = vsub.s32 32, %v6097
        %v6099 = vshll.u32 %v6090, %v6097
        %v6100 = vshrl.u32 %v6082, %v6098
        %v6101 = vor.u32 %v6099, %v6100
        %v6102 = vsub.s32 4294967266, %v6097
        %v6103 = vadd.s32 %v6102, 127
        %v6104 = vshll.u32 %v6103, 23
        %v6105 = vor.u32 4788187, %v6104
        %v6106 = vand.u32 2147483647, %v6105
        %v6108 = vcvt.s32.f32 %v6101
        %v6109 = vmul.f32 %v6108, %v6106
        %v6110 = vxor.u32 %v6109, 2147483648
        %v6111 = vsel %vm6028, %v6110, %v6109
        %v6112 = vsub.s32 4, %v6088
        %v6113 = vsel %vm6028, %v6112, %v6088
        %v6114 = vsel %vm6027, %v758, %v6111
        %v6115 = vsel %vm6027, 0, %v6113
        %v6116 = vcosq.f32.pop %v6114
        %v6117 = vsinq.f32.pop %v6114
        %vm6118 = vweird.f32 %v758
        %v6119 = vadd.s32 %v6115, 3
        %v6120 = vand.u32 %v6119, 3
        %vm6121 = vcmp.lt.s32.totalorder %v6120, 2
        %vm6122 = vcmp.eq.s32.totalorder %v6120, 0
        %v6123 = vxor.u32 %v6117, 2147483648
        %v6124 = vsel %vm6122, %v6116, %v6123
        %vm6125 = vcmp.eq.s32.totalorder %v6120, 2
        %v6126 = vxor.u32 %v6116, 2147483648
        %v6127 = vsel %vm6125, %v6126, %v6117
        %v6128 = vsel %vm6121, %v6124, %v6127
        %v6129 = vsel %vm6118, nan, %v6128
        %v6130 = vand.u32 2147483647, %v763
        %vm6131 = vcmp.le.f32.partialorder %v6130, 0.7853982
        %vm6132 = vcmp.lt.s32.totalorder %v763, 0
        %v6133 = vand.u32 %v763, 2139095040
        %v6134 = vshrl.u32 %v6133, 23
        %v6135 = vsub.s32 %v6134, 127
        %v6136 = vand.u32 2147483647, %v763
        %v6137 = vand.u32 %v6136, 8388607
        %v6138 = vor.u32 %v6137, 8388608
        %v6139 = vsub.s32 0, %v6138
        %v6140 = vadd.s32 %v6135, 1
        %vm6141 = vcmp.gt.s32.totalorder %v6140, 0
        %v6142 = vsel %vm6141, %v6140, 0
        %v6143 = vshrl.u32 %v6142, 5
        %v6144 = vand.u32 %v6142, 31
        %v6145 = vsub.s32 32, %v6144
        %v6146 = vshrl.u32 683565275, %v6145
        %v6147 = vshll.u32 683565275, %v6144
        %v6148 = vshrl.u32 2475754826, %v6145
        %v6149 = vor.u32 %v6147, %v6148
        %v6150 = vshll.u32 2475754826, %v6144
        %v6151 = vshrl.u32 2131351028, %v6145
        %v6152 = vor.u32 %v6150, %v6151
        %v6153 = vshll.u32 2131351028, %v6144
        %v6154 = vshrl.u32 2102212464, %v6145
        %v6155 = vor.u32 %v6153, %v6154
        %v6156 = vshll.u32 2102212464, %v6144
        %v6157 = vshrl.u32 920167782, %v6145
        %v6158 = vor.u32 %v6156, %v6157
        %v6159 = vshll.u32 920167782, %v6144
        %v6160 = vshrl.u32 1326507024, %v6145
        %v6161 = vor.u32 %v6159, %v6160
        %vm6162 = vcmp.lt.s32.totalorder %v6143, 1
        %vm6163 = vcmp.lt.s32.totalorder %v6143, 2
        %vm6164 = vcmp.lt.s32.totalorder %v6143, 3
        %vm6165 = vcmp.lt.s32.totalorder %v6143, 4
        %v6166 = vsel %vm6162, %v6146, %v6149
        %v6167 = vsel %vm6165, %v6155, 2102212464
        %v6168 = vsel %vm6164, %v6152, %v6167
        %v6169 = vsel %vm6163, %v6166, %v6168
        %v6170 = vsel %vm6162, %v6149, %v6152
        %v6171 = vsel %vm6165, %v6158, 920167782
        %v6172 = vsel %vm6164, %v6155, %v6171
        %v6173 = vsel %vm6163, %v6170, %v6172
        %v6174 = vsel %vm6162, %v6152, %v6155
        %v6175 = vsel %vm6165, %v6161, 1326507024
        %v6176 = vsel %vm6164, %v6158, %v6175
        %v6177 = vsel %vm6163, %v6174, %v6176
        %v6178 = vshll.u32 %v6138, 8
        %v6179 = vmul.u32.u64.compose %v6178, %v6177
        %v6180 = vextract.low.u32 %v6179
        %v6181 = vextract.high.u32 %v6179
        %v6182 = vmul.u32.u64.compose %v6178, %v6173
        %v6183 = vextract.low.u32 %v6182
        %v6184 = vextract.high.u32 %v6182
        %v6185 = vmul.u32 %v6178, %v6169
        %v6186 = vadd.s32 %v6181, %v6183
        %vm6187 = vc.u32 %v6181, %v6183
        %v6188 = vadd.s32 %v6184, 1
        %v6189 = vsel %vm6187, %v6188, %v6184
        %v6190 = vadd.s32 %v6185, %v6189
        %v6191 = vadd.s32 %v6190, 536870912
        %v6192 = vshrl.u32 %v6191, 30
        %v6193 = vshll.u32 %v6192, 30
        %v6194 = vsub.s32 %v6190, %v6193
        %vm6195 = vcmp.lt.s32.totalorder %v6194, 0
        %v6196 = vsub.s32 0, %v6194
        %v6197 = vsel %vm6195, %v6196, %v6194
        %v6198 = vclz %v6197
        %v6199 = vsub.s32 %v6198, 2
        %vm6200 = vcmp.gt.s32.totalorder 0, %v6199
        %v6201 = vsel %vm6200, 0, %v6199
        %v6202 = vsub.s32 32, %v6201
        %v6203 = vshll.u32 %v6194, %v6201
        %v6204 = vshrl.u32 %v6186, %v6202
        %v6205 = vor.u32 %v6203, %v6204
        %v6206 = vsub.s32 4294967266, %v6201
        %v6207 = vadd.s32 %v6206, 127
        %v6208 = vshll.u32 %v6207, 23
        %v6209 = vor.u32 4788187, %v6208
        %v6210 = vand.u32 2147483647, %v6209
        %v6212 = vcvt.s32.f32 %v6205
        %v6213 = vmul.f32 %v6212, %v6210
        %v6214 = vxor.u32 %v6213, 2147483648
        %v6215 = vsel %vm6132, %v6214, %v6213
        %v6216 = vsub.s32 4, %v6192
        %v6217 = vsel %vm6132, %v6216, %v6192
        %v6218 = vsel %vm6131, %v763, %v6215
        %v6219 = vsel %vm6131, 0, %v6217
        %v6220 = vcosq.f32.pop %v6218
        %v6221 = vsinq.f32.pop %v6218
        %vm6222 = vweird.f32 %v763
        %v6223 = vadd.s32 %v6219, 3
        %v6224 = vand.u32 %v6223, 3
        %vm6225 = vcmp.lt.s32.totalorder %v6224, 2
        %vm6226 = vcmp.eq.s32.totalorder %v6224, 0
        %v6227 = vxor.u32 %v6221, 2147483648
        %v6228 = vsel %vm6226, %v6220, %v6227
        %vm6229 = vcmp.eq.s32.totalorder %v6224, 2
        %v6230 = vxor.u32 %v6220, 2147483648
        %v6231 = vsel %vm6229, %v6230, %v6221
        %v6232 = vsel %vm6225, %v6228, %v6231
        %v6233 = vsel %vm6222, nan, %v6232
        %v6234 = vand.u32 2147483647, %v768
        %vm6235 = vcmp.le.f32.partialorder %v6234, 0.7853982
        %vm6236 = vcmp.lt.s32.totalorder %v768, 0
        %v6237 = vand.u32 %v768, 2139095040
        %v6238 = vshrl.u32 %v6237, 23
        %v6239 = vsub.s32 %v6238, 127
        %v6240 = vand.u32 2147483647, %v768
        %v6241 = vand.u32 %v6240, 8388607
        %v6242 = vor.u32 %v6241, 8388608
        %v6243 = vsub.s32 0, %v6242
        %v6244 = vadd.s32 %v6239, 1
        %vm6245 = vcmp.gt.s32.totalorder %v6244, 0
        %v6246 = vsel %vm6245, %v6244, 0
        %v6247 = vshrl.u32 %v6246, 5
        %v6248 = vand.u32 %v6246, 31
        %v6249 = vsub.s32 32, %v6248
        %v6250 = vshrl.u32 683565275, %v6249
        %v6251 = vshll.u32 683565275, %v6248
        %v6252 = vshrl.u32 2475754826, %v6249
        %v6253 = vor.u32 %v6251, %v6252
        %v6254 = vshll.u32 2475754826, %v6248
        %v6255 = vshrl.u32 2131351028, %v6249
        %v6256 = vor.u32 %v6254, %v6255
        %v6257 = vshll.u32 2131351028, %v6248
        %v6258 = vshrl.u32 2102212464, %v6249
        %v6259 = vor.u32 %v6257, %v6258
        %v6260 = vshll.u32 2102212464, %v6248
        %v6261 = vshrl.u32 920167782, %v6249
        %v6262 = vor.u32 %v6260, %v6261
        %v6263 = vshll.u32 920167782, %v6248
        %v6264 = vshrl.u32 1326507024, %v6249
        %v6265 = vor.u32 %v6263, %v6264
        %vm6266 = vcmp.lt.s32.totalorder %v6247, 1
        %vm6267 = vcmp.lt.s32.totalorder %v6247, 2
        %vm6268 = vcmp.lt.s32.totalorder %v6247, 3
        %vm6269 = vcmp.lt.s32.totalorder %v6247, 4
        %v6270 = vsel %vm6266, %v6250, %v6253
        %v6271 = vsel %vm6269, %v6259, 2102212464
        %v6272 = vsel %vm6268, %v6256, %v6271
        %v6273 = vsel %vm6267, %v6270, %v6272
        %v6274 = vsel %vm6266, %v6253, %v6256
        %v6275 = vsel %vm6269, %v6262, 920167782
        %v6276 = vsel %vm6268, %v6259, %v6275
        %v6277 = vsel %vm6267, %v6274, %v6276
        %v6278 = vsel %vm6266, %v6256, %v6259
        %v6279 = vsel %vm6269, %v6265, 1326507024
        %v6280 = vsel %vm6268, %v6262, %v6279
        %v6281 = vsel %vm6267, %v6278, %v6280
        %v6282 = vshll.u32 %v6242, 8
        %v6283 = vmul.u32.u64.compose %v6282, %v6281
        %v6284 = vextract.low.u32 %v6283
        %v6285 = vextract.high.u32 %v6283
        %v6286 = vmul.u32.u64.compose %v6282, %v6277
        %v6287 = vextract.low.u32 %v6286
        %v6288 = vextract.high.u32 %v6286
        %v6289 = vmul.u32 %v6282, %v6273
        %v6290 = vadd.s32 %v6285, %v6287
        %vm6291 = vc.u32 %v6285, %v6287
        %v6292 = vadd.s32 %v6288, 1
        %v6293 = vsel %vm6291, %v6292, %v6288
        %v6294 = vadd.s32 %v6289, %v6293
        %v6295 = vadd.s32 %v6294, 536870912
        %v6296 = vshrl.u32 %v6295, 30
        %v6297 = vshll.u32 %v6296, 30
        %v6298 = vsub.s32 %v6294, %v6297
        %vm6299 = vcmp.lt.s32.totalorder %v6298, 0
        %v6300 = vsub.s32 0, %v6298
        %v6301 = vsel %vm6299, %v6300, %v6298
        %v6302 = vclz %v6301
        %v6303 = vsub.s32 %v6302, 2
        %vm6304 = vcmp.gt.s32.totalorder 0, %v6303
        %v6305 = vsel %vm6304, 0, %v6303
        %v6306 = vsub.s32 32, %v6305
        %v6307 = vshll.u32 %v6298, %v6305
        %v6308 = vshrl.u32 %v6290, %v6306
        %v6309 = vor.u32 %v6307, %v6308
        %v6310 = vsub.s32 4294967266, %v6305
        %v6311 = vadd.s32 %v6310, 127
        %v6312 = vshll.u32 %v6311, 23
        %v6313 = vor.u32 4788187, %v6312
        %v6314 = vand.u32 2147483647, %v6313
        %v6316 = vcvt.s32.f32 %v6309
        %v6317 = vmul.f32 %v6316, %v6314
        %v6318 = vxor.u32 %v6317, 2147483648
        %v6319 = vsel %vm6236, %v6318, %v6317
        %v6320 = vsub.s32 4, %v6296
        %v6321 = vsel %vm6236, %v6320, %v6296
        %v6322 = vsel %vm6235, %v768, %v6319
        %v6323 = vsel %vm6235, 0, %v6321
        %v6324 = vcosq.f32.pop %v6322
        %v6325 = vsinq.f32.pop %v6322
        %vm6326 = vweird.f32 %v768
        %v6327 = vadd.s32 %v6323, 3
        %v6328 = vand.u32 %v6327, 3
        %vm6329 = vcmp.lt.s32.totalorder %v6328, 2
        %vm6330 = vcmp.eq.s32.totalorder %v6328, 0
        %v6331 = vxor.u32 %v6325, 2147483648
        %v6332 = vsel %vm6330, %v6324, %v6331
        %vm6333 = vcmp.eq.s32.totalorder %v6328, 2
        %v6334 = vxor.u32 %v6324, 2147483648
        %v6335 = vsel %vm6333, %v6334, %v6325
        %v6336 = vsel %vm6329, %v6332, %v6335
        %v6337 = vsel %vm6326, nan, %v6336
        %v6338 = vand.u32 2147483647, %v773
        %vm6339 = vcmp.le.f32.partialorder %v6338, 0.7853982
        %vm6340 = vcmp.lt.s32.totalorder %v773, 0
        %v6341 = vand.u32 %v773, 2139095040
        %v6342 = vshrl.u32 %v6341, 23
        %v6343 = vsub.s32 %v6342, 127
        %v6344 = vand.u32 2147483647, %v773
        %v6345 = vand.u32 %v6344, 8388607
        %v6346 = vor.u32 %v6345, 8388608
        %v6347 = vsub.s32 0, %v6346
        %v6348 = vadd.s32 %v6343, 1
        %vm6349 = vcmp.gt.s32.totalorder %v6348, 0
        %v6350 = vsel %vm6349, %v6348, 0
        %v6351 = vshrl.u32 %v6350, 5
        %v6352 = vand.u32 %v6350, 31
        %v6353 = vsub.s32 32, %v6352
        %v6354 = vshrl.u32 683565275, %v6353
        %v6355 = vshll.u32 683565275, %v6352
        %v6356 = vshrl.u32 2475754826, %v6353
        %v6357 = vor.u32 %v6355, %v6356
        %v6358 = vshll.u32 2475754826, %v6352
        %v6359 = vshrl.u32 2131351028, %v6353
        %v6360 = vor.u32 %v6358, %v6359
        %v6361 = vshll.u32 2131351028, %v6352
        %v6362 = vshrl.u32 2102212464, %v6353
        %v6363 = vor.u32 %v6361, %v6362
        %v6364 = vshll.u32 2102212464, %v6352
        %v6365 = vshrl.u32 920167782, %v6353
        %v6366 = vor.u32 %v6364, %v6365
        %v6367 = vshll.u32 920167782, %v6352
        %v6368 = vshrl.u32 1326507024, %v6353
        %v6369 = vor.u32 %v6367, %v6368
        %vm6370 = vcmp.lt.s32.totalorder %v6351, 1
        %vm6371 = vcmp.lt.s32.totalorder %v6351, 2
        %vm6372 = vcmp.lt.s32.totalorder %v6351, 3
        %vm6373 = vcmp.lt.s32.totalorder %v6351, 4
        %v6374 = vsel %vm6370, %v6354, %v6357
        %v6375 = vsel %vm6373, %v6363, 2102212464
        %v6376 = vsel %vm6372, %v6360, %v6375
        %v6377 = vsel %vm6371, %v6374, %v6376
        %v6378 = vsel %vm6370, %v6357, %v6360
        %v6379 = vsel %vm6373, %v6366, 920167782
        %v6380 = vsel %vm6372, %v6363, %v6379
        %v6381 = vsel %vm6371, %v6378, %v6380
        %v6382 = vsel %vm6370, %v6360, %v6363
        %v6383 = vsel %vm6373, %v6369, 1326507024
        %v6384 = vsel %vm6372, %v6366, %v6383
        %v6385 = vsel %vm6371, %v6382, %v6384
        %v6386 = vshll.u32 %v6346, 8
        %v6387 = vmul.u32.u64.compose %v6386, %v6385
        %v6388 = vextract.low.u32 %v6387
        %v6389 = vextract.high.u32 %v6387
        %v6390 = vmul.u32.u64.compose %v6386, %v6381
        %v6391 = vextract.low.u32 %v6390
        %v6392 = vextract.high.u32 %v6390
        %v6393 = vmul.u32 %v6386, %v6377
        %v6394 = vadd.s32 %v6389, %v6391
        %vm6395 = vc.u32 %v6389, %v6391
        %v6396 = vadd.s32 %v6392, 1
        %v6397 = vsel %vm6395, %v6396, %v6392
        %v6398 = vadd.s32 %v6393, %v6397
        %v6399 = vadd.s32 %v6398, 536870912
        %v6400 = vshrl.u32 %v6399, 30
        %v6401 = vshll.u32 %v6400, 30
        %v6402 = vsub.s32 %v6398, %v6401
        %vm6403 = vcmp.lt.s32.totalorder %v6402, 0
        %v6404 = vsub.s32 0, %v6402
        %v6405 = vsel %vm6403, %v6404, %v6402
        %v6406 = vclz %v6405
        %v6407 = vsub.s32 %v6406, 2
        %vm6408 = vcmp.gt.s32.totalorder 0, %v6407
        %v6409 = vsel %vm6408, 0, %v6407
        %v6410 = vsub.s32 32, %v6409
        %v6411 = vshll.u32 %v6402, %v6409
        %v6412 = vshrl.u32 %v6394, %v6410
        %v6413 = vor.u32 %v6411, %v6412
        %v6414 = vsub.s32 4294967266, %v6409
        %v6415 = vadd.s32 %v6414, 127
        %v6416 = vshll.u32 %v6415, 23
        %v6417 = vor.u32 4788187, %v6416
        %v6418 = vand.u32 2147483647, %v6417
        %v6420 = vcvt.s32.f32 %v6413
        %v6421 = vmul.f32 %v6420, %v6418
        %v6422 = vxor.u32 %v6421, 2147483648
        %v6423 = vsel %vm6340, %v6422, %v6421
        %v6424 = vsub.s32 4, %v6400
        %v6425 = vsel %vm6340, %v6424, %v6400
        %v6426 = vsel %vm6339, %v773, %v6423
        %v6427 = vsel %vm6339, 0, %v6425
        %v6428 = vcosq.f32.pop %v6426
        %v6429 = vsinq.f32.pop %v6426
        %vm6430 = vweird.f32 %v773
        %v6431 = vadd.s32 %v6427, 3
        %v6432 = vand.u32 %v6431, 3
        %vm6433 = vcmp.lt.s32.totalorder %v6432, 2
        %vm6434 = vcmp.eq.s32.totalorder %v6432, 0
        %v6435 = vxor.u32 %v6429, 2147483648
        %v6436 = vsel %vm6434, %v6428, %v6435
        %vm6437 = vcmp.eq.s32.totalorder %v6432, 2
        %v6438 = vxor.u32 %v6428, 2147483648
        %v6439 = vsel %vm6437, %v6438, %v6429
        %v6440 = vsel %vm6433, %v6436, %v6439
        %v6441 = vsel %vm6430, nan, %v6440
        %v6442 = vand.u32 2147483647, %v778
        %vm6443 = vcmp.le.f32.partialorder %v6442, 0.7853982
        %vm6444 = vcmp.lt.s32.totalorder %v778, 0
        %v6445 = vand.u32 %v778, 2139095040
        %v6446 = vshrl.u32 %v6445, 23
        %v6447 = vsub.s32 %v6446, 127
        %v6448 = vand.u32 2147483647, %v778
        %v6449 = vand.u32 %v6448, 8388607
        %v6450 = vor.u32 %v6449, 8388608
        %v6451 = vsub.s32 0, %v6450
        %v6452 = vadd.s32 %v6447, 1
        %vm6453 = vcmp.gt.s32.totalorder %v6452, 0
        %v6454 = vsel %vm6453, %v6452, 0
        %v6455 = vshrl.u32 %v6454, 5
        %v6456 = vand.u32 %v6454, 31
        %v6457 = vsub.s32 32, %v6456
        %v6458 = vshrl.u32 683565275, %v6457
        %v6459 = vshll.u32 683565275, %v6456
        %v6460 = vshrl.u32 2475754826, %v6457
        %v6461 = vor.u32 %v6459, %v6460
        %v6462 = vshll.u32 2475754826, %v6456
        %v6463 = vshrl.u32 2131351028, %v6457
        %v6464 = vor.u32 %v6462, %v6463
        %v6465 = vshll.u32 2131351028, %v6456
        %v6466 = vshrl.u32 2102212464, %v6457
        %v6467 = vor.u32 %v6465, %v6466
        %v6468 = vshll.u32 2102212464, %v6456
        %v6469 = vshrl.u32 920167782, %v6457
        %v6470 = vor.u32 %v6468, %v6469
        %v6471 = vshll.u32 920167782, %v6456
        %v6472 = vshrl.u32 1326507024, %v6457
        %v6473 = vor.u32 %v6471, %v6472
        %vm6474 = vcmp.lt.s32.totalorder %v6455, 1
        %vm6475 = vcmp.lt.s32.totalorder %v6455, 2
        %vm6476 = vcmp.lt.s32.totalorder %v6455, 3
        %vm6477 = vcmp.lt.s32.totalorder %v6455, 4
        %v6478 = vsel %vm6474, %v6458, %v6461
        %v6479 = vsel %vm6477, %v6467, 2102212464
        %v6480 = vsel %vm6476, %v6464, %v6479
        %v6481 = vsel %vm6475, %v6478, %v6480
        %v6482 = vsel %vm6474, %v6461, %v6464
        %v6483 = vsel %vm6477, %v6470, 920167782
        %v6484 = vsel %vm6476, %v6467, %v6483
        %v6485 = vsel %vm6475, %v6482, %v6484
        %v6486 = vsel %vm6474, %v6464, %v6467
        %v6487 = vsel %vm6477, %v6473, 1326507024
        %v6488 = vsel %vm6476, %v6470, %v6487
        %v6489 = vsel %vm6475, %v6486, %v6488
        %v6490 = vshll.u32 %v6450, 8
        %v6491 = vmul.u32.u64.compose %v6490, %v6489
        %v6492 = vextract.low.u32 %v6491
        %v6493 = vextract.high.u32 %v6491
        %v6494 = vmul.u32.u64.compose %v6490, %v6485
        %v6495 = vextract.low.u32 %v6494
        %v6496 = vextract.high.u32 %v6494
        %v6497 = vmul.u32 %v6490, %v6481
        %v6498 = vadd.s32 %v6493, %v6495
        %vm6499 = vc.u32 %v6493, %v6495
        %v6500 = vadd.s32 %v6496, 1
        %v6501 = vsel %vm6499, %v6500, %v6496
        %v6502 = vadd.s32 %v6497, %v6501
        %v6503 = vadd.s32 %v6502, 536870912
        %v6504 = vshrl.u32 %v6503, 30
        %v6505 = vshll.u32 %v6504, 30
        %v6506 = vsub.s32 %v6502, %v6505
        %vm6507 = vcmp.lt.s32.totalorder %v6506, 0
        %v6508 = vsub.s32 0, %v6506
        %v6509 = vsel %vm6507, %v6508, %v6506
        %v6510 = vclz %v6509
        %v6511 = vsub.s32 %v6510, 2
        %vm6512 = vcmp.gt.s32.totalorder 0, %v6511
        %v6513 = vsel %vm6512, 0, %v6511
        %v6514 = vsub.s32 32, %v6513
        %v6515 = vshll.u32 %v6506, %v6513
        %v6516 = vshrl.u32 %v6498, %v6514
        %v6517 = vor.u32 %v6515, %v6516
        %v6518 = vsub.s32 4294967266, %v6513
        %v6519 = vadd.s32 %v6518, 127
        %v6520 = vshll.u32 %v6519, 23
        %v6521 = vor.u32 4788187, %v6520
        %v6522 = vand.u32 2147483647, %v6521
        %v6524 = vcvt.s32.f32 %v6517
        %v6525 = vmul.f32 %v6524, %v6522
        %v6526 = vxor.u32 %v6525, 2147483648
        %v6527 = vsel %vm6444, %v6526, %v6525
        %v6528 = vsub.s32 4, %v6504
        %v6529 = vsel %vm6444, %v6528, %v6504
        %v6530 = vsel %vm6443, %v778, %v6527
        %v6531 = vsel %vm6443, 0, %v6529
        %v6532 = vcosq.f32.pop %v6530
        %v6533 = vsinq.f32.pop %v6530
        %vm6534 = vweird.f32 %v778
        %v6535 = vadd.s32 %v6531, 3
        %v6536 = vand.u32 %v6535, 3
        %vm6537 = vcmp.lt.s32.totalorder %v6536, 2
        %vm6538 = vcmp.eq.s32.totalorder %v6536, 0
        %v6539 = vxor.u32 %v6533, 2147483648
        %v6540 = vsel %vm6538, %v6532, %v6539
        %vm6541 = vcmp.eq.s32.totalorder %v6536, 2
        %v6542 = vxor.u32 %v6532, 2147483648
        %v6543 = vsel %vm6541, %v6542, %v6533
        %v6544 = vsel %vm6537, %v6540, %v6543
        %v6545 = vsel %vm6534, nan, %v6544
        %v6546 = vand.u32 2147483647, %v783
        %vm6547 = vcmp.le.f32.partialorder %v6546, 0.7853982
        %vm6548 = vcmp.lt.s32.totalorder %v783, 0
        %v6549 = vand.u32 %v783, 2139095040
        %v6550 = vshrl.u32 %v6549, 23
        %v6551 = vsub.s32 %v6550, 127
        %v6552 = vand.u32 2147483647, %v783
        %v6553 = vand.u32 %v6552, 8388607
        %v6554 = vor.u32 %v6553, 8388608
        %v6555 = vsub.s32 0, %v6554
        %v6556 = vadd.s32 %v6551, 1
        %vm6557 = vcmp.gt.s32.totalorder %v6556, 0
        %v6558 = vsel %vm6557, %v6556, 0
        %v6559 = vshrl.u32 %v6558, 5
        %v6560 = vand.u32 %v6558, 31
        %v6561 = vsub.s32 32, %v6560
        %v6562 = vshrl.u32 683565275, %v6561
        %v6563 = vshll.u32 683565275, %v6560
        %v6564 = vshrl.u32 2475754826, %v6561
        %v6565 = vor.u32 %v6563, %v6564
        %v6566 = vshll.u32 2475754826, %v6560
        %v6567 = vshrl.u32 2131351028, %v6561
        %v6568 = vor.u32 %v6566, %v6567
        %v6569 = vshll.u32 2131351028, %v6560
        %v6570 = vshrl.u32 2102212464, %v6561
        %v6571 = vor.u32 %v6569, %v6570
        %v6572 = vshll.u32 2102212464, %v6560
        %v6573 = vshrl.u32 920167782, %v6561
        %v6574 = vor.u32 %v6572, %v6573
        %v6575 = vshll.u32 920167782, %v6560
        %v6576 = vshrl.u32 1326507024, %v6561
        %v6577 = vor.u32 %v6575, %v6576
        %vm6578 = vcmp.lt.s32.totalorder %v6559, 1
        %vm6579 = vcmp.lt.s32.totalorder %v6559, 2
        %vm6580 = vcmp.lt.s32.totalorder %v6559, 3
        %vm6581 = vcmp.lt.s32.totalorder %v6559, 4
        %v6582 = vsel %vm6578, %v6562, %v6565
        %v6583 = vsel %vm6581, %v6571, 2102212464
        %v6584 = vsel %vm6580, %v6568, %v6583
        %v6585 = vsel %vm6579, %v6582, %v6584
        %v6586 = vsel %vm6578, %v6565, %v6568
        %v6587 = vsel %vm6581, %v6574, 920167782
        %v6588 = vsel %vm6580, %v6571, %v6587
        %v6589 = vsel %vm6579, %v6586, %v6588
        %v6590 = vsel %vm6578, %v6568, %v6571
        %v6591 = vsel %vm6581, %v6577, 1326507024
        %v6592 = vsel %vm6580, %v6574, %v6591
        %v6593 = vsel %vm6579, %v6590, %v6592
        %v6594 = vshll.u32 %v6554, 8
        %v6595 = vmul.u32.u64.compose %v6594, %v6593
        %v6596 = vextract.low.u32 %v6595
        %v6597 = vextract.high.u32 %v6595
        %v6598 = vmul.u32.u64.compose %v6594, %v6589
        %v6599 = vextract.low.u32 %v6598
        %v6600 = vextract.high.u32 %v6598
        %v6601 = vmul.u32 %v6594, %v6585
        %v6602 = vadd.s32 %v6597, %v6599
        %vm6603 = vc.u32 %v6597, %v6599
        %v6604 = vadd.s32 %v6600, 1
        %v6605 = vsel %vm6603, %v6604, %v6600
        %v6606 = vadd.s32 %v6601, %v6605
        %v6607 = vadd.s32 %v6606, 536870912
        %v6608 = vshrl.u32 %v6607, 30
        %v6609 = vshll.u32 %v6608, 30
        %v6610 = vsub.s32 %v6606, %v6609
        %vm6611 = vcmp.lt.s32.totalorder %v6610, 0
        %v6612 = vsub.s32 0, %v6610
        %v6613 = vsel %vm6611, %v6612, %v6610
        %v6614 = vclz %v6613
        %v6615 = vsub.s32 %v6614, 2
        %vm6616 = vcmp.gt.s32.totalorder 0, %v6615
        %v6617 = vsel %vm6616, 0, %v6615
        %v6618 = vsub.s32 32, %v6617
        %v6619 = vshll.u32 %v6610, %v6617
        %v6620 = vshrl.u32 %v6602, %v6618
        %v6621 = vor.u32 %v6619, %v6620
        %v6622 = vsub.s32 4294967266, %v6617
        %v6623 = vadd.s32 %v6622, 127
        %v6624 = vshll.u32 %v6623, 23
        %v6625 = vor.u32 4788187, %v6624
        %v6626 = vand.u32 2147483647, %v6625
        %v6628 = vcvt.s32.f32 %v6621
        %v6629 = vmul.f32 %v6628, %v6626
        %v6630 = vxor.u32 %v6629, 2147483648
        %v6631 = vsel %vm6548, %v6630, %v6629
        %v6632 = vsub.s32 4, %v6608
        %v6633 = vsel %vm6548, %v6632, %v6608
        %v6634 = vsel %vm6547, %v783, %v6631
        %v6635 = vsel %vm6547, 0, %v6633
        %v6636 = vcosq.f32.pop %v6634
        %v6637 = vsinq.f32.pop %v6634
        %vm6638 = vweird.f32 %v783
        %v6639 = vadd.s32 %v6635, 3
        %v6640 = vand.u32 %v6639, 3
        %vm6641 = vcmp.lt.s32.totalorder %v6640, 2
        %vm6642 = vcmp.eq.s32.totalorder %v6640, 0
        %v6643 = vxor.u32 %v6637, 2147483648
        %v6644 = vsel %vm6642, %v6636, %v6643
        %vm6645 = vcmp.eq.s32.totalorder %v6640, 2
        %v6646 = vxor.u32 %v6636, 2147483648
        %v6647 = vsel %vm6645, %v6646, %v6637
        %v6648 = vsel %vm6641, %v6644, %v6647
        %v6649 = vsel %vm6638, nan, %v6648
        %v6650 = vand.u32 2147483647, %v788
        %vm6651 = vcmp.le.f32.partialorder %v6650, 0.7853982
        %vm6652 = vcmp.lt.s32.totalorder %v788, 0
        %v6653 = vand.u32 %v788, 2139095040
        %v6654 = vshrl.u32 %v6653, 23
        %v6655 = vsub.s32 %v6654, 127
        %v6656 = vand.u32 2147483647, %v788
        %v6657 = vand.u32 %v6656, 8388607
        %v6658 = vor.u32 %v6657, 8388608
        %v6659 = vsub.s32 0, %v6658
        %v6660 = vadd.s32 %v6655, 1
        %vm6661 = vcmp.gt.s32.totalorder %v6660, 0
        %v6662 = vsel %vm6661, %v6660, 0
        %v6663 = vshrl.u32 %v6662, 5
        %v6664 = vand.u32 %v6662, 31
        %v6665 = vsub.s32 32, %v6664
        %v6666 = vshrl.u32 683565275, %v6665
        %v6667 = vshll.u32 683565275, %v6664
        %v6668 = vshrl.u32 2475754826, %v6665
        %v6669 = vor.u32 %v6667, %v6668
        %v6670 = vshll.u32 2475754826, %v6664
        %v6671 = vshrl.u32 2131351028, %v6665
        %v6672 = vor.u32 %v6670, %v6671
        %v6673 = vshll.u32 2131351028, %v6664
        %v6674 = vshrl.u32 2102212464, %v6665
        %v6675 = vor.u32 %v6673, %v6674
        %v6676 = vshll.u32 2102212464, %v6664
        %v6677 = vshrl.u32 920167782, %v6665
        %v6678 = vor.u32 %v6676, %v6677
        %v6679 = vshll.u32 920167782, %v6664
        %v6680 = vshrl.u32 1326507024, %v6665
        %v6681 = vor.u32 %v6679, %v6680
        %vm6682 = vcmp.lt.s32.totalorder %v6663, 1
        %vm6683 = vcmp.lt.s32.totalorder %v6663, 2
        %vm6684 = vcmp.lt.s32.totalorder %v6663, 3
        %vm6685 = vcmp.lt.s32.totalorder %v6663, 4
        %v6686 = vsel %vm6682, %v6666, %v6669
        %v6687 = vsel %vm6685, %v6675, 2102212464
        %v6688 = vsel %vm6684, %v6672, %v6687
        %v6689 = vsel %vm6683, %v6686, %v6688
        %v6690 = vsel %vm6682, %v6669, %v6672
        %v6691 = vsel %vm6685, %v6678, 920167782
        %v6692 = vsel %vm6684, %v6675, %v6691
        %v6693 = vsel %vm6683, %v6690, %v6692
        %v6694 = vsel %vm6682, %v6672, %v6675
        %v6695 = vsel %vm6685, %v6681, 1326507024
        %v6696 = vsel %vm6684, %v6678, %v6695
        %v6697 = vsel %vm6683, %v6694, %v6696
        %v6698 = vshll.u32 %v6658, 8
        %v6699 = vmul.u32.u64.compose %v6698, %v6697
        %v6700 = vextract.low.u32 %v6699
        %v6701 = vextract.high.u32 %v6699
        %v6702 = vmul.u32.u64.compose %v6698, %v6693
        %v6703 = vextract.low.u32 %v6702
        %v6704 = vextract.high.u32 %v6702
        %v6705 = vmul.u32 %v6698, %v6689
        %v6706 = vadd.s32 %v6701, %v6703
        %vm6707 = vc.u32 %v6701, %v6703
        %v6708 = vadd.s32 %v6704, 1
        %v6709 = vsel %vm6707, %v6708, %v6704
        %v6710 = vadd.s32 %v6705, %v6709
        %v6711 = vadd.s32 %v6710, 536870912
        %v6712 = vshrl.u32 %v6711, 30
        %v6713 = vshll.u32 %v6712, 30
        %v6714 = vsub.s32 %v6710, %v6713
        %vm6715 = vcmp.lt.s32.totalorder %v6714, 0
        %v6716 = vsub.s32 0, %v6714
        %v6717 = vsel %vm6715, %v6716, %v6714
        %v6718 = vclz %v6717
        %v6719 = vsub.s32 %v6718, 2
        %vm6720 = vcmp.gt.s32.totalorder 0, %v6719
        %v6721 = vsel %vm6720, 0, %v6719
        %v6722 = vsub.s32 32, %v6721
        %v6723 = vshll.u32 %v6714, %v6721
        %v6724 = vshrl.u32 %v6706, %v6722
        %v6725 = vor.u32 %v6723, %v6724
        %v6726 = vsub.s32 4294967266, %v6721
        %v6727 = vadd.s32 %v6726, 127
        %v6728 = vshll.u32 %v6727, 23
        %v6729 = vor.u32 4788187, %v6728
        %v6730 = vand.u32 2147483647, %v6729
        %v6732 = vcvt.s32.f32 %v6725
        %v6733 = vmul.f32 %v6732, %v6730
        %v6734 = vxor.u32 %v6733, 2147483648
        %v6735 = vsel %vm6652, %v6734, %v6733
        %v6736 = vsub.s32 4, %v6712
        %v6737 = vsel %vm6652, %v6736, %v6712
        %v6738 = vsel %vm6651, %v788, %v6735
        %v6739 = vsel %vm6651, 0, %v6737
        %v6740 = vcosq.f32.pop %v6738
        %v6741 = vsinq.f32.pop %v6738
        %vm6742 = vweird.f32 %v788
        %v6743 = vadd.s32 %v6739, 3
        %v6744 = vand.u32 %v6743, 3
        %vm6745 = vcmp.lt.s32.totalorder %v6744, 2
        %vm6746 = vcmp.eq.s32.totalorder %v6744, 0
        %v6747 = vxor.u32 %v6741, 2147483648
        %v6748 = vsel %vm6746, %v6740, %v6747
        %vm6749 = vcmp.eq.s32.totalorder %v6744, 2
        %v6750 = vxor.u32 %v6740, 2147483648
        %v6751 = vsel %vm6749, %v6750, %v6741
        %v6752 = vsel %vm6745, %v6748, %v6751
        %v6753 = vsel %vm6742, nan, %v6752
        %v6754 = vand.u32 2147483647, %v793
        %vm6755 = vcmp.le.f32.partialorder %v6754, 0.7853982
        %vm6756 = vcmp.lt.s32.totalorder %v793, 0
        %v6757 = vand.u32 %v793, 2139095040
        %v6758 = vshrl.u32 %v6757, 23
        %v6759 = vsub.s32 %v6758, 127
        %v6760 = vand.u32 2147483647, %v793
        %v6761 = vand.u32 %v6760, 8388607
        %v6762 = vor.u32 %v6761, 8388608
        %v6763 = vsub.s32 0, %v6762
        %v6764 = vadd.s32 %v6759, 1
        %vm6765 = vcmp.gt.s32.totalorder %v6764, 0
        %v6766 = vsel %vm6765, %v6764, 0
        %v6767 = vshrl.u32 %v6766, 5
        %v6768 = vand.u32 %v6766, 31
        %v6769 = vsub.s32 32, %v6768
        %v6770 = vshrl.u32 683565275, %v6769
        %v6771 = vshll.u32 683565275, %v6768
        %v6772 = vshrl.u32 2475754826, %v6769
        %v6773 = vor.u32 %v6771, %v6772
        %v6774 = vshll.u32 2475754826, %v6768
        %v6775 = vshrl.u32 2131351028, %v6769
        %v6776 = vor.u32 %v6774, %v6775
        %v6777 = vshll.u32 2131351028, %v6768
        %v6778 = vshrl.u32 2102212464, %v6769
        %v6779 = vor.u32 %v6777, %v6778
        %v6780 = vshll.u32 2102212464, %v6768
        %v6781 = vshrl.u32 920167782, %v6769
        %v6782 = vor.u32 %v6780, %v6781
        %v6783 = vshll.u32 920167782, %v6768
        %v6784 = vshrl.u32 1326507024, %v6769
        %v6785 = vor.u32 %v6783, %v6784
        %vm6786 = vcmp.lt.s32.totalorder %v6767, 1
        %vm6787 = vcmp.lt.s32.totalorder %v6767, 2
        %vm6788 = vcmp.lt.s32.totalorder %v6767, 3
        %vm6789 = vcmp.lt.s32.totalorder %v6767, 4
        %v6790 = vsel %vm6786, %v6770, %v6773
        %v6791 = vsel %vm6789, %v6779, 2102212464
        %v6792 = vsel %vm6788, %v6776, %v6791
        %v6793 = vsel %vm6787, %v6790, %v6792
        %v6794 = vsel %vm6786, %v6773, %v6776
        %v6795 = vsel %vm6789, %v6782, 920167782
        %v6796 = vsel %vm6788, %v6779, %v6795
        %v6797 = vsel %vm6787, %v6794, %v6796
        %v6798 = vsel %vm6786, %v6776, %v6779
        %v6799 = vsel %vm6789, %v6785, 1326507024
        %v6800 = vsel %vm6788, %v6782, %v6799
        %v6801 = vsel %vm6787, %v6798, %v6800
        %v6802 = vshll.u32 %v6762, 8
        %v6803 = vmul.u32.u64.compose %v6802, %v6801
        %v6804 = vextract.low.u32 %v6803
        %v6805 = vextract.high.u32 %v6803
        %v6806 = vmul.u32.u64.compose %v6802, %v6797
        %v6807 = vextract.low.u32 %v6806
        %v6808 = vextract.high.u32 %v6806
        %v6809 = vmul.u32 %v6802, %v6793
        %v6810 = vadd.s32 %v6805, %v6807
        %vm6811 = vc.u32 %v6805, %v6807
        %v6812 = vadd.s32 %v6808, 1
        %v6813 = vsel %vm6811, %v6812, %v6808
        %v6814 = vadd.s32 %v6809, %v6813
        %v6815 = vadd.s32 %v6814, 536870912
        %v6816 = vshrl.u32 %v6815, 30
        %v6817 = vshll.u32 %v6816, 30
        %v6818 = vsub.s32 %v6814, %v6817
        %vm6819 = vcmp.lt.s32.totalorder %v6818, 0
        %v6820 = vsub.s32 0, %v6818
        %v6821 = vsel %vm6819, %v6820, %v6818
        %v6822 = vclz %v6821
        %v6823 = vsub.s32 %v6822, 2
        %vm6824 = vcmp.gt.s32.totalorder 0, %v6823
        %v6825 = vsel %vm6824, 0, %v6823
        %v6826 = vsub.s32 32, %v6825
        %v6827 = vshll.u32 %v6818, %v6825
        %v6828 = vshrl.u32 %v6810, %v6826
        %v6829 = vor.u32 %v6827, %v6828
        %v6830 = vsub.s32 4294967266, %v6825
        %v6831 = vadd.s32 %v6830, 127
        %v6832 = vshll.u32 %v6831, 23
        %v6833 = vor.u32 4788187, %v6832
        %v6834 = vand.u32 2147483647, %v6833
        %v6836 = vcvt.s32.f32 %v6829
        %v6837 = vmul.f32 %v6836, %v6834
        %v6838 = vxor.u32 %v6837, 2147483648
        %v6839 = vsel %vm6756, %v6838, %v6837
        %v6840 = vsub.s32 4, %v6816
        %v6841 = vsel %vm6756, %v6840, %v6816
        %v6842 = vsel %vm6755, %v793, %v6839
        %v6843 = vsel %vm6755, 0, %v6841
        %v6844 = vcosq.f32.pop %v6842
        %v6845 = vsinq.f32.pop %v6842
        %vm6846 = vweird.f32 %v793
        %v6847 = vadd.s32 %v6843, 3
        %v6848 = vand.u32 %v6847, 3
        %vm6849 = vcmp.lt.s32.totalorder %v6848, 2
        %vm6850 = vcmp.eq.s32.totalorder %v6848, 0
        %v6851 = vxor.u32 %v6845, 2147483648
        %v6852 = vsel %vm6850, %v6844, %v6851
        %vm6853 = vcmp.eq.s32.totalorder %v6848, 2
        %v6854 = vxor.u32 %v6844, 2147483648
        %v6855 = vsel %vm6853, %v6854, %v6845
        %v6856 = vsel %vm6849, %v6852, %v6855
        %v6857 = vsel %vm6846, nan, %v6856
        %v6858 = vand.u32 2147483647, %v798
        %vm6859 = vcmp.le.f32.partialorder %v6858, 0.7853982
        %vm6860 = vcmp.lt.s32.totalorder %v798, 0
        %v6861 = vand.u32 %v798, 2139095040
        %v6862 = vshrl.u32 %v6861, 23
        %v6863 = vsub.s32 %v6862, 127
        %v6864 = vand.u32 2147483647, %v798
        %v6865 = vand.u32 %v6864, 8388607
        %v6866 = vor.u32 %v6865, 8388608
        %v6867 = vsub.s32 0, %v6866
        %v6868 = vadd.s32 %v6863, 1
        %vm6869 = vcmp.gt.s32.totalorder %v6868, 0
        %v6870 = vsel %vm6869, %v6868, 0
        %v6871 = vshrl.u32 %v6870, 5
        %v6872 = vand.u32 %v6870, 31
        %v6873 = vsub.s32 32, %v6872
        %v6874 = vshrl.u32 683565275, %v6873
        %v6875 = vshll.u32 683565275, %v6872
        %v6876 = vshrl.u32 2475754826, %v6873
        %v6877 = vor.u32 %v6875, %v6876
        %v6878 = vshll.u32 2475754826, %v6872
        %v6879 = vshrl.u32 2131351028, %v6873
        %v6880 = vor.u32 %v6878, %v6879
        %v6881 = vshll.u32 2131351028, %v6872
        %v6882 = vshrl.u32 2102212464, %v6873
        %v6883 = vor.u32 %v6881, %v6882
        %v6884 = vshll.u32 2102212464, %v6872
        %v6885 = vshrl.u32 920167782, %v6873
        %v6886 = vor.u32 %v6884, %v6885
        %v6887 = vshll.u32 920167782, %v6872
        %v6888 = vshrl.u32 1326507024, %v6873
        %v6889 = vor.u32 %v6887, %v6888
        %vm6890 = vcmp.lt.s32.totalorder %v6871, 1
        %vm6891 = vcmp.lt.s32.totalorder %v6871, 2
        %vm6892 = vcmp.lt.s32.totalorder %v6871, 3
        %vm6893 = vcmp.lt.s32.totalorder %v6871, 4
        %v6894 = vsel %vm6890, %v6874, %v6877
        %v6895 = vsel %vm6893, %v6883, 2102212464
        %v6896 = vsel %vm6892, %v6880, %v6895
        %v6897 = vsel %vm6891, %v6894, %v6896
        %v6898 = vsel %vm6890, %v6877, %v6880
        %v6899 = vsel %vm6893, %v6886, 920167782
        %v6900 = vsel %vm6892, %v6883, %v6899
        %v6901 = vsel %vm6891, %v6898, %v6900
        %v6902 = vsel %vm6890, %v6880, %v6883
        %v6903 = vsel %vm6893, %v6889, 1326507024
        %v6904 = vsel %vm6892, %v6886, %v6903
        %v6905 = vsel %vm6891, %v6902, %v6904
        %v6906 = vshll.u32 %v6866, 8
        %v6907 = vmul.u32.u64.compose %v6906, %v6905
        %v6908 = vextract.low.u32 %v6907
        %v6909 = vextract.high.u32 %v6907
        %v6910 = vmul.u32.u64.compose %v6906, %v6901
        %v6911 = vextract.low.u32 %v6910
        %v6912 = vextract.high.u32 %v6910
        %v6913 = vmul.u32 %v6906, %v6897
        %v6914 = vadd.s32 %v6909, %v6911
        %vm6915 = vc.u32 %v6909, %v6911
        %v6916 = vadd.s32 %v6912, 1
        %v6917 = vsel %vm6915, %v6916, %v6912
        %v6918 = vadd.s32 %v6913, %v6917
        %v6919 = vadd.s32 %v6918, 536870912
        %v6920 = vshrl.u32 %v6919, 30
        %v6921 = vshll.u32 %v6920, 30
        %v6922 = vsub.s32 %v6918, %v6921
        %vm6923 = vcmp.lt.s32.totalorder %v6922, 0
        %v6924 = vsub.s32 0, %v6922
        %v6925 = vsel %vm6923, %v6924, %v6922
        %v6926 = vclz %v6925
        %v6927 = vsub.s32 %v6926, 2
        %vm6928 = vcmp.gt.s32.totalorder 0, %v6927
        %v6929 = vsel %vm6928, 0, %v6927
        %v6930 = vsub.s32 32, %v6929
        %v6931 = vshll.u32 %v6922, %v6929
        %v6932 = vshrl.u32 %v6914, %v6930
        %v6933 = vor.u32 %v6931, %v6932
        %v6934 = vsub.s32 4294967266, %v6929
        %v6935 = vadd.s32 %v6934, 127
        %v6936 = vshll.u32 %v6935, 23
        %v6937 = vor.u32 4788187, %v6936
        %v6938 = vand.u32 2147483647, %v6937
        %v6940 = vcvt.s32.f32 %v6933
        %v6941 = vmul.f32 %v6940, %v6938
        %v6942 = vxor.u32 %v6941, 2147483648
        %v6943 = vsel %vm6860, %v6942, %v6941
        %v6944 = vsub.s32 4, %v6920
        %v6945 = vsel %vm6860, %v6944, %v6920
        %v6946 = vsel %vm6859, %v798, %v6943
        %v6947 = vsel %vm6859, 0, %v6945
        %v6948 = vcosq.f32.pop %v6946
        %v6949 = vsinq.f32.pop %v6946
        %vm6950 = vweird.f32 %v798
        %v6951 = vadd.s32 %v6947, 3
        %v6952 = vand.u32 %v6951, 3
        %vm6953 = vcmp.lt.s32.totalorder %v6952, 2
        %vm6954 = vcmp.eq.s32.totalorder %v6952, 0
        %v6955 = vxor.u32 %v6949, 2147483648
        %v6956 = vsel %vm6954, %v6948, %v6955
        %vm6957 = vcmp.eq.s32.totalorder %v6952, 2
        %v6958 = vxor.u32 %v6948, 2147483648
        %v6959 = vsel %vm6957, %v6958, %v6949
        %v6960 = vsel %vm6953, %v6956, %v6959
        %v6961 = vsel %vm6950, nan, %v6960
        %v6962 = vand.u32 2147483647, %v803
        %vm6963 = vcmp.le.f32.partialorder %v6962, 0.7853982
        %vm6964 = vcmp.lt.s32.totalorder %v803, 0
        %v6965 = vand.u32 %v803, 2139095040
        %v6966 = vshrl.u32 %v6965, 23
        %v6967 = vsub.s32 %v6966, 127
        %v6968 = vand.u32 2147483647, %v803
        %v6969 = vand.u32 %v6968, 8388607
        %v6970 = vor.u32 %v6969, 8388608
        %v6971 = vsub.s32 0, %v6970
        %v6972 = vadd.s32 %v6967, 1
        %vm6973 = vcmp.gt.s32.totalorder %v6972, 0
        %v6974 = vsel %vm6973, %v6972, 0
        %v6975 = vshrl.u32 %v6974, 5
        %v6976 = vand.u32 %v6974, 31
        %v6977 = vsub.s32 32, %v6976
        %v6978 = vshrl.u32 683565275, %v6977
        %v6979 = vshll.u32 683565275, %v6976
        %v6980 = vshrl.u32 2475754826, %v6977
        %v6981 = vor.u32 %v6979, %v6980
        %v6982 = vshll.u32 2475754826, %v6976
        %v6983 = vshrl.u32 2131351028, %v6977
        %v6984 = vor.u32 %v6982, %v6983
        %v6985 = vshll.u32 2131351028, %v6976
        %v6986 = vshrl.u32 2102212464, %v6977
        %v6987 = vor.u32 %v6985, %v6986
        %v6988 = vshll.u32 2102212464, %v6976
        %v6989 = vshrl.u32 920167782, %v6977
        %v6990 = vor.u32 %v6988, %v6989
        %v6991 = vshll.u32 920167782, %v6976
        %v6992 = vshrl.u32 1326507024, %v6977
        %v6993 = vor.u32 %v6991, %v6992
        %vm6994 = vcmp.lt.s32.totalorder %v6975, 1
        %vm6995 = vcmp.lt.s32.totalorder %v6975, 2
        %vm6996 = vcmp.lt.s32.totalorder %v6975, 3
        %vm6997 = vcmp.lt.s32.totalorder %v6975, 4
        %v6998 = vsel %vm6994, %v6978, %v6981
        %v6999 = vsel %vm6997, %v6987, 2102212464
        %v7000 = vsel %vm6996, %v6984, %v6999
        %v7001 = vsel %vm6995, %v6998, %v7000
        %v7002 = vsel %vm6994, %v6981, %v6984
        %v7003 = vsel %vm6997, %v6990, 920167782
        %v7004 = vsel %vm6996, %v6987, %v7003
        %v7005 = vsel %vm6995, %v7002, %v7004
        %v7006 = vsel %vm6994, %v6984, %v6987
        %v7007 = vsel %vm6997, %v6993, 1326507024
        %v7008 = vsel %vm6996, %v6990, %v7007
        %v7009 = vsel %vm6995, %v7006, %v7008
        %v7010 = vshll.u32 %v6970, 8
        %v7011 = vmul.u32.u64.compose %v7010, %v7009
        %v7012 = vextract.low.u32 %v7011
        %v7013 = vextract.high.u32 %v7011
        %v7014 = vmul.u32.u64.compose %v7010, %v7005
        %v7015 = vextract.low.u32 %v7014
        %v7016 = vextract.high.u32 %v7014
        %v7017 = vmul.u32 %v7010, %v7001
        %v7018 = vadd.s32 %v7013, %v7015
        %vm7019 = vc.u32 %v7013, %v7015
        %v7020 = vadd.s32 %v7016, 1
        %v7021 = vsel %vm7019, %v7020, %v7016
        %v7022 = vadd.s32 %v7017, %v7021
        %v7023 = vadd.s32 %v7022, 536870912
        %v7024 = vshrl.u32 %v7023, 30
        %v7025 = vshll.u32 %v7024, 30
        %v7026 = vsub.s32 %v7022, %v7025
        %vm7027 = vcmp.lt.s32.totalorder %v7026, 0
        %v7028 = vsub.s32 0, %v7026
        %v7029 = vsel %vm7027, %v7028, %v7026
        %v7030 = vclz %v7029
        %v7031 = vsub.s32 %v7030, 2
        %vm7032 = vcmp.gt.s32.totalorder 0, %v7031
        %v7033 = vsel %vm7032, 0, %v7031
        %v7034 = vsub.s32 32, %v7033
        %v7035 = vshll.u32 %v7026, %v7033
        %v7036 = vshrl.u32 %v7018, %v7034
        %v7037 = vor.u32 %v7035, %v7036
        %v7038 = vsub.s32 4294967266, %v7033
        %v7039 = vadd.s32 %v7038, 127
        %v7040 = vshll.u32 %v7039, 23
        %v7041 = vor.u32 4788187, %v7040
        %v7042 = vand.u32 2147483647, %v7041
        %v7044 = vcvt.s32.f32 %v7037
        %v7045 = vmul.f32 %v7044, %v7042
        %v7046 = vxor.u32 %v7045, 2147483648
        %v7047 = vsel %vm6964, %v7046, %v7045
        %v7048 = vsub.s32 4, %v7024
        %v7049 = vsel %vm6964, %v7048, %v7024
        %v7050 = vsel %vm6963, %v803, %v7047
        %v7051 = vsel %vm6963, 0, %v7049
        %v7052 = vcosq.f32.pop %v7050
        %v7053 = vsinq.f32.pop %v7050
        %vm7054 = vweird.f32 %v803
        %v7055 = vadd.s32 %v7051, 3
        %v7056 = vand.u32 %v7055, 3
        %vm7057 = vcmp.lt.s32.totalorder %v7056, 2
        %vm7058 = vcmp.eq.s32.totalorder %v7056, 0
        %v7059 = vxor.u32 %v7053, 2147483648
        %v7060 = vsel %vm7058, %v7052, %v7059
        %vm7061 = vcmp.eq.s32.totalorder %v7056, 2
        %v7062 = vxor.u32 %v7052, 2147483648
        %v7063 = vsel %vm7061, %v7062, %v7053
        %v7064 = vsel %vm7057, %v7060, %v7063
        %v7065 = vsel %vm7054, nan, %v7064
        %v7066 = vand.u32 2147483647, %v808
        %vm7067 = vcmp.le.f32.partialorder %v7066, 0.7853982
        %vm7068 = vcmp.lt.s32.totalorder %v808, 0
        %v7069 = vand.u32 %v808, 2139095040
        %v7070 = vshrl.u32 %v7069, 23
        %v7071 = vsub.s32 %v7070, 127
        %v7072 = vand.u32 2147483647, %v808
        %v7073 = vand.u32 %v7072, 8388607
        %v7074 = vor.u32 %v7073, 8388608
        %v7075 = vsub.s32 0, %v7074
        %v7076 = vadd.s32 %v7071, 1
        %vm7077 = vcmp.gt.s32.totalorder %v7076, 0
        %v7078 = vsel %vm7077, %v7076, 0
        %v7079 = vshrl.u32 %v7078, 5
        %v7080 = vand.u32 %v7078, 31
        %v7081 = vsub.s32 32, %v7080
        %v7082 = vshrl.u32 683565275, %v7081
        %v7083 = vshll.u32 683565275, %v7080
        %v7084 = vshrl.u32 2475754826, %v7081
        %v7085 = vor.u32 %v7083, %v7084
        %v7086 = vshll.u32 2475754826, %v7080
        %v7087 = vshrl.u32 2131351028, %v7081
        %v7088 = vor.u32 %v7086, %v7087
        %v7089 = vshll.u32 2131351028, %v7080
        %v7090 = vshrl.u32 2102212464, %v7081
        %v7091 = vor.u32 %v7089, %v7090
        %v7092 = vshll.u32 2102212464, %v7080
        %v7093 = vshrl.u32 920167782, %v7081
        %v7094 = vor.u32 %v7092, %v7093
        %v7095 = vshll.u32 920167782, %v7080
        %v7096 = vshrl.u32 1326507024, %v7081
        %v7097 = vor.u32 %v7095, %v7096
        %vm7098 = vcmp.lt.s32.totalorder %v7079, 1
        %vm7099 = vcmp.lt.s32.totalorder %v7079, 2
        %vm7100 = vcmp.lt.s32.totalorder %v7079, 3
        %vm7101 = vcmp.lt.s32.totalorder %v7079, 4
        %v7102 = vsel %vm7098, %v7082, %v7085
        %v7103 = vsel %vm7101, %v7091, 2102212464
        %v7104 = vsel %vm7100, %v7088, %v7103
        %v7105 = vsel %vm7099, %v7102, %v7104
        %v7106 = vsel %vm7098, %v7085, %v7088
        %v7107 = vsel %vm7101, %v7094, 920167782
        %v7108 = vsel %vm7100, %v7091, %v7107
        %v7109 = vsel %vm7099, %v7106, %v7108
        %v7110 = vsel %vm7098, %v7088, %v7091
        %v7111 = vsel %vm7101, %v7097, 1326507024
        %v7112 = vsel %vm7100, %v7094, %v7111
        %v7113 = vsel %vm7099, %v7110, %v7112
        %v7114 = vshll.u32 %v7074, 8
        %v7115 = vmul.u32.u64.compose %v7114, %v7113
        %v7116 = vextract.low.u32 %v7115
        %v7117 = vextract.high.u32 %v7115
        %v7118 = vmul.u32.u64.compose %v7114, %v7109
        %v7119 = vextract.low.u32 %v7118
        %v7120 = vextract.high.u32 %v7118
        %v7121 = vmul.u32 %v7114, %v7105
        %v7122 = vadd.s32 %v7117, %v7119
        %vm7123 = vc.u32 %v7117, %v7119
        %v7124 = vadd.s32 %v7120, 1
        %v7125 = vsel %vm7123, %v7124, %v7120
        %v7126 = vadd.s32 %v7121, %v7125
        %v7127 = vadd.s32 %v7126, 536870912
        %v7128 = vshrl.u32 %v7127, 30
        %v7129 = vshll.u32 %v7128, 30
        %v7130 = vsub.s32 %v7126, %v7129
        %vm7131 = vcmp.lt.s32.totalorder %v7130, 0
        %v7132 = vsub.s32 0, %v7130
        %v7133 = vsel %vm7131, %v7132, %v7130
        %v7134 = vclz %v7133
        %v7135 = vsub.s32 %v7134, 2
        %vm7136 = vcmp.gt.s32.totalorder 0, %v7135
        %v7137 = vsel %vm7136, 0, %v7135
        %v7138 = vsub.s32 32, %v7137
        %v7139 = vshll.u32 %v7130, %v7137
        %v7140 = vshrl.u32 %v7122, %v7138
        %v7141 = vor.u32 %v7139, %v7140
        %v7142 = vsub.s32 4294967266, %v7137
        %v7143 = vadd.s32 %v7142, 127
        %v7144 = vshll.u32 %v7143, 23
        %v7145 = vor.u32 4788187, %v7144
        %v7146 = vand.u32 2147483647, %v7145
        %v7148 = vcvt.s32.f32 %v7141
        %v7149 = vmul.f32 %v7148, %v7146
        %v7150 = vxor.u32 %v7149, 2147483648
        %v7151 = vsel %vm7068, %v7150, %v7149
        %v7152 = vsub.s32 4, %v7128
        %v7153 = vsel %vm7068, %v7152, %v7128
        %v7154 = vsel %vm7067, %v808, %v7151
        %v7155 = vsel %vm7067, 0, %v7153
        %v7156 = vcosq.f32.pop %v7154
        %v7157 = vsinq.f32.pop %v7154
        %vm7158 = vweird.f32 %v808
        %v7159 = vadd.s32 %v7155, 3
        %v7160 = vand.u32 %v7159, 3
        %vm7161 = vcmp.lt.s32.totalorder %v7160, 2
        %vm7162 = vcmp.eq.s32.totalorder %v7160, 0
        %v7163 = vxor.u32 %v7157, 2147483648
        %v7164 = vsel %vm7162, %v7156, %v7163
        %vm7165 = vcmp.eq.s32.totalorder %v7160, 2
        %v7166 = vxor.u32 %v7156, 2147483648
        %v7167 = vsel %vm7165, %v7166, %v7157
        %v7168 = vsel %vm7161, %v7164, %v7167
        %v7169 = vsel %vm7158, nan, %v7168
        %v7170 = vand.u32 2147483647, %v813
        %vm7171 = vcmp.le.f32.partialorder %v7170, 0.7853982
        %vm7172 = vcmp.lt.s32.totalorder %v813, 0
        %v7173 = vand.u32 %v813, 2139095040
        %v7174 = vshrl.u32 %v7173, 23
        %v7175 = vsub.s32 %v7174, 127
        %v7176 = vand.u32 2147483647, %v813
        %v7177 = vand.u32 %v7176, 8388607
        %v7178 = vor.u32 %v7177, 8388608
        %v7179 = vsub.s32 0, %v7178
        %v7180 = vadd.s32 %v7175, 1
        %vm7181 = vcmp.gt.s32.totalorder %v7180, 0
        %v7182 = vsel %vm7181, %v7180, 0
        %v7183 = vshrl.u32 %v7182, 5
        %v7184 = vand.u32 %v7182, 31
        %v7185 = vsub.s32 32, %v7184
        %v7186 = vshrl.u32 683565275, %v7185
        %v7187 = vshll.u32 683565275, %v7184
        %v7188 = vshrl.u32 2475754826, %v7185
        %v7189 = vor.u32 %v7187, %v7188
        %v7190 = vshll.u32 2475754826, %v7184
        %v7191 = vshrl.u32 2131351028, %v7185
        %v7192 = vor.u32 %v7190, %v7191
        %v7193 = vshll.u32 2131351028, %v7184
        %v7194 = vshrl.u32 2102212464, %v7185
        %v7195 = vor.u32 %v7193, %v7194
        %v7196 = vshll.u32 2102212464, %v7184
        %v7197 = vshrl.u32 920167782, %v7185
        %v7198 = vor.u32 %v7196, %v7197
        %v7199 = vshll.u32 920167782, %v7184
        %v7200 = vshrl.u32 1326507024, %v7185
        %v7201 = vor.u32 %v7199, %v7200
        %vm7202 = vcmp.lt.s32.totalorder %v7183, 1
        %vm7203 = vcmp.lt.s32.totalorder %v7183, 2
        %vm7204 = vcmp.lt.s32.totalorder %v7183, 3
        %vm7205 = vcmp.lt.s32.totalorder %v7183, 4
        %v7206 = vsel %vm7202, %v7186, %v7189
        %v7207 = vsel %vm7205, %v7195, 2102212464
        %v7208 = vsel %vm7204, %v7192, %v7207
        %v7209 = vsel %vm7203, %v7206, %v7208
        %v7210 = vsel %vm7202, %v7189, %v7192
        %v7211 = vsel %vm7205, %v7198, 920167782
        %v7212 = vsel %vm7204, %v7195, %v7211
        %v7213 = vsel %vm7203, %v7210, %v7212
        %v7214 = vsel %vm7202, %v7192, %v7195
        %v7215 = vsel %vm7205, %v7201, 1326507024
        %v7216 = vsel %vm7204, %v7198, %v7215
        %v7217 = vsel %vm7203, %v7214, %v7216
        %v7218 = vshll.u32 %v7178, 8
        %v7219 = vmul.u32.u64.compose %v7218, %v7217
        %v7220 = vextract.low.u32 %v7219
        %v7221 = vextract.high.u32 %v7219
        %v7222 = vmul.u32.u64.compose %v7218, %v7213
        %v7223 = vextract.low.u32 %v7222
        %v7224 = vextract.high.u32 %v7222
        %v7225 = vmul.u32 %v7218, %v7209
        %v7226 = vadd.s32 %v7221, %v7223
        %vm7227 = vc.u32 %v7221, %v7223
        %v7228 = vadd.s32 %v7224, 1
        %v7229 = vsel %vm7227, %v7228, %v7224
        %v7230 = vadd.s32 %v7225, %v7229
        %v7231 = vadd.s32 %v7230, 536870912
        %v7232 = vshrl.u32 %v7231, 30
        %v7233 = vshll.u32 %v7232, 30
        %v7234 = vsub.s32 %v7230, %v7233
        %vm7235 = vcmp.lt.s32.totalorder %v7234, 0
        %v7236 = vsub.s32 0, %v7234
        %v7237 = vsel %vm7235, %v7236, %v7234
        %v7238 = vclz %v7237
        %v7239 = vsub.s32 %v7238, 2
        %vm7240 = vcmp.gt.s32.totalorder 0, %v7239
        %v7241 = vsel %vm7240, 0, %v7239
        %v7242 = vsub.s32 32, %v7241
        %v7243 = vshll.u32 %v7234, %v7241
        %v7244 = vshrl.u32 %v7226, %v7242
        %v7245 = vor.u32 %v7243, %v7244
        %v7246 = vsub.s32 4294967266, %v7241
        %v7247 = vadd.s32 %v7246, 127
        %v7248 = vshll.u32 %v7247, 23
        %v7249 = vor.u32 4788187, %v7248
        %v7250 = vand.u32 2147483647, %v7249
        %v7252 = vcvt.s32.f32 %v7245
        %v7253 = vmul.f32 %v7252, %v7250
        %v7254 = vxor.u32 %v7253, 2147483648
        %v7255 = vsel %vm7172, %v7254, %v7253
        %v7256 = vsub.s32 4, %v7232
        %v7257 = vsel %vm7172, %v7256, %v7232
        %v7258 = vsel %vm7171, %v813, %v7255
        %v7259 = vsel %vm7171, 0, %v7257
        %v7260 = vcosq.f32.pop %v7258
        %v7261 = vsinq.f32.pop %v7258
        %vm7262 = vweird.f32 %v813
        %v7263 = vadd.s32 %v7259, 3
        %v7264 = vand.u32 %v7263, 3
        %vm7265 = vcmp.lt.s32.totalorder %v7264, 2
        %vm7266 = vcmp.eq.s32.totalorder %v7264, 0
        %v7267 = vxor.u32 %v7261, 2147483648
        %v7268 = vsel %vm7266, %v7260, %v7267
        %vm7269 = vcmp.eq.s32.totalorder %v7264, 2
        %v7270 = vxor.u32 %v7260, 2147483648
        %v7271 = vsel %vm7269, %v7270, %v7261
        %v7272 = vsel %vm7265, %v7268, %v7271
        %v7273 = vsel %vm7262, nan, %v7272
        %v7274 = vand.u32 2147483647, %v818
        %vm7275 = vcmp.le.f32.partialorder %v7274, 0.7853982
        %vm7276 = vcmp.lt.s32.totalorder %v818, 0
        %v7277 = vand.u32 %v818, 2139095040
        %v7278 = vshrl.u32 %v7277, 23
        %v7279 = vsub.s32 %v7278, 127
        %v7280 = vand.u32 2147483647, %v818
        %v7281 = vand.u32 %v7280, 8388607
        %v7282 = vor.u32 %v7281, 8388608
        %v7283 = vsub.s32 0, %v7282
        %v7284 = vadd.s32 %v7279, 1
        %vm7285 = vcmp.gt.s32.totalorder %v7284, 0
        %v7286 = vsel %vm7285, %v7284, 0
        %v7287 = vshrl.u32 %v7286, 5
        %v7288 = vand.u32 %v7286, 31
        %v7289 = vsub.s32 32, %v7288
        %v7290 = vshrl.u32 683565275, %v7289
        %v7291 = vshll.u32 683565275, %v7288
        %v7292 = vshrl.u32 2475754826, %v7289
        %v7293 = vor.u32 %v7291, %v7292
        %v7294 = vshll.u32 2475754826, %v7288
        %v7295 = vshrl.u32 2131351028, %v7289
        %v7296 = vor.u32 %v7294, %v7295
        %v7297 = vshll.u32 2131351028, %v7288
        %v7298 = vshrl.u32 2102212464, %v7289
        %v7299 = vor.u32 %v7297, %v7298
        %v7300 = vshll.u32 2102212464, %v7288
        %v7301 = vshrl.u32 920167782, %v7289
        %v7302 = vor.u32 %v7300, %v7301
        %v7303 = vshll.u32 920167782, %v7288
        %v7304 = vshrl.u32 1326507024, %v7289
        %v7305 = vor.u32 %v7303, %v7304
        %vm7306 = vcmp.lt.s32.totalorder %v7287, 1
        %vm7307 = vcmp.lt.s32.totalorder %v7287, 2
        %vm7308 = vcmp.lt.s32.totalorder %v7287, 3
        %vm7309 = vcmp.lt.s32.totalorder %v7287, 4
        %v7310 = vsel %vm7306, %v7290, %v7293
        %v7311 = vsel %vm7309, %v7299, 2102212464
        %v7312 = vsel %vm7308, %v7296, %v7311
        %v7313 = vsel %vm7307, %v7310, %v7312
        %v7314 = vsel %vm7306, %v7293, %v7296
        %v7315 = vsel %vm7309, %v7302, 920167782
        %v7316 = vsel %vm7308, %v7299, %v7315
        %v7317 = vsel %vm7307, %v7314, %v7316
        %v7318 = vsel %vm7306, %v7296, %v7299
        %v7319 = vsel %vm7309, %v7305, 1326507024
        %v7320 = vsel %vm7308, %v7302, %v7319
        %v7321 = vsel %vm7307, %v7318, %v7320
        %v7322 = vshll.u32 %v7282, 8
        %v7323 = vmul.u32.u64.compose %v7322, %v7321
        %v7324 = vextract.low.u32 %v7323
        %v7325 = vextract.high.u32 %v7323
        %v7326 = vmul.u32.u64.compose %v7322, %v7317
        %v7327 = vextract.low.u32 %v7326
        %v7328 = vextract.high.u32 %v7326
        %v7329 = vmul.u32 %v7322, %v7313
        %v7330 = vadd.s32 %v7325, %v7327
        %vm7331 = vc.u32 %v7325, %v7327
        %v7332 = vadd.s32 %v7328, 1
        %v7333 = vsel %vm7331, %v7332, %v7328
        %v7334 = vadd.s32 %v7329, %v7333
        %v7335 = vadd.s32 %v7334, 536870912
        %v7336 = vshrl.u32 %v7335, 30
        %v7337 = vshll.u32 %v7336, 30
        %v7338 = vsub.s32 %v7334, %v7337
        %vm7339 = vcmp.lt.s32.totalorder %v7338, 0
        %v7340 = vsub.s32 0, %v7338
        %v7341 = vsel %vm7339, %v7340, %v7338
        %v7342 = vclz %v7341
        %v7343 = vsub.s32 %v7342, 2
        %vm7344 = vcmp.gt.s32.totalorder 0, %v7343
        %v7345 = vsel %vm7344, 0, %v7343
        %v7346 = vsub.s32 32, %v7345
        %v7347 = vshll.u32 %v7338, %v7345
        %v7348 = vshrl.u32 %v7330, %v7346
        %v7349 = vor.u32 %v7347, %v7348
        %v7350 = vsub.s32 4294967266, %v7345
        %v7351 = vadd.s32 %v7350, 127
        %v7352 = vshll.u32 %v7351, 23
        %v7353 = vor.u32 4788187, %v7352
        %v7354 = vand.u32 2147483647, %v7353
        %v7356 = vcvt.s32.f32 %v7349
        %v7357 = vmul.f32 %v7356, %v7354
        %v7358 = vxor.u32 %v7357, 2147483648
        %v7359 = vsel %vm7276, %v7358, %v7357
        %v7360 = vsub.s32 4, %v7336
        %v7361 = vsel %vm7276, %v7360, %v7336
        %v7362 = vsel %vm7275, %v818, %v7359
        %v7363 = vsel %vm7275, 0, %v7361
        %v7364 = vcosq.f32.pop %v7362
        %v7365 = vsinq.f32.pop %v7362
        %vm7366 = vweird.f32 %v818
        %v7367 = vadd.s32 %v7363, 3
        %v7368 = vand.u32 %v7367, 3
        %vm7369 = vcmp.lt.s32.totalorder %v7368, 2
        %vm7370 = vcmp.eq.s32.totalorder %v7368, 0
        %v7371 = vxor.u32 %v7365, 2147483648
        %v7372 = vsel %vm7370, %v7364, %v7371
        %vm7373 = vcmp.eq.s32.totalorder %v7368, 2
        %v7374 = vxor.u32 %v7364, 2147483648
        %v7375 = vsel %vm7373, %v7374, %v7365
        %v7376 = vsel %vm7369, %v7372, %v7375
        %v7377 = vsel %vm7366, nan, %v7376
        %v7378 = vand.u32 2147483647, %v823
        %vm7379 = vcmp.le.f32.partialorder %v7378, 0.7853982
        %vm7380 = vcmp.lt.s32.totalorder %v823, 0
        %v7381 = vand.u32 %v823, 2139095040
        %v7382 = vshrl.u32 %v7381, 23
        %v7383 = vsub.s32 %v7382, 127
        %v7384 = vand.u32 2147483647, %v823
        %v7385 = vand.u32 %v7384, 8388607
        %v7386 = vor.u32 %v7385, 8388608
        %v7387 = vsub.s32 0, %v7386
        %v7388 = vadd.s32 %v7383, 1
        %vm7389 = vcmp.gt.s32.totalorder %v7388, 0
        %v7390 = vsel %vm7389, %v7388, 0
        %v7391 = vshrl.u32 %v7390, 5
        %v7392 = vand.u32 %v7390, 31
        %v7393 = vsub.s32 32, %v7392
        %v7394 = vshrl.u32 683565275, %v7393
        %v7395 = vshll.u32 683565275, %v7392
        %v7396 = vshrl.u32 2475754826, %v7393
        %v7397 = vor.u32 %v7395, %v7396
        %v7398 = vshll.u32 2475754826, %v7392
        %v7399 = vshrl.u32 2131351028, %v7393
        %v7400 = vor.u32 %v7398, %v7399
        %v7401 = vshll.u32 2131351028, %v7392
        %v7402 = vshrl.u32 2102212464, %v7393
        %v7403 = vor.u32 %v7401, %v7402
        %v7404 = vshll.u32 2102212464, %v7392
        %v7405 = vshrl.u32 920167782, %v7393
        %v7406 = vor.u32 %v7404, %v7405
        %v7407 = vshll.u32 920167782, %v7392
        %v7408 = vshrl.u32 1326507024, %v7393
        %v7409 = vor.u32 %v7407, %v7408
        %vm7410 = vcmp.lt.s32.totalorder %v7391, 1
        %vm7411 = vcmp.lt.s32.totalorder %v7391, 2
        %vm7412 = vcmp.lt.s32.totalorder %v7391, 3
        %vm7413 = vcmp.lt.s32.totalorder %v7391, 4
        %v7414 = vsel %vm7410, %v7394, %v7397
        %v7415 = vsel %vm7413, %v7403, 2102212464
        %v7416 = vsel %vm7412, %v7400, %v7415
        %v7417 = vsel %vm7411, %v7414, %v7416
        %v7418 = vsel %vm7410, %v7397, %v7400
        %v7419 = vsel %vm7413, %v7406, 920167782
        %v7420 = vsel %vm7412, %v7403, %v7419
        %v7421 = vsel %vm7411, %v7418, %v7420
        %v7422 = vsel %vm7410, %v7400, %v7403
        %v7423 = vsel %vm7413, %v7409, 1326507024
        %v7424 = vsel %vm7412, %v7406, %v7423
        %v7425 = vsel %vm7411, %v7422, %v7424
        %v7426 = vshll.u32 %v7386, 8
        %v7427 = vmul.u32.u64.compose %v7426, %v7425
        %v7428 = vextract.low.u32 %v7427
        %v7429 = vextract.high.u32 %v7427
        %v7430 = vmul.u32.u64.compose %v7426, %v7421
        %v7431 = vextract.low.u32 %v7430
        %v7432 = vextract.high.u32 %v7430
        %v7433 = vmul.u32 %v7426, %v7417
        %v7434 = vadd.s32 %v7429, %v7431
        %vm7435 = vc.u32 %v7429, %v7431
        %v7436 = vadd.s32 %v7432, 1
        %v7437 = vsel %vm7435, %v7436, %v7432
        %v7438 = vadd.s32 %v7433, %v7437
        %v7439 = vadd.s32 %v7438, 536870912
        %v7440 = vshrl.u32 %v7439, 30
        %v7441 = vshll.u32 %v7440, 30
        %v7442 = vsub.s32 %v7438, %v7441
        %vm7443 = vcmp.lt.s32.totalorder %v7442, 0
        %v7444 = vsub.s32 0, %v7442
        %v7445 = vsel %vm7443, %v7444, %v7442
        %v7446 = vclz %v7445
        %v7447 = vsub.s32 %v7446, 2
        %vm7448 = vcmp.gt.s32.totalorder 0, %v7447
        %v7449 = vsel %vm7448, 0, %v7447
        %v7450 = vsub.s32 32, %v7449
        %v7451 = vshll.u32 %v7442, %v7449
        %v7452 = vshrl.u32 %v7434, %v7450
        %v7453 = vor.u32 %v7451, %v7452
        %v7454 = vsub.s32 4294967266, %v7449
        %v7455 = vadd.s32 %v7454, 127
        %v7456 = vshll.u32 %v7455, 23
        %v7457 = vor.u32 4788187, %v7456
        %v7458 = vand.u32 2147483647, %v7457
        %v7460 = vcvt.s32.f32 %v7453
        %v7461 = vmul.f32 %v7460, %v7458
        %v7462 = vxor.u32 %v7461, 2147483648
        %v7463 = vsel %vm7380, %v7462, %v7461
        %v7464 = vsub.s32 4, %v7440
        %v7465 = vsel %vm7380, %v7464, %v7440
        %v7466 = vsel %vm7379, %v823, %v7463
        %v7467 = vsel %vm7379, 0, %v7465
        %v7468 = vcosq.f32.pop %v7466
        %v7469 = vsinq.f32.pop %v7466
        %vm7470 = vweird.f32 %v823
        %v7471 = vadd.s32 %v7467, 3
        %v7472 = vand.u32 %v7471, 3
        %vm7473 = vcmp.lt.s32.totalorder %v7472, 2
        %vm7474 = vcmp.eq.s32.totalorder %v7472, 0
        %v7475 = vxor.u32 %v7469, 2147483648
        %v7476 = vsel %vm7474, %v7468, %v7475
        %vm7477 = vcmp.eq.s32.totalorder %v7472, 2
        %v7478 = vxor.u32 %v7468, 2147483648
        %v7479 = vsel %vm7477, %v7478, %v7469
        %v7480 = vsel %vm7473, %v7476, %v7479
        %v7481 = vsel %vm7470, nan, %v7480
        %7482 = vst [vmem:[%s164] sm:$0xff] %v929
        %7483 = vst [vmem:[%s164 + $0x8] sm:$0xff] %v1033
        %7484 = vst [vmem:[%s164 + $0x10] sm:$0xff] %v1137
        %7485 = vst [vmem:[%s164 + $0x18] sm:$0xff] %v1241
        %7486 = vst [vmem:[%s164 + $0x20] sm:$0xff] %v1345
        %7487 = vst [vmem:[%s164 + $0x28] sm:$0xff] %v1449
        %7488 = vst [vmem:[%s164 + $0x30] sm:$0xff] %v1553
        %7489 = vst [vmem:[%s164 + $0x38] sm:$0xff] %v1657
        %7490 = vst [vmem:[%s164 + $0x40] sm:$0xff] %v1761
        %7491 = vst [vmem:[%s164 + $0x48] sm:$0xff] %v1865
        %7492 = vst [vmem:[%s164 + $0x50] sm:$0xff] %v1969
        %7493 = vst [vmem:[%s164 + $0x58] sm:$0xff] %v2073
        %7494 = vst [vmem:[%s164 + $0x60] sm:$0xff] %v2177
        %7495 = vst [vmem:[%s164 + $0x68] sm:$0xff] %v2281
        %7496 = vst [vmem:[%s164 + $0x70] sm:$0xff] %v2385
        %7497 = vst [vmem:[%s164 + $0x78] sm:$0xff] %v2489
        %7498 = vst [vmem:[%s164 + $0x80] sm:$0xff] %v2593
        %7499 = vst [vmem:[%s164 + $0x88] sm:$0xff] %v2697
        %7500 = vst [vmem:[%s164 + $0x90] sm:$0xff] %v2801
        %7501 = vst [vmem:[%s164 + $0x98] sm:$0xff] %v2905
        %7502 = vst [vmem:[%s164 + $0xa0] sm:$0xff] %v3009
        %7503 = vst [vmem:[%s164 + $0xa8] sm:$0xff] %v3113
        %7504 = vst [vmem:[%s164 + $0xb0] sm:$0xff] %v3217
        %7505 = vst [vmem:[%s164 + $0xb8] sm:$0xff] %v3321
        %7506 = vst [vmem:[%s164 + $0xc0] sm:$0xff] %v3425
        %7507 = vst [vmem:[%s164 + $0xc8] sm:$0xff] %v3529
        %7508 = vst [vmem:[%s164 + $0xd0] sm:$0xff] %v3633
        %7509 = vst [vmem:[%s164 + $0xd8] sm:$0xff] %v3737
        %7510 = vst [vmem:[%s164 + $0xe0] sm:$0xff] %v3841
        %7511 = vst [vmem:[%s164 + $0xe8] sm:$0xff] %v3945
        %7512 = vst [vmem:[%s164 + $0xf0] sm:$0xff] %v4049
        %7513 = vst [vmem:[%s164 + $0xf8] sm:$0xff] %v4153
        %7514 = vst [vmem:[%s164 + $0x100] sm:$0xff] %v4257
        %7515 = vst [vmem:[%s164 + $0x108] sm:$0xff] %v4361
        %7516 = vst [vmem:[%s164 + $0x110] sm:$0xff] %v4465
        %7517 = vst [vmem:[%s164 + $0x118] sm:$0xff] %v4569
        %7518 = vst [vmem:[%s164 + $0x120] sm:$0xff] %v4673
        %7519 = vst [vmem:[%s164 + $0x128] sm:$0xff] %v4777
        %7520 = vst [vmem:[%s164 + $0x130] sm:$0xff] %v4881
        %7521 = vst [vmem:[%s164 + $0x138] sm:$0xff] %v4985
        %7522 = vst [vmem:[%s164 + $0x140] sm:$0xff] %v5089
        %7523 = vst [vmem:[%s164 + $0x148] sm:$0xff] %v5193
        %7524 = vst [vmem:[%s164 + $0x150] sm:$0xff] %v5297
        %7525 = vst [vmem:[%s164 + $0x158] sm:$0xff] %v5401
        %7526 = vst [vmem:[%s164 + $0x160] sm:$0xff] %v5505
        %7527 = vst [vmem:[%s164 + $0x168] sm:$0xff] %v5609
        %7528 = vst [vmem:[%s164 + $0x170] sm:$0xff] %v5713
        %7529 = vst [vmem:[%s164 + $0x178] sm:$0xff] %v5817
        %7530 = vst [vmem:[%s164 + $0x180] sm:$0xff] %v5921
        %7531 = vst [vmem:[%s164 + $0x188] sm:$0xff] %v6025
        %7532 = vst [vmem:[%s164 + $0x190] sm:$0xff] %v6129
        %7533 = vst [vmem:[%s164 + $0x198] sm:$0xff] %v6233
        %7534 = vst [vmem:[%s164 + $0x1a0] sm:$0xff] %v6337
        %7535 = vst [vmem:[%s164 + $0x1a8] sm:$0xff] %v6441
        %7536 = vst [vmem:[%s164 + $0x1b0] sm:$0xff] %v6545
        %7537 = vst [vmem:[%s164 + $0x1b8] sm:$0xff] %v6649
        %7538 = vst [vmem:[%s164 + $0x1c0] sm:$0xff] %v6753
        %7539 = vst [vmem:[%s164 + $0x1c8] sm:$0xff] %v6857
        %7540 = vst [vmem:[%s164 + $0x1d0] sm:$0xff] %v6961
        %7541 = vst [vmem:[%s164 + $0x1d8] sm:$0xff] %v7065
        %7542 = vst [vmem:[%s164 + $0x1e0] sm:$0xff] %v7169
        %7543 = vst [vmem:[%s164 + $0x1e8] sm:$0xff] %v7273
        %7544 = vst [vmem:[%s164 + $0x1f0] sm:$0xff] %v7377
        %7545 = vst [vmem:[%s164 + $0x1f8] sm:$0xff] %v7481
        %s7546 = sand.u32 %s93, 1
        %s7547 = scalar_lea.sflag [#allocation3], %s7546
        %s7548 = sand.u32 %s93, 1
        %s7549 = smul.addr %s7548, 512
        %s7550 = scalar_lea.vmem [#allocation2], %s7549
        // Predicated region
        $region33: #{tpu_custom_call.1} parent=31 // pred_check
          %p7551 = pneg %p103
        $region34: #{tpu_custom_call.1} parent=31 // pred_check_branch
          %7553 = sbr.rel (%p7551) target = $region36
        $region35: #{tpu_custom_call.1} parent=31 // pred_region
          %s7554 = smul.u32 64, %s17
          %s7556 = ssub.s32 8192, 8192
          %7557 = vsyncadd %s7547, %s7556
          %s7558 = smul.addr %s7554, 128
          %s7559 = scalar_lea.hbm %s3, %s7558
          %s7560 = sshll.u32 %s7550, 4
          %s7561 = int_to_ptr.vmem [resolvable:$true] %s7560
          %7566 = dma.vmem_to_hbm [thread:$0]  %s7561, 8192, %s7559, %s7547, 128, 128, 8
        $region36: #{tpu_custom_call.1} parent=31 // pred_fallthru
          _
      $region32: #{tpu_custom_call.1} parent=5 // pred_fallthru
        _
      %p7567 = scmp.le.s32.totalorder 2, %s12
      // Predicated region
      $region37: #{tpu_custom_call.1} parent=5 // pred_check
        %p7568 = pneg %p7567
      $region38: #{tpu_custom_call.1} parent=5 // pred_check_branch
        %7570 = sbr.rel (%p7568) target = $region40
      $region39: #{tpu_custom_call.1} parent=5 // pred_region
        %s7571 = ssub.s32 %s12, 2
        // Predicated region
        $region41: #{tpu_custom_call.1} parent=39 // pred_check
          %p7572 = pneg %p109
        $region42: #{tpu_custom_call.1} parent=39 // pred_check_branch
          %7574 = sbr.rel (%p7572) target = $region44
        $region43: #{tpu_custom_call.1} parent=39 // pred_region
          %s7575 = sand.u32 %s94, 1
          %s7576 = scalar_lea.sflag [#allocation3], %s7575
          %s7577 = sand.u32 %s94, 1
          %s7578 = smul.addr %s7577, 512
          %s7579 = scalar_lea.vmem [#allocation2], %s7578
          %7580 = dma.done %s7576, 8192
        $region44: #{tpu_custom_call.1} parent=39 // pred_fallthru
          _
      $region40: #{tpu_custom_call.1} parent=5 // pred_fallthru
        _
    $region6: #{tpu_custom_call.1} parent=1 // loop_footer
      %s16 = sadd.s32 1, %s12
    $region7: #{tpu_custom_call.1} parent=1 // loop_footer_branch
      %11 = sbr.rel target = $region3
    $region8: #{tpu_custom_call.1} parent=1 // loop_exit
      _
    %7581 = vsyncpa [#allocation3], 1
    %s7582 = scalar_lea.sflag [#allocation3], 1
    %7583 = vsyncpa %s7582, 1

</llo_original>
